<compile_context>
chip_gen: v5e
topology: v5e:2x2
jax: 0.10.0
libtpu: 0.0.40
codegen_flags: <defaults>
</compile_context>

<pallas_src>
import jax
import jax.numpy as jnp
import numpy as np
from jax import lax
from jax.experimental import pallas as pl
from jax.experimental.pallas import tpu as pltpu

C = 128          # lane-padded channel dimension (real channel counts <= 80)
EPS = 1e-5       # BatchNorm2d default eps
OUT_T = 37       # AdaptiveAvgPool2d((1, 37)) target length
N_F1 = 40
N_F2 = 40
IN_CH = 63


# ---------------------------------------------------------------------------
# Pallas kernels
# ---------------------------------------------------------------------------
def _elu(v):
    return jnp.where(v > 0, v, jnp.exp(v) - 1.0)


def _make_conv_kernel(K, l_conv, act, has_pool):
    """pool( act( sum_k x[k:k+l_conv] @ W_k * scale + shift ) )."""

    def kernel(x_ref, w_ref, s_ref, t_ref, *rest):
        if has_pool:
            p_ref, o_ref = rest
        else:
            (o_ref,) = rest

        if K == 1:
            acc = jnp.dot(x_ref[...], w_ref[0],
                          preferred_element_type=jnp.float32)
        else:
            acc = jnp.zeros((l_conv, C), jnp.float32)
            for k in range(K):                    # K static and small (<= 25)
                xk = x_ref[pl.ds(k, l_conv), :]
                acc = acc + jnp.dot(xk, w_ref[k],
                                    preferred_element_type=jnp.float32)

        y = acc * s_ref[...] + t_ref[...]          # fused Conv-bias + BatchNorm
        if act == "elu":
            y = _elu(y)
        if has_pool:
            y = jnp.dot(p_ref[...], y, preferred_element_type=jnp.float32)
        o_ref[...] = y.astype(o_ref.dtype)

    return kernel


def fused_conv_layer(x, taps, scale, shift, *, act="elu", pool=None):
    """x: [B, Lp, 128]; taps: [K, 128, 128]; scale/shift: [128];
    pool: optional [Lout, Lconv] matrix.  Returns [B, Lout, 128]."""
    B, Lp, _ = x.shape
    K = taps.shape[0]
    l_conv = Lp - K + 1
    l_out = pool.shape[0] if pool is not None else l_conv

    kernel = _make_conv_kernel(K, l_conv, act, pool is not None)

    in_specs = [
        pl.BlockSpec((None, Lp, C), lambda b: (b, 0, 0)),   # per-batch tile
        pl.BlockSpec((K, C, C), lambda b: (0, 0, 0)),       # weights: VMEM-resident
        pl.BlockSpec((1, C), lambda b: (0, 0)),
        pl.BlockSpec((1, C), lambda b: (0, 0)),
    ]
    args = [x, taps, scale.reshape(1, C), shift.reshape(1, C)]
    if pool is not None:
        in_specs.append(pl.BlockSpec((l_out, l_conv), lambda b: (0, 0)))
        args.append(pool)

    flops = 2 * B * l_conv * K * C * C
    bytes_acc = 4 * (B * Lp * C + K * C * C + 2 * C + B * l_out * C)
    if pool is not None:
        flops += 2 * B * l_out * l_conv * C
        bytes_acc += 4 * l_out * l_conv

    return pl.pallas_call(
        kernel,
        out_shape=jax.ShapeDtypeStruct((B, l_out, C), x.dtype),
        grid_spec=pltpu.PrefetchScalarGridSpec(
            num_scalar_prefetch=0,
            grid=(B,),
            in_specs=in_specs,
            out_specs=pl.BlockSpec((None, l_out, C), lambda b: (b, 0, 0)),
        ),
        compiler_params=pltpu.CompilerParams(
            dimension_semantics=("parallel",)),
        cost_estimate=pl.CostEstimate(
            flops=flops,
            transcendentals=B * l_conv * C,
            bytes_accessed=bytes_acc),
    )(*args)


def _head_kernel(x_ref, aw1_ref, ab1_ref, aw2_ref, ab2_ref,
                 fw_ref, fs_ref, ft_ref, pw_ref, pb_ref, o_ref):
    """Attention (squeeze/excite) + re-weighting + fusion conv/BN/ELU +
    projection conv, all on one [37, 128] per-batch tile."""
    x = x_ref[...]
    pooled = jnp.mean(x, axis=0, keepdims=True)            # AdaptiveAvgPool2d(1)
    h = jnp.dot(pooled, aw1_ref[...],
                preferred_element_type=jnp.float32) + ab1_ref[...]
    h = _elu(h)
    a = jnp.dot(h, aw2_ref[...],
                preferred_element_type=jnp.float32) + ab2_ref[...]
    a = 1.0 / (1.0 + jnp.exp(-a))                          # sigmoid
    wgt = x * a                                            # channel attention
    f = jnp.dot(wgt, fw_ref[...], preferred_element_type=jnp.float32)
    f = _elu(f * fs_ref[...] + ft_ref[...])                # fusion conv+BN+ELU
    o = jnp.dot(f, pw_ref[...],
                preferred_element_type=jnp.float32) + pb_ref[...]
    o_ref[...] = o.astype(o_ref.dtype)


def head_layer(comb, aw1, ab1, aw2, ab2, fw, fs, ft, pw, pb):
    B, L, _ = comb.shape
    mat = pl.BlockSpec((C, C), lambda b: (0, 0))
    vec = pl.BlockSpec((1, C), lambda b: (0, 0))
    return pl.pallas_call(
        _head_kernel,
        out_shape=jax.ShapeDtypeStruct((B, L, C), comb.dtype),
        grid_spec=pltpu.PrefetchScalarGridSpec(
            num_scalar_prefetch=0,
            grid=(B,),
            in_specs=[pl.BlockSpec((None, L, C), lambda b: (b, 0, 0)),
                      mat, vec, mat, vec, mat, vec, vec, mat, vec],
            out_specs=pl.BlockSpec((None, L, C), lambda b: (b, 0, 0)),
        ),
        compiler_params=pltpu.CompilerParams(
            dimension_semantics=("parallel",)),
    )(comb, aw1, ab1, aw2, ab2, fw, fs, ft, pw, pb)


# ---------------------------------------------------------------------------
# Constant pooling matrices (pooling along time is a linear map)
# ---------------------------------------------------------------------------
def avgpool_matrix(length, k, stride):
    l_out = (length - k) // stride + 1
    p = np.zeros((l_out, length), np.float32)
    for i in range(l_out):
        p[i, i * stride:i * stride + k] = 1.0 / k
    return jnp.asarray(p)


def adaptive_matrix(length, out_len):
    a = np.zeros((out_len, length), np.float32)
    for i in range(out_len):
        s0 = (i * length) // out_len
        e0 = -(-((i + 1) * length) // out_len)          # ceil
        a[i, s0:e0] = 1.0 / (e0 - s0)
    return jnp.asarray(a)


# ---------------------------------------------------------------------------
# Parameter preprocessing: fold Conv bias + BatchNorm into scale/shift,
# collapse 2-D kernels to their active row, expand the grouped conv to an
# equivalent (masked) dense weight, pad all channel dims to 128 lanes.
# ---------------------------------------------------------------------------
def _padc(v):
    return jnp.pad(v.astype(jnp.float32), (0, C - v.shape[0]))


def _padmat(m):
    return jnp.pad(m.astype(jnp.float32),
                   ((0, C - m.shape[0]), (0, C - m.shape[1])))


def _taps_dense(w4):
    # w4: [O, I, kh, kw]; with H == 1 only row kh//2 ever touches real data.
    o, i, kh, kw = w4.shape
    taps = jnp.transpose(w4[:, :, kh // 2, :], (2, 1, 0))      # [kw, I, O]
    return jnp.pad(taps, ((0, 0), (0, C - i), (0, C - o)))


def _taps_grouped(w4, groups):
    # w4: [O, 1, kh, kw]; input channel of output o is o // (O // groups).
    o, _, kh, kw = w4.shape
    per_g = o // groups
    w_eff = jnp.transpose(w4[:, 0, kh // 2, :], (1, 0))        # [kw, O]
    in_idx = np.arange(o) // per_g
    out_idx = np.arange(o)
    taps = jnp.zeros((kw, C, C), jnp.float32)
    return taps.at[:, in_idx, out_idx].set(w_eff)


def _fuse_bn(bias, bn):
    gamma, beta, mean, var = bn
    s = gamma / jnp.sqrt(var + EPS)
    t = beta + (bias - mean) * s
    return _padc(s), _padc(t)


def prep_pallas_params(p):
    q = {}
    q["t1_taps"] = _taps_dense(p["t1_w"])
    q["t1_s"], q["t1_t"] = _fuse_bn(p["t1_b"], p["t1_bn"])
    q["t2_taps"] = _taps_dense(p["t2_w"])
    q["t2_s"], q["t2_t"] = _fuse_bn(p["t2_b"], p["t2_bn"])
    q["s1_taps"] = _taps_dense(p["s1_w"])
    q["s1_s"], q["s1_t"] = _fuse_bn(p["s1_b"], p["s1_bn"])
    q["s2_taps"] = _taps_grouped(p["s2_w"], groups=N_F1)
    q["s2_s"], q["s2_t"] = _fuse_bn(p["s2_b"], p["s2_bn"])
    q["s3_taps"] = _taps_dense(p["s3_w"])
    q["s3_s"], q["s3_t"] = _fuse_bn(p["s3_b"], p["s3_bn"])
    q["aw1"] = _padmat(p["a1_w"][:, :, 0, 0].T)
    q["ab1"] = _padc(p["a1_b"]).reshape(1, C)
    q["aw2"] = _padmat(p["a2_w"][:, :, 0, 0].T)
    q["ab2"] = _padc(p["a2_b"]).reshape(1, C)
    q["fw"] = _padmat(p["f_w"][:, :, 0, 0].T)
    fs, ft = _fuse_bn(p["f_b"], p["f_bn"])
    q["fs"] = fs.reshape(1, C)
    q["ft"] = ft.reshape(1, C)
    q["pw"] = _padmat(p["p_w"][:, :, 0, 0].T)
    q["pb"] = _padc(p["p_b"]).reshape(1, C)
    return q


# ---------------------------------------------------------------------------
# Pallas forward pass (MultiBranchNet.forward, inference)
# ---------------------------------------------------------------------------
def multibranch_forward_pallas(q, x):
    """x: [B, 63, T]  ->  [B, 37, 40]."""
    B, cin, T = x.shape
    xc = jnp.transpose(x, (0, 2, 1))                        # [B, T, Cin]
    xc = jnp.pad(xc, ((0, 0), (0, 0), (0, C - cin)))        # lane-pad channels

    # ---- temporal branch ----
    xt = jnp.pad(xc, ((0, 0), (12, 12), (0, 0)))            # 'same' pad, K=25
    p_avg = avgpool_matrix(T, 4, 2)                         # AvgPool2d((1,4),(1,2))
    t = fused_conv_layer(xt, q["t1_taps"], q["t1_s"], q["t1_t"],
                         act="elu", pool=p_avg)             # conv+BN+ELU+pool
    a_t = adaptive_matrix(p_avg.shape[0], OUT_T)            # AdaptiveAvgPool((1,37))
    t = fused_conv_layer(t, q["t2_taps"], q["t2_s"], q["t2_t"],
                         act="elu", pool=a_t)               # [B, 37, 128]

    # ---- spatial branch ----
    s = fused_conv_layer(xc, q["s1_taps"], q["s1_s"], q["s1_t"], act="elu")
    s = jnp.pad(s, ((0, 0), (1, 1), (0, 0)))                # 'same' pad, K=3
    s = fused_conv_layer(s, q["s2_taps"], q["s2_s"], q["s2_t"], act="elu")
    a_s = adaptive_matrix(T, OUT_T)
    s = fused_conv_layer(s, q["s3_taps"], q["s3_s"], q["s3_t"],
                         act="elu", pool=a_s)               # [B, 37, 128]

    # ---- concat (layout only), then fused attention/fusion/projection ----
    comb = jnp.concatenate([t[..., :N_F1], s[..., :N_F1]], axis=-1)
    comb = jnp.pad(comb, ((0, 0), (0, 0), (0, C - 2 * N_F1)))
    # fusion-branch AdaptiveAvgPool2d((1,37)) is an identity here (len==37).
    out = head_layer(comb, q["aw1"], q["ab1"], q["aw2"], q["ab2"],
                     q["fw"], q["fs"], q["ft"], q["pw"], q["pb"])
    return out[..., :N_F2]                                  # [B, 37, 40]


# ---------------------------------------------------------------------------
# Parameters (deterministic) and a pure-JAX reference mirroring PyTorch
# ---------------------------------------------------------------------------
def init_params(key):
    keys = iter(jax.random.split(key, 48))

    def conv(shape):
        fan_in = int(np.prod(shape[1:]))
        return jax.random.normal(next(keys), shape, jnp.float32) / np.sqrt(fan_in)

    def bias(n):
        return 0.1 * jax.random.normal(next(keys), (n,), jnp.float32)

    def bn(n):
        return (1.0 + 0.1 * jax.random.normal(next(keys), (n,), jnp.float32),
                0.1 * jax.random.normal(next(keys), (n,), jnp.float32),
                0.1 * jax.random.normal(next(keys), (n,), jnp.float32),
                jax.random.uniform(next(keys), (n,), jnp.float32, 0.5, 1.5))

    return {
        "t1_w": conv((N_F1, IN_CH, 1, 25)), "t1_b": bias(N_F1), "t1_bn": bn(N_F1),
        "t2_w": conv((N_F1, N_F1, 1, 1)), "t2_b": bias(N_F1), "t2_bn": bn(N_F1),
        "s1_w": conv((N_F1, IN_CH, 3, 1)), "s1_b": bias(N_F1), "s1_bn": bn(N_F1),
        "s2_w": conv((2 * N_F1, 1, 3, 3)), "s2_b": bias(2 * N_F1), "s2_bn": bn(2 * N_F1),
        "s3_w": conv((N_F1, 2 * N_F1, 1, 1)), "s3_b": bias(N_F1), "s3_bn": bn(N_F1),
        "f_w": conv((N_F2, 2 * N_F1, 1, 1)), "f_b": bias(N_F2), "f_bn": bn(N_F2),
        "a1_w": conv((N_F1 // 2, 2 * N_F1, 1, 1)), "a1_b": bias(N_F1 // 2),
        "a2_w": conv((2 * N_F1, N_F1 // 2, 1, 1)), "a2_b": bias(2 * N_F1),
        "p_w": conv((40, 40, 1, 1)), "p_b": bias(40),
    }


def _conv2d_ref(x, w, b, padding, groups=1):
    y = lax.conv_general_dilated(
        x, w, window_strides=(1, 1), padding=padding,
        dimension_numbers=("NCHW", "OIHW", "NCHW"),
        feature_group_count=groups, precision=lax.Precision.HIGHEST)
    return y + b[None, :, None, None]


def _bn_ref(x, bn):
    gamma, beta, mean, var = bn
    inv = gamma / jnp.sqrt(var + EPS)
    return (x - mean[None, :, None, None]) * inv[None, :, None, None] \
        + beta[None, :, None, None]


def _avgpool_ref(x, k, s):
    y = lax.reduce_window(x, jnp.float32(0.0), lax.add,
                          (1, 1, 1, k), (1, 1, 1, s), "VALID")
    return y / k


def _adaptive_w_ref(x, out_w):
    w = x.shape[-1]
    cols = []
    for i in range(out_w):
        s0 = (i * w) // out_w
        e0 = -(-((i + 1) * w) // out_w)
        cols.append(jnp.mean(x[..., s0:e0], axis=-1))
    return jnp.stack(cols, axis=-1)


def multibranch_forward_ref(p, x):
    """Pure-JAX mirror of MultiBranchNet.forward (eval mode)."""
    x4 = x[:, :, None, :]                                   # unsqueeze(2)

    t = _conv2d_ref(x4, p["t1_w"], p["t1_b"], ((0, 0), (12, 12)))
    t = jax.nn.elu(_bn_ref(t, p["t1_bn"]))
    t = _avgpool_ref(t, 4, 2)                               # Dropout: identity
    t = _conv2d_ref(t, p["t2_w"], p["t2_b"], ((0, 0), (0, 0)))
    t = jax.nn.elu(_bn_ref(t, p["t2_bn"]))
    t = _adaptive_w_ref(t, OUT_T)

    s = _conv2d_ref(x4, p["s1_w"], p["s1_b"], ((1, 1), (0, 0)))
    s = jax.nn.elu(_bn_ref(s, p["s1_bn"]))
    s = _conv2d_ref(s, p["s2_w"], p["s2_b"], ((1, 1), (1, 1)), groups=N_F1)
    s = jax.nn.elu(_bn_ref(s, p["s2_bn"]))
    s = _conv2d_ref(s, p["s3_w"], p["s3_b"], ((0, 0), (0, 0)))
    s = jax.nn.elu(_bn_ref(s, p["s3_bn"]))
    s = _adaptive_w_ref(s, OUT_T)

    comb = jnp.concatenate([t, s], axis=1)                  # [B, 80, 1, 37]

    a = jnp.mean(comb, axis=(2, 3), keepdims=True)          # AdaptiveAvgPool2d(1)
    a = jax.nn.elu(_conv2d_ref(a, p["a1_w"], p["a1_b"], ((0, 0), (0, 0))))
    a = jax.nn.sigmoid(_conv2d_ref(a, p["a2_w"], p["a2_b"], ((0, 0), (0, 0))))
    wgt = comb * a

    f = _conv2d_ref(wgt, p["f_w"], p["f_b"], ((0, 0), (0, 0)))
    f = jax.nn.elu(_bn_ref(f, p["f_bn"]))                   # Dropout: identity
    f = _adaptive_w_ref(f, OUT_T)                           # identity (len 37)

    o = _conv2d_ref(f, p["p_w"], p["p_b"], ((0, 0), (0, 0)))    # [B, 40, 1, 37]
    return jnp.transpose(o[:, :, 0, :], (0, 2, 1))          # 'b e h w -> b (hw) e'


if __name__ == "__main__":
    key = jax.random.PRNGKey(0)
    kx, kp = jax.random.split(key)

    B, T = 2, 96
    x = jax.random.normal(kx, (B, IN_CH, T), jnp.float32)
    params = init_params(kp)
    q = prep_pallas_params(params)

    fwd = jax.jit(multibranch_forward_pallas)
    out = jax.block_until_ready(fwd(q, x))

    ref = multibranch_forward_ref(params, x)
    assert out.shape == (B, OUT_T, N_F2), out.shape
    # Tolerance covers MXU matmul pass precision inside the Pallas kernels vs
    # the HIGHEST-precision XLA convolution reference.
    max_err = float(jnp.max(jnp.abs(out - ref)))
    assert jnp.allclose(out, ref, atol=3e-2, rtol=3e-2), max_err
    print("KERNEL_OK")
</pallas_src>

<mosaic_0001>
module attributes {stable_mosaic.version = 11 : i64} {
  func.func @kernel(%arg0: i32, %arg1: memref<1x96x128xf32, #tpu.memory_space<vmem>>, %arg2: memref<1x128x128xf32, #tpu.memory_space<vmem>>, %arg3: memref<1x128xf32, #tpu.memory_space<vmem>>, %arg4: memref<1x128xf32, #tpu.memory_space<vmem>>, %arg5: memref<1x96x128xf32, #tpu.memory_space<vmem>>) attributes {dimension_semantics = [#tpu.dimension_semantics<parallel>], iteration_bounds = array<i64: 2>, scalar_prefetch = 0 : i64, scratch_operands = 0 : i64, tpu.core_type = #tpu.core_type<tc>, window_params = [{transform_indices = @transform_0, window_bounds = array<i64: 1, 96, 128>}, {pipeline_mode = #tpu.pipeline_mode<synchronous>, transform_indices = @transform_1, window_bounds = array<i64: 1, 128, 128>}, {pipeline_mode = #tpu.pipeline_mode<synchronous>, transform_indices = @transform_2, window_bounds = array<i64: 1, 128>}, {pipeline_mode = #tpu.pipeline_mode<synchronous>, transform_indices = @transform_3, window_bounds = array<i64: 1, 128>}, {transform_indices = @transform_4, window_bounds = array<i64: 1, 96, 128>}]} {
    %c0 = arith.constant 0 : index
    %c0_0 = arith.constant 0 : index
    %c0_1 = arith.constant 0 : index
    %0 = vector.load %arg1[%c0, %c0_0, %c0_1] : memref<1x96x128xf32, #tpu.memory_space<vmem>>, vector<1x96x128xf32>
    %1 = vector.shape_cast %0 : vector<1x96x128xf32> to vector<96x128xf32>
    %c0_2 = arith.constant 0 : index
    %c0_3 = arith.constant 0 : index
    %c0_4 = arith.constant 0 : index
    %2 = vector.load %arg2[%c0_2, %c0_3, %c0_4] : memref<1x128x128xf32, #tpu.memory_space<vmem>>, vector<1x128x128xf32>
    %3 = vector.shape_cast %2 : vector<1x128x128xf32> to vector<128x128xf32>
    %cst = arith.constant dense<0.000000e+00> : vector<96x128xf32>
    %4 = tpu.matmul %1, %3, %cst {dimension_numbers = #tpu.dot_dimension_numbers<[1], [0], [0], [1], [0, 0, 1, 1], [], []>} : vector<96x128xf32>, vector<128x128xf32>, vector<96x128xf32> -> vector<96x128xf32>
    %c0_5 = arith.constant 0 : index
    %c0_6 = arith.constant 0 : index
    %5 = vector.load %arg3[%c0_5, %c0_6] : memref<1x128xf32, #tpu.memory_space<vmem>>, vector<1x128xf32>
    %6 = vector.broadcast %5 : vector<1x128xf32> to vector<96x128xf32>
    %7 = arith.mulf %4, %6 : vector<96x128xf32>
    %c0_7 = arith.constant 0 : index
    %c0_8 = arith.constant 0 : index
    %8 = vector.load %arg4[%c0_7, %c0_8] : memref<1x128xf32, #tpu.memory_space<vmem>>, vector<1x128xf32>
    %9 = vector.broadcast %8 : vector<1x128xf32> to vector<96x128xf32>
    %10 = arith.addf %7, %9 : vector<96x128xf32>
    %cst_9 = arith.constant 0.000000e+00 : f32
    %11 = vector.broadcast %cst_9 : f32 to vector<96x128xf32>
    %12 = arith.cmpf ogt, %10, %11 : vector<96x128xf32>
    %13 = math.exp %10 : vector<96x128xf32>
    %cst_10 = arith.constant 1.000000e+00 : f32
    %14 = vector.broadcast %cst_10 : f32 to vector<96x128xf32>
    %15 = arith.subf %13, %14 : vector<96x128xf32>
    %16 = arith.select %12, %10, %15 : vector<96x128xi1>, vector<96x128xf32>
    %c0_11 = arith.constant 0 : index
    %c0_12 = arith.constant 0 : index
    %c0_13 = arith.constant 0 : index
    %17 = vector.load %arg5[%c0_11, %c0_12, %c0_13] : memref<1x96x128xf32, #tpu.memory_space<vmem>>, vector<1x96x128xf32>
    %18 = vector.shape_cast %17 : vector<1x96x128xf32> to vector<96x128xf32>
    %19 = vector.shape_cast %16 : vector<96x128xf32> to vector<1x96x128xf32>
    tpu.vector_store %arg5[%c0_11, %c0_12, %c0_13], %19 {strides = array<i32>} : memref<1x96x128xf32, #tpu.memory_space<vmem>>, vector<1x96x128xf32>,
    return
  }
  func.func @transform_0(%arg0: i32) -> (i32, i32, i32) {
    %c0_i32 = arith.constant 0 : i32
    %c0_i32_0 = arith.constant 0 : i32
    %c0_i32_1 = arith.constant 0 : i32
    return %arg0, %c0_i32, %c0_i32_0 : i32, i32, i32
  }
  func.func @transform_1(%arg0: i32) -> (i32, i32, i32) {
    %c0_i32 = arith.constant 0 : i32
    %c0_i32_0 = arith.constant 0 : i32
    %c0_i32_1 = arith.constant 0 : i32
    %c0_i32_2 = arith.constant 0 : i32
    return %c0_i32, %c0_i32_0, %c0_i32_1 : i32, i32, i32
  }
  func.func @transform_2(%arg0: i32) -> (i32, i32) {
    %c0_i32 = arith.constant 0 : i32
    %c0_i32_0 = arith.constant 0 : i32
    %c0_i32_1 = arith.constant 0 : i32
    return %c0_i32, %c0_i32_0 : i32, i32
  }
  func.func @transform_3(%arg0: i32) -> (i32, i32) {
    %c0_i32 = arith.constant 0 : i32
    %c0_i32_0 = arith.constant 0 : i32
    %c0_i32_1 = arith.constant 0 : i32
    return %c0_i32, %c0_i32_0 : i32, i32
  }
  func.func @transform_4(%arg0: i32) -> (i32, i32, i32) {
    %c0_i32 = arith.constant 0 : i32
    %c0_i32_0 = arith.constant 0 : i32
    %c0_i32_1 = arith.constant 0 : i32
    return %arg0, %c0_i32, %c0_i32_0 : i32, i32, i32
  }
}

module attributes {stable_mosaic.version = 11 : i64} {
  func.func @kernel(%arg0: i32, %arg1: memref<1x98x128xf32, #tpu.memory_space<vmem>>, %arg2: memref<3x128x128xf32, #tpu.memory_space<vmem>>, %arg3: memref<1x128xf32, #tpu.memory_space<vmem>>, %arg4: memref<1x128xf32, #tpu.memory_space<vmem>>, %arg5: memref<1x96x128xf32, #tpu.memory_space<vmem>>) attributes {dimension_semantics = [#tpu.dimension_semantics<parallel>], iteration_bounds = array<i64: 2>, scalar_prefetch = 0 : i64, scratch_operands = 0 : i64, tpu.core_type = #tpu.core_type<tc>, window_params = [{transform_indices = @transform_0, window_bounds = array<i64: 1, 98, 128>}, {pipeline_mode = #tpu.pipeline_mode<synchronous>, transform_indices = @transform_1, window_bounds = array<i64: 3, 128, 128>}, {pipeline_mode = #tpu.pipeline_mode<synchronous>, transform_indices = @transform_2, window_bounds = array<i64: 1, 128>}, {pipeline_mode = #tpu.pipeline_mode<synchronous>, transform_indices = @transform_3, window_bounds = array<i64: 1, 128>}, {transform_indices = @transform_4, window_bounds = array<i64: 1, 96, 128>}]} {
    %cst = arith.constant 0.000000e+00 : f32
    %0 = vector.broadcast %cst : f32 to vector<96x128xf32>
    %c0 = arith.constant 0 : index
    %c0_0 = arith.constant 0 : index
    %c0_1 = arith.constant 0 : index
    %1 = vector.load %arg1[%c0, %c0_0, %c0_1] : memref<1x98x128xf32, #tpu.memory_space<vmem>>, vector<1x96x128xf32>
    %2 = vector.shape_cast %1 : vector<1x96x128xf32> to vector<96x128xf32>
    %c0_2 = arith.constant 0 : index
    %c0_3 = arith.constant 0 : index
    %c0_4 = arith.constant 0 : index
    %3 = vector.load %arg2[%c0_2, %c0_3, %c0_4] : memref<3x128x128xf32, #tpu.memory_space<vmem>>, vector<1x128x128xf32>
    %4 = vector.shape_cast %3 : vector<1x128x128xf32> to vector<128x128xf32>
    %cst_5 = arith.constant dense<0.000000e+00> : vector<96x128xf32>
    %5 = tpu.matmul %2, %4, %cst_5 {dimension_numbers = #tpu.dot_dimension_numbers<[1], [0], [0], [1], [0, 0, 1, 1], [], []>} : vector<96x128xf32>, vector<128x128xf32>, vector<96x128xf32> -> vector<96x128xf32>
    %6 = arith.addf %0, %5 : vector<96x128xf32>
    %c0_6 = arith.constant 0 : index
    %c1 = arith.constant 1 : index
    %c0_7 = arith.constant 0 : index
    %7 = vector.load %arg1[%c0_6, %c1, %c0_7] : memref<1x98x128xf32, #tpu.memory_space<vmem>>, vector<1x96x128xf32>
    %8 = vector.shape_cast %7 : vector<1x96x128xf32> to vector<96x128xf32>
    %c1_8 = arith.constant 1 : index
    %c0_9 = arith.constant 0 : index
    %c0_10 = arith.constant 0 : index
    %9 = vector.load %arg2[%c1_8, %c0_9, %c0_10] : memref<3x128x128xf32, #tpu.memory_space<vmem>>, vector<1x128x128xf32>
    %10 = vector.shape_cast %9 : vector<1x128x128xf32> to vector<128x128xf32>
    %cst_11 = arith.constant dense<0.000000e+00> : vector<96x128xf32>
    %11 = tpu.matmul %8, %10, %cst_11 {dimension_numbers = #tpu.dot_dimension_numbers<[1], [0], [0], [1], [0, 0, 1, 1], [], []>} : vector<96x128xf32>, vector<128x128xf32>, vector<96x128xf32> -> vector<96x128xf32>
    %12 = arith.addf %6, %11 : vector<96x128xf32>
    %c0_12 = arith.constant 0 : index
    %c2 = arith.constant 2 : index
    %c0_13 = arith.constant 0 : index
    %13 = vector.load %arg1[%c0_12, %c2, %c0_13] : memref<1x98x128xf32, #tpu.memory_space<vmem>>, vector<1x96x128xf32>
    %14 = vector.shape_cast %13 : vector<1x96x128xf32> to vector<96x128xf32>
    %c2_14 = arith.constant 2 : index
    %c0_15 = arith.constant 0 : index
    %c0_16 = arith.constant 0 : index
    %15 = vector.load %arg2[%c2_14, %c0_15, %c0_16] : memref<3x128x128xf32, #tpu.memory_space<vmem>>, vector<1x128x128xf32>
    %16 = vector.shape_cast %15 : vector<1x128x128xf32> to vector<128x128xf32>
    %cst_17 = arith.constant dense<0.000000e+00> : vector<96x128xf32>
    %17 = tpu.matmul %14, %16, %cst_17 {dimension_numbers = #tpu.dot_dimension_numbers<[1], [0], [0], [1], [0, 0, 1, 1], [], []>} : vector<96x128xf32>, vector<128x128xf32>, vector<96x128xf32> -> vector<96x128xf32>
    %18 = arith.addf %12, %17 : vector<96x128xf32>
    %c0_18 = arith.constant 0 : index
    %c0_19 = arith.constant 0 : index
    %19 = vector.load %arg3[%c0_18, %c0_19] : memref<1x128xf32, #tpu.memory_space<vmem>>, vector<1x128xf32>
    %20 = vector.broadcast %19 : vector<1x128xf32> to vector<96x128xf32>
    %21 = arith.mulf %18, %20 : vector<96x128xf32>
    %c0_20 = arith.constant 0 : index
    %c0_21 = arith.constant 0 : index
    %22 = vector.load %arg4[%c0_20, %c0_21] : memref<1x128xf32, #tpu.memory_space<vmem>>, vector<1x128xf32>
    %23 = vector.broadcast %22 : vector<1x128xf32> to vector<96x128xf32>
    %24 = arith.addf %21, %23 : vector<96x128xf32>
    %cst_22 = arith.constant 0.000000e+00 : f32
    %25 = vector.broadcast %cst_22 : f32 to vector<96x128xf32>
    %26 = arith.cmpf ogt, %24, %25 : vector<96x128xf32>
    %27 = math.exp %24 : vector<96x128xf32>
    %cst_23 = arith.constant 1.000000e+00 : f32
    %28 = vector.broadcast %cst_23 : f32 to vector<96x128xf32>
    %29 = arith.subf %27, %28 : vector<96x128xf32>
    %30 = arith.select %26, %24, %29 : vector<96x128xi1>, vector<96x128xf32>
    %c0_24 = arith.constant 0 : index
    %c0_25 = arith.constant 0 : index
    %c0_26 = arith.constant 0 : index
    %31 = vector.load %arg5[%c0_24, %c0_25, %c0_26] : memref<1x96x128xf32, #tpu.memory_space<vmem>>, vector<1x96x128xf32>
    %32 = vector.shape_cast %31 : vector<1x96x128xf32> to vector<96x128xf32>
    %33 = vector.shape_cast %30 : vector<96x128xf32> to vector<1x96x128xf32>
    tpu.vector_store %arg5[%c0_24, %c0_25, %c0_26], %33 {strides = array<i32>} : memref<1x96x128xf32, #tpu.memory_space<vmem>>, vector<1x96x128xf32>,
    return
  }
  func.func @transform_0(%arg0: i32) -> (i32, i32, i32) {
    %c0_i32 = arith.constant 0 : i32
    %c0_i32_0 = arith.constant 0 : i32
    %c0_i32_1 = arith.constant 0 : i32
    return %arg0, %c0_i32, %c0_i32_0 : i32, i32, i32
  }
  func.func @transform_1(%arg0: i32) -> (i32, i32, i32) {
    %c0_i32 = arith.constant 0 : i32
    %c0_i32_0 = arith.constant 0 : i32
    %c0_i32_1 = arith.constant 0 : i32
    %c0_i32_2 = arith.constant 0 : i32
    return %c0_i32, %c0_i32_0, %c0_i32_1 : i32, i32, i32
  }
  func.func @transform_2(%arg0: i32) -> (i32, i32) {
    %c0_i32 = arith.constant 0 : i32
    %c0_i32_0 = arith.constant 0 : i32
    %c0_i32_1 = arith.constant 0 : i32
    return %c0_i32, %c0_i32_0 : i32, i32
  }
  func.func @transform_3(%arg0: i32) -> (i32, i32) {
    %c0_i32 = arith.constant 0 : i32
    %c0_i32_0 = arith.constant 0 : i32
    %c0_i32_1 = arith.constant 0 : i32
    return %c0_i32, %c0_i32_0 : i32, i32
  }
  func.func @transform_4(%arg0: i32) -> (i32, i32, i32) {
    %c0_i32 = arith.constant 0 : i32
    %c0_i32_0 = arith.constant 0 : i32
    %c0_i32_1 = arith.constant 0 : i32
    return %arg0, %c0_i32, %c0_i32_0 : i32, i32, i32
  }
}

module attributes {stable_mosaic.version = 11 : i64} {
  func.func @kernel(%arg0: i32, %arg1: memref<1x96x128xf32, #tpu.memory_space<vmem>>, %arg2: memref<1x128x128xf32, #tpu.memory_space<vmem>>, %arg3: memref<1x128xf32, #tpu.memory_space<vmem>>, %arg4: memref<1x128xf32, #tpu.memory_space<vmem>>, %arg5: memref<37x96xf32, #tpu.memory_space<vmem>>, %arg6: memref<1x37x128xf32, #tpu.memory_space<vmem>>) attributes {dimension_semantics = [#tpu.dimension_semantics<parallel>], iteration_bounds = array<i64: 2>, scalar_prefetch = 0 : i64, scratch_operands = 0 : i64, tpu.core_type = #tpu.core_type<tc>, window_params = [{transform_indices = @transform_0, window_bounds = array<i64: 1, 96, 128>}, {pipeline_mode = #tpu.pipeline_mode<synchronous>, transform_indices = @transform_1, window_bounds = array<i64: 1, 128, 128>}, {pipeline_mode = #tpu.pipeline_mode<synchronous>, transform_indices = @transform_2, window_bounds = array<i64: 1, 128>}, {pipeline_mode = #tpu.pipeline_mode<synchronous>, transform_indices = @transform_3, window_bounds = array<i64: 1, 128>}, {pipeline_mode = #tpu.pipeline_mode<synchronous>, transform_indices = @transform_4, window_bounds = array<i64: 37, 96>}, {transform_indices = @transform_5, window_bounds = array<i64: 1, 37, 128>}]} {
    %c0 = arith.constant 0 : index
    %c0_0 = arith.constant 0 : index
    %c0_1 = arith.constant 0 : index
    %0 = vector.load %arg1[%c0, %c0_0, %c0_1] : memref<1x96x128xf32, #tpu.memory_space<vmem>>, vector<1x96x128xf32>
    %1 = vector.shape_cast %0 : vector<1x96x128xf32> to vector<96x128xf32>
    %c0_2 = arith.constant 0 : index
    %c0_3 = arith.constant 0 : index
    %c0_4 = arith.constant 0 : index
    %2 = vector.load %arg2[%c0_2, %c0_3, %c0_4] : memref<1x128x128xf32, #tpu.memory_space<vmem>>, vector<1x128x128xf32>
    %3 = vector.shape_cast %2 : vector<1x128x128xf32> to vector<128x128xf32>
    %cst = arith.constant dense<0.000000e+00> : vector<96x128xf32>
    %4 = tpu.matmul %1, %3, %cst {dimension_numbers = #tpu.dot_dimension_numbers<[1], [0], [0], [1], [0, 0, 1, 1], [], []>} : vector<96x128xf32>, vector<128x128xf32>, vector<96x128xf32> -> vector<96x128xf32>
    %c0_5 = arith.constant 0 : index
    %c0_6 = arith.constant 0 : index
    %5 = vector.load %arg3[%c0_5, %c0_6] : memref<1x128xf32, #tpu.memory_space<vmem>>, vector<1x128xf32>
    %6 = vector.broadcast %5 : vector<1x128xf32> to vector<96x128xf32>
    %7 = arith.mulf %4, %6 : vector<96x128xf32>
    %c0_7 = arith.constant 0 : index
    %c0_8 = arith.constant 0 : index
    %8 = vector.load %arg4[%c0_7, %c0_8] : memref<1x128xf32, #tpu.memory_space<vmem>>, vector<1x128xf32>
    %9 = vector.broadcast %8 : vector<1x128xf32> to vector<96x128xf32>
    %10 = arith.addf %7, %9 : vector<96x128xf32>
    %cst_9 = arith.constant 0.000000e+00 : f32
    %11 = vector.broadcast %cst_9 : f32 to vector<96x128xf32>
    %12 = arith.cmpf ogt, %10, %11 : vector<96x128xf32>
    %13 = math.exp %10 : vector<96x128xf32>
    %cst_10 = arith.constant 1.000000e+00 : f32
    %14 = vector.broadcast %cst_10 : f32 to vector<96x128xf32>
    %15 = arith.subf %13, %14 : vector<96x128xf32>
    %16 = arith.select %12, %10, %15 : vector<96x128xi1>, vector<96x128xf32>
    %c0_11 = arith.constant 0 : index
    %c0_12 = arith.constant 0 : index
    %17 = vector.load %arg5[%c0_11, %c0_12] : memref<37x96xf32, #tpu.memory_space<vmem>>, vector<37x96xf32>
    %cst_13 = arith.constant dense<0.000000e+00> : vector<37x128xf32>
    %18 = tpu.matmul %17, %16, %cst_13 {dimension_numbers = #tpu.dot_dimension_numbers<[1], [0], [0], [1], [0, 0, 1, 1], [], []>} : vector<37x96xf32>, vector<96x128xf32>, vector<37x128xf32> -> vector<37x128xf32>
    %c0_14 = arith.constant 0 : index
    %c0_15 = arith.constant 0 : index
    %c0_16 = arith.constant 0 : index
    %19 = vector.load %arg6[%c0_14, %c0_15, %c0_16] : memref<1x37x128xf32, #tpu.memory_space<vmem>>, vector<1x37x128xf32>
    %20 = vector.shape_cast %19 : vector<1x37x128xf32> to vector<37x128xf32>
    %21 = vector.shape_cast %18 : vector<37x128xf32> to vector<1x37x128xf32>
    tpu.vector_store %arg6[%c0_14, %c0_15, %c0_16], %21 {strides = array<i32>} : memref<1x37x128xf32, #tpu.memory_space<vmem>>, vector<1x37x128xf32>,
    return
  }
  func.func @transform_0(%arg0: i32) -> (i32, i32, i32) {
    %c0_i32 = arith.constant 0 : i32
    %c0_i32_0 = arith.constant 0 : i32
    %c0_i32_1 = arith.constant 0 : i32
    return %arg0, %c0_i32, %c0_i32_0 : i32, i32, i32
  }
  func.func @transform_1(%arg0: i32) -> (i32, i32, i32) {
    %c0_i32 = arith.constant 0 : i32
    %c0_i32_0 = arith.constant 0 : i32
    %c0_i32_1 = arith.constant 0 : i32
    %c0_i32_2 = arith.constant 0 : i32
    return %c0_i32, %c0_i32_0, %c0_i32_1 : i32, i32, i32
  }
  func.func @transform_2(%arg0: i32) -> (i32, i32) {
    %c0_i32 = arith.constant 0 : i32
    %c0_i32_0 = arith.constant 0 : i32
    %c0_i32_1 = arith.constant 0 : i32
    return %c0_i32, %c0_i32_0 : i32, i32
  }
  func.func @transform_3(%arg0: i32) -> (i32, i32) {
    %c0_i32 = arith.constant 0 : i32
    %c0_i32_0 = arith.constant 0 : i32
    %c0_i32_1 = arith.constant 0 : i32
    return %c0_i32, %c0_i32_0 : i32, i32
  }
  func.func @transform_4(%arg0: i32) -> (i32, i32) {
    %c0_i32 = arith.constant 0 : i32
    %c0_i32_0 = arith.constant 0 : i32
    %c0_i32_1 = arith.constant 0 : i32
    return %c0_i32, %c0_i32_0 : i32, i32
  }
  func.func @transform_5(%arg0: i32) -> (i32, i32, i32) {
    %c0_i32 = arith.constant 0 : i32
    %c0_i32_0 = arith.constant 0 : i32
    %c0_i32_1 = arith.constant 0 : i32
    return %arg0, %c0_i32, %c0_i32_0 : i32, i32, i32
  }
}

module attributes {stable_mosaic.version = 11 : i64} {
  func.func @kernel(%arg0: i32, %arg1: memref<1x120x128xf32, #tpu.memory_space<vmem>>, %arg2: memref<25x128x128xf32, #tpu.memory_space<vmem>>, %arg3: memref<1x128xf32, #tpu.memory_space<vmem>>, %arg4: memref<1x128xf32, #tpu.memory_space<vmem>>, %arg5: memref<47x96xf32, #tpu.memory_space<vmem>>, %arg6: memref<1x47x128xf32, #tpu.memory_space<vmem>>) attributes {dimension_semantics = [#tpu.dimension_semantics<parallel>], iteration_bounds = array<i64: 2>, scalar_prefetch = 0 : i64, scratch_operands = 0 : i64, tpu.core_type = #tpu.core_type<tc>, window_params = [{transform_indices = @transform_0, window_bounds = array<i64: 1, 120, 128>}, {pipeline_mode = #tpu.pipeline_mode<synchronous>, transform_indices = @transform_1, window_bounds = array<i64: 25, 128, 128>}, {pipeline_mode = #tpu.pipeline_mode<synchronous>, transform_indices = @transform_2, window_bounds = array<i64: 1, 128>}, {pipeline_mode = #tpu.pipeline_mode<synchronous>, transform_indices = @transform_3, window_bounds = array<i64: 1, 128>}, {pipeline_mode = #tpu.pipeline_mode<synchronous>, transform_indices = @transform_4, window_bounds = array<i64: 47, 96>}, {transform_indices = @transform_5, window_bounds = array<i64: 1, 47, 128>}]} {
    %cst = arith.constant 0.000000e+00 : f32
    %0 = vector.broadcast %cst : f32 to vector<96x128xf32>
    %c0 = arith.constant 0 : index
    %c0_0 = arith.constant 0 : index
    %c0_1 = arith.constant 0 : index
    %1 = vector.load %arg1[%c0, %c0_0, %c0_1] : memref<1x120x128xf32, #tpu.memory_space<vmem>>, vector<1x96x128xf32>
    %2 = vector.shape_cast %1 : vector<1x96x128xf32> to vector<96x128xf32>
    %c0_2 = arith.constant 0 : index
    %c0_3 = arith.constant 0 : index
    %c0_4 = arith.constant 0 : index
    %3 = vector.load %arg2[%c0_2, %c0_3, %c0_4] : memref<25x128x128xf32, #tpu.memory_space<vmem>>, vector<1x128x128xf32>
    %4 = vector.shape_cast %3 : vector<1x128x128xf32> to vector<128x128xf32>
    %cst_5 = arith.constant dense<0.000000e+00> : vector<96x128xf32>
    %5 = tpu.matmul %2, %4, %cst_5 {dimension_numbers = #tpu.dot_dimension_numbers<[1], [0], [0], [1], [0, 0, 1, 1], [], []>} : vector<96x128xf32>, vector<128x128xf32>, vector<96x128xf32> -> vector<96x128xf32>
    %6 = arith.addf %0, %5 : vector<96x128xf32>
    %c0_6 = arith.constant 0 : index
    %c1 = arith.constant 1 : index
    %c0_7 = arith.constant 0 : index
    %7 = vector.load %arg1[%c0_6, %c1, %c0_7] : memref<1x120x128xf32, #tpu.memory_space<vmem>>, vector<1x96x128xf32>
    %8 = vector.shape_cast %7 : vector<1x96x128xf32> to vector<96x128xf32>
    %c1_8 = arith.constant 1 : index
    %c0_9 = arith.constant 0 : index
    %c0_10 = arith.constant 0 : index
    %9 = vector.load %arg2[%c1_8, %c0_9, %c0_10] : memref<25x128x128xf32, #tpu.memory_space<vmem>>, vector<1x128x128xf32>
    %10 = vector.shape_cast %9 : vector<1x128x128xf32> to vector<128x128xf32>
    %cst_11 = arith.constant dense<0.000000e+00> : vector<96x128xf32>
    %11 = tpu.matmul %8, %10, %cst_11 {dimension_numbers = #tpu.dot_dimension_numbers<[1], [0], [0], [1], [0, 0, 1, 1], [], []>} : vector<96x128xf32>, vector<128x128xf32>, vector<96x128xf32> -> vector<96x128xf32>
    %12 = arith.addf %6, %11 : vector<96x128xf32>
    %c0_12 = arith.constant 0 : index
    %c2 = arith.constant 2 : index
    %c0_13 = arith.constant 0 : index
    %13 = vector.load %arg1[%c0_12, %c2, %c0_13] : memref<1x120x128xf32, #tpu.memory_space<vmem>>, vector<1x96x128xf32>
    %14 = vector.shape_cast %13 : vector<1x96x128xf32> to vector<96x128xf32>
    %c2_14 = arith.constant 2 : index
    %c0_15 = arith.constant 0 : index
    %c0_16 = arith.constant 0 : index
    %15 = vector.load %arg2[%c2_14, %c0_15, %c0_16] : memref<25x128x128xf32, #tpu.memory_space<vmem>>, vector<1x128x128xf32>
    %16 = vector.shape_cast %15 : vector<1x128x128xf32> to vector<128x128xf32>
    %cst_17 = arith.constant dense<0.000000e+00> : vector<96x128xf32>
    %17 = tpu.matmul %14, %16, %cst_17 {dimension_numbers = #tpu.dot_dimension_numbers<[1], [0], [0], [1], [0, 0, 1, 1], [], []>} : vector<96x128xf32>, vector<128x128xf32>, vector<96x128xf32> -> vector<96x128xf32>
    %18 = arith.addf %12, %17 : vector<96x128xf32>
    %c0_18 = arith.constant 0 : index
    %c3 = arith.constant 3 : index
    %c0_19 = arith.constant 0 : index
    %19 = vector.load %arg1[%c0_18, %c3, %c0_19] : memref<1x120x128xf32, #tpu.memory_space<vmem>>, vector<1x96x128xf32>
    %20 = vector.shape_cast %19 : vector<1x96x128xf32> to vector<96x128xf32>
    %c3_20 = arith.constant 3 : index
    %c0_21 = arith.constant 0 : index
    %c0_22 = arith.constant 0 : index
    %21 = vector.load %arg2[%c3_20, %c0_21, %c0_22] : memref<25x128x128xf32, #tpu.memory_space<vmem>>, vector<1x128x128xf32>
    %22 = vector.shape_cast %21 : vector<1x128x128xf32> to vector<128x128xf32>
    %cst_23 = arith.constant dense<0.000000e+00> : vector<96x128xf32>
    %23 = tpu.matmul %20, %22, %cst_23 {dimension_numbers = #tpu.dot_dimension_numbers<[1], [0], [0], [1], [0, 0, 1, 1], [], []>} : vector<96x128xf32>, vector<128x128xf32>, vector<96x128xf32> -> vector<96x128xf32>
    %24 = arith.addf %18, %23 : vector<96x128xf32>
    %c0_24 = arith.constant 0 : index
    %c4 = arith.constant 4 : index
    %c0_25 = arith.constant 0 : index
    %25 = vector.load %arg1[%c0_24, %c4, %c0_25] : memref<1x120x128xf32, #tpu.memory_space<vmem>>, vector<1x96x128xf32>
    %26 = vector.shape_cast %25 : vector<1x96x128xf32> to vector<96x128xf32>
    %c4_26 = arith.constant 4 : index
    %c0_27 = arith.constant 0 : index
    %c0_28 = arith.constant 0 : index
    %27 = vector.load %arg2[%c4_26, %c0_27, %c0_28] : memref<25x128x128xf32, #tpu.memory_space<vmem>>, vector<1x128x128xf32>
    %28 = vector.shape_cast %27 : vector<1x128x128xf32> to vector<128x128xf32>
    %cst_29 = arith.constant dense<0.000000e+00> : vector<96x128xf32>
    %29 = tpu.matmul %26, %28, %cst_29 {dimension_numbers = #tpu.dot_dimension_numbers<[1], [0], [0], [1], [0, 0, 1, 1], [], []>} : vector<96x128xf32>, vector<128x128xf32>, vector<96x128xf32> -> vector<96x128xf32>
    %30 = arith.addf %24, %29 : vector<96x128xf32>
    %c0_30 = arith.constant 0 : index
    %c5 = arith.constant 5 : index
    %c0_31 = arith.constant 0 : index
    %31 = vector.load %arg1[%c0_30, %c5, %c0_31] : memref<1x120x128xf32, #tpu.memory_space<vmem>>, vector<1x96x128xf32>
    %32 = vector.shape_cast %31 : vector<1x96x128xf32> to vector<96x128xf32>
    %c5_32 = arith.constant 5 : index
    %c0_33 = arith.constant 0 : index
    %c0_34 = arith.constant 0 : index
    %33 = vector.load %arg2[%c5_32, %c0_33, %c0_34] : memref<25x128x128xf32, #tpu.memory_space<vmem>>, vector<1x128x128xf32>
    %34 = vector.shape_cast %33 : vector<1x128x128xf32> to vector<128x128xf32>
    %cst_35 = arith.constant dense<0.000000e+00> : vector<96x128xf32>
    %35 = tpu.matmul %32, %34, %cst_35 {dimension_numbers = #tpu.dot_dimension_numbers<[1], [0], [0], [1], [0, 0, 1, 1], [], []>} : vector<96x128xf32>, vector<128x128xf32>, vector<96x128xf32> -> vector<96x128xf32>
    %36 = arith.addf %30, %35 : vector<96x128xf32>
    %c0_36 = arith.constant 0 : index
    %c6 = arith.constant 6 : index
    %c0_37 = arith.constant 0 : index
    %37 = vector.load %arg1[%c0_36, %c6, %c0_37] : memref<1x120x128xf32, #tpu.memory_space<vmem>>, vector<1x96x128xf32>
    %38 = vector.shape_cast %37 : vector<1x96x128xf32> to vector<96x128xf32>
    %c6_38 = arith.constant 6 : index
    %c0_39 = arith.constant 0 : index
    %c0_40 = arith.constant 0 : index
    %39 = vector.load %arg2[%c6_38, %c0_39, %c0_40] : memref<25x128x128xf32, #tpu.memory_space<vmem>>, vector<1x128x128xf32>
    %40 = vector.shape_cast %39 : vector<1x128x128xf32> to vector<128x128xf32>
    %cst_41 = arith.constant dense<0.000000e+00> : vector<96x128xf32>
    %41 = tpu.matmul %38, %40, %cst_41 {dimension_numbers = #tpu.dot_dimension_numbers<[1], [0], [0], [1], [0, 0, 1, 1], [], []>} : vector<96x128xf32>, vector<128x128xf32>, vector<96x128xf32> -> vector<96x128xf32>
    %42 = arith.addf %36, %41 : vector<96x128xf32>
    %c0_42 = arith.constant 0 : index
    %c7 = arith.constant 7 : index
    %c0_43 = arith.constant 0 : index
    %43 = vector.load %arg1[%c0_42, %c7, %c0_43] : memref<1x120x128xf32, #tpu.memory_space<vmem>>, vector<1x96x128xf32>
    %44 = vector.shape_cast %43 : vector<1x96x128xf32> to vector<96x128xf32>
    %c7_44 = arith.constant 7 : index
    %c0_45 = arith.constant 0 : index
    %c0_46 = arith.constant 0 : index
    %45 = vector.load %arg2[%c7_44, %c0_45, %c0_46] : memref<25x128x128xf32, #tpu.memory_space<vmem>>, vector<1x128x128xf32>
    %46 = vector.shape_cast %45 : vector<1x128x128xf32> to vector<128x128xf32>
    %cst_47 = arith.constant dense<0.000000e+00> : vector<96x128xf32>
    %47 = tpu.matmul %44, %46, %cst_47 {dimension_numbers = #tpu.dot_dimension_numbers<[1], [0], [0], [1], [0, 0, 1, 1], [], []>} : vector<96x128xf32>, vector<128x128xf32>, vector<96x128xf32> -> vector<96x128xf32>
    %48 = arith.addf %42, %47 : vector<96x128xf32>
    %c0_48 = arith.constant 0 : index
    %c8 = arith.constant 8 : index
    %c0_49 = arith.constant 0 : index
    %49 = vector.load %arg1[%c0_48, %c8, %c0_49] : memref<1x120x128xf32, #tpu.memory_space<vmem>>, vector<1x96x128xf32>
    %50 = vector.shape_cast %49 : vector<1x96x128xf32> to vector<96x128xf32>
    %c8_50 = arith.constant 8 : index
    %c0_51 = arith.constant 0 : index
    %c0_52 = arith.constant 0 : index
    %51 = vector.load %arg2[%c8_50, %c0_51, %c0_52] : memref<25x128x128xf32, #tpu.memory_space<vmem>>, vector<1x128x128xf32>
    %52 = vector.shape_cast %51 : vector<1x128x128xf32> to vector<128x128xf32>
    %cst_53 = arith.constant dense<0.000000e+00> : vector<96x128xf32>
    %53 = tpu.matmul %50, %52, %cst_53 {dimension_numbers = #tpu.dot_dimension_numbers<[1], [0], [0], [1], [0, 0, 1, 1], [], []>} : vector<96x128xf32>, vector<128x128xf32>, vector<96x128xf32> -> vector<96x128xf32>
    %54 = arith.addf %48, %53 : vector<96x128xf32>
    %c0_54 = arith.constant 0 : index
    %c9 = arith.constant 9 : index
    %c0_55 = arith.constant 0 : index
    %55 = vector.load %arg1[%c0_54, %c9, %c0_55] : memref<1x120x128xf32, #tpu.memory_space<vmem>>, vector<1x96x128xf32>
    %56 = vector.shape_cast %55 : vector<1x96x128xf32> to vector<96x128xf32>
    %c9_56 = arith.constant 9 : index
    %c0_57 = arith.constant 0 : index
    %c0_58 = arith.constant 0 : index
    %57 = vector.load %arg2[%c9_56, %c0_57, %c0_58] : memref<25x128x128xf32, #tpu.memory_space<vmem>>, vector<1x128x128xf32>
    %58 = vector.shape_cast %57 : vector<1x128x128xf32> to vector<128x128xf32>
    %cst_59 = arith.constant dense<0.000000e+00> : vector<96x128xf32>
    %59 = tpu.matmul %56, %58, %cst_59 {dimension_numbers = #tpu.dot_dimension_numbers<[1], [0], [0], [1], [0, 0, 1, 1], [], []>} : vector<96x128xf32>, vector<128x128xf32>, vector<96x128xf32> -> vector<96x128xf32>
    %60 = arith.addf %54, %59 : vector<96x128xf32>
    %c0_60 = arith.constant 0 : index
    %c10 = arith.constant 10 : index
    %c0_61 = arith.constant 0 : index
    %61 = vector.load %arg1[%c0_60, %c10, %c0_61] : memref<1x120x128xf32, #tpu.memory_space<vmem>>, vector<1x96x128xf32>
    %62 = vector.shape_cast %61 : vector<1x96x128xf32> to vector<96x128xf32>
    %c10_62 = arith.constant 10 : index
    %c0_63 = arith.constant 0 : index
    %c0_64 = arith.constant 0 : index
    %63 = vector.load %arg2[%c10_62, %c0_63, %c0_64] : memref<25x128x128xf32, #tpu.memory_space<vmem>>, vector<1x128x128xf32>
    %64 = vector.shape_cast %63 : vector<1x128x128xf32> to vector<128x128xf32>
    %cst_65 = arith.constant dense<0.000000e+00> : vector<96x128xf32>
    %65 = tpu.matmul %62, %64, %cst_65 {dimension_numbers = #tpu.dot_dimension_numbers<[1], [0], [0], [1], [0, 0, 1, 1], [], []>} : vector<96x128xf32>, vector<128x128xf32>, vector<96x128xf32> -> vector<96x128xf32>
    %66 = arith.addf %60, %65 : vector<96x128xf32>
    %c0_66 = arith.constant 0 : index
    %c11 = arith.constant 11 : index
    %c0_67 = arith.constant 0 : index
    %67 = vector.load %arg1[%c0_66, %c11, %c0_67] : memref<1x120x128xf32, #tpu.memory_space<vmem>>, vector<1x96x128xf32>
    %68 = vector.shape_cast %67 : vector<1x96x128xf32> to vector<96x128xf32>
    %c11_68 = arith.constant 11 : index
    %c0_69 = arith.constant 0 : index
    %c0_70 = arith.constant 0 : index
    %69 = vector.load %arg2[%c11_68, %c0_69, %c0_70] : memref<25x128x128xf32, #tpu.memory_space<vmem>>, vector<1x128x128xf32>
    %70 = vector.shape_cast %69 : vector<1x128x128xf32> to vector<128x128xf32>
    %cst_71 = arith.constant dense<0.000000e+00> : vector<96x128xf32>
    %71 = tpu.matmul %68, %70, %cst_71 {dimension_numbers = #tpu.dot_dimension_numbers<[1], [0], [0], [1], [0, 0, 1, 1], [], []>} : vector<96x128xf32>, vector<128x128xf32>, vector<96x128xf32> -> vector<96x128xf32>
    %72 = arith.addf %66, %71 : vector<96x128xf32>
    %c0_72 = arith.constant 0 : index
    %c12 = arith.constant 12 : index
    %c0_73 = arith.constant 0 : index
    %73 = vector.load %arg1[%c0_72, %c12, %c0_73] : memref<1x120x128xf32, #tpu.memory_space<vmem>>, vector<1x96x128xf32>
    %74 = vector.shape_cast %73 : vector<1x96x128xf32> to vector<96x128xf32>
    %c12_74 = arith.constant 12 : index
    %c0_75 = arith.constant 0 : index
    %c0_76 = arith.constant 0 : index
    %75 = vector.load %arg2[%c12_74, %c0_75, %c0_76] : memref<25x128x128xf32, #tpu.memory_space<vmem>>, vector<1x128x128xf32>
    %76 = vector.shape_cast %75 : vector<1x128x128xf32> to vector<128x128xf32>
    %cst_77 = arith.constant dense<0.000000e+00> : vector<96x128xf32>
    %77 = tpu.matmul %74, %76, %cst_77 {dimension_numbers = #tpu.dot_dimension_numbers<[1], [0], [0], [1], [0, 0, 1, 1], [], []>} : vector<96x128xf32>, vector<128x128xf32>, vector<96x128xf32> -> vector<96x128xf32>
    %78 = arith.addf %72, %77 : vector<96x128xf32>
    %c0_78 = arith.constant 0 : index
    %c13 = arith.constant 13 : index
    %c0_79 = arith.constant 0 : index
    %79 = vector.load %arg1[%c0_78, %c13, %c0_79] : memref<1x120x128xf32, #tpu.memory_space<vmem>>, vector<1x96x128xf32>
    %80 = vector.shape_cast %79 : vector<1x96x128xf32> to vector<96x128xf32>
    %c13_80 = arith.constant 13 : index
    %c0_81 = arith.constant 0 : index
    %c0_82 = arith.constant 0 : index
    %81 = vector.load %arg2[%c13_80, %c0_81, %c0_82] : memref<25x128x128xf32, #tpu.memory_space<vmem>>, vector<1x128x128xf32>
    %82 = vector.shape_cast %81 : vector<1x128x128xf32> to vector<128x128xf32>
    %cst_83 = arith.constant dense<0.000000e+00> : vector<96x128xf32>
    %83 = tpu.matmul %80, %82, %cst_83 {dimension_numbers = #tpu.dot_dimension_numbers<[1], [0], [0], [1], [0, 0, 1, 1], [], []>} : vector<96x128xf32>, vector<128x128xf32>, vector<96x128xf32> -> vector<96x128xf32>
    %84 = arith.addf %78, %83 : vector<96x128xf32>
    %c0_84 = arith.constant 0 : index
    %c14 = arith.constant 14 : index
    %c0_85 = arith.constant 0 : index
    %85 = vector.load %arg1[%c0_84, %c14, %c0_85] : memref<1x120x128xf32, #tpu.memory_space<vmem>>, vector<1x96x128xf32>
    %86 = vector.shape_cast %85 : vector<1x96x128xf32> to vector<96x128xf32>
    %c14_86 = arith.constant 14 : index
    %c0_87 = arith.constant 0 : index
    %c0_88 = arith.constant 0 : index
    %87 = vector.load %arg2[%c14_86, %c0_87, %c0_88] : memref<25x128x128xf32, #tpu.memory_space<vmem>>, vector<1x128x128xf32>
    %88 = vector.shape_cast %87 : vector<1x128x128xf32> to vector<128x128xf32>
    %cst_89 = arith.constant dense<0.000000e+00> : vector<96x128xf32>
    %89 = tpu.matmul %86, %88, %cst_89 {dimension_numbers = #tpu.dot_dimension_numbers<[1], [0], [0], [1], [0, 0, 1, 1], [], []>} : vector<96x128xf32>, vector<128x128xf32>, vector<96x128xf32> -> vector<96x128xf32>
    %90 = arith.addf %84, %89 : vector<96x128xf32>
    %c0_90 = arith.constant 0 : index
    %c15 = arith.constant 15 : index
    %c0_91 = arith.constant 0 : index
    %91 = vector.load %arg1[%c0_90, %c15, %c0_91] : memref<1x120x128xf32, #tpu.memory_space<vmem>>, vector<1x96x128xf32>
    %92 = vector.shape_cast %91 : vector<1x96x128xf32> to vector<96x128xf32>
    %c15_92 = arith.constant 15 : index
    %c0_93 = arith.constant 0 : index
    %c0_94 = arith.constant 0 : index
    %93 = vector.load %arg2[%c15_92, %c0_93, %c0_94] : memref<25x128x128xf32, #tpu.memory_space<vmem>>, vector<1x128x128xf32>
    %94 = vector.shape_cast %93 : vector<1x128x128xf32> to vector<128x128xf32>
    %cst_95 = arith.constant dense<0.000000e+00> : vector<96x128xf32>
    %95 = tpu.matmul %92, %94, %cst_95 {dimension_numbers = #tpu.dot_dimension_numbers<[1], [0], [0], [1], [0, 0, 1, 1], [], []>} : vector<96x128xf32>, vector<128x128xf32>, vector<96x128xf32> -> vector<96x128xf32>
    %96 = arith.addf %90, %95 : vector<96x128xf32>
    %c0_96 = arith.constant 0 : index
    %c16 = arith.constant 16 : index
    %c0_97 = arith.constant 0 : index
    %97 = vector.load %arg1[%c0_96, %c16, %c0_97] : memref<1x120x128xf32, #tpu.memory_space<vmem>>, vector<1x96x128xf32>
    %98 = vector.shape_cast %97 : vector<1x96x128xf32> to vector<96x128xf32>
    %c16_98 = arith.constant 16 : index
    %c0_99 = arith.constant 0 : index
    %c0_100 = arith.constant 0 : index
    %99 = vector.load %arg2[%c16_98, %c0_99, %c0_100] : memref<25x128x128xf32, #tpu.memory_space<vmem>>, vector<1x128x128xf32>
    %100 = vector.shape_cast %99 : vector<1x128x128xf32> to vector<128x128xf32>
    %cst_101 = arith.constant dense<0.000000e+00> : vector<96x128xf32>
    %101 = tpu.matmul %98, %100, %cst_101 {dimension_numbers = #tpu.dot_dimension_numbers<[1], [0], [0], [1], [0, 0, 1, 1], [], []>} : vector<96x128xf32>, vector<128x128xf32>, vector<96x128xf32> -> vector<96x128xf32>
    %102 = arith.addf %96, %101 : vector<96x128xf32>
    %c0_102 = arith.constant 0 : index
    %c17 = arith.constant 17 : index
    %c0_103 = arith.constant 0 : index
    %103 = vector.load %arg1[%c0_102, %c17, %c0_103] : memref<1x120x128xf32, #tpu.memory_space<vmem>>, vector<1x96x128xf32>
    %104 = vector.shape_cast %103 : vector<1x96x128xf32> to vector<96x128xf32>
    %c17_104 = arith.constant 17 : index
    %c0_105 = arith.constant 0 : index
    %c0_106 = arith.constant 0 : index
    %105 = vector.load %arg2[%c17_104, %c0_105, %c0_106] : memref<25x128x128xf32, #tpu.memory_space<vmem>>, vector<1x128x128xf32>
    %106 = vector.shape_cast %105 : vector<1x128x128xf32> to vector<128x128xf32>
    %cst_107 = arith.constant dense<0.000000e+00> : vector<96x128xf32>
    %107 = tpu.matmul %104, %106, %cst_107 {dimension_numbers = #tpu.dot_dimension_numbers<[1], [0], [0], [1], [0, 0, 1, 1], [], []>} : vector<96x128xf32>, vector<128x128xf32>, vector<96x128xf32> -> vector<96x128xf32>
    %108 = arith.addf %102, %107 : vector<96x128xf32>
    %c0_108 = arith.constant 0 : index
    %c18 = arith.constant 18 : index
    %c0_109 = arith.constant 0 : index
    %109 = vector.load %arg1[%c0_108, %c18, %c0_109] : memref<1x120x128xf32, #tpu.memory_space<vmem>>, vector<1x96x128xf32>
    %110 = vector.shape_cast %109 : vector<1x96x128xf32> to vector<96x128xf32>
    %c18_110 = arith.constant 18 : index
    %c0_111 = arith.constant 0 : index
    %c0_112 = arith.constant 0 : index
    %111 = vector.load %arg2[%c18_110, %c0_111, %c0_112] : memref<25x128x128xf32, #tpu.memory_space<vmem>>, vector<1x128x128xf32>
    %112 = vector.shape_cast %111 : vector<1x128x128xf32> to vector<128x128xf32>
    %cst_113 = arith.constant dense<0.000000e+00> : vector<96x128xf32>
    %113 = tpu.matmul %110, %112, %cst_113 {dimension_numbers = #tpu.dot_dimension_numbers<[1], [0], [0], [1], [0, 0, 1, 1], [], []>} : vector<96x128xf32>, vector<128x128xf32>, vector<96x128xf32> -> vector<96x128xf32>
    %114 = arith.addf %108, %113 : vector<96x128xf32>
    %c0_114 = arith.constant 0 : index
    %c19 = arith.constant 19 : index
    %c0_115 = arith.constant 0 : index
    %115 = vector.load %arg1[%c0_114, %c19, %c0_115] : memref<1x120x128xf32, #tpu.memory_space<vmem>>, vector<1x96x128xf32>
    %116 = vector.shape_cast %115 : vector<1x96x128xf32> to vector<96x128xf32>
    %c19_116 = arith.constant 19 : index
    %c0_117 = arith.constant 0 : index
    %c0_118 = arith.constant 0 : index
    %117 = vector.load %arg2[%c19_116, %c0_117, %c0_118] : memref<25x128x128xf32, #tpu.memory_space<vmem>>, vector<1x128x128xf32>
    %118 = vector.shape_cast %117 : vector<1x128x128xf32> to vector<128x128xf32>
    %cst_119 = arith.constant dense<0.000000e+00> : vector<96x128xf32>
    %119 = tpu.matmul %116, %118, %cst_119 {dimension_numbers = #tpu.dot_dimension_numbers<[1], [0], [0], [1], [0, 0, 1, 1], [], []>} : vector<96x128xf32>, vector<128x128xf32>, vector<96x128xf32> -> vector<96x128xf32>
    %120 = arith.addf %114, %119 : vector<96x128xf32>
    %c0_120 = arith.constant 0 : index
    %c20 = arith.constant 20 : index
    %c0_121 = arith.constant 0 : index
    %121 = vector.load %arg1[%c0_120, %c20, %c0_121] : memref<1x120x128xf32, #tpu.memory_space<vmem>>, vector<1x96x128xf32>
    %122 = vector.shape_cast %121 : vector<1x96x128xf32> to vector<96x128xf32>
    %c20_122 = arith.constant 20 : index
    %c0_123 = arith.constant 0 : index
    %c0_124 = arith.constant 0 : index
    %123 = vector.load %arg2[%c20_122, %c0_123, %c0_124] : memref<25x128x128xf32, #tpu.memory_space<vmem>>, vector<1x128x128xf32>
    %124 = vector.shape_cast %123 : vector<1x128x128xf32> to vector<128x128xf32>
    %cst_125 = arith.constant dense<0.000000e+00> : vector<96x128xf32>
    %125 = tpu.matmul %122, %124, %cst_125 {dimension_numbers = #tpu.dot_dimension_numbers<[1], [0], [0], [1], [0, 0, 1, 1], [], []>} : vector<96x128xf32>, vector<128x128xf32>, vector<96x128xf32> -> vector<96x128xf32>
    %126 = arith.addf %120, %125 : vector<96x128xf32>
    %c0_126 = arith.constant 0 : index
    %c21 = arith.constant 21 : index
    %c0_127 = arith.constant 0 : index
    %127 = vector.load %arg1[%c0_126, %c21, %c0_127] : memref<1x120x128xf32, #tpu.memory_space<vmem>>, vector<1x96x128xf32>
    %128 = vector.shape_cast %127 : vector<1x96x128xf32> to vector<96x128xf32>
    %c21_128 = arith.constant 21 : index
    %c0_129 = arith.constant 0 : index
    %c0_130 = arith.constant 0 : index
    %129 = vector.load %arg2[%c21_128, %c0_129, %c0_130] : memref<25x128x128xf32, #tpu.memory_space<vmem>>, vector<1x128x128xf32>
    %130 = vector.shape_cast %129 : vector<1x128x128xf32> to vector<128x128xf32>
    %cst_131 = arith.constant dense<0.000000e+00> : vector<96x128xf32>
    %131 = tpu.matmul %128, %130, %cst_131 {dimension_numbers = #tpu.dot_dimension_numbers<[1], [0], [0], [1], [0, 0, 1, 1], [], []>} : vector<96x128xf32>, vector<128x128xf32>, vector<96x128xf32> -> vector<96x128xf32>
    %132 = arith.addf %126, %131 : vector<96x128xf32>
    %c0_132 = arith.constant 0 : index
    %c22 = arith.constant 22 : index
    %c0_133 = arith.constant 0 : index
    %133 = vector.load %arg1[%c0_132, %c22, %c0_133] : memref<1x120x128xf32, #tpu.memory_space<vmem>>, vector<1x96x128xf32>
    %134 = vector.shape_cast %133 : vector<1x96x128xf32> to vector<96x128xf32>
    %c22_134 = arith.constant 22 : index
    %c0_135 = arith.constant 0 : index
    %c0_136 = arith.constant 0 : index
    %135 = vector.load %arg2[%c22_134, %c0_135, %c0_136] : memref<25x128x128xf32, #tpu.memory_space<vmem>>, vector<1x128x128xf32>
    %136 = vector.shape_cast %135 : vector<1x128x128xf32> to vector<128x128xf32>
    %cst_137 = arith.constant dense<0.000000e+00> : vector<96x128xf32>
    %137 = tpu.matmul %134, %136, %cst_137 {dimension_numbers = #tpu.dot_dimension_numbers<[1], [0], [0], [1], [0, 0, 1, 1], [], []>} : vector<96x128xf32>, vector<128x128xf32>, vector<96x128xf32> -> vector<96x128xf32>
    %138 = arith.addf %132, %137 : vector<96x128xf32>
    %c0_138 = arith.constant 0 : index
    %c23 = arith.constant 23 : index
    %c0_139 = arith.constant 0 : index
    %139 = vector.load %arg1[%c0_138, %c23, %c0_139] : memref<1x120x128xf32, #tpu.memory_space<vmem>>, vector<1x96x128xf32>
    %140 = vector.shape_cast %139 : vector<1x96x128xf32> to vector<96x128xf32>
    %c23_140 = arith.constant 23 : index
    %c0_141 = arith.constant 0 : index
    %c0_142 = arith.constant 0 : index
    %141 = vector.load %arg2[%c23_140, %c0_141, %c0_142] : memref<25x128x128xf32, #tpu.memory_space<vmem>>, vector<1x128x128xf32>
    %142 = vector.shape_cast %141 : vector<1x128x128xf32> to vector<128x128xf32>
    %cst_143 = arith.constant dense<0.000000e+00> : vector<96x128xf32>
    %143 = tpu.matmul %140, %142, %cst_143 {dimension_numbers = #tpu.dot_dimension_numbers<[1], [0], [0], [1], [0, 0, 1, 1], [], []>} : vector<96x128xf32>, vector<128x128xf32>, vector<96x128xf32> -> vector<96x128xf32>
    %144 = arith.addf %138, %143 : vector<96x128xf32>
    %c0_144 = arith.constant 0 : index
    %c24 = arith.constant 24 : index
    %c0_145 = arith.constant 0 : index
    %145 = vector.load %arg1[%c0_144, %c24, %c0_145] : memref<1x120x128xf32, #tpu.memory_space<vmem>>, vector<1x96x128xf32>
    %146 = vector.shape_cast %145 : vector<1x96x128xf32> to vector<96x128xf32>
    %c24_146 = arith.constant 24 : index
    %c0_147 = arith.constant 0 : index
    %c0_148 = arith.constant 0 : index
    %147 = vector.load %arg2[%c24_146, %c0_147, %c0_148] : memref<25x128x128xf32, #tpu.memory_space<vmem>>, vector<1x128x128xf32>
    %148 = vector.shape_cast %147 : vector<1x128x128xf32> to vector<128x128xf32>
    %cst_149 = arith.constant dense<0.000000e+00> : vector<96x128xf32>
    %149 = tpu.matmul %146, %148, %cst_149 {dimension_numbers = #tpu.dot_dimension_numbers<[1], [0], [0], [1], [0, 0, 1, 1], [], []>} : vector<96x128xf32>, vector<128x128xf32>, vector<96x128xf32> -> vector<96x128xf32>
    %150 = arith.addf %144, %149 : vector<96x128xf32>
    %c0_150 = arith.constant 0 : index
    %c0_151 = arith.constant 0 : index
    %151 = vector.load %arg3[%c0_150, %c0_151] : memref<1x128xf32, #tpu.memory_space<vmem>>, vector<1x128xf32>
    %152 = vector.broadcast %151 : vector<1x128xf32> to vector<96x128xf32>
    %153 = arith.mulf %150, %152 : vector<96x128xf32>
    %c0_152 = arith.constant 0 : index
    %c0_153 = arith.constant 0 : index
    %154 = vector.load %arg4[%c0_152, %c0_153] : memref<1x128xf32, #tpu.memory_space<vmem>>, vector<1x128xf32>
    %155 = vector.broadcast %154 : vector<1x128xf32> to vector<96x128xf32>
    %156 = arith.addf %153, %155 : vector<96x128xf32>
    %cst_154 = arith.constant 0.000000e+00 : f32
    %157 = vector.broadcast %cst_154 : f32 to vector<96x128xf32>
    %158 = arith.cmpf ogt, %156, %157 : vector<96x128xf32>
    %159 = math.exp %156 : vector<96x128xf32>
    %cst_155 = arith.constant 1.000000e+00 : f32
    %160 = vector.broadcast %cst_155 : f32 to vector<96x128xf32>
    %161 = arith.subf %159, %160 : vector<96x128xf32>
    %162 = arith.select %158, %156, %161 : vector<96x128xi1>, vector<96x128xf32>
    %c0_156 = arith.constant 0 : index
    %c0_157 = arith.constant 0 : index
    %163 = vector.load %arg5[%c0_156, %c0_157] : memref<47x96xf32, #tpu.memory_space<vmem>>, vector<47x96xf32>
    %cst_158 = arith.constant dense<0.000000e+00> : vector<47x128xf32>
    %164 = tpu.matmul %163, %162, %cst_158 {dimension_numbers = #tpu.dot_dimension_numbers<[1], [0], [0], [1], [0, 0, 1, 1], [], []>} : vector<47x96xf32>, vector<96x128xf32>, vector<47x128xf32> -> vector<47x128xf32>
    %c0_159 = arith.constant 0 : index
    %c0_160 = arith.constant 0 : index
    %c0_161 = arith.constant 0 : index
    %165 = vector.load %arg6[%c0_159, %c0_160, %c0_161] : memref<1x47x128xf32, #tpu.memory_space<vmem>>, vector<1x47x128xf32>
    %166 = vector.shape_cast %165 : vector<1x47x128xf32> to vector<47x128xf32>
    %167 = vector.shape_cast %164 : vector<47x128xf32> to vector<1x47x128xf32>
    tpu.vector_store %arg6[%c0_159, %c0_160, %c0_161], %167 {strides = array<i32>} : memref<1x47x128xf32, #tpu.memory_space<vmem>>, vector<1x47x128xf32>,
    return
  }
  func.func @transform_0(%arg0: i32) -> (i32, i32, i32) {
    %c0_i32 = arith.constant 0 : i32
    %c0_i32_0 = arith.constant 0 : i32
    %c0_i32_1 = arith.constant 0 : i32
    return %arg0, %c0_i32, %c0_i32_0 : i32, i32, i32
  }
  func.func @transform_1(%arg0: i32) -> (i32, i32, i32) {
    %c0_i32 = arith.constant 0 : i32
    %c0_i32_0 = arith.constant 0 : i32
    %c0_i32_1 = arith.constant 0 : i32
    %c0_i32_2 = arith.constant 0 : i32
    return %c0_i32, %c0_i32_0, %c0_i32_1 : i32, i32, i32
  }
  func.func @transform_2(%arg0: i32) -> (i32, i32) {
    %c0_i32 = arith.constant 0 : i32
    %c0_i32_0 = arith.constant 0 : i32
    %c0_i32_1 = arith.constant 0 : i32
    return %c0_i32, %c0_i32_0 : i32, i32
  }
  func.func @transform_3(%arg0: i32) -> (i32, i32) {
    %c0_i32 = arith.constant 0 : i32
    %c0_i32_0 = arith.constant 0 : i32
    %c0_i32_1 = arith.constant 0 : i32
    return %c0_i32, %c0_i32_0 : i32, i32
  }
  func.func @transform_4(%arg0: i32) -> (i32, i32) {
    %c0_i32 = arith.constant 0 : i32
    %c0_i32_0 = arith.constant 0 : i32
    %c0_i32_1 = arith.constant 0 : i32
    return %c0_i32, %c0_i32_0 : i32, i32
  }
  func.func @transform_5(%arg0: i32) -> (i32, i32, i32) {
    %c0_i32 = arith.constant 0 : i32
    %c0_i32_0 = arith.constant 0 : i32
    %c0_i32_1 = arith.constant 0 : i32
    return %arg0, %c0_i32, %c0_i32_0 : i32, i32, i32
  }
}

module attributes {stable_mosaic.version = 11 : i64} {
  func.func @kernel(%arg0: i32, %arg1: memref<1x47x128xf32, #tpu.memory_space<vmem>>, %arg2: memref<1x128x128xf32, #tpu.memory_space<vmem>>, %arg3: memref<1x128xf32, #tpu.memory_space<vmem>>, %arg4: memref<1x128xf32, #tpu.memory_space<vmem>>, %arg5: memref<37x47xf32, #tpu.memory_space<vmem>>, %arg6: memref<1x37x128xf32, #tpu.memory_space<vmem>>) attributes {dimension_semantics = [#tpu.dimension_semantics<parallel>], iteration_bounds = array<i64: 2>, scalar_prefetch = 0 : i64, scratch_operands = 0 : i64, tpu.core_type = #tpu.core_type<tc>, window_params = [{transform_indices = @transform_0, window_bounds = array<i64: 1, 47, 128>}, {pipeline_mode = #tpu.pipeline_mode<synchronous>, transform_indices = @transform_1, window_bounds = array<i64: 1, 128, 128>}, {pipeline_mode = #tpu.pipeline_mode<synchronous>, transform_indices = @transform_2, window_bounds = array<i64: 1, 128>}, {pipeline_mode = #tpu.pipeline_mode<synchronous>, transform_indices = @transform_3, window_bounds = array<i64: 1, 128>}, {pipeline_mode = #tpu.pipeline_mode<synchronous>, transform_indices = @transform_4, window_bounds = array<i64: 37, 47>}, {transform_indices = @transform_5, window_bounds = array<i64: 1, 37, 128>}]} {
    %c0 = arith.constant 0 : index
    %c0_0 = arith.constant 0 : index
    %c0_1 = arith.constant 0 : index
    %0 = vector.load %arg1[%c0, %c0_0, %c0_1] : memref<1x47x128xf32, #tpu.memory_space<vmem>>, vector<1x47x128xf32>
    %1 = vector.shape_cast %0 : vector<1x47x128xf32> to vector<47x128xf32>
    %c0_2 = arith.constant 0 : index
    %c0_3 = arith.constant 0 : index
    %c0_4 = arith.constant 0 : index
    %2 = vector.load %arg2[%c0_2, %c0_3, %c0_4] : memref<1x128x128xf32, #tpu.memory_space<vmem>>, vector<1x128x128xf32>
    %3 = vector.shape_cast %2 : vector<1x128x128xf32> to vector<128x128xf32>
    %cst = arith.constant dense<0.000000e+00> : vector<47x128xf32>
    %4 = tpu.matmul %1, %3, %cst {dimension_numbers = #tpu.dot_dimension_numbers<[1], [0], [0], [1], [0, 0, 1, 1], [], []>} : vector<47x128xf32>, vector<128x128xf32>, vector<47x128xf32> -> vector<47x128xf32>
    %c0_5 = arith.constant 0 : index
    %c0_6 = arith.constant 0 : index
    %5 = vector.load %arg3[%c0_5, %c0_6] : memref<1x128xf32, #tpu.memory_space<vmem>>, vector<1x128xf32>
    %6 = vector.broadcast %5 : vector<1x128xf32> to vector<47x128xf32>
    %7 = arith.mulf %4, %6 : vector<47x128xf32>
    %c0_7 = arith.constant 0 : index
    %c0_8 = arith.constant 0 : index
    %8 = vector.load %arg4[%c0_7, %c0_8] : memref<1x128xf32, #tpu.memory_space<vmem>>, vector<1x128xf32>
    %9 = vector.broadcast %8 : vector<1x128xf32> to vector<47x128xf32>
    %10 = arith.addf %7, %9 : vector<47x128xf32>
    %cst_9 = arith.constant 0.000000e+00 : f32
    %11 = vector.broadcast %cst_9 : f32 to vector<47x128xf32>
    %12 = arith.cmpf ogt, %10, %11 : vector<47x128xf32>
    %13 = math.exp %10 : vector<47x128xf32>
    %cst_10 = arith.constant 1.000000e+00 : f32
    %14 = vector.broadcast %cst_10 : f32 to vector<47x128xf32>
    %15 = arith.subf %13, %14 : vector<47x128xf32>
    %16 = arith.select %12, %10, %15 : vector<47x128xi1>, vector<47x128xf32>
    %c0_11 = arith.constant 0 : index
    %c0_12 = arith.constant 0 : index
    %17 = vector.load %arg5[%c0_11, %c0_12] : memref<37x47xf32, #tpu.memory_space<vmem>>, vector<37x47xf32>
    %cst_13 = arith.constant dense<0.000000e+00> : vector<37x128xf32>
    %18 = tpu.matmul %17, %16, %cst_13 {dimension_numbers = #tpu.dot_dimension_numbers<[1], [0], [0], [1], [0, 0, 1, 1], [], []>} : vector<37x47xf32>, vector<47x128xf32>, vector<37x128xf32> -> vector<37x128xf32>
    %c0_14 = arith.constant 0 : index
    %c0_15 = arith.constant 0 : index
    %c0_16 = arith.constant 0 : index
    %19 = vector.load %arg6[%c0_14, %c0_15, %c0_16] : memref<1x37x128xf32, #tpu.memory_space<vmem>>, vector<1x37x128xf32>
    %20 = vector.shape_cast %19 : vector<1x37x128xf32> to vector<37x128xf32>
    %21 = vector.shape_cast %18 : vector<37x128xf32> to vector<1x37x128xf32>
    tpu.vector_store %arg6[%c0_14, %c0_15, %c0_16], %21 {strides = array<i32>} : memref<1x37x128xf32, #tpu.memory_space<vmem>>, vector<1x37x128xf32>,
    return
  }
  func.func @transform_0(%arg0: i32) -> (i32, i32, i32) {
    %c0_i32 = arith.constant 0 : i32
    %c0_i32_0 = arith.constant 0 : i32
    %c0_i32_1 = arith.constant 0 : i32
    return %arg0, %c0_i32, %c0_i32_0 : i32, i32, i32
  }
  func.func @transform_1(%arg0: i32) -> (i32, i32, i32) {
    %c0_i32 = arith.constant 0 : i32
    %c0_i32_0 = arith.constant 0 : i32
    %c0_i32_1 = arith.constant 0 : i32
    %c0_i32_2 = arith.constant 0 : i32
    return %c0_i32, %c0_i32_0, %c0_i32_1 : i32, i32, i32
  }
  func.func @transform_2(%arg0: i32) -> (i32, i32) {
    %c0_i32 = arith.constant 0 : i32
    %c0_i32_0 = arith.constant 0 : i32
    %c0_i32_1 = arith.constant 0 : i32
    return %c0_i32, %c0_i32_0 : i32, i32
  }
  func.func @transform_3(%arg0: i32) -> (i32, i32) {
    %c0_i32 = arith.constant 0 : i32
    %c0_i32_0 = arith.constant 0 : i32
    %c0_i32_1 = arith.constant 0 : i32
    return %c0_i32, %c0_i32_0 : i32, i32
  }
  func.func @transform_4(%arg0: i32) -> (i32, i32) {
    %c0_i32 = arith.constant 0 : i32
    %c0_i32_0 = arith.constant 0 : i32
    %c0_i32_1 = arith.constant 0 : i32
    return %c0_i32, %c0_i32_0 : i32, i32
  }
  func.func @transform_5(%arg0: i32) -> (i32, i32, i32) {
    %c0_i32 = arith.constant 0 : i32
    %c0_i32_0 = arith.constant 0 : i32
    %c0_i32_1 = arith.constant 0 : i32
    return %arg0, %c0_i32, %c0_i32_0 : i32, i32, i32
  }
}

module attributes {stable_mosaic.version = 11 : i64} {
  func.func @_head_kernel(%arg0: i32, %arg1: memref<1x37x128xf32, #tpu.memory_space<vmem>>, %arg2: memref<128x128xf32, #tpu.memory_space<vmem>>, %arg3: memref<1x128xf32, #tpu.memory_space<vmem>>, %arg4: memref<128x128xf32, #tpu.memory_space<vmem>>, %arg5: memref<1x128xf32, #tpu.memory_space<vmem>>, %arg6: memref<128x128xf32, #tpu.memory_space<vmem>>, %arg7: memref<1x128xf32, #tpu.memory_space<vmem>>, %arg8: memref<1x128xf32, #tpu.memory_space<vmem>>, %arg9: memref<128x128xf32, #tpu.memory_space<vmem>>, %arg10: memref<1x128xf32, #tpu.memory_space<vmem>>, %arg11: memref<1x37x128xf32, #tpu.memory_space<vmem>>) attributes {dimension_semantics = [#tpu.dimension_semantics<parallel>], iteration_bounds = array<i64: 2>, scalar_prefetch = 0 : i64, scratch_operands = 0 : i64, tpu.core_type = #tpu.core_type<tc>, window_params = [{transform_indices = @transform_0, window_bounds = array<i64: 1, 37, 128>}, {pipeline_mode = #tpu.pipeline_mode<synchronous>, transform_indices = @transform_1, window_bounds = array<i64: 128, 128>}, {pipeline_mode = #tpu.pipeline_mode<synchronous>, transform_indices = @transform_2, window_bounds = array<i64: 1, 128>}, {pipeline_mode = #tpu.pipeline_mode<synchronous>, transform_indices = @transform_3, window_bounds = array<i64: 128, 128>}, {pipeline_mode = #tpu.pipeline_mode<synchronous>, transform_indices = @transform_4, window_bounds = array<i64: 1, 128>}, {pipeline_mode = #tpu.pipeline_mode<synchronous>, transform_indices = @transform_5, window_bounds = array<i64: 128, 128>}, {pipeline_mode = #tpu.pipeline_mode<synchronous>, transform_indices = @transform_6, window_bounds = array<i64: 1, 128>}, {pipeline_mode = #tpu.pipeline_mode<synchronous>, transform_indices = @transform_7, window_bounds = array<i64: 1, 128>}, {pipeline_mode = #tpu.pipeline_mode<synchronous>, transform_indices = @transform_8, window_bounds = array<i64: 128, 128>}, {pipeline_mode = #tpu.pipeline_mode<synchronous>, transform_indices = @transform_9, window_bounds = array<i64: 1, 128>}, {transform_indices = @transform_10, window_bounds = array<i64: 1, 37, 128>}]} {
    %c0 = arith.constant 0 : index
    %c0_0 = arith.constant 0 : index
    %c0_1 = arith.constant 0 : index
    %0 = vector.load %arg1[%c0, %c0_0, %c0_1] : memref<1x37x128xf32, #tpu.memory_space<vmem>>, vector<1x37x128xf32>
    %1 = vector.shape_cast %0 : vector<1x37x128xf32> to vector<37x128xf32>
    %cst = arith.constant dense<0.000000e+00> : vector<128xf32>
    %2 = vector.multi_reduction <add>, %1, %cst [0] : vector<37x128xf32> to vector<128xf32>
    %3 = vector.shape_cast %2 : vector<128xf32> to vector<1x128xf32>
    %cst_2 = arith.constant 3.700000e+01 : f32
    %4 = vector.broadcast %cst_2 : f32 to vector<1x128xf32>
    %5 = arith.divf %3, %4 : vector<1x128xf32>
    %c0_3 = arith.constant 0 : index
    %c0_4 = arith.constant 0 : index
    %6 = vector.load %arg2[%c0_3, %c0_4] : memref<128x128xf32, #tpu.memory_space<vmem>>, vector<128x128xf32>
    %cst_5 = arith.constant dense<0.000000e+00> : vector<1x128xf32>
    %7 = tpu.matmul %5, %6, %cst_5 {dimension_numbers = #tpu.dot_dimension_numbers<[1], [0], [0], [1], [0, 0, 1, 1], [], []>} : vector<1x128xf32>, vector<128x128xf32>, vector<1x128xf32> -> vector<1x128xf32>
    %c0_6 = arith.constant 0 : index
    %c0_7 = arith.constant 0 : index
    %8 = vector.load %arg3[%c0_6, %c0_7] : memref<1x128xf32, #tpu.memory_space<vmem>>, vector<1x128xf32>
    %9 = arith.addf %7, %8 : vector<1x128xf32>
    %cst_8 = arith.constant 0.000000e+00 : f32
    %10 = vector.broadcast %cst_8 : f32 to vector<1x128xf32>
    %11 = arith.cmpf ogt, %9, %10 : vector<1x128xf32>
    %12 = math.exp %9 : vector<1x128xf32>
    %cst_9 = arith.constant 1.000000e+00 : f32
    %13 = vector.broadcast %cst_9 : f32 to vector<1x128xf32>
    %14 = arith.subf %12, %13 : vector<1x128xf32>
    %15 = arith.select %11, %9, %14 : vector<1x128xi1>, vector<1x128xf32>
    %c0_10 = arith.constant 0 : index
    %c0_11 = arith.constant 0 : index
    %16 = vector.load %arg4[%c0_10, %c0_11] : memref<128x128xf32, #tpu.memory_space<vmem>>, vector<128x128xf32>
    %cst_12 = arith.constant dense<0.000000e+00> : vector<1x128xf32>
    %17 = tpu.matmul %15, %16, %cst_12 {dimension_numbers = #tpu.dot_dimension_numbers<[1], [0], [0], [1], [0, 0, 1, 1], [], []>} : vector<1x128xf32>, vector<128x128xf32>, vector<1x128xf32> -> vector<1x128xf32>
    %c0_13 = arith.constant 0 : index
    %c0_14 = arith.constant 0 : index
    %18 = vector.load %arg5[%c0_13, %c0_14] : memref<1x128xf32, #tpu.memory_space<vmem>>, vector<1x128xf32>
    %19 = arith.addf %17, %18 : vector<1x128xf32>
    %cst_15 = arith.constant 0.000000e+00 : f32
    %20 = vector.broadcast %cst_15 : f32 to vector<1x128xf32>
    %21 = arith.subf %20, %19 : vector<1x128xf32>
    %22 = math.exp %21 : vector<1x128xf32>
    %cst_16 = arith.constant 1.000000e+00 : f32
    %23 = vector.broadcast %cst_16 : f32 to vector<1x128xf32>
    %24 = arith.addf %23, %22 : vector<1x128xf32>
    %cst_17 = arith.constant 1.000000e+00 : f32
    %25 = vector.broadcast %cst_17 : f32 to vector<1x128xf32>
    %26 = arith.divf %25, %24 : vector<1x128xf32>
    %27 = vector.broadcast %26 : vector<1x128xf32> to vector<37x128xf32>
    %28 = arith.mulf %1, %27 : vector<37x128xf32>
    %c0_18 = arith.constant 0 : index
    %c0_19 = arith.constant 0 : index
    %29 = vector.load %arg6[%c0_18, %c0_19] : memref<128x128xf32, #tpu.memory_space<vmem>>, vector<128x128xf32>
    %cst_20 = arith.constant dense<0.000000e+00> : vector<37x128xf32>
    %30 = tpu.matmul %28, %29, %cst_20 {dimension_numbers = #tpu.dot_dimension_numbers<[1], [0], [0], [1], [0, 0, 1, 1], [], []>} : vector<37x128xf32>, vector<128x128xf32>, vector<37x128xf32> -> vector<37x128xf32>
    %c0_21 = arith.constant 0 : index
    %c0_22 = arith.constant 0 : index
    %31 = vector.load %arg7[%c0_21, %c0_22] : memref<1x128xf32, #tpu.memory_space<vmem>>, vector<1x128xf32>
    %32 = vector.broadcast %31 : vector<1x128xf32> to vector<37x128xf32>
    %33 = arith.mulf %30, %32 : vector<37x128xf32>
    %c0_23 = arith.constant 0 : index
    %c0_24 = arith.constant 0 : index
    %34 = vector.load %arg8[%c0_23, %c0_24] : memref<1x128xf32, #tpu.memory_space<vmem>>, vector<1x128xf32>
    %35 = vector.broadcast %34 : vector<1x128xf32> to vector<37x128xf32>
    %36 = arith.addf %33, %35 : vector<37x128xf32>
    %cst_25 = arith.constant 0.000000e+00 : f32
    %37 = vector.broadcast %cst_25 : f32 to vector<37x128xf32>
    %38 = arith.cmpf ogt, %36, %37 : vector<37x128xf32>
    %39 = math.exp %36 : vector<37x128xf32>
    %cst_26 = arith.constant 1.000000e+00 : f32
    %40 = vector.broadcast %cst_26 : f32 to vector<37x128xf32>
    %41 = arith.subf %39, %40 : vector<37x128xf32>
    %42 = arith.select %38, %36, %41 : vector<37x128xi1>, vector<37x128xf32>
    %c0_27 = arith.constant 0 : index
    %c0_28 = arith.constant 0 : index
    %43 = vector.load %arg9[%c0_27, %c0_28] : memref<128x128xf32, #tpu.memory_space<vmem>>, vector<128x128xf32>
    %cst_29 = arith.constant dense<0.000000e+00> : vector<37x128xf32>
    %44 = tpu.matmul %42, %43, %cst_29 {dimension_numbers = #tpu.dot_dimension_numbers<[1], [0], [0], [1], [0, 0, 1, 1], [], []>} : vector<37x128xf32>, vector<128x128xf32>, vector<37x128xf32> -> vector<37x128xf32>
    %c0_30 = arith.constant 0 : index
    %c0_31 = arith.constant 0 : index
    %45 = vector.load %arg10[%c0_30, %c0_31] : memref<1x128xf32, #tpu.memory_space<vmem>>, vector<1x128xf32>
    %46 = vector.broadcast %45 : vector<1x128xf32> to vector<37x128xf32>
    %47 = arith.addf %44, %46 : vector<37x128xf32>
    %c0_32 = arith.constant 0 : index
    %c0_33 = arith.constant 0 : index
    %c0_34 = arith.constant 0 : index
    %48 = vector.load %arg11[%c0_32, %c0_33, %c0_34] : memref<1x37x128xf32, #tpu.memory_space<vmem>>, vector<1x37x128xf32>
    %49 = vector.shape_cast %48 : vector<1x37x128xf32> to vector<37x128xf32>
    %50 = vector.shape_cast %47 : vector<37x128xf32> to vector<1x37x128xf32>
    tpu.vector_store %arg11[%c0_32, %c0_33, %c0_34], %50 {strides = array<i32>} : memref<1x37x128xf32, #tpu.memory_space<vmem>>, vector<1x37x128xf32>,
    return
  }
  func.func @transform_0(%arg0: i32) -> (i32, i32, i32) {
    %c0_i32 = arith.constant 0 : i32
    %c0_i32_0 = arith.constant 0 : i32
    %c0_i32_1 = arith.constant 0 : i32
    return %arg0, %c0_i32, %c0_i32_0 : i32, i32, i32
  }
  func.func @transform_1(%arg0: i32) -> (i32, i32) {
    %c0_i32 = arith.constant 0 : i32
    %c0_i32_0 = arith.constant 0 : i32
    %c0_i32_1 = arith.constant 0 : i32
    return %c0_i32, %c0_i32_0 : i32, i32
  }
  func.func @transform_2(%arg0: i32) -> (i32, i32) {
    %c0_i32 = arith.constant 0 : i32
    %c0_i32_0 = arith.constant 0 : i32
    %c0_i32_1 = arith.constant 0 : i32
    return %c0_i32, %c0_i32_0 : i32, i32
  }
  func.func @transform_3(%arg0: i32) -> (i32, i32) {
    %c0_i32 = arith.constant 0 : i32
    %c0_i32_0 = arith.constant 0 : i32
    %c0_i32_1 = arith.constant 0 : i32
    return %c0_i32, %c0_i32_0 : i32, i32
  }
  func.func @transform_4(%arg0: i32) -> (i32, i32) {
    %c0_i32 = arith.constant 0 : i32
    %c0_i32_0 = arith.constant 0 : i32
    %c0_i32_1 = arith.constant 0 : i32
    return %c0_i32, %c0_i32_0 : i32, i32
  }
  func.func @transform_5(%arg0: i32) -> (i32, i32) {
    %c0_i32 = arith.constant 0 : i32
    %c0_i32_0 = arith.constant 0 : i32
    %c0_i32_1 = arith.constant 0 : i32
    return %c0_i32, %c0_i32_0 : i32, i32
  }
  func.func @transform_6(%arg0: i32) -> (i32, i32) {
    %c0_i32 = arith.constant 0 : i32
    %c0_i32_0 = arith.constant 0 : i32
    %c0_i32_1 = arith.constant 0 : i32
    return %c0_i32, %c0_i32_0 : i32, i32
  }
  func.func @transform_7(%arg0: i32) -> (i32, i32) {
    %c0_i32 = arith.constant 0 : i32
    %c0_i32_0 = arith.constant 0 : i32
    %c0_i32_1 = arith.constant 0 : i32
    return %c0_i32, %c0_i32_0 : i32, i32
  }
  func.func @transform_8(%arg0: i32) -> (i32, i32) {
    %c0_i32 = arith.constant 0 : i32
    %c0_i32_0 = arith.constant 0 : i32
    %c0_i32_1 = arith.constant 0 : i32
    return %c0_i32, %c0_i32_0 : i32, i32
  }
  func.func @transform_9(%arg0: i32) -> (i32, i32) {
    %c0_i32 = arith.constant 0 : i32
    %c0_i32_0 = arith.constant 0 : i32
    %c0_i32_1 = arith.constant 0 : i32
    return %c0_i32, %c0_i32_0 : i32, i32
  }
  func.func @transform_10(%arg0: i32) -> (i32, i32, i32) {
    %c0_i32 = arith.constant 0 : i32
    %c0_i32_0 = arith.constant 0 : i32
    %c0_i32_1 = arith.constant 0 : i32
    return %arg0, %c0_i32, %c0_i32_0 : i32, i32, i32
  }
}

</mosaic_0001>

<llo_original>
// kernel: multibranch_forward_pallas.8
$region0: #{multibranch_forward_pallas.8}
  #allocation0 [shape = 'u32[]', space=smem, size = 0x4, offset = 0x4, fixed_abs, tag = 'smem constant byte address 0x4 - core index']
  #allocation1 [shape = 'u32[72,128]{1,0:T(1,128)}', space=vmem, size = 0x9000, scoped, tag = 'internal scratch']
  %s0 = inlined_call_operand.vmem [shape: f32[2,96,128], index: 0, kind: input, shape index: {}]
  %s1 = inlined_call_operand.hbm [shape: f32[1,128,128], index: 1, kind: input, shape index: {}]
  %s2 = inlined_call_operand.hbm [shape: f32[1,128], index: 2, kind: input, shape index: {}]
  %s3 = inlined_call_operand.hbm [shape: f32[1,128], index: 3, kind: input, shape index: {}]
  %s4 = inlined_call_operand.vmem [shape: f32[2,96,128], index: 4, kind: output, shape index: {}]
  %s5 = sld [smem:[#allocation0]]
  $region61: #{multibranch_forward_pallas.8} parent=0
    _
  %s7 = ssub.s32 1, %s5
  %s8 = scalar_select 0, %s7, %s5
  $region1: #{multibranch_forward_pallas.8} parent=0
    #allocation2 [shape = 'u8[65536]{0}', space=vmem, size = 0x10000, scoped, tag = 'input window, operand 1, single buffered']
    #allocation3 [shape = 's32[2]{0}', space=sflag, size = 0x8, scoped, tag = 'scoped memory for multibranch_forward_pallas.8']
    #allocation4 [shape = 'u8[512]{0}', space=vmem, size = 0x400, scoped, tag = 'input window, operand 2, single buffered']
    #allocation5 [shape = 's32[1]{0}', space=sflag, size = 0x4, scoped, tag = 'scoped memory for multibranch_forward_pallas.8']
    #allocation6 [shape = 'u8[512]{0}', space=vmem, size = 0x400, scoped, tag = 'input window, operand 3, single buffered']
    %9 = vsyncpa [#allocation3], 0
    %10 = vsyncpa [#allocation5], 0
    loop: start=0, step=1, limit=4
    $region2: #{multibranch_forward_pallas.8} parent=1 // loop_pre_header
      _
    $region3: #{multibranch_forward_pallas.8} parent=1 // loop_header
      %s12 = sphi 0, %s16
      %p13 = scmp.ge.s32.totalorder %s12, 4
      %s22 = sphi 0, %s24
      %s25 = sphi 0, %s22
      %s26 = sphi 0, %s25
      %s42 = sphi 0, %s26
      %s46 = sphi 0, %s46
      %s48 = sphi 0, %s46
      %s49 = sphi 0, %s48
      %s63 = sphi 0, %s49
      %s67 = sphi 0, %s67
      %s69 = sphi 0, %s67
      %s70 = sphi 0, %s69
      %s84 = sphi 0, %s70
      %s88 = sphi 0, %s88
      %s90 = sphi 0, %s88
      %s91 = sphi 0, %s90
      %s105 = sphi 0, %s91
      %s111 = sphi 0, %s113
      %s114 = sphi 0, %s111
      %s115 = sphi 0, %s114
      %s131 = sphi 0, %s115
    $region4: #{multibranch_forward_pallas.8} parent=1 // loop_header_branch
      %15 = sbr.rel (%p13) target = $region8
    $region5: #{multibranch_forward_pallas.8} parent=1 // loop_body
      %s17 = ssub.s32 %s12, 1
      %s18 = ssub.s32 %s12, 2
      %s19 = sadd.s32 %s12, 1
      %s20 = ssub.s32 %s12, %s19
      %p21 = scmp.eq.s32.totalorder %s20, 0
      %s23 = sadd.s32 %s22, 1
      %s24 = scalar_select %p21, %s22, %s23
      %p27 = pneg %p21
      %p28 = scmp.eq.s32.totalorder %s12, 1
      %p29 = por %p27, %p28
      %p30 = scmp.ne.s32.totalorder %s22, %s25
      %p31 = scmp.eq.s32.totalorder %s12, 0
      %p32 = por %p30, %p31
      %p33 = scmp.ne.s32.totalorder %s22, %s25
      %p34 = scmp.eq.s32.totalorder %s17, 1
      %p35 = por %p33, %p34
      %p36 = scmp.ne.s32.totalorder %s25, %s26
      %p37 = scmp.eq.s32.totalorder %s17, 0
      %p38 = por %p36, %p37
      %p39 = scmp.ne.s32.totalorder %s25, %s26
      %p40 = scmp.eq.s32.totalorder %s18, 1
      %p41 = por %p39, %p40
      %p43 = scmp.ne.s32.totalorder %s26, %s42
      %p44 = scmp.eq.s32.totalorder %s18, 0
      %p45 = por %p43, %p44
      %s47 = sadd.s32 %s46, 1
      %p50 = scmp.eq.s32.totalorder %s12, 1
      %p51 = scmp.ne.s32.totalorder %s46, %s48
      %p52 = scmp.eq.s32.totalorder %s12, 0
      %p53 = por %p51, %p52
      %p54 = scmp.ne.s32.totalorder %s46, %s48
      %p55 = scmp.eq.s32.totalorder %s17, 1
      %p56 = por %p54, %p55
      %p57 = scmp.ne.s32.totalorder %s48, %s49
      %p58 = scmp.eq.s32.totalorder %s17, 0
      %p59 = por %p57, %p58
      %p60 = scmp.ne.s32.totalorder %s48, %s49
      %p61 = scmp.eq.s32.totalorder %s18, 1
      %p62 = por %p60, %p61
      %p64 = scmp.ne.s32.totalorder %s49, %s63
      %p65 = scmp.eq.s32.totalorder %s18, 0
      %p66 = por %p64, %p65
      %s68 = sadd.s32 %s67, 1
      %p71 = scmp.eq.s32.totalorder %s12, 1
      %p72 = scmp.ne.s32.totalorder %s67, %s69
      %p73 = scmp.eq.s32.totalorder %s12, 0
      %p74 = por %p72, %p73
      %p75 = scmp.ne.s32.totalorder %s67, %s69
      %p76 = scmp.eq.s32.totalorder %s17, 1
      %p77 = por %p75, %p76
      %p78 = scmp.ne.s32.totalorder %s69, %s70
      %p79 = scmp.eq.s32.totalorder %s17, 0
      %p80 = por %p78, %p79
      %p81 = scmp.ne.s32.totalorder %s69, %s70
      %p82 = scmp.eq.s32.totalorder %s18, 1
      %p83 = por %p81, %p82
      %p85 = scmp.ne.s32.totalorder %s70, %s84
      %p86 = scmp.eq.s32.totalorder %s18, 0
      %p87 = por %p85, %p86
      %s89 = sadd.s32 %s88, 1
      %p92 = scmp.eq.s32.totalorder %s12, 1
      %p93 = scmp.ne.s32.totalorder %s88, %s90
      %p94 = scmp.eq.s32.totalorder %s12, 0
      %p95 = por %p93, %p94
      %p96 = scmp.ne.s32.totalorder %s88, %s90
      %p97 = scmp.eq.s32.totalorder %s17, 1
      %p98 = por %p96, %p97
      %p99 = scmp.ne.s32.totalorder %s90, %s91
      %p100 = scmp.eq.s32.totalorder %s17, 0
      %p101 = por %p99, %p100
      %p102 = scmp.ne.s32.totalorder %s90, %s91
      %p103 = scmp.eq.s32.totalorder %s18, 1
      %p104 = por %p102, %p103
      %p106 = scmp.ne.s32.totalorder %s91, %s105
      %p107 = scmp.eq.s32.totalorder %s18, 0
      %p108 = por %p106, %p107
      %s109 = ssub.s32 %s12, %s19
      %p110 = scmp.eq.s32.totalorder %s109, 0
      %s112 = sadd.s32 %s111, 1
      %s113 = scalar_select %p110, %s111, %s112
      %p116 = pneg %p110
      %p117 = scmp.eq.s32.totalorder %s12, 1
      %p118 = por %p116, %p117
      %p119 = scmp.ne.s32.totalorder %s111, %s114
      %p120 = scmp.eq.s32.totalorder %s12, 0
      %p121 = por %p119, %p120
      %p122 = scmp.ne.s32.totalorder %s111, %s114
      %p123 = scmp.eq.s32.totalorder %s17, 1
      %p124 = por %p122, %p123
      %p125 = scmp.ne.s32.totalorder %s114, %s115
      %p126 = scmp.eq.s32.totalorder %s17, 0
      %p127 = por %p125, %p126
      %p128 = scmp.ne.s32.totalorder %s114, %s115
      %p129 = scmp.eq.s32.totalorder %s18, 1
      %p130 = por %p128, %p129
      %p132 = scmp.ne.s32.totalorder %s115, %s131
      %p133 = scmp.eq.s32.totalorder %s18, 0
      %p134 = por %p132, %p133
      %p135 = scmp.le.s32.totalorder 1, %s12
      %p136 = scmp.lt.s32.totalorder %s12, 3
      %p137 = pnand %p135, %p136
      %p138 = pneg %p137
      // Predicated region
      $region9: #{multibranch_forward_pallas.8} parent=5 // pred_check
        _
      $region10: #{multibranch_forward_pallas.8} parent=5 // pred_check_branch
        %140 = sbr.rel (%p137) target = $region12
      $region11: #{multibranch_forward_pallas.8} parent=5 // pred_region
        %s141 = ssub.s32 %s12, 1
        // Predicated region
        $region13: #{multibranch_forward_pallas.8} parent=11 // pred_check
          %p142 = pneg %p59
        $region14: #{multibranch_forward_pallas.8} parent=11 // pred_check_branch
          %144 = sbr.rel (%p142) target = $region16
        $region15: #{multibranch_forward_pallas.8} parent=11 // pred_region
          %146 = vsyncadd [#allocation3], 0
          %s147 = sshll.u32 %s1, 4
          %s148 = int_to_ptr.hbm [resolvable:$true] %s147
          %s149 = sshll.u32 [#allocation2], 4
          %s150 = int_to_ptr.vmem [resolvable:$true] %s149
          %155 = dma.hbm_to_vmem [thread:$0]  %s148, 2048, %s150, [#allocation3], 128, 128, 8
        $region16: #{multibranch_forward_pallas.8} parent=11 // pred_fallthru
          _
        // Predicated region
        $region17: #{multibranch_forward_pallas.8} parent=11 // pred_check
          %p156 = pneg %p80
        $region18: #{multibranch_forward_pallas.8} parent=11 // pred_check_branch
          %158 = sbr.rel (%p156) target = $region20
        $region19: #{multibranch_forward_pallas.8} parent=11 // pred_region
          %160 = vsyncadd [#allocation5], 0
          %s162 = sshll.u32 %s2, 4
          %s163 = int_to_ptr.hbm [resolvable:$true] %s162
          %s164 = sshll.u32 [#allocation4], 4
          %s165 = int_to_ptr.vmem [resolvable:$true] %s164
          %167 = dma.hbm_to_vmem [thread:$0]  %s163, 16, %s165, [#allocation5]
        $region20: #{multibranch_forward_pallas.8} parent=11 // pred_fallthru
          _
        // Predicated region
        $region21: #{multibranch_forward_pallas.8} parent=11 // pred_check
          %p168 = pneg %p101
        $region22: #{multibranch_forward_pallas.8} parent=11 // pred_check_branch
          %170 = sbr.rel (%p168) target = $region24
        $region23: #{multibranch_forward_pallas.8} parent=11 // pred_region
          %172 = vsyncadd [#allocation5], 0
          %s174 = sshll.u32 %s3, 4
          %s175 = int_to_ptr.hbm [resolvable:$true] %s174
          %s176 = sshll.u32 [#allocation6], 4
          %s177 = int_to_ptr.vmem [resolvable:$true] %s176
          %179 = dma.hbm_to_vmem [thread:$0]  %s175, 16, %s177, [#allocation5]
        $region24: #{multibranch_forward_pallas.8} parent=11 // pred_fallthru
          _
      $region12: #{multibranch_forward_pallas.8} parent=5 // pred_fallthru
        _
      %p180 = scmp.lt.s32.totalorder %s12, 2
      // Predicated region
      $region25: #{multibranch_forward_pallas.8} parent=5 // pred_check
        %p181 = pneg %p180
      $region26: #{multibranch_forward_pallas.8} parent=5 // pred_check_branch
        %183 = sbr.rel (%p181) target = $region28
      $region27: #{multibranch_forward_pallas.8} parent=5 // pred_region
        // Predicated region
        $region29: #{multibranch_forward_pallas.8} parent=27 // pred_check
          %p184 = pneg %p32
        $region30: #{multibranch_forward_pallas.8} parent=27 // pred_check_branch
          %186 = sbr.rel (%p184) target = $region32
        $region31: #{multibranch_forward_pallas.8} parent=27 // pred_region
          %p187 = scmp.lt.s32.totalorder %s12, 1
          %s188 = scalar_select %p187, %s12, 1
          %s189 = smul.addr %s188, 12
          %s190 = smul.addr %s189, 8
          %s191 = scalar_lea.vmem %s0, %s190
        $region32: #{multibranch_forward_pallas.8} parent=27 // pred_fallthru
          _
      $region28: #{multibranch_forward_pallas.8} parent=5 // pred_fallthru
        _
      %p192 = scmp.le.s32.totalorder 1, %s12
      %p193 = scmp.lt.s32.totalorder %s12, 3
      %p194 = pnand %p192, %p193
      %p195 = pneg %p194
      // Predicated region
      $region33: #{multibranch_forward_pallas.8} parent=5 // pred_check
        _
      $region34: #{multibranch_forward_pallas.8} parent=5 // pred_check_branch
        %197 = sbr.rel (%p194) target = $region36
      $region35: #{multibranch_forward_pallas.8} parent=5 // pred_region
        %s198 = ssub.s32 %s12, 1
        // Predicated region
        $region37: #{multibranch_forward_pallas.8} parent=35 // pred_check
          %p199 = pneg %p59
        $region38: #{multibranch_forward_pallas.8} parent=35 // pred_check_branch
          %201 = sbr.rel (%p199) target = $region40
        $region39: #{multibranch_forward_pallas.8} parent=35 // pred_region
          %203 = dma.done [#allocation3], 2048
        $region40: #{multibranch_forward_pallas.8} parent=35 // pred_fallthru
          _
        // Predicated region
        $region41: #{multibranch_forward_pallas.8} parent=35 // pred_check
          %p204 = pneg %p80
        $region42: #{multibranch_forward_pallas.8} parent=35 // pred_check_branch
          %206 = sbr.rel (%p204) target = $region44
        $region43: #{multibranch_forward_pallas.8} parent=35 // pred_region
          %208 = dma.done [#allocation5], 16
        $region44: #{multibranch_forward_pallas.8} parent=35 // pred_fallthru
          _
        // Predicated region
        $region45: #{multibranch_forward_pallas.8} parent=35 // pred_check
          %p209 = pneg %p101
        $region46: #{multibranch_forward_pallas.8} parent=35 // pred_check_branch
          %211 = sbr.rel (%p209) target = $region48
        $region47: #{multibranch_forward_pallas.8} parent=35 // pred_region
          %213 = dma.done [#allocation5], 16
        $region48: #{multibranch_forward_pallas.8} parent=35 // pred_fallthru
          _
        %p214 = scmp.lt.s32.totalorder %s17, 1
        %s215 = scalar_select %p214, %s17, 1
        %s216 = smul.addr %s215, 12
        %s217 = smul.addr %s216, 8
        %s218 = scalar_lea.vmem %s0, %s217
        %p219 = pneg %p38
        %p220 = pneg %p35
        %p221 = pneg %p59
        %p222 = pneg %p56
        %p223 = pneg %p80
        %p224 = pneg %p77
        %p225 = pneg %p101
        %p226 = pneg %p98
        %p227 = pneg %p127
        %p228 = pneg %p124
        %p229 = scmp.lt.s32.totalorder %s17, 1
        %s230 = scalar_select %p229, %s17, 1
        %s231 = smul.addr %s230, 12
        %s232 = smul.addr %s231, 8
        %s233 = scalar_lea.vmem %s4, %s232
        %p234 = scmp.lt.s32.totalorder %s17, 1
        %s235 = scalar_select %p234, %s17, 1
        %s236 = smul.addr %s235, 12
        %s237 = smul.addr %s236, 8
        %s238 = scalar_lea.vmem %s0, %s237
        %p239 = scmp.lt.s32.totalorder %s17, 1
        %s240 = scalar_select %p239, %s17, 1
        %s241 = smul.addr %s240, 12
        %s242 = smul.addr %s241, 8
        %s243 = scalar_lea.vmem %s4, %s242
        %v244 = vld [vmem:[%s238] sm:$0xff]
        %v245 = vld [vmem:[%s238 + $0x8] sm:$0xff]
        %v246 = vld [vmem:[%s238 + $0x10] sm:$0xff]
        %v247 = vld [vmem:[%s238 + $0x18] sm:$0xff]
        %v248 = vld [vmem:[%s238 + $0x20] sm:$0xff]
        %v249 = vld [vmem:[%s238 + $0x28] sm:$0xff]
        %v250 = vld [vmem:[%s238 + $0x30] sm:$0xff]
        %v251 = vld [vmem:[%s238 + $0x38] sm:$0xff]
        %v252 = vld [vmem:[%s238 + $0x40] sm:$0xff]
        %v253 = vld [vmem:[%s238 + $0x48] sm:$0xff]
        %v254 = vld [vmem:[%s238 + $0x50] sm:$0xff]
        %v255 = vld [vmem:[%s238 + $0x58] sm:$0xff]
        %v256 = vld [vmem:[#allocation2] sm:$0xff]
        %v257 = vld [vmem:[#allocation2 + $0x8] sm:$0xff]
        %v258 = vld [vmem:[#allocation2 + $0x10] sm:$0xff]
        %v259 = vld [vmem:[#allocation2 + $0x18] sm:$0xff]
        %v260 = vld [vmem:[#allocation2 + $0x20] sm:$0xff]
        %v261 = vld [vmem:[#allocation2 + $0x28] sm:$0xff]
        %v262 = vld [vmem:[#allocation2 + $0x30] sm:$0xff]
        %v263 = vld [vmem:[#allocation2 + $0x38] sm:$0xff]
        %v264 = vld [vmem:[#allocation2 + $0x40] sm:$0xff]
        %v265 = vld [vmem:[#allocation2 + $0x48] sm:$0xff]
        %v266 = vld [vmem:[#allocation2 + $0x50] sm:$0xff]
        %v267 = vld [vmem:[#allocation2 + $0x58] sm:$0xff]
        %v268 = vld [vmem:[#allocation2 + $0x60] sm:$0xff]
        %v269 = vld [vmem:[#allocation2 + $0x68] sm:$0xff]
        %v270 = vld [vmem:[#allocation2 + $0x70] sm:$0xff]
        %v271 = vld [vmem:[#allocation2 + $0x78] sm:$0xff]
        %272 = vmatpush.msra.mxu0 %v271
        %273 = vmatpush.msra.mxu0 %v270
        %274 = vmatpush.msra.mxu0 %v269
        %275 = vmatpush.msra.mxu0 %v268
        %276 = vmatpush.msra.mxu0 %v267
        %277 = vmatpush.msra.mxu0 %v266
        %278 = vmatpush.msra.mxu0 %v265
        %279 = vmatpush.msra.mxu0 %v264
        %280 = vmatpush.msra.mxu0 %v263
        %281 = vmatpush.msra.mxu0 %v262
        %282 = vmatpush.msra.mxu0 %v261
        %283 = vmatpush.msra.mxu0 %v260
        %284 = vmatpush.msra.mxu0 %v259
        %285 = vmatpush.msra.mxu0 %v258
        %286 = vmatpush.msra.mxu0 %v257
        %287 = vmatpush.msra.mxu0 %v256
        %288 = vmatmul.f32.gmra.mxu0 %v244
        %v289 = vpop.f32.mrf.mxu0
        %v290 = vadd.f32 0.0, %v289
        %291 = vmatmul.f32.gmra.mxu0 %v245
        %v292 = vpop.f32.mrf.mxu0
        %v293 = vadd.f32 0.0, %v292
        %294 = vmatmul.f32.gmra.mxu0 %v246
        %v295 = vpop.f32.mrf.mxu0
        %v296 = vadd.f32 0.0, %v295
        %297 = vmatmul.f32.gmra.mxu0 %v247
        %v298 = vpop.f32.mrf.mxu0
        %v299 = vadd.f32 0.0, %v298
        %300 = vmatmul.f32.gmra.mxu0 %v248
        %v301 = vpop.f32.mrf.mxu0
        %v302 = vadd.f32 0.0, %v301
        %303 = vmatmul.f32.gmra.mxu0 %v249
        %v304 = vpop.f32.mrf.mxu0
        %v305 = vadd.f32 0.0, %v304
        %306 = vmatmul.f32.gmra.mxu0 %v250
        %v307 = vpop.f32.mrf.mxu0
        %v308 = vadd.f32 0.0, %v307
        %309 = vmatmul.f32.gmra.mxu0 %v251
        %v310 = vpop.f32.mrf.mxu0
        %v311 = vadd.f32 0.0, %v310
        %312 = vmatmul.f32.gmra.mxu0 %v252
        %v313 = vpop.f32.mrf.mxu0
        %v314 = vadd.f32 0.0, %v313
        %315 = vmatmul.f32.gmra.mxu0 %v253
        %v316 = vpop.f32.mrf.mxu0
        %v317 = vadd.f32 0.0, %v316
        %318 = vmatmul.f32.gmra.mxu0 %v254
        %v319 = vpop.f32.mrf.mxu0
        %v320 = vadd.f32 0.0, %v319
        %321 = vmatmul.f32.gmra.mxu0 %v255
        %v322 = vpop.f32.mrf.mxu0
        %v323 = vadd.f32 0.0, %v322
        %324 = vdwg.mxu0
        %v325 = vld [vmem:[#allocation4] sm:$0x1]
        %v327 = vperm.slane %v325, 0
        %v329 = vmul.f32 %v290, %v327
        %v330 = vmul.f32 %v293, %v327
        %v331 = vmul.f32 %v296, %v327
        %v332 = vmul.f32 %v299, %v327
        %v333 = vmul.f32 %v302, %v327
        %v334 = vmul.f32 %v305, %v327
        %v335 = vmul.f32 %v308, %v327
        %v336 = vmul.f32 %v311, %v327
        %v337 = vmul.f32 %v314, %v327
        %v338 = vmul.f32 %v317, %v327
        %v339 = vmul.f32 %v320, %v327
        %v340 = vmul.f32 %v323, %v327
        %v341 = vld [vmem:[#allocation6] sm:$0x1]
        %v343 = vperm.slane %v341, 0
        %v345 = vadd.f32 %v329, %v343
        %v346 = vadd.f32 %v330, %v343
        %v347 = vadd.f32 %v331, %v343
        %v348 = vadd.f32 %v332, %v343
        %v349 = vadd.f32 %v333, %v343
        %v350 = vadd.f32 %v334, %v343
        %v351 = vadd.f32 %v335, %v343
        %v352 = vadd.f32 %v336, %v343
        %v353 = vadd.f32 %v337, %v343
        %v354 = vadd.f32 %v338, %v343
        %v355 = vadd.f32 %v339, %v343
        %v356 = vadd.f32 %v340, %v343
        %vm357 = vcmp.gt.f32.partialorder %v345, 0.0
        %vm358 = vcmp.gt.f32.partialorder %v346, 0.0
        %vm359 = vcmp.gt.f32.partialorder %v347, 0.0
        %vm360 = vcmp.gt.f32.partialorder %v348, 0.0
        %vm361 = vcmp.gt.f32.partialorder %v349, 0.0
        %vm362 = vcmp.gt.f32.partialorder %v350, 0.0
        %vm363 = vcmp.gt.f32.partialorder %v351, 0.0
        %vm364 = vcmp.gt.f32.partialorder %v352, 0.0
        %vm365 = vcmp.gt.f32.partialorder %v353, 0.0
        %vm366 = vcmp.gt.f32.partialorder %v354, 0.0
        %vm367 = vcmp.gt.f32.partialorder %v355, 0.0
        %vm368 = vcmp.gt.f32.partialorder %v356, 0.0
        %v369 = vmul.f32 %v345, 1.442695
        %v370 = vpow.pop %v369
        %v371 = vmul.f32 %v346, 1.442695
        %v372 = vpow.pop %v371
        %v373 = vmul.f32 %v347, 1.442695
        %v374 = vpow.pop %v373
        %v375 = vmul.f32 %v348, 1.442695
        %v376 = vpow.pop %v375
        %v377 = vmul.f32 %v349, 1.442695
        %v378 = vpow.pop %v377
        %v379 = vmul.f32 %v350, 1.442695
        %v380 = vpow.pop %v379
        %v381 = vmul.f32 %v351, 1.442695
        %v382 = vpow.pop %v381
        %v383 = vmul.f32 %v352, 1.442695
        %v384 = vpow.pop %v383
        %v385 = vmul.f32 %v353, 1.442695
        %v386 = vpow.pop %v385
        %v387 = vmul.f32 %v354, 1.442695
        %v388 = vpow.pop %v387
        %v389 = vmul.f32 %v355, 1.442695
        %v390 = vpow.pop %v389
        %v391 = vmul.f32 %v356, 1.442695
        %v392 = vpow.pop %v391
        %v393 = vsub.f32 %v370, 1.0
        %v394 = vsub.f32 %v372, 1.0
        %v395 = vsub.f32 %v374, 1.0
        %v396 = vsub.f32 %v376, 1.0
        %v397 = vsub.f32 %v378, 1.0
        %v398 = vsub.f32 %v380, 1.0
        %v399 = vsub.f32 %v382, 1.0
        %v400 = vsub.f32 %v384, 1.0
        %v401 = vsub.f32 %v386, 1.0
        %v402 = vsub.f32 %v388, 1.0
        %v403 = vsub.f32 %v390, 1.0
        %v404 = vsub.f32 %v392, 1.0
        %v405 = vsel %vm357, %v345, %v393
        %v406 = vsel %vm358, %v346, %v394
        %v407 = vsel %vm359, %v347, %v395
        %v408 = vsel %vm360, %v348, %v396
        %v409 = vsel %vm361, %v349, %v397
        %v410 = vsel %vm362, %v350, %v398
        %v411 = vsel %vm363, %v351, %v399
        %v412 = vsel %vm364, %v352, %v400
        %v413 = vsel %vm365, %v353, %v401
        %v414 = vsel %vm366, %v354, %v402
        %v415 = vsel %vm367, %v355, %v403
        %v416 = vsel %vm368, %v356, %v404
        %417 = vst [vmem:[%s243] sm:$0xff] %v405
        %418 = vst [vmem:[%s243 + $0x8] sm:$0xff] %v406
        %419 = vst [vmem:[%s243 + $0x10] sm:$0xff] %v407
        %420 = vst [vmem:[%s243 + $0x18] sm:$0xff] %v408
        %421 = vst [vmem:[%s243 + $0x20] sm:$0xff] %v409
        %422 = vst [vmem:[%s243 + $0x28] sm:$0xff] %v410
        %423 = vst [vmem:[%s243 + $0x30] sm:$0xff] %v411
        %424 = vst [vmem:[%s243 + $0x38] sm:$0xff] %v412
        %425 = vst [vmem:[%s243 + $0x40] sm:$0xff] %v413
        %426 = vst [vmem:[%s243 + $0x48] sm:$0xff] %v414
        %427 = vst [vmem:[%s243 + $0x50] sm:$0xff] %v415
        %428 = vst [vmem:[%s243 + $0x58] sm:$0xff] %v416
        %p429 = scmp.lt.s32.totalorder %s17, 1
        %s430 = scalar_select %p429, %s17, 1
        %s431 = smul.addr %s430, 12
        %s432 = smul.addr %s431, 8
        %s433 = scalar_lea.vmem %s4, %s432
        // Predicated region
        $region49: #{multibranch_forward_pallas.8} parent=35 // pred_check
          %p434 = pneg %p124
        $region50: #{multibranch_forward_pallas.8} parent=35 // pred_check_branch
          %436 = sbr.rel (%p434) target = $region52
        $region51: #{multibranch_forward_pallas.8} parent=35 // pred_region
          _
        $region52: #{multibranch_forward_pallas.8} parent=35 // pred_fallthru
          _
      $region36: #{multibranch_forward_pallas.8} parent=5 // pred_fallthru
        _
      %p437 = scmp.le.s32.totalorder 2, %s12
      // Predicated region
      $region53: #{multibranch_forward_pallas.8} parent=5 // pred_check
        %p438 = pneg %p437
      $region54: #{multibranch_forward_pallas.8} parent=5 // pred_check_branch
        %440 = sbr.rel (%p438) target = $region56
      $region55: #{multibranch_forward_pallas.8} parent=5 // pred_region
        %s441 = ssub.s32 %s12, 2
        // Predicated region
        $region57: #{multibranch_forward_pallas.8} parent=55 // pred_check
          %p442 = pneg %p130
        $region58: #{multibranch_forward_pallas.8} parent=55 // pred_check_branch
          %444 = sbr.rel (%p442) target = $region60
        $region59: #{multibranch_forward_pallas.8} parent=55 // pred_region
          %p445 = scmp.lt.s32.totalorder %s18, 1
          %s446 = scalar_select %p445, %s18, 1
          %s447 = smul.addr %s446, 12
          %s448 = smul.addr %s447, 8
          %s449 = scalar_lea.vmem %s4, %s448
        $region60: #{multibranch_forward_pallas.8} parent=55 // pred_fallthru
          _
      $region56: #{multibranch_forward_pallas.8} parent=5 // pred_fallthru
        _
    $region6: #{multibranch_forward_pallas.8} parent=1 // loop_footer
      %s16 = sadd.s32 1, %s12
    $region7: #{multibranch_forward_pallas.8} parent=1 // loop_footer_branch
      %11 = sbr.rel target = $region3
    $region8: #{multibranch_forward_pallas.8} parent=1 // loop_exit
      _
    %450 = vsyncpa [#allocation3], 1
    %s451 = scalar_lea.sflag [#allocation3], 1
    %452 = vsyncpa %s451, 1
    %453 = vsyncpa [#allocation5], 1

// kernel: multibranch_forward_pallas.10
$region0: #{multibranch_forward_pallas.10}
  #allocation0 [shape = 'u32[]', space=smem, size = 0x4, offset = 0x4, fixed_abs, tag = 'smem constant byte address 0x4 - core index']
  #allocation1 [shape = 'u32[72,128]{1,0:T(1,128)}', space=vmem, size = 0x9000, scoped, tag = 'internal scratch']
  %s0 = inlined_call_operand.vmem [shape: f32[2,96,128], index: 0, kind: input, shape index: {}]
  %s1 = inlined_call_operand.hbm [shape: f32[1,128,128], index: 1, kind: input, shape index: {}]
  %s2 = inlined_call_operand.hbm [shape: f32[1,128], index: 2, kind: input, shape index: {}]
  %s3 = inlined_call_operand.hbm [shape: f32[1,128], index: 3, kind: input, shape index: {}]
  %s4 = inlined_call_operand.hbm [shape: f32[37,96], index: 4, kind: input, shape index: {}]
  %s5 = inlined_call_operand.vmem [shape: f32[2,37,128], index: 5, kind: output, shape index: {}]
  %s6 = sld [smem:[#allocation0]]
  $region69: #{multibranch_forward_pallas.10} parent=0
    _
  %s8 = ssub.s32 1, %s6
  %s9 = scalar_select 0, %s8, %s6
  $region1: #{multibranch_forward_pallas.10} parent=0
    #allocation2 [shape = 'u8[65536]{0}', space=vmem, size = 0x10000, scoped, tag = 'input window, operand 1, single buffered']
    #allocation3 [shape = 's32[2]{0}', space=sflag, size = 0x8, scoped, tag = 'scoped memory for multibranch_forward_pallas.10']
    #allocation4 [shape = 'u8[512]{0}', space=vmem, size = 0x400, scoped, tag = 'input window, operand 2, single buffered']
    #allocation5 [shape = 's32[1]{0}', space=sflag, size = 0x4, scoped, tag = 'scoped memory for multibranch_forward_pallas.10']
    #allocation6 [shape = 'u8[512]{0}', space=vmem, size = 0x400, scoped, tag = 'input window, operand 3, single buffered']
    #allocation7 [shape = 'u8[20480]{0}', space=vmem, size = 0x5000, scoped, tag = 'input window, operand 4, single buffered']
    #allocation8 [shape = 's32[1]{0}', space=sflag, size = 0x4, scoped, tag = 'scoped memory for multibranch_forward_pallas.10']
    %10 = vsyncpa [#allocation3], 0
    %11 = vsyncpa [#allocation5], 0
    %12 = vsyncpa [#allocation8], 0
    loop: start=0, step=1, limit=4
    $region2: #{multibranch_forward_pallas.10} parent=1 // loop_pre_header
      _
    $region3: #{multibranch_forward_pallas.10} parent=1 // loop_header
      %s14 = sphi 0, %s18
      %p15 = scmp.ge.s32.totalorder %s14, 4
      %s24 = sphi 0, %s26
      %s27 = sphi 0, %s24
      %s28 = sphi 0, %s27
      %s44 = sphi 0, %s28
      %s48 = sphi 0, %s48
      %s50 = sphi 0, %s48
      %s51 = sphi 0, %s50
      %s65 = sphi 0, %s51
      %s69 = sphi 0, %s69
      %s71 = sphi 0, %s69
      %s72 = sphi 0, %s71
      %s86 = sphi 0, %s72
      %s90 = sphi 0, %s90
      %s92 = sphi 0, %s90
      %s93 = sphi 0, %s92
      %s107 = sphi 0, %s93
      %s111 = sphi 0, %s111
      %s113 = sphi 0, %s111
      %s114 = sphi 0, %s113
      %s128 = sphi 0, %s114
      %s134 = sphi 0, %s136
      %s137 = sphi 0, %s134
      %s138 = sphi 0, %s137
      %s154 = sphi 0, %s138
    $region4: #{multibranch_forward_pallas.10} parent=1 // loop_header_branch
      %17 = sbr.rel (%p15) target = $region8
    $region5: #{multibranch_forward_pallas.10} parent=1 // loop_body
      %s19 = ssub.s32 %s14, 1
      %s20 = ssub.s32 %s14, 2
      %s21 = sadd.s32 %s14, 1
      %s22 = ssub.s32 %s14, %s21
      %p23 = scmp.eq.s32.totalorder %s22, 0
      %s25 = sadd.s32 %s24, 1
      %s26 = scalar_select %p23, %s24, %s25
      %p29 = pneg %p23
      %p30 = scmp.eq.s32.totalorder %s14, 1
      %p31 = por %p29, %p30
      %p32 = scmp.ne.s32.totalorder %s24, %s27
      %p33 = scmp.eq.s32.totalorder %s14, 0
      %p34 = por %p32, %p33
      %p35 = scmp.ne.s32.totalorder %s24, %s27
      %p36 = scmp.eq.s32.totalorder %s19, 1
      %p37 = por %p35, %p36
      %p38 = scmp.ne.s32.totalorder %s27, %s28
      %p39 = scmp.eq.s32.totalorder %s19, 0
      %p40 = por %p38, %p39
      %p41 = scmp.ne.s32.totalorder %s27, %s28
      %p42 = scmp.eq.s32.totalorder %s20, 1
      %p43 = por %p41, %p42
      %p45 = scmp.ne.s32.totalorder %s28, %s44
      %p46 = scmp.eq.s32.totalorder %s20, 0
      %p47 = por %p45, %p46
      %s49 = sadd.s32 %s48, 1
      %p52 = scmp.eq.s32.totalorder %s14, 1
      %p53 = scmp.ne.s32.totalorder %s48, %s50
      %p54 = scmp.eq.s32.totalorder %s14, 0
      %p55 = por %p53, %p54
      %p56 = scmp.ne.s32.totalorder %s48, %s50
      %p57 = scmp.eq.s32.totalorder %s19, 1
      %p58 = por %p56, %p57
      %p59 = scmp.ne.s32.totalorder %s50, %s51
      %p60 = scmp.eq.s32.totalorder %s19, 0
      %p61 = por %p59, %p60
      %p62 = scmp.ne.s32.totalorder %s50, %s51
      %p63 = scmp.eq.s32.totalorder %s20, 1
      %p64 = por %p62, %p63
      %p66 = scmp.ne.s32.totalorder %s51, %s65
      %p67 = scmp.eq.s32.totalorder %s20, 0
      %p68 = por %p66, %p67
      %s70 = sadd.s32 %s69, 1
      %p73 = scmp.eq.s32.totalorder %s14, 1
      %p74 = scmp.ne.s32.totalorder %s69, %s71
      %p75 = scmp.eq.s32.totalorder %s14, 0
      %p76 = por %p74, %p75
      %p77 = scmp.ne.s32.totalorder %s69, %s71
      %p78 = scmp.eq.s32.totalorder %s19, 1
      %p79 = por %p77, %p78
      %p80 = scmp.ne.s32.totalorder %s71, %s72
      %p81 = scmp.eq.s32.totalorder %s19, 0
      %p82 = por %p80, %p81
      %p83 = scmp.ne.s32.totalorder %s71, %s72
      %p84 = scmp.eq.s32.totalorder %s20, 1
      %p85 = por %p83, %p84
      %p87 = scmp.ne.s32.totalorder %s72, %s86
      %p88 = scmp.eq.s32.totalorder %s20, 0
      %p89 = por %p87, %p88
      %s91 = sadd.s32 %s90, 1
      %p94 = scmp.eq.s32.totalorder %s14, 1
      %p95 = scmp.ne.s32.totalorder %s90, %s92
      %p96 = scmp.eq.s32.totalorder %s14, 0
      %p97 = por %p95, %p96
      %p98 = scmp.ne.s32.totalorder %s90, %s92
      %p99 = scmp.eq.s32.totalorder %s19, 1
      %p100 = por %p98, %p99
      %p101 = scmp.ne.s32.totalorder %s92, %s93
      %p102 = scmp.eq.s32.totalorder %s19, 0
      %p103 = por %p101, %p102
      %p104 = scmp.ne.s32.totalorder %s92, %s93
      %p105 = scmp.eq.s32.totalorder %s20, 1
      %p106 = por %p104, %p105
      %p108 = scmp.ne.s32.totalorder %s93, %s107
      %p109 = scmp.eq.s32.totalorder %s20, 0
      %p110 = por %p108, %p109
      %s112 = sadd.s32 %s111, 1
      %p115 = scmp.eq.s32.totalorder %s14, 1
      %p116 = scmp.ne.s32.totalorder %s111, %s113
      %p117 = scmp.eq.s32.totalorder %s14, 0
      %p118 = por %p116, %p117
      %p119 = scmp.ne.s32.totalorder %s111, %s113
      %p120 = scmp.eq.s32.totalorder %s19, 1
      %p121 = por %p119, %p120
      %p122 = scmp.ne.s32.totalorder %s113, %s114
      %p123 = scmp.eq.s32.totalorder %s19, 0
      %p124 = por %p122, %p123
      %p125 = scmp.ne.s32.totalorder %s113, %s114
      %p126 = scmp.eq.s32.totalorder %s20, 1
      %p127 = por %p125, %p126
      %p129 = scmp.ne.s32.totalorder %s114, %s128
      %p130 = scmp.eq.s32.totalorder %s20, 0
      %p131 = por %p129, %p130
      %s132 = ssub.s32 %s14, %s21
      %p133 = scmp.eq.s32.totalorder %s132, 0
      %s135 = sadd.s32 %s134, 1
      %s136 = scalar_select %p133, %s134, %s135
      %p139 = pneg %p133
      %p140 = scmp.eq.s32.totalorder %s14, 1
      %p141 = por %p139, %p140
      %p142 = scmp.ne.s32.totalorder %s134, %s137
      %p143 = scmp.eq.s32.totalorder %s14, 0
      %p144 = por %p142, %p143
      %p145 = scmp.ne.s32.totalorder %s134, %s137
      %p146 = scmp.eq.s32.totalorder %s19, 1
      %p147 = por %p145, %p146
      %p148 = scmp.ne.s32.totalorder %s137, %s138
      %p149 = scmp.eq.s32.totalorder %s19, 0
      %p150 = por %p148, %p149
      %p151 = scmp.ne.s32.totalorder %s137, %s138
      %p152 = scmp.eq.s32.totalorder %s20, 1
      %p153 = por %p151, %p152
      %p155 = scmp.ne.s32.totalorder %s138, %s154
      %p156 = scmp.eq.s32.totalorder %s20, 0
      %p157 = por %p155, %p156
      %p158 = scmp.le.s32.totalorder 1, %s14
      %p159 = scmp.lt.s32.totalorder %s14, 3
      %p160 = pnand %p158, %p159
      %p161 = pneg %p160
      // Predicated region
      $region9: #{multibranch_forward_pallas.10} parent=5 // pred_check
        _
      $region10: #{multibranch_forward_pallas.10} parent=5 // pred_check_branch
        %163 = sbr.rel (%p160) target = $region12
      $region11: #{multibranch_forward_pallas.10} parent=5 // pred_region
        %s164 = ssub.s32 %s14, 1
        // Predicated region
        $region13: #{multibranch_forward_pallas.10} parent=11 // pred_check
          %p165 = pneg %p61
        $region14: #{multibranch_forward_pallas.10} parent=11 // pred_check_branch
          %167 = sbr.rel (%p165) target = $region16
        $region15: #{multibranch_forward_pallas.10} parent=11 // pred_region
          %169 = vsyncadd [#allocation3], 0
          %s170 = sshll.u32 %s1, 4
          %s171 = int_to_ptr.hbm [resolvable:$true] %s170
          %s172 = sshll.u32 [#allocation2], 4
          %s173 = int_to_ptr.vmem [resolvable:$true] %s172
          %178 = dma.hbm_to_vmem [thread:$0]  %s171, 2048, %s173, [#allocation3], 128, 128, 8
        $region16: #{multibranch_forward_pallas.10} parent=11 // pred_fallthru
          _
        // Predicated region
        $region17: #{multibranch_forward_pallas.10} parent=11 // pred_check
          %p179 = pneg %p82
        $region18: #{multibranch_forward_pallas.10} parent=11 // pred_check_branch
          %181 = sbr.rel (%p179) target = $region20
        $region19: #{multibranch_forward_pallas.10} parent=11 // pred_region
          %183 = vsyncadd [#allocation5], 0
          %s185 = sshll.u32 %s2, 4
          %s186 = int_to_ptr.hbm [resolvable:$true] %s185
          %s187 = sshll.u32 [#allocation4], 4
          %s188 = int_to_ptr.vmem [resolvable:$true] %s187
          %190 = dma.hbm_to_vmem [thread:$0]  %s186, 16, %s188, [#allocation5]
        $region20: #{multibranch_forward_pallas.10} parent=11 // pred_fallthru
          _
        // Predicated region
        $region21: #{multibranch_forward_pallas.10} parent=11 // pred_check
          %p191 = pneg %p103
        $region22: #{multibranch_forward_pallas.10} parent=11 // pred_check_branch
          %193 = sbr.rel (%p191) target = $region24
        $region23: #{multibranch_forward_pallas.10} parent=11 // pred_region
          %195 = vsyncadd [#allocation5], 0
          %s197 = sshll.u32 %s3, 4
          %s198 = int_to_ptr.hbm [resolvable:$true] %s197
          %s199 = sshll.u32 [#allocation6], 4
          %s200 = int_to_ptr.vmem [resolvable:$true] %s199
          %202 = dma.hbm_to_vmem [thread:$0]  %s198, 16, %s200, [#allocation5]
        $region24: #{multibranch_forward_pallas.10} parent=11 // pred_fallthru
          _
        // Predicated region
        $region25: #{multibranch_forward_pallas.10} parent=11 // pred_check
          %p203 = pneg %p124
        $region26: #{multibranch_forward_pallas.10} parent=11 // pred_check_branch
          %205 = sbr.rel (%p203) target = $region28
        $region27: #{multibranch_forward_pallas.10} parent=11 // pred_region
          %207 = vsyncadd [#allocation8], 0
          %s208 = sshll.u32 %s4, 4
          %s209 = int_to_ptr.hbm [resolvable:$true] %s208
          %s210 = sshll.u32 [#allocation7], 4
          %s211 = int_to_ptr.vmem [resolvable:$true] %s210
          %216 = dma.hbm_to_vmem [thread:$0]  %s209, 640, %s211, [#allocation8], 128, 128, 8
        $region28: #{multibranch_forward_pallas.10} parent=11 // pred_fallthru
          _
      $region12: #{multibranch_forward_pallas.10} parent=5 // pred_fallthru
        _
      %p217 = scmp.lt.s32.totalorder %s14, 2
      // Predicated region
      $region29: #{multibranch_forward_pallas.10} parent=5 // pred_check
        %p218 = pneg %p217
      $region30: #{multibranch_forward_pallas.10} parent=5 // pred_check_branch
        %220 = sbr.rel (%p218) target = $region32
      $region31: #{multibranch_forward_pallas.10} parent=5 // pred_region
        // Predicated region
        $region33: #{multibranch_forward_pallas.10} parent=31 // pred_check
          %p221 = pneg %p34
        $region34: #{multibranch_forward_pallas.10} parent=31 // pred_check_branch
          %223 = sbr.rel (%p221) target = $region36
        $region35: #{multibranch_forward_pallas.10} parent=31 // pred_region
          %p224 = scmp.lt.s32.totalorder %s14, 1
          %s225 = scalar_select %p224, %s14, 1
          %s226 = smul.addr %s225, 12
          %s227 = smul.addr %s226, 8
          %s228 = scalar_lea.vmem %s0, %s227
        $region36: #{multibranch_forward_pallas.10} parent=31 // pred_fallthru
          _
      $region32: #{multibranch_forward_pallas.10} parent=5 // pred_fallthru
        _
      %p229 = scmp.le.s32.totalorder 1, %s14
      %p230 = scmp.lt.s32.totalorder %s14, 3
      %p231 = pnand %p229, %p230
      %p232 = pneg %p231
      // Predicated region
      $region37: #{multibranch_forward_pallas.10} parent=5 // pred_check
        _
      $region38: #{multibranch_forward_pallas.10} parent=5 // pred_check_branch
        %234 = sbr.rel (%p231) target = $region40
      $region39: #{multibranch_forward_pallas.10} parent=5 // pred_region
        %s235 = ssub.s32 %s14, 1
        // Predicated region
        $region41: #{multibranch_forward_pallas.10} parent=39 // pred_check
          %p236 = pneg %p61
        $region42: #{multibranch_forward_pallas.10} parent=39 // pred_check_branch
          %238 = sbr.rel (%p236) target = $region44
        $region43: #{multibranch_forward_pallas.10} parent=39 // pred_region
          %240 = dma.done [#allocation3], 2048
        $region44: #{multibranch_forward_pallas.10} parent=39 // pred_fallthru
          _
        // Predicated region
        $region45: #{multibranch_forward_pallas.10} parent=39 // pred_check
          %p241 = pneg %p82
        $region46: #{multibranch_forward_pallas.10} parent=39 // pred_check_branch
          %243 = sbr.rel (%p241) target = $region48
        $region47: #{multibranch_forward_pallas.10} parent=39 // pred_region
          %245 = dma.done [#allocation5], 16
        $region48: #{multibranch_forward_pallas.10} parent=39 // pred_fallthru
          _
        // Predicated region
        $region49: #{multibranch_forward_pallas.10} parent=39 // pred_check
          %p246 = pneg %p103
        $region50: #{multibranch_forward_pallas.10} parent=39 // pred_check_branch
          %248 = sbr.rel (%p246) target = $region52
        $region51: #{multibranch_forward_pallas.10} parent=39 // pred_region
          %250 = dma.done [#allocation5], 16
        $region52: #{multibranch_forward_pallas.10} parent=39 // pred_fallthru
          _
        // Predicated region
        $region53: #{multibranch_forward_pallas.10} parent=39 // pred_check
          %p251 = pneg %p124
        $region54: #{multibranch_forward_pallas.10} parent=39 // pred_check_branch
          %253 = sbr.rel (%p251) target = $region56
        $region55: #{multibranch_forward_pallas.10} parent=39 // pred_region
          %255 = dma.done [#allocation8], 640
        $region56: #{multibranch_forward_pallas.10} parent=39 // pred_fallthru
          _
        %p256 = scmp.lt.s32.totalorder %s19, 1
        %s257 = scalar_select %p256, %s19, 1
        %s258 = smul.addr %s257, 12
        %s259 = smul.addr %s258, 8
        %s260 = scalar_lea.vmem %s0, %s259
        %p261 = pneg %p40
        %p262 = pneg %p37
        %p263 = pneg %p61
        %p264 = pneg %p58
        %p265 = pneg %p82
        %p266 = pneg %p79
        %p267 = pneg %p103
        %p268 = pneg %p100
        %p269 = pneg %p124
        %p270 = pneg %p121
        %p271 = pneg %p150
        %p272 = pneg %p147
        %p273 = scmp.lt.s32.totalorder %s19, 1
        %s274 = scalar_select %p273, %s19, 1
        %s275 = smul.addr %s274, 5
        %s276 = smul.addr %s275, 8
        %s277 = scalar_lea.vmem %s5, %s276
        %p278 = scmp.lt.s32.totalorder %s19, 1
        %s279 = scalar_select %p278, %s19, 1
        %s280 = smul.addr %s279, 12
        %s281 = smul.addr %s280, 8
        %s282 = scalar_lea.vmem %s0, %s281
        %p283 = scmp.lt.s32.totalorder %s19, 1
        %s284 = scalar_select %p283, %s19, 1
        %s285 = smul.addr %s284, 5
        %s286 = smul.addr %s285, 8
        %s287 = scalar_lea.vmem %s5, %s286
        %v288 = vld [vmem:[%s282] sm:$0xff]
        %v289 = vld [vmem:[%s282 + $0x8] sm:$0xff]
        %v290 = vld [vmem:[%s282 + $0x10] sm:$0xff]
        %v291 = vld [vmem:[%s282 + $0x18] sm:$0xff]
        %v292 = vld [vmem:[%s282 + $0x20] sm:$0xff]
        %v293 = vld [vmem:[%s282 + $0x28] sm:$0xff]
        %v294 = vld [vmem:[%s282 + $0x30] sm:$0xff]
        %v295 = vld [vmem:[%s282 + $0x38] sm:$0xff]
        %v296 = vld [vmem:[%s282 + $0x40] sm:$0xff]
        %v297 = vld [vmem:[%s282 + $0x48] sm:$0xff]
        %v298 = vld [vmem:[%s282 + $0x50] sm:$0xff]
        %v299 = vld [vmem:[%s282 + $0x58] sm:$0xff]
        %v300 = vld [vmem:[#allocation2] sm:$0xff]
        %v301 = vld [vmem:[#allocation2 + $0x8] sm:$0xff]
        %v302 = vld [vmem:[#allocation2 + $0x10] sm:$0xff]
        %v303 = vld [vmem:[#allocation2 + $0x18] sm:$0xff]
        %v304 = vld [vmem:[#allocation2 + $0x20] sm:$0xff]
        %v305 = vld [vmem:[#allocation2 + $0x28] sm:$0xff]
        %v306 = vld [vmem:[#allocation2 + $0x30] sm:$0xff]
        %v307 = vld [vmem:[#allocation2 + $0x38] sm:$0xff]
        %v308 = vld [vmem:[#allocation2 + $0x40] sm:$0xff]
        %v309 = vld [vmem:[#allocation2 + $0x48] sm:$0xff]
        %v310 = vld [vmem:[#allocation2 + $0x50] sm:$0xff]
        %v311 = vld [vmem:[#allocation2 + $0x58] sm:$0xff]
        %v312 = vld [vmem:[#allocation2 + $0x60] sm:$0xff]
        %v313 = vld [vmem:[#allocation2 + $0x68] sm:$0xff]
        %v314 = vld [vmem:[#allocation2 + $0x70] sm:$0xff]
        %v315 = vld [vmem:[#allocation2 + $0x78] sm:$0xff]
        %316 = vmatpush.msra.mxu0 %v315
        %317 = vmatpush.msra.mxu0 %v314
        %318 = vmatpush.msra.mxu0 %v313
        %319 = vmatpush.msra.mxu0 %v312
        %320 = vmatpush.msra.mxu0 %v311
        %321 = vmatpush.msra.mxu0 %v310
        %322 = vmatpush.msra.mxu0 %v309
        %323 = vmatpush.msra.mxu0 %v308
        %324 = vmatpush.msra.mxu0 %v307
        %325 = vmatpush.msra.mxu0 %v306
        %326 = vmatpush.msra.mxu0 %v305
        %327 = vmatpush.msra.mxu0 %v304
        %328 = vmatpush.msra.mxu0 %v303
        %329 = vmatpush.msra.mxu0 %v302
        %330 = vmatpush.msra.mxu0 %v301
        %331 = vmatpush.msra.mxu0 %v300
        %332 = vmatmul.f32.gmra.mxu0 %v288
        %v333 = vpop.f32.mrf.mxu0
        %v334 = vadd.f32 0.0, %v333
        %335 = vmatmul.f32.gmra.mxu0 %v289
        %v336 = vpop.f32.mrf.mxu0
        %v337 = vadd.f32 0.0, %v336
        %338 = vmatmul.f32.gmra.mxu0 %v290
        %v339 = vpop.f32.mrf.mxu0
        %v340 = vadd.f32 0.0, %v339
        %341 = vmatmul.f32.gmra.mxu0 %v291
        %v342 = vpop.f32.mrf.mxu0
        %v343 = vadd.f32 0.0, %v342
        %344 = vmatmul.f32.gmra.mxu0 %v292
        %v345 = vpop.f32.mrf.mxu0
        %v346 = vadd.f32 0.0, %v345
        %347 = vmatmul.f32.gmra.mxu0 %v293
        %v348 = vpop.f32.mrf.mxu0
        %v349 = vadd.f32 0.0, %v348
        %350 = vmatmul.f32.gmra.mxu0 %v294
        %v351 = vpop.f32.mrf.mxu0
        %v352 = vadd.f32 0.0, %v351
        %353 = vmatmul.f32.gmra.mxu0 %v295
        %v354 = vpop.f32.mrf.mxu0
        %v355 = vadd.f32 0.0, %v354
        %356 = vmatmul.f32.gmra.mxu0 %v296
        %v357 = vpop.f32.mrf.mxu0
        %v358 = vadd.f32 0.0, %v357
        %359 = vmatmul.f32.gmra.mxu0 %v297
        %v360 = vpop.f32.mrf.mxu0
        %v361 = vadd.f32 0.0, %v360
        %362 = vmatmul.f32.gmra.mxu0 %v298
        %v363 = vpop.f32.mrf.mxu0
        %v364 = vadd.f32 0.0, %v363
        %365 = vmatmul.f32.gmra.mxu0 %v299
        %v366 = vpop.f32.mrf.mxu0
        %v367 = vadd.f32 0.0, %v366
        %368 = vdwg.mxu0
        %v369 = vld [vmem:[#allocation4] sm:$0x1]
        %v371 = vperm.slane %v369, 0
        %v373 = vmul.f32 %v334, %v371
        %v374 = vmul.f32 %v337, %v371
        %v375 = vmul.f32 %v340, %v371
        %v376 = vmul.f32 %v343, %v371
        %v377 = vmul.f32 %v346, %v371
        %v378 = vmul.f32 %v349, %v371
        %v379 = vmul.f32 %v352, %v371
        %v380 = vmul.f32 %v355, %v371
        %v381 = vmul.f32 %v358, %v371
        %v382 = vmul.f32 %v361, %v371
        %v383 = vmul.f32 %v364, %v371
        %v384 = vmul.f32 %v367, %v371
        %v385 = vld [vmem:[#allocation6] sm:$0x1]
        %v387 = vperm.slane %v385, 0
        %v389 = vadd.f32 %v373, %v387
        %v390 = vadd.f32 %v374, %v387
        %v391 = vadd.f32 %v375, %v387
        %v392 = vadd.f32 %v376, %v387
        %v393 = vadd.f32 %v377, %v387
        %v394 = vadd.f32 %v378, %v387
        %v395 = vadd.f32 %v379, %v387
        %v396 = vadd.f32 %v380, %v387
        %v397 = vadd.f32 %v381, %v387
        %v398 = vadd.f32 %v382, %v387
        %v399 = vadd.f32 %v383, %v387
        %v400 = vadd.f32 %v384, %v387
        %vm401 = vcmp.gt.f32.partialorder %v389, 0.0
        %vm402 = vcmp.gt.f32.partialorder %v390, 0.0
        %vm403 = vcmp.gt.f32.partialorder %v391, 0.0
        %vm404 = vcmp.gt.f32.partialorder %v392, 0.0
        %vm405 = vcmp.gt.f32.partialorder %v393, 0.0
        %vm406 = vcmp.gt.f32.partialorder %v394, 0.0
        %vm407 = vcmp.gt.f32.partialorder %v395, 0.0
        %vm408 = vcmp.gt.f32.partialorder %v396, 0.0
        %vm409 = vcmp.gt.f32.partialorder %v397, 0.0
        %vm410 = vcmp.gt.f32.partialorder %v398, 0.0
        %vm411 = vcmp.gt.f32.partialorder %v399, 0.0
        %vm412 = vcmp.gt.f32.partialorder %v400, 0.0
        %v413 = vmul.f32 %v389, 1.442695
        %v414 = vpow.pop %v413
        %v415 = vmul.f32 %v390, 1.442695
        %v416 = vpow.pop %v415
        %v417 = vmul.f32 %v391, 1.442695
        %v418 = vpow.pop %v417
        %v419 = vmul.f32 %v392, 1.442695
        %v420 = vpow.pop %v419
        %v421 = vmul.f32 %v393, 1.442695
        %v422 = vpow.pop %v421
        %v423 = vmul.f32 %v394, 1.442695
        %v424 = vpow.pop %v423
        %v425 = vmul.f32 %v395, 1.442695
        %v426 = vpow.pop %v425
        %v427 = vmul.f32 %v396, 1.442695
        %v428 = vpow.pop %v427
        %v429 = vmul.f32 %v397, 1.442695
        %v430 = vpow.pop %v429
        %v431 = vmul.f32 %v398, 1.442695
        %v432 = vpow.pop %v431
        %v433 = vmul.f32 %v399, 1.442695
        %v434 = vpow.pop %v433
        %v435 = vmul.f32 %v400, 1.442695
        %v436 = vpow.pop %v435
        %v437 = vsub.f32 %v414, 1.0
        %v438 = vsub.f32 %v416, 1.0
        %v439 = vsub.f32 %v418, 1.0
        %v440 = vsub.f32 %v420, 1.0
        %v441 = vsub.f32 %v422, 1.0
        %v442 = vsub.f32 %v424, 1.0
        %v443 = vsub.f32 %v426, 1.0
        %v444 = vsub.f32 %v428, 1.0
        %v445 = vsub.f32 %v430, 1.0
        %v446 = vsub.f32 %v432, 1.0
        %v447 = vsub.f32 %v434, 1.0
        %v448 = vsub.f32 %v436, 1.0
        %v449 = vsel %vm401, %v389, %v437
        %v450 = vsel %vm402, %v390, %v438
        %v451 = vsel %vm403, %v391, %v439
        %v452 = vsel %vm404, %v392, %v440
        %v453 = vsel %vm405, %v393, %v441
        %v454 = vsel %vm406, %v394, %v442
        %v455 = vsel %vm407, %v395, %v443
        %v456 = vsel %vm408, %v396, %v444
        %v457 = vsel %vm409, %v397, %v445
        %v458 = vsel %vm410, %v398, %v446
        %v459 = vsel %vm411, %v399, %v447
        %v460 = vsel %vm412, %v400, %v448
        %v461 = vld [vmem:[#allocation7] sm:$0xff]
        %v462 = vld [vmem:[#allocation7 + $0x8] sm:$0xff]
        %v463 = vld [vmem:[#allocation7 + $0x10] sm:$0xff]
        %v464 = vld [vmem:[#allocation7 + $0x18] sm:$0xff]
        %v465 = vld [vmem:[#allocation7 + $0x20] sm:$0x1f]
        %vm466 = vcmask 785408
        %v468 = vsel %vm466, %v461, 0
        %v471 = vsel %vm466, %v462, 0
        %v474 = vsel %vm466, %v463, 0
        %v477 = vsel %vm466, %v464, 0
        %v480 = vsel %vm466, %v465, 0
        %482 = vmatpush.msra.mxu0 0.0
        %483 = vmatpush.msra.mxu0 0.0
        %484 = vmatpush.msra.mxu0 0.0
        %485 = vmatpush.msra.mxu0 0.0
        %486 = vmatpush.msra.mxu0 %v460
        %487 = vmatpush.msra.mxu0 %v459
        %488 = vmatpush.msra.mxu0 %v458
        %489 = vmatpush.msra.mxu0 %v457
        %490 = vmatpush.msra.mxu0 %v456
        %491 = vmatpush.msra.mxu0 %v455
        %492 = vmatpush.msra.mxu0 %v454
        %493 = vmatpush.msra.mxu0 %v453
        %494 = vmatpush.msra.mxu0 %v452
        %495 = vmatpush.msra.mxu0 %v451
        %496 = vmatpush.msra.mxu0 %v450
        %497 = vmatpush.msra.mxu0 %v449
        %498 = vmatmul.f32.gmra.mxu0 %v468
        %v499 = vpop.f32.mrf.mxu0
        %v500 = vadd.f32 0.0, %v499
        %501 = vmatmul.f32.gmra.mxu0 %v471
        %v502 = vpop.f32.mrf.mxu0
        %v503 = vadd.f32 0.0, %v502
        %504 = vmatmul.f32.gmra.mxu0 %v474
        %v505 = vpop.f32.mrf.mxu0
        %v506 = vadd.f32 0.0, %v505
        %507 = vmatmul.f32.gmra.mxu0 %v477
        %v508 = vpop.f32.mrf.mxu0
        %v509 = vadd.f32 0.0, %v508
        %510 = vmatmul.f32.gmra.mxu0 %v480
        %v511 = vpop.f32.mrf.mxu0
        %v512 = vadd.f32 0.0, %v511
        %513 = vdwg.mxu0
        %514 = vst [vmem:[%s287] sm:$0xff] %v500
        %515 = vst [vmem:[%s287 + $0x8] sm:$0xff] %v503
        %516 = vst [vmem:[%s287 + $0x10] sm:$0xff] %v506
        %517 = vst [vmem:[%s287 + $0x18] sm:$0xff] %v509
        %518 = vst [vmem:[%s287 + $0x20] sm:$0x1f] %v512
        %p519 = scmp.lt.s32.totalorder %s19, 1
        %s520 = scalar_select %p519, %s19, 1
        %s521 = smul.addr %s520, 5
        %s522 = smul.addr %s521, 8
        %s523 = scalar_lea.vmem %s5, %s522
        // Predicated region
        $region57: #{multibranch_forward_pallas.10} parent=39 // pred_check
          %p524 = pneg %p147
        $region58: #{multibranch_forward_pallas.10} parent=39 // pred_check_branch
          %526 = sbr.rel (%p524) target = $region60
        $region59: #{multibranch_forward_pallas.10} parent=39 // pred_region
          _
        $region60: #{multibranch_forward_pallas.10} parent=39 // pred_fallthru
          _
      $region40: #{multibranch_forward_pallas.10} parent=5 // pred_fallthru
        _
      %p527 = scmp.le.s32.totalorder 2, %s14
      // Predicated region
      $region61: #{multibranch_forward_pallas.10} parent=5 // pred_check
        %p528 = pneg %p527
      $region62: #{multibranch_forward_pallas.10} parent=5 // pred_check_branch
        %530 = sbr.rel (%p528) target = $region64
      $region63: #{multibranch_forward_pallas.10} parent=5 // pred_region
        %s531 = ssub.s32 %s14, 2
        // Predicated region
        $region65: #{multibranch_forward_pallas.10} parent=63 // pred_check
          %p532 = pneg %p153
        $region66: #{multibranch_forward_pallas.10} parent=63 // pred_check_branch
          %534 = sbr.rel (%p532) target = $region68
        $region67: #{multibranch_forward_pallas.10} parent=63 // pred_region
          %p535 = scmp.lt.s32.totalorder %s20, 1
          %s536 = scalar_select %p535, %s20, 1
          %s537 = smul.addr %s536, 5
          %s538 = smul.addr %s537, 8
          %s539 = scalar_lea.vmem %s5, %s538
        $region68: #{multibranch_forward_pallas.10} parent=63 // pred_fallthru
          _
      $region64: #{multibranch_forward_pallas.10} parent=5 // pred_fallthru
        _
    $region6: #{multibranch_forward_pallas.10} parent=1 // loop_footer
      %s18 = sadd.s32 1, %s14
    $region7: #{multibranch_forward_pallas.10} parent=1 // loop_footer_branch
      %13 = sbr.rel target = $region3
    $region8: #{multibranch_forward_pallas.10} parent=1 // loop_exit
      _
    %540 = vsyncpa [#allocation3], 1
    %s541 = scalar_lea.sflag [#allocation3], 1
    %542 = vsyncpa %s541, 1
    %543 = vsyncpa [#allocation5], 1
    %544 = vsyncpa [#allocation8], 1

// kernel: multibranch_forward_pallas.9
$region0: #{multibranch_forward_pallas.9}
  #allocation0 [shape = 'u32[]', space=smem, size = 0x4, offset = 0x4, fixed_abs, tag = 'smem constant byte address 0x4 - core index']
  #allocation1 [shape = 'u32[72,128]{1,0:T(1,128)}', space=vmem, size = 0x9000, scoped, tag = 'internal scratch']
  %s0 = inlined_call_operand.vmem [shape: f32[2,98,128], index: 0, kind: input, shape index: {}]
  %s1 = inlined_call_operand.hbm [shape: f32[3,128,128], index: 1, kind: input, shape index: {}]
  %s2 = inlined_call_operand.hbm [shape: f32[1,128], index: 2, kind: input, shape index: {}]
  %s3 = inlined_call_operand.hbm [shape: f32[1,128], index: 3, kind: input, shape index: {}]
  %s4 = inlined_call_operand.vmem [shape: f32[2,96,128], index: 4, kind: output, shape index: {}]
  %s5 = sld [smem:[#allocation0]]
  $region61: #{multibranch_forward_pallas.9} parent=0
    _
  %s7 = ssub.s32 1, %s5
  %s8 = scalar_select 0, %s7, %s5
  $region1: #{multibranch_forward_pallas.9} parent=0
    #allocation2 [shape = 'u8[196608]{0}', space=vmem, size = 0x30000, scoped, tag = 'input window, operand 1, single buffered']
    #allocation3 [shape = 's32[2]{0}', space=sflag, size = 0x8, scoped, tag = 'scoped memory for multibranch_forward_pallas.9']
    #allocation4 [shape = 'u8[512]{0}', space=vmem, size = 0x400, scoped, tag = 'input window, operand 2, single buffered']
    #allocation5 [shape = 's32[1]{0}', space=sflag, size = 0x4, scoped, tag = 'scoped memory for multibranch_forward_pallas.9']
    #allocation6 [shape = 'u8[512]{0}', space=vmem, size = 0x400, scoped, tag = 'input window, operand 3, single buffered']
    %9 = vsyncpa [#allocation3], 0
    %10 = vsyncpa [#allocation5], 0
    loop: start=0, step=1, limit=4
    $region2: #{multibranch_forward_pallas.9} parent=1 // loop_pre_header
      _
    $region3: #{multibranch_forward_pallas.9} parent=1 // loop_header
      %s12 = sphi 0, %s16
      %p13 = scmp.ge.s32.totalorder %s12, 4
      %s22 = sphi 0, %s24
      %s25 = sphi 0, %s22
      %s26 = sphi 0, %s25
      %s42 = sphi 0, %s26
      %s46 = sphi 0, %s46
      %s48 = sphi 0, %s46
      %s49 = sphi 0, %s48
      %s63 = sphi 0, %s49
      %s67 = sphi 0, %s67
      %s69 = sphi 0, %s67
      %s70 = sphi 0, %s69
      %s84 = sphi 0, %s70
      %s88 = sphi 0, %s88
      %s90 = sphi 0, %s88
      %s91 = sphi 0, %s90
      %s105 = sphi 0, %s91
      %s111 = sphi 0, %s113
      %s114 = sphi 0, %s111
      %s115 = sphi 0, %s114
      %s131 = sphi 0, %s115
    $region4: #{multibranch_forward_pallas.9} parent=1 // loop_header_branch
      %15 = sbr.rel (%p13) target = $region8
    $region5: #{multibranch_forward_pallas.9} parent=1 // loop_body
      %s17 = ssub.s32 %s12, 1
      %s18 = ssub.s32 %s12, 2
      %s19 = sadd.s32 %s12, 1
      %s20 = ssub.s32 %s12, %s19
      %p21 = scmp.eq.s32.totalorder %s20, 0
      %s23 = sadd.s32 %s22, 1
      %s24 = scalar_select %p21, %s22, %s23
      %p27 = pneg %p21
      %p28 = scmp.eq.s32.totalorder %s12, 1
      %p29 = por %p27, %p28
      %p30 = scmp.ne.s32.totalorder %s22, %s25
      %p31 = scmp.eq.s32.totalorder %s12, 0
      %p32 = por %p30, %p31
      %p33 = scmp.ne.s32.totalorder %s22, %s25
      %p34 = scmp.eq.s32.totalorder %s17, 1
      %p35 = por %p33, %p34
      %p36 = scmp.ne.s32.totalorder %s25, %s26
      %p37 = scmp.eq.s32.totalorder %s17, 0
      %p38 = por %p36, %p37
      %p39 = scmp.ne.s32.totalorder %s25, %s26
      %p40 = scmp.eq.s32.totalorder %s18, 1
      %p41 = por %p39, %p40
      %p43 = scmp.ne.s32.totalorder %s26, %s42
      %p44 = scmp.eq.s32.totalorder %s18, 0
      %p45 = por %p43, %p44
      %s47 = sadd.s32 %s46, 1
      %p50 = scmp.eq.s32.totalorder %s12, 1
      %p51 = scmp.ne.s32.totalorder %s46, %s48
      %p52 = scmp.eq.s32.totalorder %s12, 0
      %p53 = por %p51, %p52
      %p54 = scmp.ne.s32.totalorder %s46, %s48
      %p55 = scmp.eq.s32.totalorder %s17, 1
      %p56 = por %p54, %p55
      %p57 = scmp.ne.s32.totalorder %s48, %s49
      %p58 = scmp.eq.s32.totalorder %s17, 0
      %p59 = por %p57, %p58
      %p60 = scmp.ne.s32.totalorder %s48, %s49
      %p61 = scmp.eq.s32.totalorder %s18, 1
      %p62 = por %p60, %p61
      %p64 = scmp.ne.s32.totalorder %s49, %s63
      %p65 = scmp.eq.s32.totalorder %s18, 0
      %p66 = por %p64, %p65
      %s68 = sadd.s32 %s67, 1
      %p71 = scmp.eq.s32.totalorder %s12, 1
      %p72 = scmp.ne.s32.totalorder %s67, %s69
      %p73 = scmp.eq.s32.totalorder %s12, 0
      %p74 = por %p72, %p73
      %p75 = scmp.ne.s32.totalorder %s67, %s69
      %p76 = scmp.eq.s32.totalorder %s17, 1
      %p77 = por %p75, %p76
      %p78 = scmp.ne.s32.totalorder %s69, %s70
      %p79 = scmp.eq.s32.totalorder %s17, 0
      %p80 = por %p78, %p79
      %p81 = scmp.ne.s32.totalorder %s69, %s70
      %p82 = scmp.eq.s32.totalorder %s18, 1
      %p83 = por %p81, %p82
      %p85 = scmp.ne.s32.totalorder %s70, %s84
      %p86 = scmp.eq.s32.totalorder %s18, 0
      %p87 = por %p85, %p86
      %s89 = sadd.s32 %s88, 1
      %p92 = scmp.eq.s32.totalorder %s12, 1
      %p93 = scmp.ne.s32.totalorder %s88, %s90
      %p94 = scmp.eq.s32.totalorder %s12, 0
      %p95 = por %p93, %p94
      %p96 = scmp.ne.s32.totalorder %s88, %s90
      %p97 = scmp.eq.s32.totalorder %s17, 1
      %p98 = por %p96, %p97
      %p99 = scmp.ne.s32.totalorder %s90, %s91
      %p100 = scmp.eq.s32.totalorder %s17, 0
      %p101 = por %p99, %p100
      %p102 = scmp.ne.s32.totalorder %s90, %s91
      %p103 = scmp.eq.s32.totalorder %s18, 1
      %p104 = por %p102, %p103
      %p106 = scmp.ne.s32.totalorder %s91, %s105
      %p107 = scmp.eq.s32.totalorder %s18, 0
      %p108 = por %p106, %p107
      %s109 = ssub.s32 %s12, %s19
      %p110 = scmp.eq.s32.totalorder %s109, 0
      %s112 = sadd.s32 %s111, 1
      %s113 = scalar_select %p110, %s111, %s112
      %p116 = pneg %p110
      %p117 = scmp.eq.s32.totalorder %s12, 1
      %p118 = por %p116, %p117
      %p119 = scmp.ne.s32.totalorder %s111, %s114
      %p120 = scmp.eq.s32.totalorder %s12, 0
      %p121 = por %p119, %p120
      %p122 = scmp.ne.s32.totalorder %s111, %s114
      %p123 = scmp.eq.s32.totalorder %s17, 1
      %p124 = por %p122, %p123
      %p125 = scmp.ne.s32.totalorder %s114, %s115
      %p126 = scmp.eq.s32.totalorder %s17, 0
      %p127 = por %p125, %p126
      %p128 = scmp.ne.s32.totalorder %s114, %s115
      %p129 = scmp.eq.s32.totalorder %s18, 1
      %p130 = por %p128, %p129
      %p132 = scmp.ne.s32.totalorder %s115, %s131
      %p133 = scmp.eq.s32.totalorder %s18, 0
      %p134 = por %p132, %p133
      %p135 = scmp.le.s32.totalorder 1, %s12
      %p136 = scmp.lt.s32.totalorder %s12, 3
      %p137 = pnand %p135, %p136
      %p138 = pneg %p137
      // Predicated region
      $region9: #{multibranch_forward_pallas.9} parent=5 // pred_check
        _
      $region10: #{multibranch_forward_pallas.9} parent=5 // pred_check_branch
        %140 = sbr.rel (%p137) target = $region12
      $region11: #{multibranch_forward_pallas.9} parent=5 // pred_region
        %s141 = ssub.s32 %s12, 1
        // Predicated region
        $region13: #{multibranch_forward_pallas.9} parent=11 // pred_check
          %p142 = pneg %p59
        $region14: #{multibranch_forward_pallas.9} parent=11 // pred_check_branch
          %144 = sbr.rel (%p142) target = $region16
        $region15: #{multibranch_forward_pallas.9} parent=11 // pred_region
          %146 = vsyncadd [#allocation3], 0
          %s147 = sshll.u32 %s1, 4
          %s148 = int_to_ptr.hbm [resolvable:$true] %s147
          %s149 = sshll.u32 [#allocation2], 4
          %s150 = int_to_ptr.vmem [resolvable:$true] %s149
          %155 = dma.hbm_to_vmem [thread:$0]  %s148, 6144, %s150, [#allocation3], 128, 128, 8
        $region16: #{multibranch_forward_pallas.9} parent=11 // pred_fallthru
          _
        // Predicated region
        $region17: #{multibranch_forward_pallas.9} parent=11 // pred_check
          %p156 = pneg %p80
        $region18: #{multibranch_forward_pallas.9} parent=11 // pred_check_branch
          %158 = sbr.rel (%p156) target = $region20
        $region19: #{multibranch_forward_pallas.9} parent=11 // pred_region
          %160 = vsyncadd [#allocation5], 0
          %s162 = sshll.u32 %s2, 4
          %s163 = int_to_ptr.hbm [resolvable:$true] %s162
          %s164 = sshll.u32 [#allocation4], 4
          %s165 = int_to_ptr.vmem [resolvable:$true] %s164
          %167 = dma.hbm_to_vmem [thread:$0]  %s163, 16, %s165, [#allocation5]
        $region20: #{multibranch_forward_pallas.9} parent=11 // pred_fallthru
          _
        // Predicated region
        $region21: #{multibranch_forward_pallas.9} parent=11 // pred_check
          %p168 = pneg %p101
        $region22: #{multibranch_forward_pallas.9} parent=11 // pred_check_branch
          %170 = sbr.rel (%p168) target = $region24
        $region23: #{multibranch_forward_pallas.9} parent=11 // pred_region
          %172 = vsyncadd [#allocation5], 0
          %s174 = sshll.u32 %s3, 4
          %s175 = int_to_ptr.hbm [resolvable:$true] %s174
          %s176 = sshll.u32 [#allocation6], 4
          %s177 = int_to_ptr.vmem [resolvable:$true] %s176
          %179 = dma.hbm_to_vmem [thread:$0]  %s175, 16, %s177, [#allocation5]
        $region24: #{multibranch_forward_pallas.9} parent=11 // pred_fallthru
          _
      $region12: #{multibranch_forward_pallas.9} parent=5 // pred_fallthru
        _
      %p180 = scmp.lt.s32.totalorder %s12, 2
      // Predicated region
      $region25: #{multibranch_forward_pallas.9} parent=5 // pred_check
        %p181 = pneg %p180
      $region26: #{multibranch_forward_pallas.9} parent=5 // pred_check_branch
        %183 = sbr.rel (%p181) target = $region28
      $region27: #{multibranch_forward_pallas.9} parent=5 // pred_region
        // Predicated region
        $region29: #{multibranch_forward_pallas.9} parent=27 // pred_check
          %p184 = pneg %p32
        $region30: #{multibranch_forward_pallas.9} parent=27 // pred_check_branch
          %186 = sbr.rel (%p184) target = $region32
        $region31: #{multibranch_forward_pallas.9} parent=27 // pred_region
          %p187 = scmp.lt.s32.totalorder %s12, 1
          %s188 = scalar_select %p187, %s12, 1
          %s189 = smul.addr %s188, 13
          %s190 = smul.addr %s189, 8
          %s191 = scalar_lea.vmem %s0, %s190
        $region32: #{multibranch_forward_pallas.9} parent=27 // pred_fallthru
          _
      $region28: #{multibranch_forward_pallas.9} parent=5 // pred_fallthru
        _
      %p192 = scmp.le.s32.totalorder 1, %s12
      %p193 = scmp.lt.s32.totalorder %s12, 3
      %p194 = pnand %p192, %p193
      %p195 = pneg %p194
      // Predicated region
      $region33: #{multibranch_forward_pallas.9} parent=5 // pred_check
        _
      $region34: #{multibranch_forward_pallas.9} parent=5 // pred_check_branch
        %197 = sbr.rel (%p194) target = $region36
      $region35: #{multibranch_forward_pallas.9} parent=5 // pred_region
        %s198 = ssub.s32 %s12, 1
        // Predicated region
        $region37: #{multibranch_forward_pallas.9} parent=35 // pred_check
          %p199 = pneg %p59
        $region38: #{multibranch_forward_pallas.9} parent=35 // pred_check_branch
          %201 = sbr.rel (%p199) target = $region40
        $region39: #{multibranch_forward_pallas.9} parent=35 // pred_region
          %203 = dma.done [#allocation3], 6144
        $region40: #{multibranch_forward_pallas.9} parent=35 // pred_fallthru
          _
        // Predicated region
        $region41: #{multibranch_forward_pallas.9} parent=35 // pred_check
          %p204 = pneg %p80
        $region42: #{multibranch_forward_pallas.9} parent=35 // pred_check_branch
          %206 = sbr.rel (%p204) target = $region44
        $region43: #{multibranch_forward_pallas.9} parent=35 // pred_region
          %208 = dma.done [#allocation5], 16
        $region44: #{multibranch_forward_pallas.9} parent=35 // pred_fallthru
          _
        // Predicated region
        $region45: #{multibranch_forward_pallas.9} parent=35 // pred_check
          %p209 = pneg %p101
        $region46: #{multibranch_forward_pallas.9} parent=35 // pred_check_branch
          %211 = sbr.rel (%p209) target = $region48
        $region47: #{multibranch_forward_pallas.9} parent=35 // pred_region
          %213 = dma.done [#allocation5], 16
        $region48: #{multibranch_forward_pallas.9} parent=35 // pred_fallthru
          _
        %p214 = scmp.lt.s32.totalorder %s17, 1
        %s215 = scalar_select %p214, %s17, 1
        %s216 = smul.addr %s215, 13
        %s217 = smul.addr %s216, 8
        %s218 = scalar_lea.vmem %s0, %s217
        %p219 = pneg %p38
        %p220 = pneg %p35
        %p221 = pneg %p59
        %p222 = pneg %p56
        %p223 = pneg %p80
        %p224 = pneg %p77
        %p225 = pneg %p101
        %p226 = pneg %p98
        %p227 = pneg %p127
        %p228 = pneg %p124
        %p229 = scmp.lt.s32.totalorder %s17, 1
        %s230 = scalar_select %p229, %s17, 1
        %s231 = smul.addr %s230, 12
        %s232 = smul.addr %s231, 8
        %s233 = scalar_lea.vmem %s4, %s232
        %p234 = scmp.lt.s32.totalorder %s17, 1
        %s235 = scalar_select %p234, %s17, 1
        %s236 = smul.addr %s235, 13
        %s237 = smul.addr %s236, 8
        %s238 = scalar_lea.vmem %s0, %s237
        %p239 = scmp.lt.s32.totalorder %s17, 1
        %s240 = scalar_select %p239, %s17, 1
        %s241 = smul.addr %s240, 12
        %s242 = smul.addr %s241, 8
        %s243 = scalar_lea.vmem %s4, %s242
        %v244 = vld [vmem:[%s238] sm:$0xff]
        %v245 = vld [vmem:[%s238 + $0x8] sm:$0xff]
        %v246 = vld [vmem:[%s238 + $0x10] sm:$0xff]
        %v247 = vld [vmem:[%s238 + $0x18] sm:$0xff]
        %v248 = vld [vmem:[%s238 + $0x20] sm:$0xff]
        %v249 = vld [vmem:[%s238 + $0x28] sm:$0xff]
        %v250 = vld [vmem:[%s238 + $0x30] sm:$0xff]
        %v251 = vld [vmem:[%s238 + $0x38] sm:$0xff]
        %v252 = vld [vmem:[%s238 + $0x40] sm:$0xff]
        %v253 = vld [vmem:[%s238 + $0x48] sm:$0xff]
        %v254 = vld [vmem:[%s238 + $0x50] sm:$0xff]
        %v255 = vld [vmem:[%s238 + $0x58] sm:$0xff]
        %v256 = vld [vmem:[#allocation2] sm:$0xff]
        %v257 = vld [vmem:[#allocation2 + $0x8] sm:$0xff]
        %v258 = vld [vmem:[#allocation2 + $0x10] sm:$0xff]
        %v259 = vld [vmem:[#allocation2 + $0x18] sm:$0xff]
        %v260 = vld [vmem:[#allocation2 + $0x20] sm:$0xff]
        %v261 = vld [vmem:[#allocation2 + $0x28] sm:$0xff]
        %v262 = vld [vmem:[#allocation2 + $0x30] sm:$0xff]
        %v263 = vld [vmem:[#allocation2 + $0x38] sm:$0xff]
        %v264 = vld [vmem:[#allocation2 + $0x40] sm:$0xff]
        %v265 = vld [vmem:[#allocation2 + $0x48] sm:$0xff]
        %v266 = vld [vmem:[#allocation2 + $0x50] sm:$0xff]
        %v267 = vld [vmem:[#allocation2 + $0x58] sm:$0xff]
        %v268 = vld [vmem:[#allocation2 + $0x60] sm:$0xff]
        %v269 = vld [vmem:[#allocation2 + $0x68] sm:$0xff]
        %v270 = vld [vmem:[#allocation2 + $0x70] sm:$0xff]
        %v271 = vld [vmem:[#allocation2 + $0x78] sm:$0xff]
        %v272 = vld [vmem:[%s238 + $0x1] sm:$0xff]
        %v273 = vld [vmem:[%s238 + $0x9] sm:$0xff]
        %v274 = vld [vmem:[%s238 + $0x11] sm:$0xff]
        %v275 = vld [vmem:[%s238 + $0x19] sm:$0xff]
        %v276 = vld [vmem:[%s238 + $0x21] sm:$0xff]
        %v277 = vld [vmem:[%s238 + $0x29] sm:$0xff]
        %v278 = vld [vmem:[%s238 + $0x31] sm:$0xff]
        %v279 = vld [vmem:[%s238 + $0x39] sm:$0xff]
        %v280 = vld [vmem:[%s238 + $0x41] sm:$0xff]
        %v281 = vld [vmem:[%s238 + $0x49] sm:$0xff]
        %v282 = vld [vmem:[%s238 + $0x51] sm:$0xff]
        %v283 = vld [vmem:[%s238 + $0x59] sm:$0xff]
        %s284 = scalar_lea.vmem [#allocation2], 128
        %v285 = vld [vmem:[%s284] sm:$0xff]
        %v286 = vld [vmem:[%s284 + $0x8] sm:$0xff]
        %v287 = vld [vmem:[%s284 + $0x10] sm:$0xff]
        %v288 = vld [vmem:[%s284 + $0x18] sm:$0xff]
        %v289 = vld [vmem:[%s284 + $0x20] sm:$0xff]
        %v290 = vld [vmem:[%s284 + $0x28] sm:$0xff]
        %v291 = vld [vmem:[%s284 + $0x30] sm:$0xff]
        %v292 = vld [vmem:[%s284 + $0x38] sm:$0xff]
        %v293 = vld [vmem:[%s284 + $0x40] sm:$0xff]
        %v294 = vld [vmem:[%s284 + $0x48] sm:$0xff]
        %v295 = vld [vmem:[%s284 + $0x50] sm:$0xff]
        %v296 = vld [vmem:[%s284 + $0x58] sm:$0xff]
        %v297 = vld [vmem:[%s284 + $0x60] sm:$0xff]
        %v298 = vld [vmem:[%s284 + $0x68] sm:$0xff]
        %v299 = vld [vmem:[%s284 + $0x70] sm:$0xff]
        %v300 = vld [vmem:[%s284 + $0x78] sm:$0xff]
        %301 = vmatpush.msra.mxu0 %v300
        %302 = vmatpush.msra.mxu0 %v299
        %303 = vmatpush.msra.mxu0 %v298
        %304 = vmatpush.msra.mxu0 %v297
        %305 = vmatpush.msra.mxu0 %v296
        %306 = vmatpush.msra.mxu0 %v295
        %307 = vmatpush.msra.mxu0 %v294
        %308 = vmatpush.msra.mxu0 %v293
        %309 = vmatpush.msra.mxu0 %v292
        %310 = vmatpush.msra.mxu0 %v291
        %311 = vmatpush.msra.mxu0 %v290
        %312 = vmatpush.msra.mxu0 %v289
        %313 = vmatpush.msra.mxu0 %v288
        %314 = vmatpush.msra.mxu0 %v287
        %315 = vmatpush.msra.mxu0 %v286
        %316 = vmatpush.msra.mxu0 %v285
        %317 = vmatmul.f32.gmra.mxu0 %v272
        %v318 = vpop.f32.mrf.mxu0
        %v319 = vadd.f32 0.0, %v318
        %320 = vmatmul.f32.gmra.mxu0 %v273
        %v321 = vpop.f32.mrf.mxu0
        %v322 = vadd.f32 0.0, %v321
        %323 = vmatmul.f32.gmra.mxu0 %v274
        %v324 = vpop.f32.mrf.mxu0
        %v325 = vadd.f32 0.0, %v324
        %326 = vmatmul.f32.gmra.mxu0 %v275
        %v327 = vpop.f32.mrf.mxu0
        %v328 = vadd.f32 0.0, %v327
        %329 = vmatmul.f32.gmra.mxu0 %v276
        %v330 = vpop.f32.mrf.mxu0
        %v331 = vadd.f32 0.0, %v330
        %332 = vmatmul.f32.gmra.mxu0 %v277
        %v333 = vpop.f32.mrf.mxu0
        %v334 = vadd.f32 0.0, %v333
        %335 = vmatmul.f32.gmra.mxu0 %v278
        %v336 = vpop.f32.mrf.mxu0
        %v337 = vadd.f32 0.0, %v336
        %338 = vmatmul.f32.gmra.mxu0 %v279
        %v339 = vpop.f32.mrf.mxu0
        %v340 = vadd.f32 0.0, %v339
        %341 = vmatmul.f32.gmra.mxu0 %v280
        %v342 = vpop.f32.mrf.mxu0
        %v343 = vadd.f32 0.0, %v342
        %344 = vmatmul.f32.gmra.mxu0 %v281
        %v345 = vpop.f32.mrf.mxu0
        %v346 = vadd.f32 0.0, %v345
        %347 = vmatmul.f32.gmra.mxu0 %v282
        %v348 = vpop.f32.mrf.mxu0
        %v349 = vadd.f32 0.0, %v348
        %350 = vmatmul.f32.gmra.mxu0 %v283
        %v351 = vpop.f32.mrf.mxu0
        %v352 = vadd.f32 0.0, %v351
        %353 = vdwg.mxu0
        %354 = vmatpush.msra.mxu0 %v271
        %355 = vmatpush.msra.mxu0 %v270
        %356 = vmatpush.msra.mxu0 %v269
        %357 = vmatpush.msra.mxu0 %v268
        %358 = vmatpush.msra.mxu0 %v267
        %359 = vmatpush.msra.mxu0 %v266
        %360 = vmatpush.msra.mxu0 %v265
        %361 = vmatpush.msra.mxu0 %v264
        %362 = vmatpush.msra.mxu0 %v263
        %363 = vmatpush.msra.mxu0 %v262
        %364 = vmatpush.msra.mxu0 %v261
        %365 = vmatpush.msra.mxu0 %v260
        %366 = vmatpush.msra.mxu0 %v259
        %367 = vmatpush.msra.mxu0 %v258
        %368 = vmatpush.msra.mxu0 %v257
        %369 = vmatpush.msra.mxu0 %v256
        %370 = vmatmul.f32.gmra.mxu0 %v244
        %v371 = vpop.f32.mrf.mxu0
        %v372 = vadd.f32 %v319, %v371
        %373 = vmatmul.f32.gmra.mxu0 %v245
        %v374 = vpop.f32.mrf.mxu0
        %v375 = vadd.f32 %v322, %v374
        %376 = vmatmul.f32.gmra.mxu0 %v246
        %v377 = vpop.f32.mrf.mxu0
        %v378 = vadd.f32 %v325, %v377
        %379 = vmatmul.f32.gmra.mxu0 %v247
        %v380 = vpop.f32.mrf.mxu0
        %v381 = vadd.f32 %v328, %v380
        %382 = vmatmul.f32.gmra.mxu0 %v248
        %v383 = vpop.f32.mrf.mxu0
        %v384 = vadd.f32 %v331, %v383
        %385 = vmatmul.f32.gmra.mxu0 %v249
        %v386 = vpop.f32.mrf.mxu0
        %v387 = vadd.f32 %v334, %v386
        %388 = vmatmul.f32.gmra.mxu0 %v250
        %v389 = vpop.f32.mrf.mxu0
        %v390 = vadd.f32 %v337, %v389
        %391 = vmatmul.f32.gmra.mxu0 %v251
        %v392 = vpop.f32.mrf.mxu0
        %v393 = vadd.f32 %v340, %v392
        %394 = vmatmul.f32.gmra.mxu0 %v252
        %v395 = vpop.f32.mrf.mxu0
        %v396 = vadd.f32 %v343, %v395
        %397 = vmatmul.f32.gmra.mxu0 %v253
        %v398 = vpop.f32.mrf.mxu0
        %v399 = vadd.f32 %v346, %v398
        %400 = vmatmul.f32.gmra.mxu0 %v254
        %v401 = vpop.f32.mrf.mxu0
        %v402 = vadd.f32 %v349, %v401
        %403 = vmatmul.f32.gmra.mxu0 %v255
        %v404 = vpop.f32.mrf.mxu0
        %v405 = vadd.f32 %v352, %v404
        %406 = vdwg.mxu0
        %v407 = vld [vmem:[%s238 + $0x2] sm:$0xff]
        %v408 = vld [vmem:[%s238 + $0xa] sm:$0xff]
        %v409 = vld [vmem:[%s238 + $0x12] sm:$0xff]
        %v410 = vld [vmem:[%s238 + $0x1a] sm:$0xff]
        %v411 = vld [vmem:[%s238 + $0x22] sm:$0xff]
        %v412 = vld [vmem:[%s238 + $0x2a] sm:$0xff]
        %v413 = vld [vmem:[%s238 + $0x32] sm:$0xff]
        %v414 = vld [vmem:[%s238 + $0x3a] sm:$0xff]
        %v415 = vld [vmem:[%s238 + $0x42] sm:$0xff]
        %v416 = vld [vmem:[%s238 + $0x4a] sm:$0xff]
        %v417 = vld [vmem:[%s238 + $0x52] sm:$0xff]
        %v418 = vld [vmem:[%s238 + $0x5a] sm:$0xff]
        %s419 = scalar_lea.vmem [#allocation2], 256
        %v420 = vld [vmem:[%s419] sm:$0xff]
        %v421 = vld [vmem:[%s419 + $0x8] sm:$0xff]
        %v422 = vld [vmem:[%s419 + $0x10] sm:$0xff]
        %v423 = vld [vmem:[%s419 + $0x18] sm:$0xff]
        %v424 = vld [vmem:[%s419 + $0x20] sm:$0xff]
        %v425 = vld [vmem:[%s419 + $0x28] sm:$0xff]
        %v426 = vld [vmem:[%s419 + $0x30] sm:$0xff]
        %v427 = vld [vmem:[%s419 + $0x38] sm:$0xff]
        %v428 = vld [vmem:[%s419 + $0x40] sm:$0xff]
        %v429 = vld [vmem:[%s419 + $0x48] sm:$0xff]
        %v430 = vld [vmem:[%s419 + $0x50] sm:$0xff]
        %v431 = vld [vmem:[%s419 + $0x58] sm:$0xff]
        %v432 = vld [vmem:[%s419 + $0x60] sm:$0xff]
        %v433 = vld [vmem:[%s419 + $0x68] sm:$0xff]
        %v434 = vld [vmem:[%s419 + $0x70] sm:$0xff]
        %v435 = vld [vmem:[%s419 + $0x78] sm:$0xff]
        %436 = vmatpush.msra.mxu0 %v435
        %437 = vmatpush.msra.mxu0 %v434
        %438 = vmatpush.msra.mxu0 %v433
        %439 = vmatpush.msra.mxu0 %v432
        %440 = vmatpush.msra.mxu0 %v431
        %441 = vmatpush.msra.mxu0 %v430
        %442 = vmatpush.msra.mxu0 %v429
        %443 = vmatpush.msra.mxu0 %v428
        %444 = vmatpush.msra.mxu0 %v427
        %445 = vmatpush.msra.mxu0 %v426
        %446 = vmatpush.msra.mxu0 %v425
        %447 = vmatpush.msra.mxu0 %v424
        %448 = vmatpush.msra.mxu0 %v423
        %449 = vmatpush.msra.mxu0 %v422
        %450 = vmatpush.msra.mxu0 %v421
        %451 = vmatpush.msra.mxu0 %v420
        %452 = vmatmul.f32.gmra.mxu0 %v407
        %v453 = vpop.f32.mrf.mxu0
        %v454 = vadd.f32 0.0, %v453
        %455 = vmatmul.f32.gmra.mxu0 %v408
        %v456 = vpop.f32.mrf.mxu0
        %v457 = vadd.f32 0.0, %v456
        %458 = vmatmul.f32.gmra.mxu0 %v409
        %v459 = vpop.f32.mrf.mxu0
        %v460 = vadd.f32 0.0, %v459
        %461 = vmatmul.f32.gmra.mxu0 %v410
        %v462 = vpop.f32.mrf.mxu0
        %v463 = vadd.f32 0.0, %v462
        %464 = vmatmul.f32.gmra.mxu0 %v411
        %v465 = vpop.f32.mrf.mxu0
        %v466 = vadd.f32 0.0, %v465
        %467 = vmatmul.f32.gmra.mxu0 %v412
        %v468 = vpop.f32.mrf.mxu0
        %v469 = vadd.f32 0.0, %v468
        %470 = vmatmul.f32.gmra.mxu0 %v413
        %v471 = vpop.f32.mrf.mxu0
        %v472 = vadd.f32 0.0, %v471
        %473 = vmatmul.f32.gmra.mxu0 %v414
        %v474 = vpop.f32.mrf.mxu0
        %v475 = vadd.f32 0.0, %v474
        %476 = vmatmul.f32.gmra.mxu0 %v415
        %v477 = vpop.f32.mrf.mxu0
        %v478 = vadd.f32 0.0, %v477
        %479 = vmatmul.f32.gmra.mxu0 %v416
        %v480 = vpop.f32.mrf.mxu0
        %v481 = vadd.f32 0.0, %v480
        %482 = vmatmul.f32.gmra.mxu0 %v417
        %v483 = vpop.f32.mrf.mxu0
        %v484 = vadd.f32 0.0, %v483
        %485 = vmatmul.f32.gmra.mxu0 %v418
        %v486 = vpop.f32.mrf.mxu0
        %v487 = vadd.f32 0.0, %v486
        %488 = vdwg.mxu0
        %v489 = vadd.f32 %v372, %v454
        %v490 = vadd.f32 %v375, %v457
        %v491 = vadd.f32 %v378, %v460
        %v492 = vadd.f32 %v381, %v463
        %v493 = vadd.f32 %v384, %v466
        %v494 = vadd.f32 %v387, %v469
        %v495 = vadd.f32 %v390, %v472
        %v496 = vadd.f32 %v393, %v475
        %v497 = vadd.f32 %v396, %v478
        %v498 = vadd.f32 %v399, %v481
        %v499 = vadd.f32 %v402, %v484
        %v500 = vadd.f32 %v405, %v487
        %v501 = vld [vmem:[#allocation4] sm:$0x1]
        %v503 = vperm.slane %v501, 0
        %v505 = vmul.f32 %v489, %v503
        %v506 = vmul.f32 %v490, %v503
        %v507 = vmul.f32 %v491, %v503
        %v508 = vmul.f32 %v492, %v503
        %v509 = vmul.f32 %v493, %v503
        %v510 = vmul.f32 %v494, %v503
        %v511 = vmul.f32 %v495, %v503
        %v512 = vmul.f32 %v496, %v503
        %v513 = vmul.f32 %v497, %v503
        %v514 = vmul.f32 %v498, %v503
        %v515 = vmul.f32 %v499, %v503
        %v516 = vmul.f32 %v500, %v503
        %v517 = vld [vmem:[#allocation6] sm:$0x1]
        %v519 = vperm.slane %v517, 0
        %v521 = vadd.f32 %v505, %v519
        %v522 = vadd.f32 %v506, %v519
        %v523 = vadd.f32 %v507, %v519
        %v524 = vadd.f32 %v508, %v519
        %v525 = vadd.f32 %v509, %v519
        %v526 = vadd.f32 %v510, %v519
        %v527 = vadd.f32 %v511, %v519
        %v528 = vadd.f32 %v512, %v519
        %v529 = vadd.f32 %v513, %v519
        %v530 = vadd.f32 %v514, %v519
        %v531 = vadd.f32 %v515, %v519
        %v532 = vadd.f32 %v516, %v519
        %vm533 = vcmp.gt.f32.partialorder %v521, 0.0
        %vm534 = vcmp.gt.f32.partialorder %v522, 0.0
        %vm535 = vcmp.gt.f32.partialorder %v523, 0.0
        %vm536 = vcmp.gt.f32.partialorder %v524, 0.0
        %vm537 = vcmp.gt.f32.partialorder %v525, 0.0
        %vm538 = vcmp.gt.f32.partialorder %v526, 0.0
        %vm539 = vcmp.gt.f32.partialorder %v527, 0.0
        %vm540 = vcmp.gt.f32.partialorder %v528, 0.0
        %vm541 = vcmp.gt.f32.partialorder %v529, 0.0
        %vm542 = vcmp.gt.f32.partialorder %v530, 0.0
        %vm543 = vcmp.gt.f32.partialorder %v531, 0.0
        %vm544 = vcmp.gt.f32.partialorder %v532, 0.0
        %v545 = vmul.f32 %v521, 1.442695
        %v546 = vpow.pop %v545
        %v547 = vmul.f32 %v522, 1.442695
        %v548 = vpow.pop %v547
        %v549 = vmul.f32 %v523, 1.442695
        %v550 = vpow.pop %v549
        %v551 = vmul.f32 %v524, 1.442695
        %v552 = vpow.pop %v551
        %v553 = vmul.f32 %v525, 1.442695
        %v554 = vpow.pop %v553
        %v555 = vmul.f32 %v526, 1.442695
        %v556 = vpow.pop %v555
        %v557 = vmul.f32 %v527, 1.442695
        %v558 = vpow.pop %v557
        %v559 = vmul.f32 %v528, 1.442695
        %v560 = vpow.pop %v559
        %v561 = vmul.f32 %v529, 1.442695
        %v562 = vpow.pop %v561
        %v563 = vmul.f32 %v530, 1.442695
        %v564 = vpow.pop %v563
        %v565 = vmul.f32 %v531, 1.442695
        %v566 = vpow.pop %v565
        %v567 = vmul.f32 %v532, 1.442695
        %v568 = vpow.pop %v567
        %v569 = vsub.f32 %v546, 1.0
        %v570 = vsub.f32 %v548, 1.0
        %v571 = vsub.f32 %v550, 1.0
        %v572 = vsub.f32 %v552, 1.0
        %v573 = vsub.f32 %v554, 1.0
        %v574 = vsub.f32 %v556, 1.0
        %v575 = vsub.f32 %v558, 1.0
        %v576 = vsub.f32 %v560, 1.0
        %v577 = vsub.f32 %v562, 1.0
        %v578 = vsub.f32 %v564, 1.0
        %v579 = vsub.f32 %v566, 1.0
        %v580 = vsub.f32 %v568, 1.0
        %v581 = vsel %vm533, %v521, %v569
        %v582 = vsel %vm534, %v522, %v570
        %v583 = vsel %vm535, %v523, %v571
        %v584 = vsel %vm536, %v524, %v572
        %v585 = vsel %vm537, %v525, %v573
        %v586 = vsel %vm538, %v526, %v574
        %v587 = vsel %vm539, %v527, %v575
        %v588 = vsel %vm540, %v528, %v576
        %v589 = vsel %vm541, %v529, %v577
        %v590 = vsel %vm542, %v530, %v578
        %v591 = vsel %vm543, %v531, %v579
        %v592 = vsel %vm544, %v532, %v580
        %593 = vst [vmem:[%s243] sm:$0xff] %v581
        %594 = vst [vmem:[%s243 + $0x8] sm:$0xff] %v582
        %595 = vst [vmem:[%s243 + $0x10] sm:$0xff] %v583
        %596 = vst [vmem:[%s243 + $0x18] sm:$0xff] %v584
        %597 = vst [vmem:[%s243 + $0x20] sm:$0xff] %v585
        %598 = vst [vmem:[%s243 + $0x28] sm:$0xff] %v586
        %599 = vst [vmem:[%s243 + $0x30] sm:$0xff] %v587
        %600 = vst [vmem:[%s243 + $0x38] sm:$0xff] %v588
        %601 = vst [vmem:[%s243 + $0x40] sm:$0xff] %v589
        %602 = vst [vmem:[%s243 + $0x48] sm:$0xff] %v590
        %603 = vst [vmem:[%s243 + $0x50] sm:$0xff] %v591
        %604 = vst [vmem:[%s243 + $0x58] sm:$0xff] %v592
        %p605 = scmp.lt.s32.totalorder %s17, 1
        %s606 = scalar_select %p605, %s17, 1
        %s607 = smul.addr %s606, 12
        %s608 = smul.addr %s607, 8
        %s609 = scalar_lea.vmem %s4, %s608
        // Predicated region
        $region49: #{multibranch_forward_pallas.9} parent=35 // pred_check
          %p610 = pneg %p124
        $region50: #{multibranch_forward_pallas.9} parent=35 // pred_check_branch
          %612 = sbr.rel (%p610) target = $region52
        $region51: #{multibranch_forward_pallas.9} parent=35 // pred_region
          _
        $region52: #{multibranch_forward_pallas.9} parent=35 // pred_fallthru
          _
      $region36: #{multibranch_forward_pallas.9} parent=5 // pred_fallthru
        _
      %p613 = scmp.le.s32.totalorder 2, %s12
      // Predicated region
      $region53: #{multibranch_forward_pallas.9} parent=5 // pred_check
        %p614 = pneg %p613
      $region54: #{multibranch_forward_pallas.9} parent=5 // pred_check_branch
        %616 = sbr.rel (%p614) target = $region56
      $region55: #{multibranch_forward_pallas.9} parent=5 // pred_region
        %s617 = ssub.s32 %s12, 2
        // Predicated region
        $region57: #{multibranch_forward_pallas.9} parent=55 // pred_check
          %p618 = pneg %p130
        $region58: #{multibranch_forward_pallas.9} parent=55 // pred_check_branch
          %620 = sbr.rel (%p618) target = $region60
        $region59: #{multibranch_forward_pallas.9} parent=55 // pred_region
          %p621 = scmp.lt.s32.totalorder %s18, 1
          %s622 = scalar_select %p621, %s18, 1
          %s623 = smul.addr %s622, 12
          %s624 = smul.addr %s623, 8
          %s625 = scalar_lea.vmem %s4, %s624
        $region60: #{multibranch_forward_pallas.9} parent=55 // pred_fallthru
          _
      $region56: #{multibranch_forward_pallas.9} parent=5 // pred_fallthru
        _
    $region6: #{multibranch_forward_pallas.9} parent=1 // loop_footer
      %s16 = sadd.s32 1, %s12
    $region7: #{multibranch_forward_pallas.9} parent=1 // loop_footer_branch
      %11 = sbr.rel target = $region3
    $region8: #{multibranch_forward_pallas.9} parent=1 // loop_exit
      _
    %626 = vsyncpa [#allocation3], 1
    %s627 = scalar_lea.sflag [#allocation3], 1
    %628 = vsyncpa %s627, 1
    %629 = vsyncpa [#allocation5], 1

// kernel: multibranch_forward_pallas.7
$region0: #{multibranch_forward_pallas.7}
  #allocation0 [shape = 'u32[]', space=smem, size = 0x4, offset = 0x4, fixed_abs, tag = 'smem constant byte address 0x4 - core index']
  #allocation1 [shape = 'u32[72,128]{1,0:T(1,128)}', space=vmem, size = 0x9000, scoped, tag = 'internal scratch']
  %s0 = inlined_call_operand.vmem [shape: f32[2,47,128], index: 0, kind: input, shape index: {}]
  %s1 = inlined_call_operand.vmem [shape: f32[1,128,128], index: 1, kind: input, shape index: {}]
  %s2 = inlined_call_operand.vmem [shape: f32[1,128], index: 2, kind: input, shape index: {}]
  %s3 = inlined_call_operand.vmem [shape: f32[1,128], index: 3, kind: input, shape index: {}]
  %s4 = inlined_call_operand.vmem [shape: f32[37,47], index: 4, kind: input, shape index: {}]
  %s5 = inlined_call_operand.vmem [shape: f32[2,37,128], index: 5, kind: output, shape index: {}]
  %s6 = sld [smem:[#allocation0]]
  $region53: #{multibranch_forward_pallas.7} parent=0
    _
  %s8 = ssub.s32 1, %s6
  %s9 = scalar_select 0, %s8, %s6
  loop: start=0, step=1, limit=4
  $region2: #{multibranch_forward_pallas.7} parent=0 // loop_pre_header
    _
  $region3: #{multibranch_forward_pallas.7} parent=0 // loop_header
    %s11 = sphi 0, %s15
    %p12 = scmp.ge.s32.totalorder %s11, 4
    %s21 = sphi 0, %s23
    %s24 = sphi 0, %s21
    %s25 = sphi 0, %s24
    %s41 = sphi 0, %s25
    %s45 = sphi 0, %s45
    %s47 = sphi 0, %s45
    %s48 = sphi 0, %s47
    %s62 = sphi 0, %s48
    %s66 = sphi 0, %s66
    %s68 = sphi 0, %s66
    %s69 = sphi 0, %s68
    %s83 = sphi 0, %s69
    %s87 = sphi 0, %s87
    %s89 = sphi 0, %s87
    %s90 = sphi 0, %s89
    %s104 = sphi 0, %s90
    %s108 = sphi 0, %s108
    %s110 = sphi 0, %s108
    %s111 = sphi 0, %s110
    %s125 = sphi 0, %s111
    %s131 = sphi 0, %s133
    %s134 = sphi 0, %s131
    %s135 = sphi 0, %s134
    %s151 = sphi 0, %s135
  $region4: #{multibranch_forward_pallas.7} parent=0 // loop_header_branch
    %14 = sbr.rel (%p12) target = $region8
  $region5: #{multibranch_forward_pallas.7} parent=0 // loop_body
    %s16 = ssub.s32 %s11, 1
    %s17 = ssub.s32 %s11, 2
    %s18 = sadd.s32 %s11, 1
    %s19 = ssub.s32 %s11, %s18
    %p20 = scmp.eq.s32.totalorder %s19, 0
    %s22 = sadd.s32 %s21, 1
    %s23 = scalar_select %p20, %s21, %s22
    %p26 = pneg %p20
    %p27 = scmp.eq.s32.totalorder %s11, 1
    %p28 = por %p26, %p27
    %p29 = scmp.ne.s32.totalorder %s21, %s24
    %p30 = scmp.eq.s32.totalorder %s11, 0
    %p31 = por %p29, %p30
    %p32 = scmp.ne.s32.totalorder %s21, %s24
    %p33 = scmp.eq.s32.totalorder %s16, 1
    %p34 = por %p32, %p33
    %p35 = scmp.ne.s32.totalorder %s24, %s25
    %p36 = scmp.eq.s32.totalorder %s16, 0
    %p37 = por %p35, %p36
    %p38 = scmp.ne.s32.totalorder %s24, %s25
    %p39 = scmp.eq.s32.totalorder %s17, 1
    %p40 = por %p38, %p39
    %p42 = scmp.ne.s32.totalorder %s25, %s41
    %p43 = scmp.eq.s32.totalorder %s17, 0
    %p44 = por %p42, %p43
    %s46 = sadd.s32 %s45, 1
    %p49 = scmp.eq.s32.totalorder %s11, 1
    %p50 = scmp.ne.s32.totalorder %s45, %s47
    %p51 = scmp.eq.s32.totalorder %s11, 0
    %p52 = por %p50, %p51
    %p53 = scmp.ne.s32.totalorder %s45, %s47
    %p54 = scmp.eq.s32.totalorder %s16, 1
    %p55 = por %p53, %p54
    %p56 = scmp.ne.s32.totalorder %s47, %s48
    %p57 = scmp.eq.s32.totalorder %s16, 0
    %p58 = por %p56, %p57
    %p59 = scmp.ne.s32.totalorder %s47, %s48
    %p60 = scmp.eq.s32.totalorder %s17, 1
    %p61 = por %p59, %p60
    %p63 = scmp.ne.s32.totalorder %s48, %s62
    %p64 = scmp.eq.s32.totalorder %s17, 0
    %p65 = por %p63, %p64
    %s67 = sadd.s32 %s66, 1
    %p70 = scmp.eq.s32.totalorder %s11, 1
    %p71 = scmp.ne.s32.totalorder %s66, %s68
    %p72 = scmp.eq.s32.totalorder %s11, 0
    %p73 = por %p71, %p72
    %p74 = scmp.ne.s32.totalorder %s66, %s68
    %p75 = scmp.eq.s32.totalorder %s16, 1
    %p76 = por %p74, %p75
    %p77 = scmp.ne.s32.totalorder %s68, %s69
    %p78 = scmp.eq.s32.totalorder %s16, 0
    %p79 = por %p77, %p78
    %p80 = scmp.ne.s32.totalorder %s68, %s69
    %p81 = scmp.eq.s32.totalorder %s17, 1
    %p82 = por %p80, %p81
    %p84 = scmp.ne.s32.totalorder %s69, %s83
    %p85 = scmp.eq.s32.totalorder %s17, 0
    %p86 = por %p84, %p85
    %s88 = sadd.s32 %s87, 1
    %p91 = scmp.eq.s32.totalorder %s11, 1
    %p92 = scmp.ne.s32.totalorder %s87, %s89
    %p93 = scmp.eq.s32.totalorder %s11, 0
    %p94 = por %p92, %p93
    %p95 = scmp.ne.s32.totalorder %s87, %s89
    %p96 = scmp.eq.s32.totalorder %s16, 1
    %p97 = por %p95, %p96
    %p98 = scmp.ne.s32.totalorder %s89, %s90
    %p99 = scmp.eq.s32.totalorder %s16, 0
    %p100 = por %p98, %p99
    %p101 = scmp.ne.s32.totalorder %s89, %s90
    %p102 = scmp.eq.s32.totalorder %s17, 1
    %p103 = por %p101, %p102
    %p105 = scmp.ne.s32.totalorder %s90, %s104
    %p106 = scmp.eq.s32.totalorder %s17, 0
    %p107 = por %p105, %p106
    %s109 = sadd.s32 %s108, 1
    %p112 = scmp.eq.s32.totalorder %s11, 1
    %p113 = scmp.ne.s32.totalorder %s108, %s110
    %p114 = scmp.eq.s32.totalorder %s11, 0
    %p115 = por %p113, %p114
    %p116 = scmp.ne.s32.totalorder %s108, %s110
    %p117 = scmp.eq.s32.totalorder %s16, 1
    %p118 = por %p116, %p117
    %p119 = scmp.ne.s32.totalorder %s110, %s111
    %p120 = scmp.eq.s32.totalorder %s16, 0
    %p121 = por %p119, %p120
    %p122 = scmp.ne.s32.totalorder %s110, %s111
    %p123 = scmp.eq.s32.totalorder %s17, 1
    %p124 = por %p122, %p123
    %p126 = scmp.ne.s32.totalorder %s111, %s125
    %p127 = scmp.eq.s32.totalorder %s17, 0
    %p128 = por %p126, %p127
    %s129 = ssub.s32 %s11, %s18
    %p130 = scmp.eq.s32.totalorder %s129, 0
    %s132 = sadd.s32 %s131, 1
    %s133 = scalar_select %p130, %s131, %s132
    %p136 = pneg %p130
    %p137 = scmp.eq.s32.totalorder %s11, 1
    %p138 = por %p136, %p137
    %p139 = scmp.ne.s32.totalorder %s131, %s134
    %p140 = scmp.eq.s32.totalorder %s11, 0
    %p141 = por %p139, %p140
    %p142 = scmp.ne.s32.totalorder %s131, %s134
    %p143 = scmp.eq.s32.totalorder %s16, 1
    %p144 = por %p142, %p143
    %p145 = scmp.ne.s32.totalorder %s134, %s135
    %p146 = scmp.eq.s32.totalorder %s16, 0
    %p147 = por %p145, %p146
    %p148 = scmp.ne.s32.totalorder %s134, %s135
    %p149 = scmp.eq.s32.totalorder %s17, 1
    %p150 = por %p148, %p149
    %p152 = scmp.ne.s32.totalorder %s135, %s151
    %p153 = scmp.eq.s32.totalorder %s17, 0
    %p154 = por %p152, %p153
    %p155 = scmp.le.s32.totalorder 1, %s11
    %p156 = scmp.lt.s32.totalorder %s11, 3
    %p157 = pnand %p155, %p156
    %p158 = pneg %p157
    // Predicated region
    $region9: #{multibranch_forward_pallas.7} parent=5 // pred_check
      _
    $region10: #{multibranch_forward_pallas.7} parent=5 // pred_check_branch
      %160 = sbr.rel (%p157) target = $region12
    $region11: #{multibranch_forward_pallas.7} parent=5 // pred_region
      %s161 = ssub.s32 %s11, 1
      // Predicated region
      $region13: #{multibranch_forward_pallas.7} parent=11 // pred_check
        %p162 = pneg %p58
      $region14: #{multibranch_forward_pallas.7} parent=11 // pred_check_branch
        %164 = sbr.rel (%p162) target = $region16
      $region15: #{multibranch_forward_pallas.7} parent=11 // pred_region
        _
      $region16: #{multibranch_forward_pallas.7} parent=11 // pred_fallthru
        _
      // Predicated region
      $region17: #{multibranch_forward_pallas.7} parent=11 // pred_check
        %p165 = pneg %p79
      $region18: #{multibranch_forward_pallas.7} parent=11 // pred_check_branch
        %167 = sbr.rel (%p165) target = $region20
      $region19: #{multibranch_forward_pallas.7} parent=11 // pred_region
        _
      $region20: #{multibranch_forward_pallas.7} parent=11 // pred_fallthru
        _
      // Predicated region
      $region21: #{multibranch_forward_pallas.7} parent=11 // pred_check
        %p168 = pneg %p100
      $region22: #{multibranch_forward_pallas.7} parent=11 // pred_check_branch
        %170 = sbr.rel (%p168) target = $region24
      $region23: #{multibranch_forward_pallas.7} parent=11 // pred_region
        _
      $region24: #{multibranch_forward_pallas.7} parent=11 // pred_fallthru
        _
      // Predicated region
      $region25: #{multibranch_forward_pallas.7} parent=11 // pred_check
        %p171 = pneg %p121
      $region26: #{multibranch_forward_pallas.7} parent=11 // pred_check_branch
        %173 = sbr.rel (%p171) target = $region28
      $region27: #{multibranch_forward_pallas.7} parent=11 // pred_region
        _
      $region28: #{multibranch_forward_pallas.7} parent=11 // pred_fallthru
        _
    $region12: #{multibranch_forward_pallas.7} parent=5 // pred_fallthru
      _
    %p174 = scmp.lt.s32.totalorder %s11, 2
    // Predicated region
    $region29: #{multibranch_forward_pallas.7} parent=5 // pred_check
      %p175 = pneg %p174
    $region30: #{multibranch_forward_pallas.7} parent=5 // pred_check_branch
      %177 = sbr.rel (%p175) target = $region32
    $region31: #{multibranch_forward_pallas.7} parent=5 // pred_region
      // Predicated region
      $region33: #{multibranch_forward_pallas.7} parent=31 // pred_check
        %p178 = pneg %p31
      $region34: #{multibranch_forward_pallas.7} parent=31 // pred_check_branch
        %180 = sbr.rel (%p178) target = $region36
      $region35: #{multibranch_forward_pallas.7} parent=31 // pred_region
        %p181 = scmp.lt.s32.totalorder %s11, 1
        %s182 = scalar_select %p181, %s11, 1
        %s183 = smul.addr %s182, 6
        %s184 = smul.addr %s183, 8
        %s185 = scalar_lea.vmem %s0, %s184
      $region36: #{multibranch_forward_pallas.7} parent=31 // pred_fallthru
        _
    $region32: #{multibranch_forward_pallas.7} parent=5 // pred_fallthru
      _
    %p186 = scmp.le.s32.totalorder 1, %s11
    %p187 = scmp.lt.s32.totalorder %s11, 3
    %p188 = pnand %p186, %p187
    %p189 = pneg %p188
    // Predicated region
    $region37: #{multibranch_forward_pallas.7} parent=5 // pred_check
      _
    $region38: #{multibranch_forward_pallas.7} parent=5 // pred_check_branch
      %191 = sbr.rel (%p188) target = $region40
    $region39: #{multibranch_forward_pallas.7} parent=5 // pred_region
      %s192 = ssub.s32 %s11, 1
      %p193 = scmp.lt.s32.totalorder %s16, 1
      %s194 = scalar_select %p193, %s16, 1
      %s195 = smul.addr %s194, 6
      %s196 = smul.addr %s195, 8
      %s197 = scalar_lea.vmem %s0, %s196
      %p198 = pneg %p37
      %p199 = pneg %p34
      %p200 = pneg %p58
      %p201 = pneg %p55
      %p202 = pneg %p79
      %p203 = pneg %p76
      %p204 = pneg %p100
      %p205 = pneg %p97
      %p206 = pneg %p121
      %p207 = pneg %p118
      %p208 = pneg %p147
      %p209 = pneg %p144
      %p210 = scmp.lt.s32.totalorder %s16, 1
      %s211 = scalar_select %p210, %s16, 1
      %s212 = smul.addr %s211, 5
      %s213 = smul.addr %s212, 8
      %s214 = scalar_lea.vmem %s5, %s213
      %p215 = scmp.lt.s32.totalorder %s16, 1
      %s216 = scalar_select %p215, %s16, 1
      %s217 = smul.addr %s216, 6
      %s218 = smul.addr %s217, 8
      %s219 = scalar_lea.vmem %s0, %s218
      %p220 = scmp.lt.s32.totalorder %s16, 1
      %s221 = scalar_select %p220, %s16, 1
      %s222 = smul.addr %s221, 5
      %s223 = smul.addr %s222, 8
      %s224 = scalar_lea.vmem %s5, %s223
      %v225 = vld [vmem:[%s219] sm:$0xff]
      %v226 = vld [vmem:[%s219 + $0x8] sm:$0xff]
      %v227 = vld [vmem:[%s219 + $0x10] sm:$0xff]
      %v228 = vld [vmem:[%s219 + $0x18] sm:$0xff]
      %v229 = vld [vmem:[%s219 + $0x20] sm:$0xff]
      %v230 = vld [vmem:[%s219 + $0x28] sm:$0x7f]
      %v231 = vld [vmem:[%s1] sm:$0xff]
      %v232 = vld [vmem:[%s1 + $0x8] sm:$0xff]
      %v233 = vld [vmem:[%s1 + $0x10] sm:$0xff]
      %v234 = vld [vmem:[%s1 + $0x18] sm:$0xff]
      %v235 = vld [vmem:[%s1 + $0x20] sm:$0xff]
      %v236 = vld [vmem:[%s1 + $0x28] sm:$0xff]
      %v237 = vld [vmem:[%s1 + $0x30] sm:$0xff]
      %v238 = vld [vmem:[%s1 + $0x38] sm:$0xff]
      %v239 = vld [vmem:[%s1 + $0x40] sm:$0xff]
      %v240 = vld [vmem:[%s1 + $0x48] sm:$0xff]
      %v241 = vld [vmem:[%s1 + $0x50] sm:$0xff]
      %v242 = vld [vmem:[%s1 + $0x58] sm:$0xff]
      %v243 = vld [vmem:[%s1 + $0x60] sm:$0xff]
      %v244 = vld [vmem:[%s1 + $0x68] sm:$0xff]
      %v245 = vld [vmem:[%s1 + $0x70] sm:$0xff]
      %v246 = vld [vmem:[%s1 + $0x78] sm:$0xff]
      %247 = vmatpush.msra.mxu0 %v246
      %248 = vmatpush.msra.mxu0 %v245
      %249 = vmatpush.msra.mxu0 %v244
      %250 = vmatpush.msra.mxu0 %v243
      %251 = vmatpush.msra.mxu0 %v242
      %252 = vmatpush.msra.mxu0 %v241
      %253 = vmatpush.msra.mxu0 %v240
      %254 = vmatpush.msra.mxu0 %v239
      %255 = vmatpush.msra.mxu0 %v238
      %256 = vmatpush.msra.mxu0 %v237
      %257 = vmatpush.msra.mxu0 %v236
      %258 = vmatpush.msra.mxu0 %v235
      %259 = vmatpush.msra.mxu0 %v234
      %260 = vmatpush.msra.mxu0 %v233
      %261 = vmatpush.msra.mxu0 %v232
      %262 = vmatpush.msra.mxu0 %v231
      %263 = vmatmul.f32.gmra.mxu0 %v225
      %v264 = vpop.f32.mrf.mxu0
      %v265 = vadd.f32 0.0, %v264
      %266 = vmatmul.f32.gmra.mxu0 %v226
      %v267 = vpop.f32.mrf.mxu0
      %v268 = vadd.f32 0.0, %v267
      %269 = vmatmul.f32.gmra.mxu0 %v227
      %v270 = vpop.f32.mrf.mxu0
      %v271 = vadd.f32 0.0, %v270
      %272 = vmatmul.f32.gmra.mxu0 %v228
      %v273 = vpop.f32.mrf.mxu0
      %v274 = vadd.f32 0.0, %v273
      %275 = vmatmul.f32.gmra.mxu0 %v229
      %v276 = vpop.f32.mrf.mxu0
      %v277 = vadd.f32 0.0, %v276
      %278 = vmatmul.f32.gmra.mxu0 %v230
      %v279 = vpop.f32.mrf.mxu0
      %v280 = vadd.f32 0.0, %v279
      %281 = vdwg.mxu0
      %v282 = vld [vmem:[%s2] sm:$0x1]
      %v284 = vperm.slane %v282, 0
      %v286 = vmul.f32 %v265, %v284
      %v287 = vmul.f32 %v268, %v284
      %v288 = vmul.f32 %v271, %v284
      %v289 = vmul.f32 %v274, %v284
      %v290 = vmul.f32 %v277, %v284
      %v291 = vmul.f32 %v280, %v284
      %v292 = vld [vmem:[%s3] sm:$0x1]
      %v294 = vperm.slane %v292, 0
      %v296 = vadd.f32 %v286, %v294
      %v297 = vadd.f32 %v287, %v294
      %v298 = vadd.f32 %v288, %v294
      %v299 = vadd.f32 %v289, %v294
      %v300 = vadd.f32 %v290, %v294
      %v301 = vadd.f32 %v291, %v294
      %vm302 = vcmp.gt.f32.partialorder %v296, 0.0
      %vm303 = vcmp.gt.f32.partialorder %v297, 0.0
      %vm304 = vcmp.gt.f32.partialorder %v298, 0.0
      %vm305 = vcmp.gt.f32.partialorder %v299, 0.0
      %vm306 = vcmp.gt.f32.partialorder %v300, 0.0
      %vm307 = vcmp.gt.f32.partialorder %v301, 0.0
      %v308 = vmul.f32 %v296, 1.442695
      %v309 = vpow.pop %v308
      %v310 = vmul.f32 %v297, 1.442695
      %v311 = vpow.pop %v310
      %v312 = vmul.f32 %v298, 1.442695
      %v313 = vpow.pop %v312
      %v314 = vmul.f32 %v299, 1.442695
      %v315 = vpow.pop %v314
      %v316 = vmul.f32 %v300, 1.442695
      %v317 = vpow.pop %v316
      %v318 = vmul.f32 %v301, 1.442695
      %v319 = vpow.pop %v318
      %v320 = vsub.f32 %v309, 1.0
      %v321 = vsub.f32 %v311, 1.0
      %v322 = vsub.f32 %v313, 1.0
      %v323 = vsub.f32 %v315, 1.0
      %v324 = vsub.f32 %v317, 1.0
      %v325 = vsub.f32 %v319, 1.0
      %v326 = vsel %vm302, %v296, %v320
      %v327 = vsel %vm303, %v297, %v321
      %v328 = vsel %vm304, %v298, %v322
      %v329 = vsel %vm305, %v299, %v323
      %v330 = vsel %vm306, %v300, %v324
      %v331 = vsel %vm307, %v301, %v325
      %v332 = vld [vmem:[%s4] sm:$0xff]
      %v333 = vld [vmem:[%s4 + $0x8] sm:$0xff]
      %v334 = vld [vmem:[%s4 + $0x10] sm:$0xff]
      %v335 = vld [vmem:[%s4 + $0x18] sm:$0xff]
      %v336 = vld [vmem:[%s4 + $0x20] sm:$0x1f]
      %vm337 = vcmask 384000
      %v339 = vsel %vm337, %v332, 0
      %v342 = vsel %vm337, %v333, 0
      %v345 = vsel %vm337, %v334, 0
      %v348 = vsel %vm337, %v335, 0
      %v351 = vsel %vm337, %v336, 0
      %vm353 = vcmask 1046528
      %v355 = vsel %vm353, %v331, 0
      %357 = vmatpush.msra.mxu0 0.0
      %358 = vmatpush.msra.mxu0 0.0
      %359 = vmatpush.msra.mxu0 0.0
      %360 = vmatpush.msra.mxu0 0.0
      %361 = vmatpush.msra.mxu0 0.0
      %362 = vmatpush.msra.mxu0 0.0
      %363 = vmatpush.msra.mxu0 0.0
      %364 = vmatpush.msra.mxu0 0.0
      %365 = vmatpush.msra.mxu0 0.0
      %366 = vmatpush.msra.mxu0 0.0
      %367 = vmatpush.msra.mxu0 %v355
      %368 = vmatpush.msra.mxu0 %v330
      %369 = vmatpush.msra.mxu0 %v329
      %370 = vmatpush.msra.mxu0 %v328
      %371 = vmatpush.msra.mxu0 %v327
      %372 = vmatpush.msra.mxu0 %v326
      %373 = vmatmul.f32.gmra.mxu0 %v339
      %v374 = vpop.f32.mrf.mxu0
      %v375 = vadd.f32 0.0, %v374
      %376 = vmatmul.f32.gmra.mxu0 %v342
      %v377 = vpop.f32.mrf.mxu0
      %v378 = vadd.f32 0.0, %v377
      %379 = vmatmul.f32.gmra.mxu0 %v345
      %v380 = vpop.f32.mrf.mxu0
      %v381 = vadd.f32 0.0, %v380
      %382 = vmatmul.f32.gmra.mxu0 %v348
      %v383 = vpop.f32.mrf.mxu0
      %v384 = vadd.f32 0.0, %v383
      %385 = vmatmul.f32.gmra.mxu0 %v351
      %v386 = vpop.f32.mrf.mxu0
      %v387 = vadd.f32 0.0, %v386
      %388 = vdwg.mxu0
      %389 = vst [vmem:[%s224] sm:$0xff] %v375
      %390 = vst [vmem:[%s224 + $0x8] sm:$0xff] %v378
      %391 = vst [vmem:[%s224 + $0x10] sm:$0xff] %v381
      %392 = vst [vmem:[%s224 + $0x18] sm:$0xff] %v384
      %393 = vst [vmem:[%s224 + $0x20] sm:$0x1f] %v387
      %p394 = scmp.lt.s32.totalorder %s16, 1
      %s395 = scalar_select %p394, %s16, 1
      %s396 = smul.addr %s395, 5
      %s397 = smul.addr %s396, 8
      %s398 = scalar_lea.vmem %s5, %s397
      // Predicated region
      $region41: #{multibranch_forward_pallas.7} parent=39 // pred_check
        %p399 = pneg %p144
      $region42: #{multibranch_forward_pallas.7} parent=39 // pred_check_branch
        %401 = sbr.rel (%p399) target = $region44
      $region43: #{multibranch_forward_pallas.7} parent=39 // pred_region
        _
      $region44: #{multibranch_forward_pallas.7} parent=39 // pred_fallthru
        _
    $region40: #{multibranch_forward_pallas.7} parent=5 // pred_fallthru
      _
    %p402 = scmp.le.s32.totalorder 2, %s11
    // Predicated region
    $region45: #{multibranch_forward_pallas.7} parent=5 // pred_check
      %p403 = pneg %p402
    $region46: #{multibranch_forward_pallas.7} parent=5 // pred_check_branch
      %405 = sbr.rel (%p403) target = $region48
    $region47: #{multibranch_forward_pallas.7} parent=5 // pred_region
      %s406 = ssub.s32 %s11, 2
      // Predicated region
      $region49: #{multibranch_forward_pallas.7} parent=47 // pred_check
        %p407 = pneg %p150
      $region50: #{multibranch_forward_pallas.7} parent=47 // pred_check_branch
        %409 = sbr.rel (%p407) target = $region52
      $region51: #{multibranch_forward_pallas.7} parent=47 // pred_region
        %p410 = scmp.lt.s32.totalorder %s17, 1
        %s411 = scalar_select %p410, %s17, 1
        %s412 = smul.addr %s411, 5
        %s413 = smul.addr %s412, 8
        %s414 = scalar_lea.vmem %s5, %s413
      $region52: #{multibranch_forward_pallas.7} parent=47 // pred_fallthru
        _
    $region48: #{multibranch_forward_pallas.7} parent=5 // pred_fallthru
      _
  $region6: #{multibranch_forward_pallas.7} parent=0 // loop_footer
    %s15 = sadd.s32 1, %s11
  $region7: #{multibranch_forward_pallas.7} parent=0 // loop_footer_branch
    %10 = sbr.rel target = $region3
  $region8: #{multibranch_forward_pallas.7} parent=0 // loop_exit
    _

// kernel: multibranch_forward_pallas.11
$region0: #{multibranch_forward_pallas.11}
  #allocation0 [shape = 'u32[]', space=smem, size = 0x4, offset = 0x4, fixed_abs, tag = 'smem constant byte address 0x4 - core index']
  #allocation1 [shape = 'u32[72,128]{1,0:T(1,128)}', space=vmem, size = 0x9000, scoped, tag = 'internal scratch']
  %s0 = inlined_call_operand.vmem [shape: f32[2,37,128], index: 0, kind: input, shape index: {}]
  %s1 = inlined_call_operand.vmem [shape: f32[128,128], index: 1, kind: input, shape index: {}]
  %s2 = inlined_call_operand.vmem [shape: f32[1,128], index: 2, kind: input, shape index: {}]
  %s3 = inlined_call_operand.vmem [shape: f32[128,128], index: 3, kind: input, shape index: {}]
  %s4 = inlined_call_operand.vmem [shape: f32[1,128], index: 4, kind: input, shape index: {}]
  %s5 = inlined_call_operand.vmem [shape: f32[128,128], index: 5, kind: input, shape index: {}]
  %s6 = inlined_call_operand.vmem [shape: f32[1,128], index: 6, kind: input, shape index: {}]
  %s7 = inlined_call_operand.vmem [shape: f32[1,128], index: 7, kind: input, shape index: {}]
  %s8 = inlined_call_operand.vmem [shape: f32[128,128], index: 8, kind: input, shape index: {}]
  %s9 = inlined_call_operand.vmem [shape: f32[1,128], index: 9, kind: input, shape index: {}]
  %s10 = inlined_call_operand.vmem [shape: f32[2,37,128], index: 10, kind: output, shape index: {}]
  %s11 = sld [smem:[#allocation0]]
  $region73: #{multibranch_forward_pallas.11} parent=0
    _
  %s13 = ssub.s32 1, %s11
  %s14 = scalar_select 0, %s13, %s11
  loop: start=0, step=1, limit=4
  $region2: #{multibranch_forward_pallas.11} parent=0 // loop_pre_header
    _
  $region3: #{multibranch_forward_pallas.11} parent=0 // loop_header
    %s16 = sphi 0, %s20
    %p17 = scmp.ge.s32.totalorder %s16, 4
    %s26 = sphi 0, %s28
    %s29 = sphi 0, %s26
    %s30 = sphi 0, %s29
    %s46 = sphi 0, %s30
    %s50 = sphi 0, %s50
    %s52 = sphi 0, %s50
    %s53 = sphi 0, %s52
    %s67 = sphi 0, %s53
    %s71 = sphi 0, %s71
    %s73 = sphi 0, %s71
    %s74 = sphi 0, %s73
    %s88 = sphi 0, %s74
    %s92 = sphi 0, %s92
    %s94 = sphi 0, %s92
    %s95 = sphi 0, %s94
    %s109 = sphi 0, %s95
    %s113 = sphi 0, %s113
    %s115 = sphi 0, %s113
    %s116 = sphi 0, %s115
    %s130 = sphi 0, %s116
    %s134 = sphi 0, %s134
    %s136 = sphi 0, %s134
    %s137 = sphi 0, %s136
    %s151 = sphi 0, %s137
    %s155 = sphi 0, %s155
    %s157 = sphi 0, %s155
    %s158 = sphi 0, %s157
    %s172 = sphi 0, %s158
    %s176 = sphi 0, %s176
    %s178 = sphi 0, %s176
    %s179 = sphi 0, %s178
    %s193 = sphi 0, %s179
    %s197 = sphi 0, %s197
    %s199 = sphi 0, %s197
    %s200 = sphi 0, %s199
    %s214 = sphi 0, %s200
    %s218 = sphi 0, %s218
    %s220 = sphi 0, %s218
    %s221 = sphi 0, %s220
    %s235 = sphi 0, %s221
    %s241 = sphi 0, %s243
    %s244 = sphi 0, %s241
    %s245 = sphi 0, %s244
    %s261 = sphi 0, %s245
  $region4: #{multibranch_forward_pallas.11} parent=0 // loop_header_branch
    %19 = sbr.rel (%p17) target = $region8
  $region5: #{multibranch_forward_pallas.11} parent=0 // loop_body
    %s21 = ssub.s32 %s16, 1
    %s22 = ssub.s32 %s16, 2
    %s23 = sadd.s32 %s16, 1
    %s24 = ssub.s32 %s16, %s23
    %p25 = scmp.eq.s32.totalorder %s24, 0
    %s27 = sadd.s32 %s26, 1
    %s28 = scalar_select %p25, %s26, %s27
    %p31 = pneg %p25
    %p32 = scmp.eq.s32.totalorder %s16, 1
    %p33 = por %p31, %p32
    %p34 = scmp.ne.s32.totalorder %s26, %s29
    %p35 = scmp.eq.s32.totalorder %s16, 0
    %p36 = por %p34, %p35
    %p37 = scmp.ne.s32.totalorder %s26, %s29
    %p38 = scmp.eq.s32.totalorder %s21, 1
    %p39 = por %p37, %p38
    %p40 = scmp.ne.s32.totalorder %s29, %s30
    %p41 = scmp.eq.s32.totalorder %s21, 0
    %p42 = por %p40, %p41
    %p43 = scmp.ne.s32.totalorder %s29, %s30
    %p44 = scmp.eq.s32.totalorder %s22, 1
    %p45 = por %p43, %p44
    %p47 = scmp.ne.s32.totalorder %s30, %s46
    %p48 = scmp.eq.s32.totalorder %s22, 0
    %p49 = por %p47, %p48
    %s51 = sadd.s32 %s50, 1
    %p54 = scmp.eq.s32.totalorder %s16, 1
    %p55 = scmp.ne.s32.totalorder %s50, %s52
    %p56 = scmp.eq.s32.totalorder %s16, 0
    %p57 = por %p55, %p56
    %p58 = scmp.ne.s32.totalorder %s50, %s52
    %p59 = scmp.eq.s32.totalorder %s21, 1
    %p60 = por %p58, %p59
    %p61 = scmp.ne.s32.totalorder %s52, %s53
    %p62 = scmp.eq.s32.totalorder %s21, 0
    %p63 = por %p61, %p62
    %p64 = scmp.ne.s32.totalorder %s52, %s53
    %p65 = scmp.eq.s32.totalorder %s22, 1
    %p66 = por %p64, %p65
    %p68 = scmp.ne.s32.totalorder %s53, %s67
    %p69 = scmp.eq.s32.totalorder %s22, 0
    %p70 = por %p68, %p69
    %s72 = sadd.s32 %s71, 1
    %p75 = scmp.eq.s32.totalorder %s16, 1
    %p76 = scmp.ne.s32.totalorder %s71, %s73
    %p77 = scmp.eq.s32.totalorder %s16, 0
    %p78 = por %p76, %p77
    %p79 = scmp.ne.s32.totalorder %s71, %s73
    %p80 = scmp.eq.s32.totalorder %s21, 1
    %p81 = por %p79, %p80
    %p82 = scmp.ne.s32.totalorder %s73, %s74
    %p83 = scmp.eq.s32.totalorder %s21, 0
    %p84 = por %p82, %p83
    %p85 = scmp.ne.s32.totalorder %s73, %s74
    %p86 = scmp.eq.s32.totalorder %s22, 1
    %p87 = por %p85, %p86
    %p89 = scmp.ne.s32.totalorder %s74, %s88
    %p90 = scmp.eq.s32.totalorder %s22, 0
    %p91 = por %p89, %p90
    %s93 = sadd.s32 %s92, 1
    %p96 = scmp.eq.s32.totalorder %s16, 1
    %p97 = scmp.ne.s32.totalorder %s92, %s94
    %p98 = scmp.eq.s32.totalorder %s16, 0
    %p99 = por %p97, %p98
    %p100 = scmp.ne.s32.totalorder %s92, %s94
    %p101 = scmp.eq.s32.totalorder %s21, 1
    %p102 = por %p100, %p101
    %p103 = scmp.ne.s32.totalorder %s94, %s95
    %p104 = scmp.eq.s32.totalorder %s21, 0
    %p105 = por %p103, %p104
    %p106 = scmp.ne.s32.totalorder %s94, %s95
    %p107 = scmp.eq.s32.totalorder %s22, 1
    %p108 = por %p106, %p107
    %p110 = scmp.ne.s32.totalorder %s95, %s109
    %p111 = scmp.eq.s32.totalorder %s22, 0
    %p112 = por %p110, %p111
    %s114 = sadd.s32 %s113, 1
    %p117 = scmp.eq.s32.totalorder %s16, 1
    %p118 = scmp.ne.s32.totalorder %s113, %s115
    %p119 = scmp.eq.s32.totalorder %s16, 0
    %p120 = por %p118, %p119
    %p121 = scmp.ne.s32.totalorder %s113, %s115
    %p122 = scmp.eq.s32.totalorder %s21, 1
    %p123 = por %p121, %p122
    %p124 = scmp.ne.s32.totalorder %s115, %s116
    %p125 = scmp.eq.s32.totalorder %s21, 0
    %p126 = por %p124, %p125
    %p127 = scmp.ne.s32.totalorder %s115, %s116
    %p128 = scmp.eq.s32.totalorder %s22, 1
    %p129 = por %p127, %p128
    %p131 = scmp.ne.s32.totalorder %s116, %s130
    %p132 = scmp.eq.s32.totalorder %s22, 0
    %p133 = por %p131, %p132
    %s135 = sadd.s32 %s134, 1
    %p138 = scmp.eq.s32.totalorder %s16, 1
    %p139 = scmp.ne.s32.totalorder %s134, %s136
    %p140 = scmp.eq.s32.totalorder %s16, 0
    %p141 = por %p139, %p140
    %p142 = scmp.ne.s32.totalorder %s134, %s136
    %p143 = scmp.eq.s32.totalorder %s21, 1
    %p144 = por %p142, %p143
    %p145 = scmp.ne.s32.totalorder %s136, %s137
    %p146 = scmp.eq.s32.totalorder %s21, 0
    %p147 = por %p145, %p146
    %p148 = scmp.ne.s32.totalorder %s136, %s137
    %p149 = scmp.eq.s32.totalorder %s22, 1
    %p150 = por %p148, %p149
    %p152 = scmp.ne.s32.totalorder %s137, %s151
    %p153 = scmp.eq.s32.totalorder %s22, 0
    %p154 = por %p152, %p153
    %s156 = sadd.s32 %s155, 1
    %p159 = scmp.eq.s32.totalorder %s16, 1
    %p160 = scmp.ne.s32.totalorder %s155, %s157
    %p161 = scmp.eq.s32.totalorder %s16, 0
    %p162 = por %p160, %p161
    %p163 = scmp.ne.s32.totalorder %s155, %s157
    %p164 = scmp.eq.s32.totalorder %s21, 1
    %p165 = por %p163, %p164
    %p166 = scmp.ne.s32.totalorder %s157, %s158
    %p167 = scmp.eq.s32.totalorder %s21, 0
    %p168 = por %p166, %p167
    %p169 = scmp.ne.s32.totalorder %s157, %s158
    %p170 = scmp.eq.s32.totalorder %s22, 1
    %p171 = por %p169, %p170
    %p173 = scmp.ne.s32.totalorder %s158, %s172
    %p174 = scmp.eq.s32.totalorder %s22, 0
    %p175 = por %p173, %p174
    %s177 = sadd.s32 %s176, 1
    %p180 = scmp.eq.s32.totalorder %s16, 1
    %p181 = scmp.ne.s32.totalorder %s176, %s178
    %p182 = scmp.eq.s32.totalorder %s16, 0
    %p183 = por %p181, %p182
    %p184 = scmp.ne.s32.totalorder %s176, %s178
    %p185 = scmp.eq.s32.totalorder %s21, 1
    %p186 = por %p184, %p185
    %p187 = scmp.ne.s32.totalorder %s178, %s179
    %p188 = scmp.eq.s32.totalorder %s21, 0
    %p189 = por %p187, %p188
    %p190 = scmp.ne.s32.totalorder %s178, %s179
    %p191 = scmp.eq.s32.totalorder %s22, 1
    %p192 = por %p190, %p191
    %p194 = scmp.ne.s32.totalorder %s179, %s193
    %p195 = scmp.eq.s32.totalorder %s22, 0
    %p196 = por %p194, %p195
    %s198 = sadd.s32 %s197, 1
    %p201 = scmp.eq.s32.totalorder %s16, 1
    %p202 = scmp.ne.s32.totalorder %s197, %s199
    %p203 = scmp.eq.s32.totalorder %s16, 0
    %p204 = por %p202, %p203
    %p205 = scmp.ne.s32.totalorder %s197, %s199
    %p206 = scmp.eq.s32.totalorder %s21, 1
    %p207 = por %p205, %p206
    %p208 = scmp.ne.s32.totalorder %s199, %s200
    %p209 = scmp.eq.s32.totalorder %s21, 0
    %p210 = por %p208, %p209
    %p211 = scmp.ne.s32.totalorder %s199, %s200
    %p212 = scmp.eq.s32.totalorder %s22, 1
    %p213 = por %p211, %p212
    %p215 = scmp.ne.s32.totalorder %s200, %s214
    %p216 = scmp.eq.s32.totalorder %s22, 0
    %p217 = por %p215, %p216
    %s219 = sadd.s32 %s218, 1
    %p222 = scmp.eq.s32.totalorder %s16, 1
    %p223 = scmp.ne.s32.totalorder %s218, %s220
    %p224 = scmp.eq.s32.totalorder %s16, 0
    %p225 = por %p223, %p224
    %p226 = scmp.ne.s32.totalorder %s218, %s220
    %p227 = scmp.eq.s32.totalorder %s21, 1
    %p228 = por %p226, %p227
    %p229 = scmp.ne.s32.totalorder %s220, %s221
    %p230 = scmp.eq.s32.totalorder %s21, 0
    %p231 = por %p229, %p230
    %p232 = scmp.ne.s32.totalorder %s220, %s221
    %p233 = scmp.eq.s32.totalorder %s22, 1
    %p234 = por %p232, %p233
    %p236 = scmp.ne.s32.totalorder %s221, %s235
    %p237 = scmp.eq.s32.totalorder %s22, 0
    %p238 = por %p236, %p237
    %s239 = ssub.s32 %s16, %s23
    %p240 = scmp.eq.s32.totalorder %s239, 0
    %s242 = sadd.s32 %s241, 1
    %s243 = scalar_select %p240, %s241, %s242
    %p246 = pneg %p240
    %p247 = scmp.eq.s32.totalorder %s16, 1
    %p248 = por %p246, %p247
    %p249 = scmp.ne.s32.totalorder %s241, %s244
    %p250 = scmp.eq.s32.totalorder %s16, 0
    %p251 = por %p249, %p250
    %p252 = scmp.ne.s32.totalorder %s241, %s244
    %p253 = scmp.eq.s32.totalorder %s21, 1
    %p254 = por %p252, %p253
    %p255 = scmp.ne.s32.totalorder %s244, %s245
    %p256 = scmp.eq.s32.totalorder %s21, 0
    %p257 = por %p255, %p256
    %p258 = scmp.ne.s32.totalorder %s244, %s245
    %p259 = scmp.eq.s32.totalorder %s22, 1
    %p260 = por %p258, %p259
    %p262 = scmp.ne.s32.totalorder %s245, %s261
    %p263 = scmp.eq.s32.totalorder %s22, 0
    %p264 = por %p262, %p263
    %p265 = scmp.le.s32.totalorder 1, %s16
    %p266 = scmp.lt.s32.totalorder %s16, 3
    %p267 = pnand %p265, %p266
    %p268 = pneg %p267
    // Predicated region
    $region9: #{multibranch_forward_pallas.11} parent=5 // pred_check
      _
    $region10: #{multibranch_forward_pallas.11} parent=5 // pred_check_branch
      %270 = sbr.rel (%p267) target = $region12
    $region11: #{multibranch_forward_pallas.11} parent=5 // pred_region
      %s271 = ssub.s32 %s16, 1
      // Predicated region
      $region13: #{multibranch_forward_pallas.11} parent=11 // pred_check
        %p272 = pneg %p63
      $region14: #{multibranch_forward_pallas.11} parent=11 // pred_check_branch
        %274 = sbr.rel (%p272) target = $region16
      $region15: #{multibranch_forward_pallas.11} parent=11 // pred_region
        _
      $region16: #{multibranch_forward_pallas.11} parent=11 // pred_fallthru
        _
      // Predicated region
      $region17: #{multibranch_forward_pallas.11} parent=11 // pred_check
        %p275 = pneg %p84
      $region18: #{multibranch_forward_pallas.11} parent=11 // pred_check_branch
        %277 = sbr.rel (%p275) target = $region20
      $region19: #{multibranch_forward_pallas.11} parent=11 // pred_region
        _
      $region20: #{multibranch_forward_pallas.11} parent=11 // pred_fallthru
        _
      // Predicated region
      $region21: #{multibranch_forward_pallas.11} parent=11 // pred_check
        %p278 = pneg %p105
      $region22: #{multibranch_forward_pallas.11} parent=11 // pred_check_branch
        %280 = sbr.rel (%p278) target = $region24
      $region23: #{multibranch_forward_pallas.11} parent=11 // pred_region
        _
      $region24: #{multibranch_forward_pallas.11} parent=11 // pred_fallthru
        _
      // Predicated region
      $region25: #{multibranch_forward_pallas.11} parent=11 // pred_check
        %p281 = pneg %p126
      $region26: #{multibranch_forward_pallas.11} parent=11 // pred_check_branch
        %283 = sbr.rel (%p281) target = $region28
      $region27: #{multibranch_forward_pallas.11} parent=11 // pred_region
        _
      $region28: #{multibranch_forward_pallas.11} parent=11 // pred_fallthru
        _
      // Predicated region
      $region29: #{multibranch_forward_pallas.11} parent=11 // pred_check
        %p284 = pneg %p147
      $region30: #{multibranch_forward_pallas.11} parent=11 // pred_check_branch
        %286 = sbr.rel (%p284) target = $region32
      $region31: #{multibranch_forward_pallas.11} parent=11 // pred_region
        _
      $region32: #{multibranch_forward_pallas.11} parent=11 // pred_fallthru
        _
      // Predicated region
      $region33: #{multibranch_forward_pallas.11} parent=11 // pred_check
        %p287 = pneg %p168
      $region34: #{multibranch_forward_pallas.11} parent=11 // pred_check_branch
        %289 = sbr.rel (%p287) target = $region36
      $region35: #{multibranch_forward_pallas.11} parent=11 // pred_region
        _
      $region36: #{multibranch_forward_pallas.11} parent=11 // pred_fallthru
        _
      // Predicated region
      $region37: #{multibranch_forward_pallas.11} parent=11 // pred_check
        %p290 = pneg %p189
      $region38: #{multibranch_forward_pallas.11} parent=11 // pred_check_branch
        %292 = sbr.rel (%p290) target = $region40
      $region39: #{multibranch_forward_pallas.11} parent=11 // pred_region
        _
      $region40: #{multibranch_forward_pallas.11} parent=11 // pred_fallthru
        _
      // Predicated region
      $region41: #{multibranch_forward_pallas.11} parent=11 // pred_check
        %p293 = pneg %p210
      $region42: #{multibranch_forward_pallas.11} parent=11 // pred_check_branch
        %295 = sbr.rel (%p293) target = $region44
      $region43: #{multibranch_forward_pallas.11} parent=11 // pred_region
        _
      $region44: #{multibranch_forward_pallas.11} parent=11 // pred_fallthru
        _
      // Predicated region
      $region45: #{multibranch_forward_pallas.11} parent=11 // pred_check
        %p296 = pneg %p231
      $region46: #{multibranch_forward_pallas.11} parent=11 // pred_check_branch
        %298 = sbr.rel (%p296) target = $region48
      $region47: #{multibranch_forward_pallas.11} parent=11 // pred_region
        _
      $region48: #{multibranch_forward_pallas.11} parent=11 // pred_fallthru
        _
    $region12: #{multibranch_forward_pallas.11} parent=5 // pred_fallthru
      _
    %p299 = scmp.lt.s32.totalorder %s16, 2
    // Predicated region
    $region49: #{multibranch_forward_pallas.11} parent=5 // pred_check
      %p300 = pneg %p299
    $region50: #{multibranch_forward_pallas.11} parent=5 // pred_check_branch
      %302 = sbr.rel (%p300) target = $region52
    $region51: #{multibranch_forward_pallas.11} parent=5 // pred_region
      // Predicated region
      $region53: #{multibranch_forward_pallas.11} parent=51 // pred_check
        %p303 = pneg %p36
      $region54: #{multibranch_forward_pallas.11} parent=51 // pred_check_branch
        %305 = sbr.rel (%p303) target = $region56
      $region55: #{multibranch_forward_pallas.11} parent=51 // pred_region
        %p306 = scmp.lt.s32.totalorder %s16, 1
        %s307 = scalar_select %p306, %s16, 1
        %s308 = smul.addr %s307, 5
        %s309 = smul.addr %s308, 8
        %s310 = scalar_lea.vmem %s0, %s309
      $region56: #{multibranch_forward_pallas.11} parent=51 // pred_fallthru
        _
    $region52: #{multibranch_forward_pallas.11} parent=5 // pred_fallthru
      _
    %p311 = scmp.le.s32.totalorder 1, %s16
    %p312 = scmp.lt.s32.totalorder %s16, 3
    %p313 = pnand %p311, %p312
    %p314 = pneg %p313
    // Predicated region
    $region57: #{multibranch_forward_pallas.11} parent=5 // pred_check
      _
    $region58: #{multibranch_forward_pallas.11} parent=5 // pred_check_branch
      %316 = sbr.rel (%p313) target = $region60
    $region59: #{multibranch_forward_pallas.11} parent=5 // pred_region
      %s317 = ssub.s32 %s16, 1
      %p318 = scmp.lt.s32.totalorder %s21, 1
      %s319 = scalar_select %p318, %s21, 1
      %s320 = smul.addr %s319, 5
      %s321 = smul.addr %s320, 8
      %s322 = scalar_lea.vmem %s0, %s321
      %p323 = pneg %p42
      %p324 = pneg %p39
      %p325 = pneg %p63
      %p326 = pneg %p60
      %p327 = pneg %p84
      %p328 = pneg %p81
      %p329 = pneg %p105
      %p330 = pneg %p102
      %p331 = pneg %p126
      %p332 = pneg %p123
      %p333 = pneg %p147
      %p334 = pneg %p144
      %p335 = pneg %p168
      %p336 = pneg %p165
      %p337 = pneg %p189
      %p338 = pneg %p186
      %p339 = pneg %p210
      %p340 = pneg %p207
      %p341 = pneg %p231
      %p342 = pneg %p228
      %p343 = pneg %p257
      %p344 = pneg %p254
      %p345 = scmp.lt.s32.totalorder %s21, 1
      %s346 = scalar_select %p345, %s21, 1
      %s347 = smul.addr %s346, 5
      %s348 = smul.addr %s347, 8
      %s349 = scalar_lea.vmem %s10, %s348
      %p350 = scmp.lt.s32.totalorder %s21, 1
      %s351 = scalar_select %p350, %s21, 1
      %s352 = smul.addr %s351, 5
      %s353 = smul.addr %s352, 8
      %s354 = scalar_lea.vmem %s0, %s353
      %p355 = scmp.lt.s32.totalorder %s21, 1
      %s356 = scalar_select %p355, %s21, 1
      %s357 = smul.addr %s356, 5
      %s358 = smul.addr %s357, 8
      %s359 = scalar_lea.vmem %s10, %s358
      %v360 = vld [vmem:[%s354] sm:$0xff]
      %v361 = vld [vmem:[%s354 + $0x8] sm:$0xff]
      %v362 = vld [vmem:[%s354 + $0x10] sm:$0xff]
      %v363 = vld [vmem:[%s354 + $0x18] sm:$0xff]
      %v364 = vld [vmem:[%s354 + $0x20] sm:$0x1f]
      %v365 = vadd.f32 %v360, %v361
      %v366 = vadd.f32 %v365, %v362
      %v367 = vadd.f32 %v366, %v363
      %vm368 = vcmask 1044480
      %v369 = vsel %vm368, %v364, 0.0
      %v370 = vadd.f32 %v367, %v369
      %v371 = vrot.slane %v370, 4
      %v372 = vadd.f32 %v370, %v371
      %v373 = vrot.slane %v372, 2
      %v374 = vadd.f32 %v372, %v373
      %v375 = vrot.slane %v374, 1
      %v376 = vadd.f32 %v374, %v375
      %v377 = vrcp.pop 37.0
      %v378 = vmul.f32 37.0, %v377
      %v379 = vsub.f32 1.0, %v378
      %v380 = vmul.f32 %v377, %v379
      %v381 = vadd.f32 %v377, %v380
      %vm382 = vweird.f32 %v377
      %v383 = vsel %vm382, %v377, %v381
      %v384 = vmul.f32 %v376, %v383
      %v385 = vld [vmem:[%s1] sm:$0xff]
      %v386 = vld [vmem:[%s1 + $0x8] sm:$0xff]
      %v387 = vld [vmem:[%s1 + $0x10] sm:$0xff]
      %v388 = vld [vmem:[%s1 + $0x18] sm:$0xff]
      %v389 = vld [vmem:[%s1 + $0x20] sm:$0xff]
      %v390 = vld [vmem:[%s1 + $0x28] sm:$0xff]
      %v391 = vld [vmem:[%s1 + $0x30] sm:$0xff]
      %v392 = vld [vmem:[%s1 + $0x38] sm:$0xff]
      %v393 = vld [vmem:[%s1 + $0x40] sm:$0xff]
      %v394 = vld [vmem:[%s1 + $0x48] sm:$0xff]
      %v395 = vld [vmem:[%s1 + $0x50] sm:$0xff]
      %v396 = vld [vmem:[%s1 + $0x58] sm:$0xff]
      %v397 = vld [vmem:[%s1 + $0x60] sm:$0xff]
      %v398 = vld [vmem:[%s1 + $0x68] sm:$0xff]
      %v399 = vld [vmem:[%s1 + $0x70] sm:$0xff]
      %v400 = vld [vmem:[%s1 + $0x78] sm:$0xff]
      %v401 = vld [vmem:[%s2] sm:$0x1]
      %402 = vmatpush.msra.mxu0 %v400
      %403 = vmatpush.msra.mxu0 %v399
      %404 = vmatpush.msra.mxu0 %v398
      %405 = vmatpush.msra.mxu0 %v397
      %406 = vmatpush.msra.mxu0 %v396
      %407 = vmatpush.msra.mxu0 %v395
      %408 = vmatpush.msra.mxu0 %v394
      %409 = vmatpush.msra.mxu0 %v393
      %410 = vmatpush.msra.mxu0 %v392
      %411 = vmatpush.msra.mxu0 %v391
      %412 = vmatpush.msra.mxu0 %v390
      %413 = vmatpush.msra.mxu0 %v389
      %414 = vmatpush.msra.mxu0 %v388
      %415 = vmatpush.msra.mxu0 %v387
      %416 = vmatpush.msra.mxu0 %v386
      %417 = vmatpush.msra.mxu0 %v385
      %418 = vmatmul.f32.gmra.mxu0 %v384
      %v419 = vpop.f32.mrf.mxu0
      %v420 = vadd.f32 %v401, %v419
      %421 = vdwg.mxu0
      %vm422 = vcmp.gt.f32.partialorder %v420, 0.0
      %v423 = vmul.f32 %v420, 1.442695
      %v424 = vpow.pop %v423
      %v425 = vsub.f32 %v424, 1.0
      %v426 = vsel %vm422, %v420, %v425
      %v427 = vld [vmem:[%s3] sm:$0xff]
      %v428 = vld [vmem:[%s3 + $0x8] sm:$0xff]
      %v429 = vld [vmem:[%s3 + $0x10] sm:$0xff]
      %v430 = vld [vmem:[%s3 + $0x18] sm:$0xff]
      %v431 = vld [vmem:[%s3 + $0x20] sm:$0xff]
      %v432 = vld [vmem:[%s3 + $0x28] sm:$0xff]
      %v433 = vld [vmem:[%s3 + $0x30] sm:$0xff]
      %v434 = vld [vmem:[%s3 + $0x38] sm:$0xff]
      %v435 = vld [vmem:[%s3 + $0x40] sm:$0xff]
      %v436 = vld [vmem:[%s3 + $0x48] sm:$0xff]
      %v437 = vld [vmem:[%s3 + $0x50] sm:$0xff]
      %v438 = vld [vmem:[%s3 + $0x58] sm:$0xff]
      %v439 = vld [vmem:[%s3 + $0x60] sm:$0xff]
      %v440 = vld [vmem:[%s3 + $0x68] sm:$0xff]
      %v441 = vld [vmem:[%s3 + $0x70] sm:$0xff]
      %v442 = vld [vmem:[%s3 + $0x78] sm:$0xff]
      %v443 = vld [vmem:[%s4] sm:$0x1]
      %444 = vmatpush.msra.mxu0 %v442
      %445 = vmatpush.msra.mxu0 %v441
      %446 = vmatpush.msra.mxu0 %v440
      %447 = vmatpush.msra.mxu0 %v439
      %448 = vmatpush.msra.mxu0 %v438
      %449 = vmatpush.msra.mxu0 %v437
      %450 = vmatpush.msra.mxu0 %v436
      %451 = vmatpush.msra.mxu0 %v435
      %452 = vmatpush.msra.mxu0 %v434
      %453 = vmatpush.msra.mxu0 %v433
      %454 = vmatpush.msra.mxu0 %v432
      %455 = vmatpush.msra.mxu0 %v431
      %456 = vmatpush.msra.mxu0 %v430
      %457 = vmatpush.msra.mxu0 %v429
      %458 = vmatpush.msra.mxu0 %v428
      %459 = vmatpush.msra.mxu0 %v427
      %460 = vmatmul.f32.gmra.mxu0 %v426
      %v461 = vpop.f32.mrf.mxu0
      %v462 = vadd.f32 %v443, %v461
      %463 = vdwg.mxu0
      %v464 = vsub.f32 0.0, %v462
      %v465 = vmul.f32 %v464, 1.442695
      %v466 = vpow.pop %v465
      %v467 = vadd.f32 %v466, 1.0
      %v468 = vrcp.pop %v467
      %v469 = vmul.f32 %v467, %v468
      %v470 = vsub.f32 1.0, %v469
      %v471 = vmul.f32 %v468, %v470
      %v472 = vadd.f32 %v468, %v471
      %vm473 = vweird.f32 %v467
      %vm474 = vweird.f32 %v468
      %vm475 = vmor %vm473, %vm474
      %v476 = vsel %vm475, %v468, %v472
      %v477 = vand.u32 2147483647, %v467
      %vm478 = vcmp.eq.f32.partialorder %v477, 8.507059e+37
      %v479 = vand.u32 %v467, 2147483648
      %v480 = vor.u32 1.1754944e-38, %v479
      %v481 = vsel %vm478, %v480, %v476
      %v482 = vmul.f32 1.0, %v481
      %v483 = vperm.slane %v482, 0
      %v484 = vmul.f32 %v360, %v483
      %v485 = vmul.f32 %v361, %v483
      %v486 = vmul.f32 %v362, %v483
      %v487 = vmul.f32 %v363, %v483
      %v488 = vmul.f32 %v364, %v483
      %v489 = vld [vmem:[%s5] sm:$0xff]
      %v490 = vld [vmem:[%s5 + $0x8] sm:$0xff]
      %v491 = vld [vmem:[%s5 + $0x10] sm:$0xff]
      %v492 = vld [vmem:[%s5 + $0x18] sm:$0xff]
      %v493 = vld [vmem:[%s5 + $0x20] sm:$0xff]
      %v494 = vld [vmem:[%s5 + $0x28] sm:$0xff]
      %v495 = vld [vmem:[%s5 + $0x30] sm:$0xff]
      %v496 = vld [vmem:[%s5 + $0x38] sm:$0xff]
      %v497 = vld [vmem:[%s5 + $0x40] sm:$0xff]
      %v498 = vld [vmem:[%s5 + $0x48] sm:$0xff]
      %v499 = vld [vmem:[%s5 + $0x50] sm:$0xff]
      %v500 = vld [vmem:[%s5 + $0x58] sm:$0xff]
      %v501 = vld [vmem:[%s5 + $0x60] sm:$0xff]
      %v502 = vld [vmem:[%s5 + $0x68] sm:$0xff]
      %v503 = vld [vmem:[%s5 + $0x70] sm:$0xff]
      %v504 = vld [vmem:[%s5 + $0x78] sm:$0xff]
      %505 = vmatpush.msra.mxu0 %v504
      %506 = vmatpush.msra.mxu0 %v503
      %507 = vmatpush.msra.mxu0 %v502
      %508 = vmatpush.msra.mxu0 %v501
      %509 = vmatpush.msra.mxu0 %v500
      %510 = vmatpush.msra.mxu0 %v499
      %511 = vmatpush.msra.mxu0 %v498
      %512 = vmatpush.msra.mxu0 %v497
      %513 = vmatpush.msra.mxu0 %v496
      %514 = vmatpush.msra.mxu0 %v495
      %515 = vmatpush.msra.mxu0 %v494
      %516 = vmatpush.msra.mxu0 %v493
      %517 = vmatpush.msra.mxu0 %v492
      %518 = vmatpush.msra.mxu0 %v491
      %519 = vmatpush.msra.mxu0 %v490
      %520 = vmatpush.msra.mxu0 %v489
      %521 = vmatmul.f32.gmra.mxu0 %v484
      %v522 = vpop.f32.mrf.mxu0
      %v523 = vadd.f32 0.0, %v522
      %524 = vmatmul.f32.gmra.mxu0 %v485
      %v525 = vpop.f32.mrf.mxu0
      %v526 = vadd.f32 0.0, %v525
      %527 = vmatmul.f32.gmra.mxu0 %v486
      %v528 = vpop.f32.mrf.mxu0
      %v529 = vadd.f32 0.0, %v528
      %530 = vmatmul.f32.gmra.mxu0 %v487
      %v531 = vpop.f32.mrf.mxu0
      %v532 = vadd.f32 0.0, %v531
      %533 = vmatmul.f32.gmra.mxu0 %v488
      %v534 = vpop.f32.mrf.mxu0
      %v535 = vadd.f32 0.0, %v534
      %536 = vdwg.mxu0
      %v537 = vld [vmem:[%s6] sm:$0x1]
      %v539 = vperm.slane %v537, 0
      %v541 = vmul.f32 %v523, %v539
      %v542 = vmul.f32 %v526, %v539
      %v543 = vmul.f32 %v529, %v539
      %v544 = vmul.f32 %v532, %v539
      %v545 = vmul.f32 %v535, %v539
      %v546 = vld [vmem:[%s7] sm:$0x1]
      %v548 = vperm.slane %v546, 0
      %v550 = vadd.f32 %v541, %v548
      %v551 = vadd.f32 %v542, %v548
      %v552 = vadd.f32 %v543, %v548
      %v553 = vadd.f32 %v544, %v548
      %v554 = vadd.f32 %v545, %v548
      %vm555 = vcmp.gt.f32.partialorder %v550, 0.0
      %vm556 = vcmp.gt.f32.partialorder %v551, 0.0
      %vm557 = vcmp.gt.f32.partialorder %v552, 0.0
      %vm558 = vcmp.gt.f32.partialorder %v553, 0.0
      %vm559 = vcmp.gt.f32.partialorder %v554, 0.0
      %v560 = vmul.f32 %v550, 1.442695
      %v561 = vpow.pop %v560
      %v562 = vmul.f32 %v551, 1.442695
      %v563 = vpow.pop %v562
      %v564 = vmul.f32 %v552, 1.442695
      %v565 = vpow.pop %v564
      %v566 = vmul.f32 %v553, 1.442695
      %v567 = vpow.pop %v566
      %v568 = vmul.f32 %v554, 1.442695
      %v569 = vpow.pop %v568
      %v570 = vsub.f32 %v561, 1.0
      %v571 = vsub.f32 %v563, 1.0
      %v572 = vsub.f32 %v565, 1.0
      %v573 = vsub.f32 %v567, 1.0
      %v574 = vsub.f32 %v569, 1.0
      %v575 = vsel %vm555, %v550, %v570
      %v576 = vsel %vm556, %v551, %v571
      %v577 = vsel %vm557, %v552, %v572
      %v578 = vsel %vm558, %v553, %v573
      %v579 = vsel %vm559, %v554, %v574
      %v580 = vld [vmem:[%s8] sm:$0xff]
      %v581 = vld [vmem:[%s8 + $0x8] sm:$0xff]
      %v582 = vld [vmem:[%s8 + $0x10] sm:$0xff]
      %v583 = vld [vmem:[%s8 + $0x18] sm:$0xff]
      %v584 = vld [vmem:[%s8 + $0x20] sm:$0xff]
      %v585 = vld [vmem:[%s8 + $0x28] sm:$0xff]
      %v586 = vld [vmem:[%s8 + $0x30] sm:$0xff]
      %v587 = vld [vmem:[%s8 + $0x38] sm:$0xff]
      %v588 = vld [vmem:[%s8 + $0x40] sm:$0xff]
      %v589 = vld [vmem:[%s8 + $0x48] sm:$0xff]
      %v590 = vld [vmem:[%s8 + $0x50] sm:$0xff]
      %v591 = vld [vmem:[%s8 + $0x58] sm:$0xff]
      %v592 = vld [vmem:[%s8 + $0x60] sm:$0xff]
      %v593 = vld [vmem:[%s8 + $0x68] sm:$0xff]
      %v594 = vld [vmem:[%s8 + $0x70] sm:$0xff]
      %v595 = vld [vmem:[%s8 + $0x78] sm:$0xff]
      %v596 = vld [vmem:[%s9] sm:$0x1]
      %v598 = vperm.slane %v596, 0
      %600 = vmatpush.msra.mxu0 %v595
      %601 = vmatpush.msra.mxu0 %v594
      %602 = vmatpush.msra.mxu0 %v593
      %603 = vmatpush.msra.mxu0 %v592
      %604 = vmatpush.msra.mxu0 %v591
      %605 = vmatpush.msra.mxu0 %v590
      %606 = vmatpush.msra.mxu0 %v589
      %607 = vmatpush.msra.mxu0 %v588
      %608 = vmatpush.msra.mxu0 %v587
      %609 = vmatpush.msra.mxu0 %v586
      %610 = vmatpush.msra.mxu0 %v585
      %611 = vmatpush.msra.mxu0 %v584
      %612 = vmatpush.msra.mxu0 %v583
      %613 = vmatpush.msra.mxu0 %v582
      %614 = vmatpush.msra.mxu0 %v581
      %615 = vmatpush.msra.mxu0 %v580
      %616 = vmatmul.f32.gmra.mxu0 %v575
      %v617 = vpop.f32.mrf.mxu0
      %v618 = vadd.f32 %v598, %v617
      %619 = vmatmul.f32.gmra.mxu0 %v576
      %v620 = vpop.f32.mrf.mxu0
      %v621 = vadd.f32 %v598, %v620
      %622 = vmatmul.f32.gmra.mxu0 %v577
      %v623 = vpop.f32.mrf.mxu0
      %v624 = vadd.f32 %v598, %v623
      %625 = vmatmul.f32.gmra.mxu0 %v578
      %v626 = vpop.f32.mrf.mxu0
      %v627 = vadd.f32 %v598, %v626
      %628 = vmatmul.f32.gmra.mxu0 %v579
      %v629 = vpop.f32.mrf.mxu0
      %v630 = vadd.f32 %v598, %v629
      %631 = vdwg.mxu0
      %632 = vst [vmem:[%s359] sm:$0xff] %v618
      %633 = vst [vmem:[%s359 + $0x8] sm:$0xff] %v621
      %634 = vst [vmem:[%s359 + $0x10] sm:$0xff] %v624
      %635 = vst [vmem:[%s359 + $0x18] sm:$0xff] %v627
      %636 = vst [vmem:[%s359 + $0x20] sm:$0x1f] %v630
      %p637 = scmp.lt.s32.totalorder %s21, 1
      %s638 = scalar_select %p637, %s21, 1
      %s639 = smul.addr %s638, 5
      %s640 = smul.addr %s639, 8
      %s641 = scalar_lea.vmem %s10, %s640
      // Predicated region
      $region61: #{multibranch_forward_pallas.11} parent=59 // pred_check
        %p642 = pneg %p254
      $region62: #{multibranch_forward_pallas.11} parent=59 // pred_check_branch
        %644 = sbr.rel (%p642) target = $region64
      $region63: #{multibranch_forward_pallas.11} parent=59 // pred_region
        _
      $region64: #{multibranch_forward_pallas.11} parent=59 // pred_fallthru
        _
    $region60: #{multibranch_forward_pallas.11} parent=5 // pred_fallthru
      _
    %p645 = scmp.le.s32.totalorder 2, %s16
    // Predicated region
    $region65: #{multibranch_forward_pallas.11} parent=5 // pred_check
      %p646 = pneg %p645
    $region66: #{multibranch_forward_pallas.11} parent=5 // pred_check_branch
      %648 = sbr.rel (%p646) target = $region68
    $region67: #{multibranch_forward_pallas.11} parent=5 // pred_region
      %s649 = ssub.s32 %s16, 2
      // Predicated region
      $region69: #{multibranch_forward_pallas.11} parent=67 // pred_check
        %p650 = pneg %p260
      $region70: #{multibranch_forward_pallas.11} parent=67 // pred_check_branch
        %652 = sbr.rel (%p650) target = $region72
      $region71: #{multibranch_forward_pallas.11} parent=67 // pred_region
        %p653 = scmp.lt.s32.totalorder %s22, 1
        %s654 = scalar_select %p653, %s22, 1
        %s655 = smul.addr %s654, 5
        %s656 = smul.addr %s655, 8
        %s657 = scalar_lea.vmem %s10, %s656
      $region72: #{multibranch_forward_pallas.11} parent=67 // pred_fallthru
        _
    $region68: #{multibranch_forward_pallas.11} parent=5 // pred_fallthru
      _
  $region6: #{multibranch_forward_pallas.11} parent=0 // loop_footer
    %s20 = sadd.s32 1, %s16
  $region7: #{multibranch_forward_pallas.11} parent=0 // loop_footer_branch
    %15 = sbr.rel target = $region3
  $region8: #{multibranch_forward_pallas.11} parent=0 // loop_exit
    _

// kernel: multibranch_forward_pallas.6
$region0: #{multibranch_forward_pallas.6}
  #allocation0 [shape = 'u32[]', space=smem, size = 0x4, offset = 0x4, fixed_abs, tag = 'smem constant byte address 0x4 - core index']
  #allocation1 [shape = 'u32[72,128]{1,0:T(1,128)}', space=vmem, size = 0x9000, scoped, tag = 'internal scratch']
  %s0 = inlined_call_operand.vmem [shape: f32[2,120,128], index: 0, kind: input, shape index: {}]
  %s1 = inlined_call_operand.vmem [shape: f32[25,128,128], index: 1, kind: input, shape index: {}]
  %s2 = inlined_call_operand.vmem [shape: f32[1,128], index: 2, kind: input, shape index: {}]
  %s3 = inlined_call_operand.vmem [shape: f32[1,128], index: 3, kind: input, shape index: {}]
  %s4 = inlined_call_operand.vmem [shape: f32[47,96], index: 4, kind: input, shape index: {}]
  %s5 = inlined_call_operand.vmem [shape: f32[2,47,128], index: 5, kind: output, shape index: {}]
  %s6 = sld [smem:[#allocation0]]
  $region53: #{multibranch_forward_pallas.6} parent=0
    _
  %s8 = ssub.s32 1, %s6
  %s9 = scalar_select 0, %s8, %s6
  loop: start=0, step=1, limit=4
  $region2: #{multibranch_forward_pallas.6} parent=0 // loop_pre_header
    _
  $region3: #{multibranch_forward_pallas.6} parent=0 // loop_header
    %s11 = sphi 0, %s15
    %p12 = scmp.ge.s32.totalorder %s11, 4
    %s21 = sphi 0, %s23
    %s24 = sphi 0, %s21
    %s25 = sphi 0, %s24
    %s41 = sphi 0, %s25
    %s45 = sphi 0, %s45
    %s47 = sphi 0, %s45
    %s48 = sphi 0, %s47
    %s62 = sphi 0, %s48
    %s66 = sphi 0, %s66
    %s68 = sphi 0, %s66
    %s69 = sphi 0, %s68
    %s83 = sphi 0, %s69
    %s87 = sphi 0, %s87
    %s89 = sphi 0, %s87
    %s90 = sphi 0, %s89
    %s104 = sphi 0, %s90
    %s108 = sphi 0, %s108
    %s110 = sphi 0, %s108
    %s111 = sphi 0, %s110
    %s125 = sphi 0, %s111
    %s131 = sphi 0, %s133
    %s134 = sphi 0, %s131
    %s135 = sphi 0, %s134
    %s151 = sphi 0, %s135
  $region4: #{multibranch_forward_pallas.6} parent=0 // loop_header_branch
    %14 = sbr.rel (%p12) target = $region8
  $region5: #{multibranch_forward_pallas.6} parent=0 // loop_body
    %s16 = ssub.s32 %s11, 1
    %s17 = ssub.s32 %s11, 2
    %s18 = sadd.s32 %s11, 1
    %s19 = ssub.s32 %s11, %s18
    %p20 = scmp.eq.s32.totalorder %s19, 0
    %s22 = sadd.s32 %s21, 1
    %s23 = scalar_select %p20, %s21, %s22
    %p26 = pneg %p20
    %p27 = scmp.eq.s32.totalorder %s11, 1
    %p28 = por %p26, %p27
    %p29 = scmp.ne.s32.totalorder %s21, %s24
    %p30 = scmp.eq.s32.totalorder %s11, 0
    %p31 = por %p29, %p30
    %p32 = scmp.ne.s32.totalorder %s21, %s24
    %p33 = scmp.eq.s32.totalorder %s16, 1
    %p34 = por %p32, %p33
    %p35 = scmp.ne.s32.totalorder %s24, %s25
    %p36 = scmp.eq.s32.totalorder %s16, 0
    %p37 = por %p35, %p36
    %p38 = scmp.ne.s32.totalorder %s24, %s25
    %p39 = scmp.eq.s32.totalorder %s17, 1
    %p40 = por %p38, %p39
    %p42 = scmp.ne.s32.totalorder %s25, %s41
    %p43 = scmp.eq.s32.totalorder %s17, 0
    %p44 = por %p42, %p43
    %s46 = sadd.s32 %s45, 1
    %p49 = scmp.eq.s32.totalorder %s11, 1
    %p50 = scmp.ne.s32.totalorder %s45, %s47
    %p51 = scmp.eq.s32.totalorder %s11, 0
    %p52 = por %p50, %p51
    %p53 = scmp.ne.s32.totalorder %s45, %s47
    %p54 = scmp.eq.s32.totalorder %s16, 1
    %p55 = por %p53, %p54
    %p56 = scmp.ne.s32.totalorder %s47, %s48
    %p57 = scmp.eq.s32.totalorder %s16, 0
    %p58 = por %p56, %p57
    %p59 = scmp.ne.s32.totalorder %s47, %s48
    %p60 = scmp.eq.s32.totalorder %s17, 1
    %p61 = por %p59, %p60
    %p63 = scmp.ne.s32.totalorder %s48, %s62
    %p64 = scmp.eq.s32.totalorder %s17, 0
    %p65 = por %p63, %p64
    %s67 = sadd.s32 %s66, 1
    %p70 = scmp.eq.s32.totalorder %s11, 1
    %p71 = scmp.ne.s32.totalorder %s66, %s68
    %p72 = scmp.eq.s32.totalorder %s11, 0
    %p73 = por %p71, %p72
    %p74 = scmp.ne.s32.totalorder %s66, %s68
    %p75 = scmp.eq.s32.totalorder %s16, 1
    %p76 = por %p74, %p75
    %p77 = scmp.ne.s32.totalorder %s68, %s69
    %p78 = scmp.eq.s32.totalorder %s16, 0
    %p79 = por %p77, %p78
    %p80 = scmp.ne.s32.totalorder %s68, %s69
    %p81 = scmp.eq.s32.totalorder %s17, 1
    %p82 = por %p80, %p81
    %p84 = scmp.ne.s32.totalorder %s69, %s83
    %p85 = scmp.eq.s32.totalorder %s17, 0
    %p86 = por %p84, %p85
    %s88 = sadd.s32 %s87, 1
    %p91 = scmp.eq.s32.totalorder %s11, 1
    %p92 = scmp.ne.s32.totalorder %s87, %s89
    %p93 = scmp.eq.s32.totalorder %s11, 0
    %p94 = por %p92, %p93
    %p95 = scmp.ne.s32.totalorder %s87, %s89
    %p96 = scmp.eq.s32.totalorder %s16, 1
    %p97 = por %p95, %p96
    %p98 = scmp.ne.s32.totalorder %s89, %s90
    %p99 = scmp.eq.s32.totalorder %s16, 0
    %p100 = por %p98, %p99
    %p101 = scmp.ne.s32.totalorder %s89, %s90
    %p102 = scmp.eq.s32.totalorder %s17, 1
    %p103 = por %p101, %p102
    %p105 = scmp.ne.s32.totalorder %s90, %s104
    %p106 = scmp.eq.s32.totalorder %s17, 0
    %p107 = por %p105, %p106
    %s109 = sadd.s32 %s108, 1
    %p112 = scmp.eq.s32.totalorder %s11, 1
    %p113 = scmp.ne.s32.totalorder %s108, %s110
    %p114 = scmp.eq.s32.totalorder %s11, 0
    %p115 = por %p113, %p114
    %p116 = scmp.ne.s32.totalorder %s108, %s110
    %p117 = scmp.eq.s32.totalorder %s16, 1
    %p118 = por %p116, %p117
    %p119 = scmp.ne.s32.totalorder %s110, %s111
    %p120 = scmp.eq.s32.totalorder %s16, 0
    %p121 = por %p119, %p120
    %p122 = scmp.ne.s32.totalorder %s110, %s111
    %p123 = scmp.eq.s32.totalorder %s17, 1
    %p124 = por %p122, %p123
    %p126 = scmp.ne.s32.totalorder %s111, %s125
    %p127 = scmp.eq.s32.totalorder %s17, 0
    %p128 = por %p126, %p127
    %s129 = ssub.s32 %s11, %s18
    %p130 = scmp.eq.s32.totalorder %s129, 0
    %s132 = sadd.s32 %s131, 1
    %s133 = scalar_select %p130, %s131, %s132
    %p136 = pneg %p130
    %p137 = scmp.eq.s32.totalorder %s11, 1
    %p138 = por %p136, %p137
    %p139 = scmp.ne.s32.totalorder %s131, %s134
    %p140 = scmp.eq.s32.totalorder %s11, 0
    %p141 = por %p139, %p140
    %p142 = scmp.ne.s32.totalorder %s131, %s134
    %p143 = scmp.eq.s32.totalorder %s16, 1
    %p144 = por %p142, %p143
    %p145 = scmp.ne.s32.totalorder %s134, %s135
    %p146 = scmp.eq.s32.totalorder %s16, 0
    %p147 = por %p145, %p146
    %p148 = scmp.ne.s32.totalorder %s134, %s135
    %p149 = scmp.eq.s32.totalorder %s17, 1
    %p150 = por %p148, %p149
    %p152 = scmp.ne.s32.totalorder %s135, %s151
    %p153 = scmp.eq.s32.totalorder %s17, 0
    %p154 = por %p152, %p153
    %p155 = scmp.le.s32.totalorder 1, %s11
    %p156 = scmp.lt.s32.totalorder %s11, 3
    %p157 = pnand %p155, %p156
    %p158 = pneg %p157
    // Predicated region
    $region9: #{multibranch_forward_pallas.6} parent=5 // pred_check
      _
    $region10: #{multibranch_forward_pallas.6} parent=5 // pred_check_branch
      %160 = sbr.rel (%p157) target = $region12
    $region11: #{multibranch_forward_pallas.6} parent=5 // pred_region
      %s161 = ssub.s32 %s11, 1
      // Predicated region
      $region13: #{multibranch_forward_pallas.6} parent=11 // pred_check
        %p162 = pneg %p58
      $region14: #{multibranch_forward_pallas.6} parent=11 // pred_check_branch
        %164 = sbr.rel (%p162) target = $region16
      $region15: #{multibranch_forward_pallas.6} parent=11 // pred_region
        _
      $region16: #{multibranch_forward_pallas.6} parent=11 // pred_fallthru
        _
      // Predicated region
      $region17: #{multibranch_forward_pallas.6} parent=11 // pred_check
        %p165 = pneg %p79
      $region18: #{multibranch_forward_pallas.6} parent=11 // pred_check_branch
        %167 = sbr.rel (%p165) target = $region20
      $region19: #{multibranch_forward_pallas.6} parent=11 // pred_region
        _
      $region20: #{multibranch_forward_pallas.6} parent=11 // pred_fallthru
        _
      // Predicated region
      $region21: #{multibranch_forward_pallas.6} parent=11 // pred_check
        %p168 = pneg %p100
      $region22: #{multibranch_forward_pallas.6} parent=11 // pred_check_branch
        %170 = sbr.rel (%p168) target = $region24
      $region23: #{multibranch_forward_pallas.6} parent=11 // pred_region
        _
      $region24: #{multibranch_forward_pallas.6} parent=11 // pred_fallthru
        _
      // Predicated region
      $region25: #{multibranch_forward_pallas.6} parent=11 // pred_check
        %p171 = pneg %p121
      $region26: #{multibranch_forward_pallas.6} parent=11 // pred_check_branch
        %173 = sbr.rel (%p171) target = $region28
      $region27: #{multibranch_forward_pallas.6} parent=11 // pred_region
        _
      $region28: #{multibranch_forward_pallas.6} parent=11 // pred_fallthru
        _
    $region12: #{multibranch_forward_pallas.6} parent=5 // pred_fallthru
      _
    %p174 = scmp.lt.s32.totalorder %s11, 2
    // Predicated region
    $region29: #{multibranch_forward_pallas.6} parent=5 // pred_check
      %p175 = pneg %p174
    $region30: #{multibranch_forward_pallas.6} parent=5 // pred_check_branch
      %177 = sbr.rel (%p175) target = $region32
    $region31: #{multibranch_forward_pallas.6} parent=5 // pred_region
      // Predicated region
      $region33: #{multibranch_forward_pallas.6} parent=31 // pred_check
        %p178 = pneg %p31
      $region34: #{multibranch_forward_pallas.6} parent=31 // pred_check_branch
        %180 = sbr.rel (%p178) target = $region36
      $region35: #{multibranch_forward_pallas.6} parent=31 // pred_region
        %p181 = scmp.lt.s32.totalorder %s11, 1
        %s182 = scalar_select %p181, %s11, 1
        %s183 = smul.addr %s182, 15
        %s184 = smul.addr %s183, 8
        %s185 = scalar_lea.vmem %s0, %s184
      $region36: #{multibranch_forward_pallas.6} parent=31 // pred_fallthru
        _
    $region32: #{multibranch_forward_pallas.6} parent=5 // pred_fallthru
      _
    %p186 = scmp.le.s32.totalorder 1, %s11
    %p187 = scmp.lt.s32.totalorder %s11, 3
    %p188 = pnand %p186, %p187
    %p189 = pneg %p188
    // Predicated region
    $region37: #{multibranch_forward_pallas.6} parent=5 // pred_check
      _
    $region38: #{multibranch_forward_pallas.6} parent=5 // pred_check_branch
      %191 = sbr.rel (%p188) target = $region40
    $region39: #{multibranch_forward_pallas.6} parent=5 // pred_region
      %s192 = ssub.s32 %s11, 1
      %p193 = scmp.lt.s32.totalorder %s16, 1
      %s194 = scalar_select %p193, %s16, 1
      %s195 = smul.addr %s194, 15
      %s196 = smul.addr %s195, 8
      %s197 = scalar_lea.vmem %s0, %s196
      %p198 = pneg %p37
      %p199 = pneg %p34
      %p200 = pneg %p58
      %p201 = pneg %p55
      %p202 = pneg %p79
      %p203 = pneg %p76
      %p204 = pneg %p100
      %p205 = pneg %p97
      %p206 = pneg %p121
      %p207 = pneg %p118
      %p208 = pneg %p147
      %p209 = pneg %p144
      %p210 = scmp.lt.s32.totalorder %s16, 1
      %s211 = scalar_select %p210, %s16, 1
      %s212 = smul.addr %s211, 6
      %s213 = smul.addr %s212, 8
      %s214 = scalar_lea.vmem %s5, %s213
      %p215 = scmp.lt.s32.totalorder %s16, 1
      %s216 = scalar_select %p215, %s16, 1
      %s217 = smul.addr %s216, 15
      %s218 = smul.addr %s217, 8
      %s219 = scalar_lea.vmem %s0, %s218
      %p220 = scmp.lt.s32.totalorder %s16, 1
      %s221 = scalar_select %p220, %s16, 1
      %s222 = smul.addr %s221, 6
      %s223 = smul.addr %s222, 8
      %s224 = scalar_lea.vmem %s5, %s223
      %v225 = vld [vmem:[%s219] sm:$0xff]
      %v226 = vld [vmem:[%s219 + $0x8] sm:$0xff]
      %v227 = vld [vmem:[%s219 + $0x10] sm:$0xff]
      %v228 = vld [vmem:[%s219 + $0x18] sm:$0xff]
      %v229 = vld [vmem:[%s219 + $0x20] sm:$0xff]
      %v230 = vld [vmem:[%s219 + $0x28] sm:$0xff]
      %v231 = vld [vmem:[%s219 + $0x30] sm:$0xff]
      %v232 = vld [vmem:[%s219 + $0x38] sm:$0xff]
      %v233 = vld [vmem:[%s219 + $0x40] sm:$0xff]
      %v234 = vld [vmem:[%s219 + $0x48] sm:$0xff]
      %v235 = vld [vmem:[%s219 + $0x50] sm:$0xff]
      %v236 = vld [vmem:[%s219 + $0x58] sm:$0xff]
      %v237 = vld [vmem:[%s1] sm:$0xff]
      %v238 = vld [vmem:[%s1 + $0x8] sm:$0xff]
      %v239 = vld [vmem:[%s1 + $0x10] sm:$0xff]
      %v240 = vld [vmem:[%s1 + $0x18] sm:$0xff]
      %v241 = vld [vmem:[%s1 + $0x20] sm:$0xff]
      %v242 = vld [vmem:[%s1 + $0x28] sm:$0xff]
      %v243 = vld [vmem:[%s1 + $0x30] sm:$0xff]
      %v244 = vld [vmem:[%s1 + $0x38] sm:$0xff]
      %v245 = vld [vmem:[%s1 + $0x40] sm:$0xff]
      %v246 = vld [vmem:[%s1 + $0x48] sm:$0xff]
      %v247 = vld [vmem:[%s1 + $0x50] sm:$0xff]
      %v248 = vld [vmem:[%s1 + $0x58] sm:$0xff]
      %v249 = vld [vmem:[%s1 + $0x60] sm:$0xff]
      %v250 = vld [vmem:[%s1 + $0x68] sm:$0xff]
      %v251 = vld [vmem:[%s1 + $0x70] sm:$0xff]
      %v252 = vld [vmem:[%s1 + $0x78] sm:$0xff]
      %v253 = vld [vmem:[%s219 + $0x1] sm:$0xff]
      %v254 = vld [vmem:[%s219 + $0x9] sm:$0xff]
      %v255 = vld [vmem:[%s219 + $0x11] sm:$0xff]
      %v256 = vld [vmem:[%s219 + $0x19] sm:$0xff]
      %v257 = vld [vmem:[%s219 + $0x21] sm:$0xff]
      %v258 = vld [vmem:[%s219 + $0x29] sm:$0xff]
      %v259 = vld [vmem:[%s219 + $0x31] sm:$0xff]
      %v260 = vld [vmem:[%s219 + $0x39] sm:$0xff]
      %v261 = vld [vmem:[%s219 + $0x41] sm:$0xff]
      %v262 = vld [vmem:[%s219 + $0x49] sm:$0xff]
      %v263 = vld [vmem:[%s219 + $0x51] sm:$0xff]
      %v264 = vld [vmem:[%s219 + $0x59] sm:$0xff]
      %s265 = scalar_lea.vmem %s1, 128
      %v266 = vld [vmem:[%s265] sm:$0xff]
      %v267 = vld [vmem:[%s265 + $0x8] sm:$0xff]
      %v268 = vld [vmem:[%s265 + $0x10] sm:$0xff]
      %v269 = vld [vmem:[%s265 + $0x18] sm:$0xff]
      %v270 = vld [vmem:[%s265 + $0x20] sm:$0xff]
      %v271 = vld [vmem:[%s265 + $0x28] sm:$0xff]
      %v272 = vld [vmem:[%s265 + $0x30] sm:$0xff]
      %v273 = vld [vmem:[%s265 + $0x38] sm:$0xff]
      %v274 = vld [vmem:[%s265 + $0x40] sm:$0xff]
      %v275 = vld [vmem:[%s265 + $0x48] sm:$0xff]
      %v276 = vld [vmem:[%s265 + $0x50] sm:$0xff]
      %v277 = vld [vmem:[%s265 + $0x58] sm:$0xff]
      %v278 = vld [vmem:[%s265 + $0x60] sm:$0xff]
      %v279 = vld [vmem:[%s265 + $0x68] sm:$0xff]
      %v280 = vld [vmem:[%s265 + $0x70] sm:$0xff]
      %v281 = vld [vmem:[%s265 + $0x78] sm:$0xff]
      %282 = vmatpush.msra.mxu0 %v281
      %283 = vmatpush.msra.mxu0 %v280
      %284 = vmatpush.msra.mxu0 %v279
      %285 = vmatpush.msra.mxu0 %v278
      %286 = vmatpush.msra.mxu0 %v277
      %287 = vmatpush.msra.mxu0 %v276
      %288 = vmatpush.msra.mxu0 %v275
      %289 = vmatpush.msra.mxu0 %v274
      %290 = vmatpush.msra.mxu0 %v273
      %291 = vmatpush.msra.mxu0 %v272
      %292 = vmatpush.msra.mxu0 %v271
      %293 = vmatpush.msra.mxu0 %v270
      %294 = vmatpush.msra.mxu0 %v269
      %295 = vmatpush.msra.mxu0 %v268
      %296 = vmatpush.msra.mxu0 %v267
      %297 = vmatpush.msra.mxu0 %v266
      %298 = vmatmul.f32.gmra.mxu0 %v253
      %v299 = vpop.f32.mrf.mxu0
      %v300 = vadd.f32 0.0, %v299
      %301 = vmatmul.f32.gmra.mxu0 %v254
      %v302 = vpop.f32.mrf.mxu0
      %v303 = vadd.f32 0.0, %v302
      %304 = vmatmul.f32.gmra.mxu0 %v255
      %v305 = vpop.f32.mrf.mxu0
      %v306 = vadd.f32 0.0, %v305
      %307 = vmatmul.f32.gmra.mxu0 %v256
      %v308 = vpop.f32.mrf.mxu0
      %v309 = vadd.f32 0.0, %v308
      %310 = vmatmul.f32.gmra.mxu0 %v257
      %v311 = vpop.f32.mrf.mxu0
      %v312 = vadd.f32 0.0, %v311
      %313 = vmatmul.f32.gmra.mxu0 %v258
      %v314 = vpop.f32.mrf.mxu0
      %v315 = vadd.f32 0.0, %v314
      %316 = vmatmul.f32.gmra.mxu0 %v259
      %v317 = vpop.f32.mrf.mxu0
      %v318 = vadd.f32 0.0, %v317
      %319 = vmatmul.f32.gmra.mxu0 %v260
      %v320 = vpop.f32.mrf.mxu0
      %v321 = vadd.f32 0.0, %v320
      %322 = vmatmul.f32.gmra.mxu0 %v261
      %v323 = vpop.f32.mrf.mxu0
      %v324 = vadd.f32 0.0, %v323
      %325 = vmatmul.f32.gmra.mxu0 %v262
      %v326 = vpop.f32.mrf.mxu0
      %v327 = vadd.f32 0.0, %v326
      %328 = vmatmul.f32.gmra.mxu0 %v263
      %v329 = vpop.f32.mrf.mxu0
      %v330 = vadd.f32 0.0, %v329
      %331 = vmatmul.f32.gmra.mxu0 %v264
      %v332 = vpop.f32.mrf.mxu0
      %v333 = vadd.f32 0.0, %v332
      %334 = vdwg.mxu0
      %335 = vmatpush.msra.mxu0 %v252
      %336 = vmatpush.msra.mxu0 %v251
      %337 = vmatpush.msra.mxu0 %v250
      %338 = vmatpush.msra.mxu0 %v249
      %339 = vmatpush.msra.mxu0 %v248
      %340 = vmatpush.msra.mxu0 %v247
      %341 = vmatpush.msra.mxu0 %v246
      %342 = vmatpush.msra.mxu0 %v245
      %343 = vmatpush.msra.mxu0 %v244
      %344 = vmatpush.msra.mxu0 %v243
      %345 = vmatpush.msra.mxu0 %v242
      %346 = vmatpush.msra.mxu0 %v241
      %347 = vmatpush.msra.mxu0 %v240
      %348 = vmatpush.msra.mxu0 %v239
      %349 = vmatpush.msra.mxu0 %v238
      %350 = vmatpush.msra.mxu0 %v237
      %351 = vmatmul.f32.gmra.mxu0 %v225
      %v352 = vpop.f32.mrf.mxu0
      %v353 = vadd.f32 %v300, %v352
      %354 = vmatmul.f32.gmra.mxu0 %v226
      %v355 = vpop.f32.mrf.mxu0
      %v356 = vadd.f32 %v303, %v355
      %357 = vmatmul.f32.gmra.mxu0 %v227
      %v358 = vpop.f32.mrf.mxu0
      %v359 = vadd.f32 %v306, %v358
      %360 = vmatmul.f32.gmra.mxu0 %v228
      %v361 = vpop.f32.mrf.mxu0
      %v362 = vadd.f32 %v309, %v361
      %363 = vmatmul.f32.gmra.mxu0 %v229
      %v364 = vpop.f32.mrf.mxu0
      %v365 = vadd.f32 %v312, %v364
      %366 = vmatmul.f32.gmra.mxu0 %v230
      %v367 = vpop.f32.mrf.mxu0
      %v368 = vadd.f32 %v315, %v367
      %369 = vmatmul.f32.gmra.mxu0 %v231
      %v370 = vpop.f32.mrf.mxu0
      %v371 = vadd.f32 %v318, %v370
      %372 = vmatmul.f32.gmra.mxu0 %v232
      %v373 = vpop.f32.mrf.mxu0
      %v374 = vadd.f32 %v321, %v373
      %375 = vmatmul.f32.gmra.mxu0 %v233
      %v376 = vpop.f32.mrf.mxu0
      %v377 = vadd.f32 %v324, %v376
      %378 = vmatmul.f32.gmra.mxu0 %v234
      %v379 = vpop.f32.mrf.mxu0
      %v380 = vadd.f32 %v327, %v379
      %381 = vmatmul.f32.gmra.mxu0 %v235
      %v382 = vpop.f32.mrf.mxu0
      %v383 = vadd.f32 %v330, %v382
      %384 = vmatmul.f32.gmra.mxu0 %v236
      %v385 = vpop.f32.mrf.mxu0
      %v386 = vadd.f32 %v333, %v385
      %387 = vdwg.mxu0
      %v388 = vld [vmem:[%s219 + $0x2] sm:$0xff]
      %v389 = vld [vmem:[%s219 + $0xa] sm:$0xff]
      %v390 = vld [vmem:[%s219 + $0x12] sm:$0xff]
      %v391 = vld [vmem:[%s219 + $0x1a] sm:$0xff]
      %v392 = vld [vmem:[%s219 + $0x22] sm:$0xff]
      %v393 = vld [vmem:[%s219 + $0x2a] sm:$0xff]
      %v394 = vld [vmem:[%s219 + $0x32] sm:$0xff]
      %v395 = vld [vmem:[%s219 + $0x3a] sm:$0xff]
      %v396 = vld [vmem:[%s219 + $0x42] sm:$0xff]
      %v397 = vld [vmem:[%s219 + $0x4a] sm:$0xff]
      %v398 = vld [vmem:[%s219 + $0x52] sm:$0xff]
      %v399 = vld [vmem:[%s219 + $0x5a] sm:$0xff]
      %s400 = scalar_lea.vmem %s1, 256
      %v401 = vld [vmem:[%s400] sm:$0xff]
      %v402 = vld [vmem:[%s400 + $0x8] sm:$0xff]
      %v403 = vld [vmem:[%s400 + $0x10] sm:$0xff]
      %v404 = vld [vmem:[%s400 + $0x18] sm:$0xff]
      %v405 = vld [vmem:[%s400 + $0x20] sm:$0xff]
      %v406 = vld [vmem:[%s400 + $0x28] sm:$0xff]
      %v407 = vld [vmem:[%s400 + $0x30] sm:$0xff]
      %v408 = vld [vmem:[%s400 + $0x38] sm:$0xff]
      %v409 = vld [vmem:[%s400 + $0x40] sm:$0xff]
      %v410 = vld [vmem:[%s400 + $0x48] sm:$0xff]
      %v411 = vld [vmem:[%s400 + $0x50] sm:$0xff]
      %v412 = vld [vmem:[%s400 + $0x58] sm:$0xff]
      %v413 = vld [vmem:[%s400 + $0x60] sm:$0xff]
      %v414 = vld [vmem:[%s400 + $0x68] sm:$0xff]
      %v415 = vld [vmem:[%s400 + $0x70] sm:$0xff]
      %v416 = vld [vmem:[%s400 + $0x78] sm:$0xff]
      %417 = vmatpush.msra.mxu0 %v416
      %418 = vmatpush.msra.mxu0 %v415
      %419 = vmatpush.msra.mxu0 %v414
      %420 = vmatpush.msra.mxu0 %v413
      %421 = vmatpush.msra.mxu0 %v412
      %422 = vmatpush.msra.mxu0 %v411
      %423 = vmatpush.msra.mxu0 %v410
      %424 = vmatpush.msra.mxu0 %v409
      %425 = vmatpush.msra.mxu0 %v408
      %426 = vmatpush.msra.mxu0 %v407
      %427 = vmatpush.msra.mxu0 %v406
      %428 = vmatpush.msra.mxu0 %v405
      %429 = vmatpush.msra.mxu0 %v404
      %430 = vmatpush.msra.mxu0 %v403
      %431 = vmatpush.msra.mxu0 %v402
      %432 = vmatpush.msra.mxu0 %v401
      %433 = vmatmul.f32.gmra.mxu0 %v388
      %v434 = vpop.f32.mrf.mxu0
      %v435 = vadd.f32 0.0, %v434
      %436 = vmatmul.f32.gmra.mxu0 %v389
      %v437 = vpop.f32.mrf.mxu0
      %v438 = vadd.f32 0.0, %v437
      %439 = vmatmul.f32.gmra.mxu0 %v390
      %v440 = vpop.f32.mrf.mxu0
      %v441 = vadd.f32 0.0, %v440
      %442 = vmatmul.f32.gmra.mxu0 %v391
      %v443 = vpop.f32.mrf.mxu0
      %v444 = vadd.f32 0.0, %v443
      %445 = vmatmul.f32.gmra.mxu0 %v392
      %v446 = vpop.f32.mrf.mxu0
      %v447 = vadd.f32 0.0, %v446
      %448 = vmatmul.f32.gmra.mxu0 %v393
      %v449 = vpop.f32.mrf.mxu0
      %v450 = vadd.f32 0.0, %v449
      %451 = vmatmul.f32.gmra.mxu0 %v394
      %v452 = vpop.f32.mrf.mxu0
      %v453 = vadd.f32 0.0, %v452
      %454 = vmatmul.f32.gmra.mxu0 %v395
      %v455 = vpop.f32.mrf.mxu0
      %v456 = vadd.f32 0.0, %v455
      %457 = vmatmul.f32.gmra.mxu0 %v396
      %v458 = vpop.f32.mrf.mxu0
      %v459 = vadd.f32 0.0, %v458
      %460 = vmatmul.f32.gmra.mxu0 %v397
      %v461 = vpop.f32.mrf.mxu0
      %v462 = vadd.f32 0.0, %v461
      %463 = vmatmul.f32.gmra.mxu0 %v398
      %v464 = vpop.f32.mrf.mxu0
      %v465 = vadd.f32 0.0, %v464
      %466 = vmatmul.f32.gmra.mxu0 %v399
      %v467 = vpop.f32.mrf.mxu0
      %v468 = vadd.f32 0.0, %v467
      %469 = vdwg.mxu0
      %v470 = vadd.f32 %v353, %v435
      %v471 = vadd.f32 %v356, %v438
      %v472 = vadd.f32 %v359, %v441
      %v473 = vadd.f32 %v362, %v444
      %v474 = vadd.f32 %v365, %v447
      %v475 = vadd.f32 %v368, %v450
      %v476 = vadd.f32 %v371, %v453
      %v477 = vadd.f32 %v374, %v456
      %v478 = vadd.f32 %v377, %v459
      %v479 = vadd.f32 %v380, %v462
      %v480 = vadd.f32 %v383, %v465
      %v481 = vadd.f32 %v386, %v468
      %v482 = vld [vmem:[%s219 + $0x3] sm:$0xff]
      %v483 = vld [vmem:[%s219 + $0xb] sm:$0xff]
      %v484 = vld [vmem:[%s219 + $0x13] sm:$0xff]
      %v485 = vld [vmem:[%s219 + $0x1b] sm:$0xff]
      %v486 = vld [vmem:[%s219 + $0x23] sm:$0xff]
      %v487 = vld [vmem:[%s219 + $0x2b] sm:$0xff]
      %v488 = vld [vmem:[%s219 + $0x33] sm:$0xff]
      %v489 = vld [vmem:[%s219 + $0x3b] sm:$0xff]
      %v490 = vld [vmem:[%s219 + $0x43] sm:$0xff]
      %v491 = vld [vmem:[%s219 + $0x4b] sm:$0xff]
      %v492 = vld [vmem:[%s219 + $0x53] sm:$0xff]
      %v493 = vld [vmem:[%s219 + $0x5b] sm:$0xff]
      %s494 = scalar_lea.vmem %s1, 384
      %v495 = vld [vmem:[%s494] sm:$0xff]
      %v496 = vld [vmem:[%s494 + $0x8] sm:$0xff]
      %v497 = vld [vmem:[%s494 + $0x10] sm:$0xff]
      %v498 = vld [vmem:[%s494 + $0x18] sm:$0xff]
      %v499 = vld [vmem:[%s494 + $0x20] sm:$0xff]
      %v500 = vld [vmem:[%s494 + $0x28] sm:$0xff]
      %v501 = vld [vmem:[%s494 + $0x30] sm:$0xff]
      %v502 = vld [vmem:[%s494 + $0x38] sm:$0xff]
      %v503 = vld [vmem:[%s494 + $0x40] sm:$0xff]
      %v504 = vld [vmem:[%s494 + $0x48] sm:$0xff]
      %v505 = vld [vmem:[%s494 + $0x50] sm:$0xff]
      %v506 = vld [vmem:[%s494 + $0x58] sm:$0xff]
      %v507 = vld [vmem:[%s494 + $0x60] sm:$0xff]
      %v508 = vld [vmem:[%s494 + $0x68] sm:$0xff]
      %v509 = vld [vmem:[%s494 + $0x70] sm:$0xff]
      %v510 = vld [vmem:[%s494 + $0x78] sm:$0xff]
      %511 = vmatpush.msra.mxu0 %v510
      %512 = vmatpush.msra.mxu0 %v509
      %513 = vmatpush.msra.mxu0 %v508
      %514 = vmatpush.msra.mxu0 %v507
      %515 = vmatpush.msra.mxu0 %v506
      %516 = vmatpush.msra.mxu0 %v505
      %517 = vmatpush.msra.mxu0 %v504
      %518 = vmatpush.msra.mxu0 %v503
      %519 = vmatpush.msra.mxu0 %v502
      %520 = vmatpush.msra.mxu0 %v501
      %521 = vmatpush.msra.mxu0 %v500
      %522 = vmatpush.msra.mxu0 %v499
      %523 = vmatpush.msra.mxu0 %v498
      %524 = vmatpush.msra.mxu0 %v497
      %525 = vmatpush.msra.mxu0 %v496
      %526 = vmatpush.msra.mxu0 %v495
      %527 = vmatmul.f32.gmra.mxu0 %v482
      %v528 = vpop.f32.mrf.mxu0
      %v529 = vadd.f32 0.0, %v528
      %530 = vmatmul.f32.gmra.mxu0 %v483
      %v531 = vpop.f32.mrf.mxu0
      %v532 = vadd.f32 0.0, %v531
      %533 = vmatmul.f32.gmra.mxu0 %v484
      %v534 = vpop.f32.mrf.mxu0
      %v535 = vadd.f32 0.0, %v534
      %536 = vmatmul.f32.gmra.mxu0 %v485
      %v537 = vpop.f32.mrf.mxu0
      %v538 = vadd.f32 0.0, %v537
      %539 = vmatmul.f32.gmra.mxu0 %v486
      %v540 = vpop.f32.mrf.mxu0
      %v541 = vadd.f32 0.0, %v540
      %542 = vmatmul.f32.gmra.mxu0 %v487
      %v543 = vpop.f32.mrf.mxu0
      %v544 = vadd.f32 0.0, %v543
      %545 = vmatmul.f32.gmra.mxu0 %v488
      %v546 = vpop.f32.mrf.mxu0
      %v547 = vadd.f32 0.0, %v546
      %548 = vmatmul.f32.gmra.mxu0 %v489
      %v549 = vpop.f32.mrf.mxu0
      %v550 = vadd.f32 0.0, %v549
      %551 = vmatmul.f32.gmra.mxu0 %v490
      %v552 = vpop.f32.mrf.mxu0
      %v553 = vadd.f32 0.0, %v552
      %554 = vmatmul.f32.gmra.mxu0 %v491
      %v555 = vpop.f32.mrf.mxu0
      %v556 = vadd.f32 0.0, %v555
      %557 = vmatmul.f32.gmra.mxu0 %v492
      %v558 = vpop.f32.mrf.mxu0
      %v559 = vadd.f32 0.0, %v558
      %560 = vmatmul.f32.gmra.mxu0 %v493
      %v561 = vpop.f32.mrf.mxu0
      %v562 = vadd.f32 0.0, %v561
      %563 = vdwg.mxu0
      %v564 = vadd.f32 %v470, %v529
      %v565 = vadd.f32 %v471, %v532
      %v566 = vadd.f32 %v472, %v535
      %v567 = vadd.f32 %v473, %v538
      %v568 = vadd.f32 %v474, %v541
      %v569 = vadd.f32 %v475, %v544
      %v570 = vadd.f32 %v476, %v547
      %v571 = vadd.f32 %v477, %v550
      %v572 = vadd.f32 %v478, %v553
      %v573 = vadd.f32 %v479, %v556
      %v574 = vadd.f32 %v480, %v559
      %v575 = vadd.f32 %v481, %v562
      %v576 = vld [vmem:[%s219 + $0x4] sm:$0xff]
      %v577 = vld [vmem:[%s219 + $0xc] sm:$0xff]
      %v578 = vld [vmem:[%s219 + $0x14] sm:$0xff]
      %v579 = vld [vmem:[%s219 + $0x1c] sm:$0xff]
      %v580 = vld [vmem:[%s219 + $0x24] sm:$0xff]
      %v581 = vld [vmem:[%s219 + $0x2c] sm:$0xff]
      %v582 = vld [vmem:[%s219 + $0x34] sm:$0xff]
      %v583 = vld [vmem:[%s219 + $0x3c] sm:$0xff]
      %v584 = vld [vmem:[%s219 + $0x44] sm:$0xff]
      %v585 = vld [vmem:[%s219 + $0x4c] sm:$0xff]
      %v586 = vld [vmem:[%s219 + $0x54] sm:$0xff]
      %v587 = vld [vmem:[%s219 + $0x5c] sm:$0xff]
      %s588 = scalar_lea.vmem %s1, 512
      %v589 = vld [vmem:[%s588] sm:$0xff]
      %v590 = vld [vmem:[%s588 + $0x8] sm:$0xff]
      %v591 = vld [vmem:[%s588 + $0x10] sm:$0xff]
      %v592 = vld [vmem:[%s588 + $0x18] sm:$0xff]
      %v593 = vld [vmem:[%s588 + $0x20] sm:$0xff]
      %v594 = vld [vmem:[%s588 + $0x28] sm:$0xff]
      %v595 = vld [vmem:[%s588 + $0x30] sm:$0xff]
      %v596 = vld [vmem:[%s588 + $0x38] sm:$0xff]
      %v597 = vld [vmem:[%s588 + $0x40] sm:$0xff]
      %v598 = vld [vmem:[%s588 + $0x48] sm:$0xff]
      %v599 = vld [vmem:[%s588 + $0x50] sm:$0xff]
      %v600 = vld [vmem:[%s588 + $0x58] sm:$0xff]
      %v601 = vld [vmem:[%s588 + $0x60] sm:$0xff]
      %v602 = vld [vmem:[%s588 + $0x68] sm:$0xff]
      %v603 = vld [vmem:[%s588 + $0x70] sm:$0xff]
      %v604 = vld [vmem:[%s588 + $0x78] sm:$0xff]
      %605 = vmatpush.msra.mxu0 %v604
      %606 = vmatpush.msra.mxu0 %v603
      %607 = vmatpush.msra.mxu0 %v602
      %608 = vmatpush.msra.mxu0 %v601
      %609 = vmatpush.msra.mxu0 %v600
      %610 = vmatpush.msra.mxu0 %v599
      %611 = vmatpush.msra.mxu0 %v598
      %612 = vmatpush.msra.mxu0 %v597
      %613 = vmatpush.msra.mxu0 %v596
      %614 = vmatpush.msra.mxu0 %v595
      %615 = vmatpush.msra.mxu0 %v594
      %616 = vmatpush.msra.mxu0 %v593
      %617 = vmatpush.msra.mxu0 %v592
      %618 = vmatpush.msra.mxu0 %v591
      %619 = vmatpush.msra.mxu0 %v590
      %620 = vmatpush.msra.mxu0 %v589
      %621 = vmatmul.f32.gmra.mxu0 %v576
      %v622 = vpop.f32.mrf.mxu0
      %v623 = vadd.f32 0.0, %v622
      %624 = vmatmul.f32.gmra.mxu0 %v577
      %v625 = vpop.f32.mrf.mxu0
      %v626 = vadd.f32 0.0, %v625
      %627 = vmatmul.f32.gmra.mxu0 %v578
      %v628 = vpop.f32.mrf.mxu0
      %v629 = vadd.f32 0.0, %v628
      %630 = vmatmul.f32.gmra.mxu0 %v579
      %v631 = vpop.f32.mrf.mxu0
      %v632 = vadd.f32 0.0, %v631
      %633 = vmatmul.f32.gmra.mxu0 %v580
      %v634 = vpop.f32.mrf.mxu0
      %v635 = vadd.f32 0.0, %v634
      %636 = vmatmul.f32.gmra.mxu0 %v581
      %v637 = vpop.f32.mrf.mxu0
      %v638 = vadd.f32 0.0, %v637
      %639 = vmatmul.f32.gmra.mxu0 %v582
      %v640 = vpop.f32.mrf.mxu0
      %v641 = vadd.f32 0.0, %v640
      %642 = vmatmul.f32.gmra.mxu0 %v583
      %v643 = vpop.f32.mrf.mxu0
      %v644 = vadd.f32 0.0, %v643
      %645 = vmatmul.f32.gmra.mxu0 %v584
      %v646 = vpop.f32.mrf.mxu0
      %v647 = vadd.f32 0.0, %v646
      %648 = vmatmul.f32.gmra.mxu0 %v585
      %v649 = vpop.f32.mrf.mxu0
      %v650 = vadd.f32 0.0, %v649
      %651 = vmatmul.f32.gmra.mxu0 %v586
      %v652 = vpop.f32.mrf.mxu0
      %v653 = vadd.f32 0.0, %v652
      %654 = vmatmul.f32.gmra.mxu0 %v587
      %v655 = vpop.f32.mrf.mxu0
      %v656 = vadd.f32 0.0, %v655
      %657 = vdwg.mxu0
      %v658 = vadd.f32 %v564, %v623
      %v659 = vadd.f32 %v565, %v626
      %v660 = vadd.f32 %v566, %v629
      %v661 = vadd.f32 %v567, %v632
      %v662 = vadd.f32 %v568, %v635
      %v663 = vadd.f32 %v569, %v638
      %v664 = vadd.f32 %v570, %v641
      %v665 = vadd.f32 %v571, %v644
      %v666 = vadd.f32 %v572, %v647
      %v667 = vadd.f32 %v573, %v650
      %v668 = vadd.f32 %v574, %v653
      %v669 = vadd.f32 %v575, %v656
      %v670 = vld [vmem:[%s219 + $0x5] sm:$0xff]
      %v671 = vld [vmem:[%s219 + $0xd] sm:$0xff]
      %v672 = vld [vmem:[%s219 + $0x15] sm:$0xff]
      %v673 = vld [vmem:[%s219 + $0x1d] sm:$0xff]
      %v674 = vld [vmem:[%s219 + $0x25] sm:$0xff]
      %v675 = vld [vmem:[%s219 + $0x2d] sm:$0xff]
      %v676 = vld [vmem:[%s219 + $0x35] sm:$0xff]
      %v677 = vld [vmem:[%s219 + $0x3d] sm:$0xff]
      %v678 = vld [vmem:[%s219 + $0x45] sm:$0xff]
      %v679 = vld [vmem:[%s219 + $0x4d] sm:$0xff]
      %v680 = vld [vmem:[%s219 + $0x55] sm:$0xff]
      %v681 = vld [vmem:[%s219 + $0x5d] sm:$0xff]
      %s682 = scalar_lea.vmem %s1, 640
      %v683 = vld [vmem:[%s682] sm:$0xff]
      %v684 = vld [vmem:[%s682 + $0x8] sm:$0xff]
      %v685 = vld [vmem:[%s682 + $0x10] sm:$0xff]
      %v686 = vld [vmem:[%s682 + $0x18] sm:$0xff]
      %v687 = vld [vmem:[%s682 + $0x20] sm:$0xff]
      %v688 = vld [vmem:[%s682 + $0x28] sm:$0xff]
      %v689 = vld [vmem:[%s682 + $0x30] sm:$0xff]
      %v690 = vld [vmem:[%s682 + $0x38] sm:$0xff]
      %v691 = vld [vmem:[%s682 + $0x40] sm:$0xff]
      %v692 = vld [vmem:[%s682 + $0x48] sm:$0xff]
      %v693 = vld [vmem:[%s682 + $0x50] sm:$0xff]
      %v694 = vld [vmem:[%s682 + $0x58] sm:$0xff]
      %v695 = vld [vmem:[%s682 + $0x60] sm:$0xff]
      %v696 = vld [vmem:[%s682 + $0x68] sm:$0xff]
      %v697 = vld [vmem:[%s682 + $0x70] sm:$0xff]
      %v698 = vld [vmem:[%s682 + $0x78] sm:$0xff]
      %699 = vmatpush.msra.mxu0 %v698
      %700 = vmatpush.msra.mxu0 %v697
      %701 = vmatpush.msra.mxu0 %v696
      %702 = vmatpush.msra.mxu0 %v695
      %703 = vmatpush.msra.mxu0 %v694
      %704 = vmatpush.msra.mxu0 %v693
      %705 = vmatpush.msra.mxu0 %v692
      %706 = vmatpush.msra.mxu0 %v691
      %707 = vmatpush.msra.mxu0 %v690
      %708 = vmatpush.msra.mxu0 %v689
      %709 = vmatpush.msra.mxu0 %v688
      %710 = vmatpush.msra.mxu0 %v687
      %711 = vmatpush.msra.mxu0 %v686
      %712 = vmatpush.msra.mxu0 %v685
      %713 = vmatpush.msra.mxu0 %v684
      %714 = vmatpush.msra.mxu0 %v683
      %715 = vmatmul.f32.gmra.mxu0 %v670
      %v716 = vpop.f32.mrf.mxu0
      %v717 = vadd.f32 0.0, %v716
      %718 = vmatmul.f32.gmra.mxu0 %v671
      %v719 = vpop.f32.mrf.mxu0
      %v720 = vadd.f32 0.0, %v719
      %721 = vmatmul.f32.gmra.mxu0 %v672
      %v722 = vpop.f32.mrf.mxu0
      %v723 = vadd.f32 0.0, %v722
      %724 = vmatmul.f32.gmra.mxu0 %v673
      %v725 = vpop.f32.mrf.mxu0
      %v726 = vadd.f32 0.0, %v725
      %727 = vmatmul.f32.gmra.mxu0 %v674
      %v728 = vpop.f32.mrf.mxu0
      %v729 = vadd.f32 0.0, %v728
      %730 = vmatmul.f32.gmra.mxu0 %v675
      %v731 = vpop.f32.mrf.mxu0
      %v732 = vadd.f32 0.0, %v731
      %733 = vmatmul.f32.gmra.mxu0 %v676
      %v734 = vpop.f32.mrf.mxu0
      %v735 = vadd.f32 0.0, %v734
      %736 = vmatmul.f32.gmra.mxu0 %v677
      %v737 = vpop.f32.mrf.mxu0
      %v738 = vadd.f32 0.0, %v737
      %739 = vmatmul.f32.gmra.mxu0 %v678
      %v740 = vpop.f32.mrf.mxu0
      %v741 = vadd.f32 0.0, %v740
      %742 = vmatmul.f32.gmra.mxu0 %v679
      %v743 = vpop.f32.mrf.mxu0
      %v744 = vadd.f32 0.0, %v743
      %745 = vmatmul.f32.gmra.mxu0 %v680
      %v746 = vpop.f32.mrf.mxu0
      %v747 = vadd.f32 0.0, %v746
      %748 = vmatmul.f32.gmra.mxu0 %v681
      %v749 = vpop.f32.mrf.mxu0
      %v750 = vadd.f32 0.0, %v749
      %751 = vdwg.mxu0
      %v752 = vadd.f32 %v658, %v717
      %v753 = vadd.f32 %v659, %v720
      %v754 = vadd.f32 %v660, %v723
      %v755 = vadd.f32 %v661, %v726
      %v756 = vadd.f32 %v662, %v729
      %v757 = vadd.f32 %v663, %v732
      %v758 = vadd.f32 %v664, %v735
      %v759 = vadd.f32 %v665, %v738
      %v760 = vadd.f32 %v666, %v741
      %v761 = vadd.f32 %v667, %v744
      %v762 = vadd.f32 %v668, %v747
      %v763 = vadd.f32 %v669, %v750
      %v764 = vld [vmem:[%s219 + $0x6] sm:$0xff]
      %v765 = vld [vmem:[%s219 + $0xe] sm:$0xff]
      %v766 = vld [vmem:[%s219 + $0x16] sm:$0xff]
      %v767 = vld [vmem:[%s219 + $0x1e] sm:$0xff]
      %v768 = vld [vmem:[%s219 + $0x26] sm:$0xff]
      %v769 = vld [vmem:[%s219 + $0x2e] sm:$0xff]
      %v770 = vld [vmem:[%s219 + $0x36] sm:$0xff]
      %v771 = vld [vmem:[%s219 + $0x3e] sm:$0xff]
      %v772 = vld [vmem:[%s219 + $0x46] sm:$0xff]
      %v773 = vld [vmem:[%s219 + $0x4e] sm:$0xff]
      %v774 = vld [vmem:[%s219 + $0x56] sm:$0xff]
      %v775 = vld [vmem:[%s219 + $0x5e] sm:$0xff]
      %s776 = scalar_lea.vmem %s1, 768
      %v777 = vld [vmem:[%s776] sm:$0xff]
      %v778 = vld [vmem:[%s776 + $0x8] sm:$0xff]
      %v779 = vld [vmem:[%s776 + $0x10] sm:$0xff]
      %v780 = vld [vmem:[%s776 + $0x18] sm:$0xff]
      %v781 = vld [vmem:[%s776 + $0x20] sm:$0xff]
      %v782 = vld [vmem:[%s776 + $0x28] sm:$0xff]
      %v783 = vld [vmem:[%s776 + $0x30] sm:$0xff]
      %v784 = vld [vmem:[%s776 + $0x38] sm:$0xff]
      %v785 = vld [vmem:[%s776 + $0x40] sm:$0xff]
      %v786 = vld [vmem:[%s776 + $0x48] sm:$0xff]
      %v787 = vld [vmem:[%s776 + $0x50] sm:$0xff]
      %v788 = vld [vmem:[%s776 + $0x58] sm:$0xff]
      %v789 = vld [vmem:[%s776 + $0x60] sm:$0xff]
      %v790 = vld [vmem:[%s776 + $0x68] sm:$0xff]
      %v791 = vld [vmem:[%s776 + $0x70] sm:$0xff]
      %v792 = vld [vmem:[%s776 + $0x78] sm:$0xff]
      %793 = vmatpush.msra.mxu0 %v792
      %794 = vmatpush.msra.mxu0 %v791
      %795 = vmatpush.msra.mxu0 %v790
      %796 = vmatpush.msra.mxu0 %v789
      %797 = vmatpush.msra.mxu0 %v788
      %798 = vmatpush.msra.mxu0 %v787
      %799 = vmatpush.msra.mxu0 %v786
      %800 = vmatpush.msra.mxu0 %v785
      %801 = vmatpush.msra.mxu0 %v784
      %802 = vmatpush.msra.mxu0 %v783
      %803 = vmatpush.msra.mxu0 %v782
      %804 = vmatpush.msra.mxu0 %v781
      %805 = vmatpush.msra.mxu0 %v780
      %806 = vmatpush.msra.mxu0 %v779
      %807 = vmatpush.msra.mxu0 %v778
      %808 = vmatpush.msra.mxu0 %v777
      %809 = vmatmul.f32.gmra.mxu0 %v764
      %v810 = vpop.f32.mrf.mxu0
      %v811 = vadd.f32 0.0, %v810
      %812 = vmatmul.f32.gmra.mxu0 %v765
      %v813 = vpop.f32.mrf.mxu0
      %v814 = vadd.f32 0.0, %v813
      %815 = vmatmul.f32.gmra.mxu0 %v766
      %v816 = vpop.f32.mrf.mxu0
      %v817 = vadd.f32 0.0, %v816
      %818 = vmatmul.f32.gmra.mxu0 %v767
      %v819 = vpop.f32.mrf.mxu0
      %v820 = vadd.f32 0.0, %v819
      %821 = vmatmul.f32.gmra.mxu0 %v768
      %v822 = vpop.f32.mrf.mxu0
      %v823 = vadd.f32 0.0, %v822
      %824 = vmatmul.f32.gmra.mxu0 %v769
      %v825 = vpop.f32.mrf.mxu0
      %v826 = vadd.f32 0.0, %v825
      %827 = vmatmul.f32.gmra.mxu0 %v770
      %v828 = vpop.f32.mrf.mxu0
      %v829 = vadd.f32 0.0, %v828
      %830 = vmatmul.f32.gmra.mxu0 %v771
      %v831 = vpop.f32.mrf.mxu0
      %v832 = vadd.f32 0.0, %v831
      %833 = vmatmul.f32.gmra.mxu0 %v772
      %v834 = vpop.f32.mrf.mxu0
      %v835 = vadd.f32 0.0, %v834
      %836 = vmatmul.f32.gmra.mxu0 %v773
      %v837 = vpop.f32.mrf.mxu0
      %v838 = vadd.f32 0.0, %v837
      %839 = vmatmul.f32.gmra.mxu0 %v774
      %v840 = vpop.f32.mrf.mxu0
      %v841 = vadd.f32 0.0, %v840
      %842 = vmatmul.f32.gmra.mxu0 %v775
      %v843 = vpop.f32.mrf.mxu0
      %v844 = vadd.f32 0.0, %v843
      %845 = vdwg.mxu0
      %v846 = vadd.f32 %v752, %v811
      %v847 = vadd.f32 %v753, %v814
      %v848 = vadd.f32 %v754, %v817
      %v849 = vadd.f32 %v755, %v820
      %v850 = vadd.f32 %v756, %v823
      %v851 = vadd.f32 %v757, %v826
      %v852 = vadd.f32 %v758, %v829
      %v853 = vadd.f32 %v759, %v832
      %v854 = vadd.f32 %v760, %v835
      %v855 = vadd.f32 %v761, %v838
      %v856 = vadd.f32 %v762, %v841
      %v857 = vadd.f32 %v763, %v844
      %v858 = vld [vmem:[%s219 + $0x7] sm:$0xff]
      %v859 = vld [vmem:[%s219 + $0xf] sm:$0xff]
      %v860 = vld [vmem:[%s219 + $0x17] sm:$0xff]
      %v861 = vld [vmem:[%s219 + $0x1f] sm:$0xff]
      %v862 = vld [vmem:[%s219 + $0x27] sm:$0xff]
      %v863 = vld [vmem:[%s219 + $0x2f] sm:$0xff]
      %v864 = vld [vmem:[%s219 + $0x37] sm:$0xff]
      %v865 = vld [vmem:[%s219 + $0x3f] sm:$0xff]
      %v866 = vld [vmem:[%s219 + $0x47] sm:$0xff]
      %v867 = vld [vmem:[%s219 + $0x4f] sm:$0xff]
      %v868 = vld [vmem:[%s219 + $0x57] sm:$0xff]
      %v869 = vld [vmem:[%s219 + $0x5f] sm:$0xff]
      %s870 = scalar_lea.vmem %s1, 896
      %v871 = vld [vmem:[%s870] sm:$0xff]
      %v872 = vld [vmem:[%s870 + $0x8] sm:$0xff]
      %v873 = vld [vmem:[%s870 + $0x10] sm:$0xff]
      %v874 = vld [vmem:[%s870 + $0x18] sm:$0xff]
      %v875 = vld [vmem:[%s870 + $0x20] sm:$0xff]
      %v876 = vld [vmem:[%s870 + $0x28] sm:$0xff]
      %v877 = vld [vmem:[%s870 + $0x30] sm:$0xff]
      %v878 = vld [vmem:[%s870 + $0x38] sm:$0xff]
      %v879 = vld [vmem:[%s870 + $0x40] sm:$0xff]
      %v880 = vld [vmem:[%s870 + $0x48] sm:$0xff]
      %v881 = vld [vmem:[%s870 + $0x50] sm:$0xff]
      %v882 = vld [vmem:[%s870 + $0x58] sm:$0xff]
      %v883 = vld [vmem:[%s870 + $0x60] sm:$0xff]
      %v884 = vld [vmem:[%s870 + $0x68] sm:$0xff]
      %v885 = vld [vmem:[%s870 + $0x70] sm:$0xff]
      %v886 = vld [vmem:[%s870 + $0x78] sm:$0xff]
      %887 = vmatpush.msra.mxu0 %v886
      %888 = vmatpush.msra.mxu0 %v885
      %889 = vmatpush.msra.mxu0 %v884
      %890 = vmatpush.msra.mxu0 %v883
      %891 = vmatpush.msra.mxu0 %v882
      %892 = vmatpush.msra.mxu0 %v881
      %893 = vmatpush.msra.mxu0 %v880
      %894 = vmatpush.msra.mxu0 %v879
      %895 = vmatpush.msra.mxu0 %v878
      %896 = vmatpush.msra.mxu0 %v877
      %897 = vmatpush.msra.mxu0 %v876
      %898 = vmatpush.msra.mxu0 %v875
      %899 = vmatpush.msra.mxu0 %v874
      %900 = vmatpush.msra.mxu0 %v873
      %901 = vmatpush.msra.mxu0 %v872
      %902 = vmatpush.msra.mxu0 %v871
      %903 = vmatmul.f32.gmra.mxu0 %v858
      %v904 = vpop.f32.mrf.mxu0
      %v905 = vadd.f32 0.0, %v904
      %906 = vmatmul.f32.gmra.mxu0 %v859
      %v907 = vpop.f32.mrf.mxu0
      %v908 = vadd.f32 0.0, %v907
      %909 = vmatmul.f32.gmra.mxu0 %v860
      %v910 = vpop.f32.mrf.mxu0
      %v911 = vadd.f32 0.0, %v910
      %912 = vmatmul.f32.gmra.mxu0 %v861
      %v913 = vpop.f32.mrf.mxu0
      %v914 = vadd.f32 0.0, %v913
      %915 = vmatmul.f32.gmra.mxu0 %v862
      %v916 = vpop.f32.mrf.mxu0
      %v917 = vadd.f32 0.0, %v916
      %918 = vmatmul.f32.gmra.mxu0 %v863
      %v919 = vpop.f32.mrf.mxu0
      %v920 = vadd.f32 0.0, %v919
      %921 = vmatmul.f32.gmra.mxu0 %v864
      %v922 = vpop.f32.mrf.mxu0
      %v923 = vadd.f32 0.0, %v922
      %924 = vmatmul.f32.gmra.mxu0 %v865
      %v925 = vpop.f32.mrf.mxu0
      %v926 = vadd.f32 0.0, %v925
      %927 = vmatmul.f32.gmra.mxu0 %v866
      %v928 = vpop.f32.mrf.mxu0
      %v929 = vadd.f32 0.0, %v928
      %930 = vmatmul.f32.gmra.mxu0 %v867
      %v931 = vpop.f32.mrf.mxu0
      %v932 = vadd.f32 0.0, %v931
      %933 = vmatmul.f32.gmra.mxu0 %v868
      %v934 = vpop.f32.mrf.mxu0
      %v935 = vadd.f32 0.0, %v934
      %936 = vmatmul.f32.gmra.mxu0 %v869
      %v937 = vpop.f32.mrf.mxu0
      %v938 = vadd.f32 0.0, %v937
      %939 = vdwg.mxu0
      %v940 = vadd.f32 %v846, %v905
      %v941 = vadd.f32 %v847, %v908
      %v942 = vadd.f32 %v848, %v911
      %v943 = vadd.f32 %v849, %v914
      %v944 = vadd.f32 %v850, %v917
      %v945 = vadd.f32 %v851, %v920
      %v946 = vadd.f32 %v852, %v923
      %v947 = vadd.f32 %v853, %v926
      %v948 = vadd.f32 %v854, %v929
      %v949 = vadd.f32 %v855, %v932
      %v950 = vadd.f32 %v856, %v935
      %v951 = vadd.f32 %v857, %v938
      %v952 = vld [vmem:[%s219 + $0x8] sm:$0xff]
      %v953 = vld [vmem:[%s219 + $0x10] sm:$0xff]
      %v954 = vld [vmem:[%s219 + $0x18] sm:$0xff]
      %v955 = vld [vmem:[%s219 + $0x20] sm:$0xff]
      %v956 = vld [vmem:[%s219 + $0x28] sm:$0xff]
      %v957 = vld [vmem:[%s219 + $0x30] sm:$0xff]
      %v958 = vld [vmem:[%s219 + $0x38] sm:$0xff]
      %v959 = vld [vmem:[%s219 + $0x40] sm:$0xff]
      %v960 = vld [vmem:[%s219 + $0x48] sm:$0xff]
      %v961 = vld [vmem:[%s219 + $0x50] sm:$0xff]
      %v962 = vld [vmem:[%s219 + $0x58] sm:$0xff]
      %v963 = vld [vmem:[%s219 + $0x60] sm:$0xff]
      %s964 = scalar_lea.vmem %s1, 1024
      %v965 = vld [vmem:[%s964] sm:$0xff]
      %v966 = vld [vmem:[%s964 + $0x8] sm:$0xff]
      %v967 = vld [vmem:[%s964 + $0x10] sm:$0xff]
      %v968 = vld [vmem:[%s964 + $0x18] sm:$0xff]
      %v969 = vld [vmem:[%s964 + $0x20] sm:$0xff]
      %v970 = vld [vmem:[%s964 + $0x28] sm:$0xff]
      %v971 = vld [vmem:[%s964 + $0x30] sm:$0xff]
      %v972 = vld [vmem:[%s964 + $0x38] sm:$0xff]
      %v973 = vld [vmem:[%s964 + $0x40] sm:$0xff]
      %v974 = vld [vmem:[%s964 + $0x48] sm:$0xff]
      %v975 = vld [vmem:[%s964 + $0x50] sm:$0xff]
      %v976 = vld [vmem:[%s964 + $0x58] sm:$0xff]
      %v977 = vld [vmem:[%s964 + $0x60] sm:$0xff]
      %v978 = vld [vmem:[%s964 + $0x68] sm:$0xff]
      %v979 = vld [vmem:[%s964 + $0x70] sm:$0xff]
      %v980 = vld [vmem:[%s964 + $0x78] sm:$0xff]
      %981 = vmatpush.msra.mxu0 %v980
      %982 = vmatpush.msra.mxu0 %v979
      %983 = vmatpush.msra.mxu0 %v978
      %984 = vmatpush.msra.mxu0 %v977
      %985 = vmatpush.msra.mxu0 %v976
      %986 = vmatpush.msra.mxu0 %v975
      %987 = vmatpush.msra.mxu0 %v974
      %988 = vmatpush.msra.mxu0 %v973
      %989 = vmatpush.msra.mxu0 %v972
      %990 = vmatpush.msra.mxu0 %v971
      %991 = vmatpush.msra.mxu0 %v970
      %992 = vmatpush.msra.mxu0 %v969
      %993 = vmatpush.msra.mxu0 %v968
      %994 = vmatpush.msra.mxu0 %v967
      %995 = vmatpush.msra.mxu0 %v966
      %996 = vmatpush.msra.mxu0 %v965
      %997 = vmatmul.f32.gmra.mxu0 %v952
      %v998 = vpop.f32.mrf.mxu0
      %v999 = vadd.f32 0.0, %v998
      %1000 = vmatmul.f32.gmra.mxu0 %v953
      %v1001 = vpop.f32.mrf.mxu0
      %v1002 = vadd.f32 0.0, %v1001
      %1003 = vmatmul.f32.gmra.mxu0 %v954
      %v1004 = vpop.f32.mrf.mxu0
      %v1005 = vadd.f32 0.0, %v1004
      %1006 = vmatmul.f32.gmra.mxu0 %v955
      %v1007 = vpop.f32.mrf.mxu0
      %v1008 = vadd.f32 0.0, %v1007
      %1009 = vmatmul.f32.gmra.mxu0 %v956
      %v1010 = vpop.f32.mrf.mxu0
      %v1011 = vadd.f32 0.0, %v1010
      %1012 = vmatmul.f32.gmra.mxu0 %v957
      %v1013 = vpop.f32.mrf.mxu0
      %v1014 = vadd.f32 0.0, %v1013
      %1015 = vmatmul.f32.gmra.mxu0 %v958
      %v1016 = vpop.f32.mrf.mxu0
      %v1017 = vadd.f32 0.0, %v1016
      %1018 = vmatmul.f32.gmra.mxu0 %v959
      %v1019 = vpop.f32.mrf.mxu0
      %v1020 = vadd.f32 0.0, %v1019
      %1021 = vmatmul.f32.gmra.mxu0 %v960
      %v1022 = vpop.f32.mrf.mxu0
      %v1023 = vadd.f32 0.0, %v1022
      %1024 = vmatmul.f32.gmra.mxu0 %v961
      %v1025 = vpop.f32.mrf.mxu0
      %v1026 = vadd.f32 0.0, %v1025
      %1027 = vmatmul.f32.gmra.mxu0 %v962
      %v1028 = vpop.f32.mrf.mxu0
      %v1029 = vadd.f32 0.0, %v1028
      %1030 = vmatmul.f32.gmra.mxu0 %v963
      %v1031 = vpop.f32.mrf.mxu0
      %v1032 = vadd.f32 0.0, %v1031
      %1033 = vdwg.mxu0
      %v1034 = vadd.f32 %v940, %v999
      %v1035 = vadd.f32 %v941, %v1002
      %v1036 = vadd.f32 %v942, %v1005
      %v1037 = vadd.f32 %v943, %v1008
      %v1038 = vadd.f32 %v944, %v1011
      %v1039 = vadd.f32 %v945, %v1014
      %v1040 = vadd.f32 %v946, %v1017
      %v1041 = vadd.f32 %v947, %v1020
      %v1042 = vadd.f32 %v948, %v1023
      %v1043 = vadd.f32 %v949, %v1026
      %v1044 = vadd.f32 %v950, %v1029
      %v1045 = vadd.f32 %v951, %v1032
      %v1046 = vld [vmem:[%s219 + $0x9] sm:$0xff]
      %v1047 = vld [vmem:[%s219 + $0x11] sm:$0xff]
      %v1048 = vld [vmem:[%s219 + $0x19] sm:$0xff]
      %v1049 = vld [vmem:[%s219 + $0x21] sm:$0xff]
      %v1050 = vld [vmem:[%s219 + $0x29] sm:$0xff]
      %v1051 = vld [vmem:[%s219 + $0x31] sm:$0xff]
      %v1052 = vld [vmem:[%s219 + $0x39] sm:$0xff]
      %v1053 = vld [vmem:[%s219 + $0x41] sm:$0xff]
      %v1054 = vld [vmem:[%s219 + $0x49] sm:$0xff]
      %v1055 = vld [vmem:[%s219 + $0x51] sm:$0xff]
      %v1056 = vld [vmem:[%s219 + $0x59] sm:$0xff]
      %v1057 = vld [vmem:[%s219 + $0x61] sm:$0xff]
      %s1058 = scalar_lea.vmem %s1, 1152
      %v1059 = vld [vmem:[%s1058] sm:$0xff]
      %v1060 = vld [vmem:[%s1058 + $0x8] sm:$0xff]
      %v1061 = vld [vmem:[%s1058 + $0x10] sm:$0xff]
      %v1062 = vld [vmem:[%s1058 + $0x18] sm:$0xff]
      %v1063 = vld [vmem:[%s1058 + $0x20] sm:$0xff]
      %v1064 = vld [vmem:[%s1058 + $0x28] sm:$0xff]
      %v1065 = vld [vmem:[%s1058 + $0x30] sm:$0xff]
      %v1066 = vld [vmem:[%s1058 + $0x38] sm:$0xff]
      %v1067 = vld [vmem:[%s1058 + $0x40] sm:$0xff]
      %v1068 = vld [vmem:[%s1058 + $0x48] sm:$0xff]
      %v1069 = vld [vmem:[%s1058 + $0x50] sm:$0xff]
      %v1070 = vld [vmem:[%s1058 + $0x58] sm:$0xff]
      %v1071 = vld [vmem:[%s1058 + $0x60] sm:$0xff]
      %v1072 = vld [vmem:[%s1058 + $0x68] sm:$0xff]
      %v1073 = vld [vmem:[%s1058 + $0x70] sm:$0xff]
      %v1074 = vld [vmem:[%s1058 + $0x78] sm:$0xff]
      %1075 = vmatpush.msra.mxu0 %v1074
      %1076 = vmatpush.msra.mxu0 %v1073
      %1077 = vmatpush.msra.mxu0 %v1072
      %1078 = vmatpush.msra.mxu0 %v1071
      %1079 = vmatpush.msra.mxu0 %v1070
      %1080 = vmatpush.msra.mxu0 %v1069
      %1081 = vmatpush.msra.mxu0 %v1068
      %1082 = vmatpush.msra.mxu0 %v1067
      %1083 = vmatpush.msra.mxu0 %v1066
      %1084 = vmatpush.msra.mxu0 %v1065
      %1085 = vmatpush.msra.mxu0 %v1064
      %1086 = vmatpush.msra.mxu0 %v1063
      %1087 = vmatpush.msra.mxu0 %v1062
      %1088 = vmatpush.msra.mxu0 %v1061
      %1089 = vmatpush.msra.mxu0 %v1060
      %1090 = vmatpush.msra.mxu0 %v1059
      %1091 = vmatmul.f32.gmra.mxu0 %v1046
      %v1092 = vpop.f32.mrf.mxu0
      %v1093 = vadd.f32 0.0, %v1092
      %1094 = vmatmul.f32.gmra.mxu0 %v1047
      %v1095 = vpop.f32.mrf.mxu0
      %v1096 = vadd.f32 0.0, %v1095
      %1097 = vmatmul.f32.gmra.mxu0 %v1048
      %v1098 = vpop.f32.mrf.mxu0
      %v1099 = vadd.f32 0.0, %v1098
      %1100 = vmatmul.f32.gmra.mxu0 %v1049
      %v1101 = vpop.f32.mrf.mxu0
      %v1102 = vadd.f32 0.0, %v1101
      %1103 = vmatmul.f32.gmra.mxu0 %v1050
      %v1104 = vpop.f32.mrf.mxu0
      %v1105 = vadd.f32 0.0, %v1104
      %1106 = vmatmul.f32.gmra.mxu0 %v1051
      %v1107 = vpop.f32.mrf.mxu0
      %v1108 = vadd.f32 0.0, %v1107
      %1109 = vmatmul.f32.gmra.mxu0 %v1052
      %v1110 = vpop.f32.mrf.mxu0
      %v1111 = vadd.f32 0.0, %v1110
      %1112 = vmatmul.f32.gmra.mxu0 %v1053
      %v1113 = vpop.f32.mrf.mxu0
      %v1114 = vadd.f32 0.0, %v1113
      %1115 = vmatmul.f32.gmra.mxu0 %v1054
      %v1116 = vpop.f32.mrf.mxu0
      %v1117 = vadd.f32 0.0, %v1116
      %1118 = vmatmul.f32.gmra.mxu0 %v1055
      %v1119 = vpop.f32.mrf.mxu0
      %v1120 = vadd.f32 0.0, %v1119
      %1121 = vmatmul.f32.gmra.mxu0 %v1056
      %v1122 = vpop.f32.mrf.mxu0
      %v1123 = vadd.f32 0.0, %v1122
      %1124 = vmatmul.f32.gmra.mxu0 %v1057
      %v1125 = vpop.f32.mrf.mxu0
      %v1126 = vadd.f32 0.0, %v1125
      %1127 = vdwg.mxu0
      %v1128 = vadd.f32 %v1034, %v1093
      %v1129 = vadd.f32 %v1035, %v1096
      %v1130 = vadd.f32 %v1036, %v1099
      %v1131 = vadd.f32 %v1037, %v1102
      %v1132 = vadd.f32 %v1038, %v1105
      %v1133 = vadd.f32 %v1039, %v1108
      %v1134 = vadd.f32 %v1040, %v1111
      %v1135 = vadd.f32 %v1041, %v1114
      %v1136 = vadd.f32 %v1042, %v1117
      %v1137 = vadd.f32 %v1043, %v1120
      %v1138 = vadd.f32 %v1044, %v1123
      %v1139 = vadd.f32 %v1045, %v1126
      %v1140 = vld [vmem:[%s219 + $0xa] sm:$0xff]
      %v1141 = vld [vmem:[%s219 + $0x12] sm:$0xff]
      %v1142 = vld [vmem:[%s219 + $0x1a] sm:$0xff]
      %v1143 = vld [vmem:[%s219 + $0x22] sm:$0xff]
      %v1144 = vld [vmem:[%s219 + $0x2a] sm:$0xff]
      %v1145 = vld [vmem:[%s219 + $0x32] sm:$0xff]
      %v1146 = vld [vmem:[%s219 + $0x3a] sm:$0xff]
      %v1147 = vld [vmem:[%s219 + $0x42] sm:$0xff]
      %v1148 = vld [vmem:[%s219 + $0x4a] sm:$0xff]
      %v1149 = vld [vmem:[%s219 + $0x52] sm:$0xff]
      %v1150 = vld [vmem:[%s219 + $0x5a] sm:$0xff]
      %v1151 = vld [vmem:[%s219 + $0x62] sm:$0xff]
      %s1152 = scalar_lea.vmem %s1, 1280
      %v1153 = vld [vmem:[%s1152] sm:$0xff]
      %v1154 = vld [vmem:[%s1152 + $0x8] sm:$0xff]
      %v1155 = vld [vmem:[%s1152 + $0x10] sm:$0xff]
      %v1156 = vld [vmem:[%s1152 + $0x18] sm:$0xff]
      %v1157 = vld [vmem:[%s1152 + $0x20] sm:$0xff]
      %v1158 = vld [vmem:[%s1152 + $0x28] sm:$0xff]
      %v1159 = vld [vmem:[%s1152 + $0x30] sm:$0xff]
      %v1160 = vld [vmem:[%s1152 + $0x38] sm:$0xff]
      %v1161 = vld [vmem:[%s1152 + $0x40] sm:$0xff]
      %v1162 = vld [vmem:[%s1152 + $0x48] sm:$0xff]
      %v1163 = vld [vmem:[%s1152 + $0x50] sm:$0xff]
      %v1164 = vld [vmem:[%s1152 + $0x58] sm:$0xff]
      %v1165 = vld [vmem:[%s1152 + $0x60] sm:$0xff]
      %v1166 = vld [vmem:[%s1152 + $0x68] sm:$0xff]
      %v1167 = vld [vmem:[%s1152 + $0x70] sm:$0xff]
      %v1168 = vld [vmem:[%s1152 + $0x78] sm:$0xff]
      %1169 = vmatpush.msra.mxu0 %v1168
      %1170 = vmatpush.msra.mxu0 %v1167
      %1171 = vmatpush.msra.mxu0 %v1166
      %1172 = vmatpush.msra.mxu0 %v1165
      %1173 = vmatpush.msra.mxu0 %v1164
      %1174 = vmatpush.msra.mxu0 %v1163
      %1175 = vmatpush.msra.mxu0 %v1162
      %1176 = vmatpush.msra.mxu0 %v1161
      %1177 = vmatpush.msra.mxu0 %v1160
      %1178 = vmatpush.msra.mxu0 %v1159
      %1179 = vmatpush.msra.mxu0 %v1158
      %1180 = vmatpush.msra.mxu0 %v1157
      %1181 = vmatpush.msra.mxu0 %v1156
      %1182 = vmatpush.msra.mxu0 %v1155
      %1183 = vmatpush.msra.mxu0 %v1154
      %1184 = vmatpush.msra.mxu0 %v1153
      %1185 = vmatmul.f32.gmra.mxu0 %v1140
      %v1186 = vpop.f32.mrf.mxu0
      %v1187 = vadd.f32 0.0, %v1186
      %1188 = vmatmul.f32.gmra.mxu0 %v1141
      %v1189 = vpop.f32.mrf.mxu0
      %v1190 = vadd.f32 0.0, %v1189
      %1191 = vmatmul.f32.gmra.mxu0 %v1142
      %v1192 = vpop.f32.mrf.mxu0
      %v1193 = vadd.f32 0.0, %v1192
      %1194 = vmatmul.f32.gmra.mxu0 %v1143
      %v1195 = vpop.f32.mrf.mxu0
      %v1196 = vadd.f32 0.0, %v1195
      %1197 = vmatmul.f32.gmra.mxu0 %v1144
      %v1198 = vpop.f32.mrf.mxu0
      %v1199 = vadd.f32 0.0, %v1198
      %1200 = vmatmul.f32.gmra.mxu0 %v1145
      %v1201 = vpop.f32.mrf.mxu0
      %v1202 = vadd.f32 0.0, %v1201
      %1203 = vmatmul.f32.gmra.mxu0 %v1146
      %v1204 = vpop.f32.mrf.mxu0
      %v1205 = vadd.f32 0.0, %v1204
      %1206 = vmatmul.f32.gmra.mxu0 %v1147
      %v1207 = vpop.f32.mrf.mxu0
      %v1208 = vadd.f32 0.0, %v1207
      %1209 = vmatmul.f32.gmra.mxu0 %v1148
      %v1210 = vpop.f32.mrf.mxu0
      %v1211 = vadd.f32 0.0, %v1210
      %1212 = vmatmul.f32.gmra.mxu0 %v1149
      %v1213 = vpop.f32.mrf.mxu0
      %v1214 = vadd.f32 0.0, %v1213
      %1215 = vmatmul.f32.gmra.mxu0 %v1150
      %v1216 = vpop.f32.mrf.mxu0
      %v1217 = vadd.f32 0.0, %v1216
      %1218 = vmatmul.f32.gmra.mxu0 %v1151
      %v1219 = vpop.f32.mrf.mxu0
      %v1220 = vadd.f32 0.0, %v1219
      %1221 = vdwg.mxu0
      %v1222 = vadd.f32 %v1128, %v1187
      %v1223 = vadd.f32 %v1129, %v1190
      %v1224 = vadd.f32 %v1130, %v1193
      %v1225 = vadd.f32 %v1131, %v1196
      %v1226 = vadd.f32 %v1132, %v1199
      %v1227 = vadd.f32 %v1133, %v1202
      %v1228 = vadd.f32 %v1134, %v1205
      %v1229 = vadd.f32 %v1135, %v1208
      %v1230 = vadd.f32 %v1136, %v1211
      %v1231 = vadd.f32 %v1137, %v1214
      %v1232 = vadd.f32 %v1138, %v1217
      %v1233 = vadd.f32 %v1139, %v1220
      %v1234 = vld [vmem:[%s219 + $0xb] sm:$0xff]
      %v1235 = vld [vmem:[%s219 + $0x13] sm:$0xff]
      %v1236 = vld [vmem:[%s219 + $0x1b] sm:$0xff]
      %v1237 = vld [vmem:[%s219 + $0x23] sm:$0xff]
      %v1238 = vld [vmem:[%s219 + $0x2b] sm:$0xff]
      %v1239 = vld [vmem:[%s219 + $0x33] sm:$0xff]
      %v1240 = vld [vmem:[%s219 + $0x3b] sm:$0xff]
      %v1241 = vld [vmem:[%s219 + $0x43] sm:$0xff]
      %v1242 = vld [vmem:[%s219 + $0x4b] sm:$0xff]
      %v1243 = vld [vmem:[%s219 + $0x53] sm:$0xff]
      %v1244 = vld [vmem:[%s219 + $0x5b] sm:$0xff]
      %v1245 = vld [vmem:[%s219 + $0x63] sm:$0xff]
      %s1246 = scalar_lea.vmem %s1, 1408
      %v1247 = vld [vmem:[%s1246] sm:$0xff]
      %v1248 = vld [vmem:[%s1246 + $0x8] sm:$0xff]
      %v1249 = vld [vmem:[%s1246 + $0x10] sm:$0xff]
      %v1250 = vld [vmem:[%s1246 + $0x18] sm:$0xff]
      %v1251 = vld [vmem:[%s1246 + $0x20] sm:$0xff]
      %v1252 = vld [vmem:[%s1246 + $0x28] sm:$0xff]
      %v1253 = vld [vmem:[%s1246 + $0x30] sm:$0xff]
      %v1254 = vld [vmem:[%s1246 + $0x38] sm:$0xff]
      %v1255 = vld [vmem:[%s1246 + $0x40] sm:$0xff]
      %v1256 = vld [vmem:[%s1246 + $0x48] sm:$0xff]
      %v1257 = vld [vmem:[%s1246 + $0x50] sm:$0xff]
      %v1258 = vld [vmem:[%s1246 + $0x58] sm:$0xff]
      %v1259 = vld [vmem:[%s1246 + $0x60] sm:$0xff]
      %v1260 = vld [vmem:[%s1246 + $0x68] sm:$0xff]
      %v1261 = vld [vmem:[%s1246 + $0x70] sm:$0xff]
      %v1262 = vld [vmem:[%s1246 + $0x78] sm:$0xff]
      %1263 = vmatpush.msra.mxu0 %v1262
      %1264 = vmatpush.msra.mxu0 %v1261
      %1265 = vmatpush.msra.mxu0 %v1260
      %1266 = vmatpush.msra.mxu0 %v1259
      %1267 = vmatpush.msra.mxu0 %v1258
      %1268 = vmatpush.msra.mxu0 %v1257
      %1269 = vmatpush.msra.mxu0 %v1256
      %1270 = vmatpush.msra.mxu0 %v1255
      %1271 = vmatpush.msra.mxu0 %v1254
      %1272 = vmatpush.msra.mxu0 %v1253
      %1273 = vmatpush.msra.mxu0 %v1252
      %1274 = vmatpush.msra.mxu0 %v1251
      %1275 = vmatpush.msra.mxu0 %v1250
      %1276 = vmatpush.msra.mxu0 %v1249
      %1277 = vmatpush.msra.mxu0 %v1248
      %1278 = vmatpush.msra.mxu0 %v1247
      %1279 = vmatmul.f32.gmra.mxu0 %v1234
      %v1280 = vpop.f32.mrf.mxu0
      %v1281 = vadd.f32 0.0, %v1280
      %1282 = vmatmul.f32.gmra.mxu0 %v1235
      %v1283 = vpop.f32.mrf.mxu0
      %v1284 = vadd.f32 0.0, %v1283
      %1285 = vmatmul.f32.gmra.mxu0 %v1236
      %v1286 = vpop.f32.mrf.mxu0
      %v1287 = vadd.f32 0.0, %v1286
      %1288 = vmatmul.f32.gmra.mxu0 %v1237
      %v1289 = vpop.f32.mrf.mxu0
      %v1290 = vadd.f32 0.0, %v1289
      %1291 = vmatmul.f32.gmra.mxu0 %v1238
      %v1292 = vpop.f32.mrf.mxu0
      %v1293 = vadd.f32 0.0, %v1292
      %1294 = vmatmul.f32.gmra.mxu0 %v1239
      %v1295 = vpop.f32.mrf.mxu0
      %v1296 = vadd.f32 0.0, %v1295
      %1297 = vmatmul.f32.gmra.mxu0 %v1240
      %v1298 = vpop.f32.mrf.mxu0
      %v1299 = vadd.f32 0.0, %v1298
      %1300 = vmatmul.f32.gmra.mxu0 %v1241
      %v1301 = vpop.f32.mrf.mxu0
      %v1302 = vadd.f32 0.0, %v1301
      %1303 = vmatmul.f32.gmra.mxu0 %v1242
      %v1304 = vpop.f32.mrf.mxu0
      %v1305 = vadd.f32 0.0, %v1304
      %1306 = vmatmul.f32.gmra.mxu0 %v1243
      %v1307 = vpop.f32.mrf.mxu0
      %v1308 = vadd.f32 0.0, %v1307
      %1309 = vmatmul.f32.gmra.mxu0 %v1244
      %v1310 = vpop.f32.mrf.mxu0
      %v1311 = vadd.f32 0.0, %v1310
      %1312 = vmatmul.f32.gmra.mxu0 %v1245
      %v1313 = vpop.f32.mrf.mxu0
      %v1314 = vadd.f32 0.0, %v1313
      %1315 = vdwg.mxu0
      %v1316 = vadd.f32 %v1222, %v1281
      %v1317 = vadd.f32 %v1223, %v1284
      %v1318 = vadd.f32 %v1224, %v1287
      %v1319 = vadd.f32 %v1225, %v1290
      %v1320 = vadd.f32 %v1226, %v1293
      %v1321 = vadd.f32 %v1227, %v1296
      %v1322 = vadd.f32 %v1228, %v1299
      %v1323 = vadd.f32 %v1229, %v1302
      %v1324 = vadd.f32 %v1230, %v1305
      %v1325 = vadd.f32 %v1231, %v1308
      %v1326 = vadd.f32 %v1232, %v1311
      %v1327 = vadd.f32 %v1233, %v1314
      %v1328 = vld [vmem:[%s219 + $0xc] sm:$0xff]
      %v1329 = vld [vmem:[%s219 + $0x14] sm:$0xff]
      %v1330 = vld [vmem:[%s219 + $0x1c] sm:$0xff]
      %v1331 = vld [vmem:[%s219 + $0x24] sm:$0xff]
      %v1332 = vld [vmem:[%s219 + $0x2c] sm:$0xff]
      %v1333 = vld [vmem:[%s219 + $0x34] sm:$0xff]
      %v1334 = vld [vmem:[%s219 + $0x3c] sm:$0xff]
      %v1335 = vld [vmem:[%s219 + $0x44] sm:$0xff]
      %v1336 = vld [vmem:[%s219 + $0x4c] sm:$0xff]
      %v1337 = vld [vmem:[%s219 + $0x54] sm:$0xff]
      %v1338 = vld [vmem:[%s219 + $0x5c] sm:$0xff]
      %v1339 = vld [vmem:[%s219 + $0x64] sm:$0xff]
      %s1340 = scalar_lea.vmem %s1, 1536
      %v1341 = vld [vmem:[%s1340] sm:$0xff]
      %v1342 = vld [vmem:[%s1340 + $0x8] sm:$0xff]
      %v1343 = vld [vmem:[%s1340 + $0x10] sm:$0xff]
      %v1344 = vld [vmem:[%s1340 + $0x18] sm:$0xff]
      %v1345 = vld [vmem:[%s1340 + $0x20] sm:$0xff]
      %v1346 = vld [vmem:[%s1340 + $0x28] sm:$0xff]
      %v1347 = vld [vmem:[%s1340 + $0x30] sm:$0xff]
      %v1348 = vld [vmem:[%s1340 + $0x38] sm:$0xff]
      %v1349 = vld [vmem:[%s1340 + $0x40] sm:$0xff]
      %v1350 = vld [vmem:[%s1340 + $0x48] sm:$0xff]
      %v1351 = vld [vmem:[%s1340 + $0x50] sm:$0xff]
      %v1352 = vld [vmem:[%s1340 + $0x58] sm:$0xff]
      %v1353 = vld [vmem:[%s1340 + $0x60] sm:$0xff]
      %v1354 = vld [vmem:[%s1340 + $0x68] sm:$0xff]
      %v1355 = vld [vmem:[%s1340 + $0x70] sm:$0xff]
      %v1356 = vld [vmem:[%s1340 + $0x78] sm:$0xff]
      %1357 = vmatpush.msra.mxu0 %v1356
      %1358 = vmatpush.msra.mxu0 %v1355
      %1359 = vmatpush.msra.mxu0 %v1354
      %1360 = vmatpush.msra.mxu0 %v1353
      %1361 = vmatpush.msra.mxu0 %v1352
      %1362 = vmatpush.msra.mxu0 %v1351
      %1363 = vmatpush.msra.mxu0 %v1350
      %1364 = vmatpush.msra.mxu0 %v1349
      %1365 = vmatpush.msra.mxu0 %v1348
      %1366 = vmatpush.msra.mxu0 %v1347
      %1367 = vmatpush.msra.mxu0 %v1346
      %1368 = vmatpush.msra.mxu0 %v1345
      %1369 = vmatpush.msra.mxu0 %v1344
      %1370 = vmatpush.msra.mxu0 %v1343
      %1371 = vmatpush.msra.mxu0 %v1342
      %1372 = vmatpush.msra.mxu0 %v1341
      %1373 = vmatmul.f32.gmra.mxu0 %v1328
      %v1374 = vpop.f32.mrf.mxu0
      %v1375 = vadd.f32 0.0, %v1374
      %1376 = vmatmul.f32.gmra.mxu0 %v1329
      %v1377 = vpop.f32.mrf.mxu0
      %v1378 = vadd.f32 0.0, %v1377
      %1379 = vmatmul.f32.gmra.mxu0 %v1330
      %v1380 = vpop.f32.mrf.mxu0
      %v1381 = vadd.f32 0.0, %v1380
      %1382 = vmatmul.f32.gmra.mxu0 %v1331
      %v1383 = vpop.f32.mrf.mxu0
      %v1384 = vadd.f32 0.0, %v1383
      %1385 = vmatmul.f32.gmra.mxu0 %v1332
      %v1386 = vpop.f32.mrf.mxu0
      %v1387 = vadd.f32 0.0, %v1386
      %1388 = vmatmul.f32.gmra.mxu0 %v1333
      %v1389 = vpop.f32.mrf.mxu0
      %v1390 = vadd.f32 0.0, %v1389
      %1391 = vmatmul.f32.gmra.mxu0 %v1334
      %v1392 = vpop.f32.mrf.mxu0
      %v1393 = vadd.f32 0.0, %v1392
      %1394 = vmatmul.f32.gmra.mxu0 %v1335
      %v1395 = vpop.f32.mrf.mxu0
      %v1396 = vadd.f32 0.0, %v1395
      %1397 = vmatmul.f32.gmra.mxu0 %v1336
      %v1398 = vpop.f32.mrf.mxu0
      %v1399 = vadd.f32 0.0, %v1398
      %1400 = vmatmul.f32.gmra.mxu0 %v1337
      %v1401 = vpop.f32.mrf.mxu0
      %v1402 = vadd.f32 0.0, %v1401
      %1403 = vmatmul.f32.gmra.mxu0 %v1338
      %v1404 = vpop.f32.mrf.mxu0
      %v1405 = vadd.f32 0.0, %v1404
      %1406 = vmatmul.f32.gmra.mxu0 %v1339
      %v1407 = vpop.f32.mrf.mxu0
      %v1408 = vadd.f32 0.0, %v1407
      %1409 = vdwg.mxu0
      %v1410 = vadd.f32 %v1316, %v1375
      %v1411 = vadd.f32 %v1317, %v1378
      %v1412 = vadd.f32 %v1318, %v1381
      %v1413 = vadd.f32 %v1319, %v1384
      %v1414 = vadd.f32 %v1320, %v1387
      %v1415 = vadd.f32 %v1321, %v1390
      %v1416 = vadd.f32 %v1322, %v1393
      %v1417 = vadd.f32 %v1323, %v1396
      %v1418 = vadd.f32 %v1324, %v1399
      %v1419 = vadd.f32 %v1325, %v1402
      %v1420 = vadd.f32 %v1326, %v1405
      %v1421 = vadd.f32 %v1327, %v1408
      %v1422 = vld [vmem:[%s219 + $0xd] sm:$0xff]
      %v1423 = vld [vmem:[%s219 + $0x15] sm:$0xff]
      %v1424 = vld [vmem:[%s219 + $0x1d] sm:$0xff]
      %v1425 = vld [vmem:[%s219 + $0x25] sm:$0xff]
      %v1426 = vld [vmem:[%s219 + $0x2d] sm:$0xff]
      %v1427 = vld [vmem:[%s219 + $0x35] sm:$0xff]
      %v1428 = vld [vmem:[%s219 + $0x3d] sm:$0xff]
      %v1429 = vld [vmem:[%s219 + $0x45] sm:$0xff]
      %v1430 = vld [vmem:[%s219 + $0x4d] sm:$0xff]
      %v1431 = vld [vmem:[%s219 + $0x55] sm:$0xff]
      %v1432 = vld [vmem:[%s219 + $0x5d] sm:$0xff]
      %v1433 = vld [vmem:[%s219 + $0x65] sm:$0xff]
      %s1434 = scalar_lea.vmem %s1, 1664
      %v1435 = vld [vmem:[%s1434] sm:$0xff]
      %v1436 = vld [vmem:[%s1434 + $0x8] sm:$0xff]
      %v1437 = vld [vmem:[%s1434 + $0x10] sm:$0xff]
      %v1438 = vld [vmem:[%s1434 + $0x18] sm:$0xff]
      %v1439 = vld [vmem:[%s1434 + $0x20] sm:$0xff]
      %v1440 = vld [vmem:[%s1434 + $0x28] sm:$0xff]
      %v1441 = vld [vmem:[%s1434 + $0x30] sm:$0xff]
      %v1442 = vld [vmem:[%s1434 + $0x38] sm:$0xff]
      %v1443 = vld [vmem:[%s1434 + $0x40] sm:$0xff]
      %v1444 = vld [vmem:[%s1434 + $0x48] sm:$0xff]
      %v1445 = vld [vmem:[%s1434 + $0x50] sm:$0xff]
      %v1446 = vld [vmem:[%s1434 + $0x58] sm:$0xff]
      %v1447 = vld [vmem:[%s1434 + $0x60] sm:$0xff]
      %v1448 = vld [vmem:[%s1434 + $0x68] sm:$0xff]
      %v1449 = vld [vmem:[%s1434 + $0x70] sm:$0xff]
      %v1450 = vld [vmem:[%s1434 + $0x78] sm:$0xff]
      %1451 = vmatpush.msra.mxu0 %v1450
      %1452 = vmatpush.msra.mxu0 %v1449
      %1453 = vmatpush.msra.mxu0 %v1448
      %1454 = vmatpush.msra.mxu0 %v1447
      %1455 = vmatpush.msra.mxu0 %v1446
      %1456 = vmatpush.msra.mxu0 %v1445
      %1457 = vmatpush.msra.mxu0 %v1444
      %1458 = vmatpush.msra.mxu0 %v1443
      %1459 = vmatpush.msra.mxu0 %v1442
      %1460 = vmatpush.msra.mxu0 %v1441
      %1461 = vmatpush.msra.mxu0 %v1440
      %1462 = vmatpush.msra.mxu0 %v1439
      %1463 = vmatpush.msra.mxu0 %v1438
      %1464 = vmatpush.msra.mxu0 %v1437
      %1465 = vmatpush.msra.mxu0 %v1436
      %1466 = vmatpush.msra.mxu0 %v1435
      %1467 = vmatmul.f32.gmra.mxu0 %v1422
      %v1468 = vpop.f32.mrf.mxu0
      %v1469 = vadd.f32 0.0, %v1468
      %1470 = vmatmul.f32.gmra.mxu0 %v1423
      %v1471 = vpop.f32.mrf.mxu0
      %v1472 = vadd.f32 0.0, %v1471
      %1473 = vmatmul.f32.gmra.mxu0 %v1424
      %v1474 = vpop.f32.mrf.mxu0
      %v1475 = vadd.f32 0.0, %v1474
      %1476 = vmatmul.f32.gmra.mxu0 %v1425
      %v1477 = vpop.f32.mrf.mxu0
      %v1478 = vadd.f32 0.0, %v1477
      %1479 = vmatmul.f32.gmra.mxu0 %v1426
      %v1480 = vpop.f32.mrf.mxu0
      %v1481 = vadd.f32 0.0, %v1480
      %1482 = vmatmul.f32.gmra.mxu0 %v1427
      %v1483 = vpop.f32.mrf.mxu0
      %v1484 = vadd.f32 0.0, %v1483
      %1485 = vmatmul.f32.gmra.mxu0 %v1428
      %v1486 = vpop.f32.mrf.mxu0
      %v1487 = vadd.f32 0.0, %v1486
      %1488 = vmatmul.f32.gmra.mxu0 %v1429
      %v1489 = vpop.f32.mrf.mxu0
      %v1490 = vadd.f32 0.0, %v1489
      %1491 = vmatmul.f32.gmra.mxu0 %v1430
      %v1492 = vpop.f32.mrf.mxu0
      %v1493 = vadd.f32 0.0, %v1492
      %1494 = vmatmul.f32.gmra.mxu0 %v1431
      %v1495 = vpop.f32.mrf.mxu0
      %v1496 = vadd.f32 0.0, %v1495
      %1497 = vmatmul.f32.gmra.mxu0 %v1432
      %v1498 = vpop.f32.mrf.mxu0
      %v1499 = vadd.f32 0.0, %v1498
      %1500 = vmatmul.f32.gmra.mxu0 %v1433
      %v1501 = vpop.f32.mrf.mxu0
      %v1502 = vadd.f32 0.0, %v1501
      %1503 = vdwg.mxu0
      %v1504 = vadd.f32 %v1410, %v1469
      %v1505 = vadd.f32 %v1411, %v1472
      %v1506 = vadd.f32 %v1412, %v1475
      %v1507 = vadd.f32 %v1413, %v1478
      %v1508 = vadd.f32 %v1414, %v1481
      %v1509 = vadd.f32 %v1415, %v1484
      %v1510 = vadd.f32 %v1416, %v1487
      %v1511 = vadd.f32 %v1417, %v1490
      %v1512 = vadd.f32 %v1418, %v1493
      %v1513 = vadd.f32 %v1419, %v1496
      %v1514 = vadd.f32 %v1420, %v1499
      %v1515 = vadd.f32 %v1421, %v1502
      %v1516 = vld [vmem:[%s219 + $0xe] sm:$0xff]
      %v1517 = vld [vmem:[%s219 + $0x16] sm:$0xff]
      %v1518 = vld [vmem:[%s219 + $0x1e] sm:$0xff]
      %v1519 = vld [vmem:[%s219 + $0x26] sm:$0xff]
      %v1520 = vld [vmem:[%s219 + $0x2e] sm:$0xff]
      %v1521 = vld [vmem:[%s219 + $0x36] sm:$0xff]
      %v1522 = vld [vmem:[%s219 + $0x3e] sm:$0xff]
      %v1523 = vld [vmem:[%s219 + $0x46] sm:$0xff]
      %v1524 = vld [vmem:[%s219 + $0x4e] sm:$0xff]
      %v1525 = vld [vmem:[%s219 + $0x56] sm:$0xff]
      %v1526 = vld [vmem:[%s219 + $0x5e] sm:$0xff]
      %v1527 = vld [vmem:[%s219 + $0x66] sm:$0xff]
      %s1528 = scalar_lea.vmem %s1, 1792
      %v1529 = vld [vmem:[%s1528] sm:$0xff]
      %v1530 = vld [vmem:[%s1528 + $0x8] sm:$0xff]
      %v1531 = vld [vmem:[%s1528 + $0x10] sm:$0xff]
      %v1532 = vld [vmem:[%s1528 + $0x18] sm:$0xff]
      %v1533 = vld [vmem:[%s1528 + $0x20] sm:$0xff]
      %v1534 = vld [vmem:[%s1528 + $0x28] sm:$0xff]
      %v1535 = vld [vmem:[%s1528 + $0x30] sm:$0xff]
      %v1536 = vld [vmem:[%s1528 + $0x38] sm:$0xff]
      %v1537 = vld [vmem:[%s1528 + $0x40] sm:$0xff]
      %v1538 = vld [vmem:[%s1528 + $0x48] sm:$0xff]
      %v1539 = vld [vmem:[%s1528 + $0x50] sm:$0xff]
      %v1540 = vld [vmem:[%s1528 + $0x58] sm:$0xff]
      %v1541 = vld [vmem:[%s1528 + $0x60] sm:$0xff]
      %v1542 = vld [vmem:[%s1528 + $0x68] sm:$0xff]
      %v1543 = vld [vmem:[%s1528 + $0x70] sm:$0xff]
      %v1544 = vld [vmem:[%s1528 + $0x78] sm:$0xff]
      %1545 = vmatpush.msra.mxu0 %v1544
      %1546 = vmatpush.msra.mxu0 %v1543
      %1547 = vmatpush.msra.mxu0 %v1542
      %1548 = vmatpush.msra.mxu0 %v1541
      %1549 = vmatpush.msra.mxu0 %v1540
      %1550 = vmatpush.msra.mxu0 %v1539
      %1551 = vmatpush.msra.mxu0 %v1538
      %1552 = vmatpush.msra.mxu0 %v1537
      %1553 = vmatpush.msra.mxu0 %v1536
      %1554 = vmatpush.msra.mxu0 %v1535
      %1555 = vmatpush.msra.mxu0 %v1534
      %1556 = vmatpush.msra.mxu0 %v1533
      %1557 = vmatpush.msra.mxu0 %v1532
      %1558 = vmatpush.msra.mxu0 %v1531
      %1559 = vmatpush.msra.mxu0 %v1530
      %1560 = vmatpush.msra.mxu0 %v1529
      %1561 = vmatmul.f32.gmra.mxu0 %v1516
      %v1562 = vpop.f32.mrf.mxu0
      %v1563 = vadd.f32 0.0, %v1562
      %1564 = vmatmul.f32.gmra.mxu0 %v1517
      %v1565 = vpop.f32.mrf.mxu0
      %v1566 = vadd.f32 0.0, %v1565
      %1567 = vmatmul.f32.gmra.mxu0 %v1518
      %v1568 = vpop.f32.mrf.mxu0
      %v1569 = vadd.f32 0.0, %v1568
      %1570 = vmatmul.f32.gmra.mxu0 %v1519
      %v1571 = vpop.f32.mrf.mxu0
      %v1572 = vadd.f32 0.0, %v1571
      %1573 = vmatmul.f32.gmra.mxu0 %v1520
      %v1574 = vpop.f32.mrf.mxu0
      %v1575 = vadd.f32 0.0, %v1574
      %1576 = vmatmul.f32.gmra.mxu0 %v1521
      %v1577 = vpop.f32.mrf.mxu0
      %v1578 = vadd.f32 0.0, %v1577
      %1579 = vmatmul.f32.gmra.mxu0 %v1522
      %v1580 = vpop.f32.mrf.mxu0
      %v1581 = vadd.f32 0.0, %v1580
      %1582 = vmatmul.f32.gmra.mxu0 %v1523
      %v1583 = vpop.f32.mrf.mxu0
      %v1584 = vadd.f32 0.0, %v1583
      %1585 = vmatmul.f32.gmra.mxu0 %v1524
      %v1586 = vpop.f32.mrf.mxu0
      %v1587 = vadd.f32 0.0, %v1586
      %1588 = vmatmul.f32.gmra.mxu0 %v1525
      %v1589 = vpop.f32.mrf.mxu0
      %v1590 = vadd.f32 0.0, %v1589
      %1591 = vmatmul.f32.gmra.mxu0 %v1526
      %v1592 = vpop.f32.mrf.mxu0
      %v1593 = vadd.f32 0.0, %v1592
      %1594 = vmatmul.f32.gmra.mxu0 %v1527
      %v1595 = vpop.f32.mrf.mxu0
      %v1596 = vadd.f32 0.0, %v1595
      %1597 = vdwg.mxu0
      %v1598 = vadd.f32 %v1504, %v1563
      %v1599 = vadd.f32 %v1505, %v1566
      %v1600 = vadd.f32 %v1506, %v1569
      %v1601 = vadd.f32 %v1507, %v1572
      %v1602 = vadd.f32 %v1508, %v1575
      %v1603 = vadd.f32 %v1509, %v1578
      %v1604 = vadd.f32 %v1510, %v1581
      %v1605 = vadd.f32 %v1511, %v1584
      %v1606 = vadd.f32 %v1512, %v1587
      %v1607 = vadd.f32 %v1513, %v1590
      %v1608 = vadd.f32 %v1514, %v1593
      %v1609 = vadd.f32 %v1515, %v1596
      %v1610 = vld [vmem:[%s219 + $0xf] sm:$0xff]
      %v1611 = vld [vmem:[%s219 + $0x17] sm:$0xff]
      %v1612 = vld [vmem:[%s219 + $0x1f] sm:$0xff]
      %v1613 = vld [vmem:[%s219 + $0x27] sm:$0xff]
      %v1614 = vld [vmem:[%s219 + $0x2f] sm:$0xff]
      %v1615 = vld [vmem:[%s219 + $0x37] sm:$0xff]
      %v1616 = vld [vmem:[%s219 + $0x3f] sm:$0xff]
      %v1617 = vld [vmem:[%s219 + $0x47] sm:$0xff]
      %v1618 = vld [vmem:[%s219 + $0x4f] sm:$0xff]
      %v1619 = vld [vmem:[%s219 + $0x57] sm:$0xff]
      %v1620 = vld [vmem:[%s219 + $0x5f] sm:$0xff]
      %v1621 = vld [vmem:[%s219 + $0x67] sm:$0xff]
      %s1622 = scalar_lea.vmem %s1, 1920
      %v1623 = vld [vmem:[%s1622] sm:$0xff]
      %v1624 = vld [vmem:[%s1622 + $0x8] sm:$0xff]
      %v1625 = vld [vmem:[%s1622 + $0x10] sm:$0xff]
      %v1626 = vld [vmem:[%s1622 + $0x18] sm:$0xff]
      %v1627 = vld [vmem:[%s1622 + $0x20] sm:$0xff]
      %v1628 = vld [vmem:[%s1622 + $0x28] sm:$0xff]
      %v1629 = vld [vmem:[%s1622 + $0x30] sm:$0xff]
      %v1630 = vld [vmem:[%s1622 + $0x38] sm:$0xff]
      %v1631 = vld [vmem:[%s1622 + $0x40] sm:$0xff]
      %v1632 = vld [vmem:[%s1622 + $0x48] sm:$0xff]
      %v1633 = vld [vmem:[%s1622 + $0x50] sm:$0xff]
      %v1634 = vld [vmem:[%s1622 + $0x58] sm:$0xff]
      %v1635 = vld [vmem:[%s1622 + $0x60] sm:$0xff]
      %v1636 = vld [vmem:[%s1622 + $0x68] sm:$0xff]
      %v1637 = vld [vmem:[%s1622 + $0x70] sm:$0xff]
      %v1638 = vld [vmem:[%s1622 + $0x78] sm:$0xff]
      %1639 = vmatpush.msra.mxu0 %v1638
      %1640 = vmatpush.msra.mxu0 %v1637
      %1641 = vmatpush.msra.mxu0 %v1636
      %1642 = vmatpush.msra.mxu0 %v1635
      %1643 = vmatpush.msra.mxu0 %v1634
      %1644 = vmatpush.msra.mxu0 %v1633
      %1645 = vmatpush.msra.mxu0 %v1632
      %1646 = vmatpush.msra.mxu0 %v1631
      %1647 = vmatpush.msra.mxu0 %v1630
      %1648 = vmatpush.msra.mxu0 %v1629
      %1649 = vmatpush.msra.mxu0 %v1628
      %1650 = vmatpush.msra.mxu0 %v1627
      %1651 = vmatpush.msra.mxu0 %v1626
      %1652 = vmatpush.msra.mxu0 %v1625
      %1653 = vmatpush.msra.mxu0 %v1624
      %1654 = vmatpush.msra.mxu0 %v1623
      %1655 = vmatmul.f32.gmra.mxu0 %v1610
      %v1656 = vpop.f32.mrf.mxu0
      %v1657 = vadd.f32 0.0, %v1656
      %1658 = vmatmul.f32.gmra.mxu0 %v1611
      %v1659 = vpop.f32.mrf.mxu0
      %v1660 = vadd.f32 0.0, %v1659
      %1661 = vmatmul.f32.gmra.mxu0 %v1612
      %v1662 = vpop.f32.mrf.mxu0
      %v1663 = vadd.f32 0.0, %v1662
      %1664 = vmatmul.f32.gmra.mxu0 %v1613
      %v1665 = vpop.f32.mrf.mxu0
      %v1666 = vadd.f32 0.0, %v1665
      %1667 = vmatmul.f32.gmra.mxu0 %v1614
      %v1668 = vpop.f32.mrf.mxu0
      %v1669 = vadd.f32 0.0, %v1668
      %1670 = vmatmul.f32.gmra.mxu0 %v1615
      %v1671 = vpop.f32.mrf.mxu0
      %v1672 = vadd.f32 0.0, %v1671
      %1673 = vmatmul.f32.gmra.mxu0 %v1616
      %v1674 = vpop.f32.mrf.mxu0
      %v1675 = vadd.f32 0.0, %v1674
      %1676 = vmatmul.f32.gmra.mxu0 %v1617
      %v1677 = vpop.f32.mrf.mxu0
      %v1678 = vadd.f32 0.0, %v1677
      %1679 = vmatmul.f32.gmra.mxu0 %v1618
      %v1680 = vpop.f32.mrf.mxu0
      %v1681 = vadd.f32 0.0, %v1680
      %1682 = vmatmul.f32.gmra.mxu0 %v1619
      %v1683 = vpop.f32.mrf.mxu0
      %v1684 = vadd.f32 0.0, %v1683
      %1685 = vmatmul.f32.gmra.mxu0 %v1620
      %v1686 = vpop.f32.mrf.mxu0
      %v1687 = vadd.f32 0.0, %v1686
      %1688 = vmatmul.f32.gmra.mxu0 %v1621
      %v1689 = vpop.f32.mrf.mxu0
      %v1690 = vadd.f32 0.0, %v1689
      %1691 = vdwg.mxu0
      %v1692 = vadd.f32 %v1598, %v1657
      %v1693 = vadd.f32 %v1599, %v1660
      %v1694 = vadd.f32 %v1600, %v1663
      %v1695 = vadd.f32 %v1601, %v1666
      %v1696 = vadd.f32 %v1602, %v1669
      %v1697 = vadd.f32 %v1603, %v1672
      %v1698 = vadd.f32 %v1604, %v1675
      %v1699 = vadd.f32 %v1605, %v1678
      %v1700 = vadd.f32 %v1606, %v1681
      %v1701 = vadd.f32 %v1607, %v1684
      %v1702 = vadd.f32 %v1608, %v1687
      %v1703 = vadd.f32 %v1609, %v1690
      %v1704 = vld [vmem:[%s219 + $0x10] sm:$0xff]
      %v1705 = vld [vmem:[%s219 + $0x18] sm:$0xff]
      %v1706 = vld [vmem:[%s219 + $0x20] sm:$0xff]
      %v1707 = vld [vmem:[%s219 + $0x28] sm:$0xff]
      %v1708 = vld [vmem:[%s219 + $0x30] sm:$0xff]
      %v1709 = vld [vmem:[%s219 + $0x38] sm:$0xff]
      %v1710 = vld [vmem:[%s219 + $0x40] sm:$0xff]
      %v1711 = vld [vmem:[%s219 + $0x48] sm:$0xff]
      %v1712 = vld [vmem:[%s219 + $0x50] sm:$0xff]
      %v1713 = vld [vmem:[%s219 + $0x58] sm:$0xff]
      %v1714 = vld [vmem:[%s219 + $0x60] sm:$0xff]
      %v1715 = vld [vmem:[%s219 + $0x68] sm:$0xff]
      %s1716 = scalar_lea.vmem %s1, 2048
      %v1717 = vld [vmem:[%s1716] sm:$0xff]
      %v1718 = vld [vmem:[%s1716 + $0x8] sm:$0xff]
      %v1719 = vld [vmem:[%s1716 + $0x10] sm:$0xff]
      %v1720 = vld [vmem:[%s1716 + $0x18] sm:$0xff]
      %v1721 = vld [vmem:[%s1716 + $0x20] sm:$0xff]
      %v1722 = vld [vmem:[%s1716 + $0x28] sm:$0xff]
      %v1723 = vld [vmem:[%s1716 + $0x30] sm:$0xff]
      %v1724 = vld [vmem:[%s1716 + $0x38] sm:$0xff]
      %v1725 = vld [vmem:[%s1716 + $0x40] sm:$0xff]
      %v1726 = vld [vmem:[%s1716 + $0x48] sm:$0xff]
      %v1727 = vld [vmem:[%s1716 + $0x50] sm:$0xff]
      %v1728 = vld [vmem:[%s1716 + $0x58] sm:$0xff]
      %v1729 = vld [vmem:[%s1716 + $0x60] sm:$0xff]
      %v1730 = vld [vmem:[%s1716 + $0x68] sm:$0xff]
      %v1731 = vld [vmem:[%s1716 + $0x70] sm:$0xff]
      %v1732 = vld [vmem:[%s1716 + $0x78] sm:$0xff]
      %1733 = vmatpush.msra.mxu0 %v1732
      %1734 = vmatpush.msra.mxu0 %v1731
      %1735 = vmatpush.msra.mxu0 %v1730
      %1736 = vmatpush.msra.mxu0 %v1729
      %1737 = vmatpush.msra.mxu0 %v1728
      %1738 = vmatpush.msra.mxu0 %v1727
      %1739 = vmatpush.msra.mxu0 %v1726
      %1740 = vmatpush.msra.mxu0 %v1725
      %1741 = vmatpush.msra.mxu0 %v1724
      %1742 = vmatpush.msra.mxu0 %v1723
      %1743 = vmatpush.msra.mxu0 %v1722
      %1744 = vmatpush.msra.mxu0 %v1721
      %1745 = vmatpush.msra.mxu0 %v1720
      %1746 = vmatpush.msra.mxu0 %v1719
      %1747 = vmatpush.msra.mxu0 %v1718
      %1748 = vmatpush.msra.mxu0 %v1717
      %1749 = vmatmul.f32.gmra.mxu0 %v1704
      %v1750 = vpop.f32.mrf.mxu0
      %v1751 = vadd.f32 0.0, %v1750
      %1752 = vmatmul.f32.gmra.mxu0 %v1705
      %v1753 = vpop.f32.mrf.mxu0
      %v1754 = vadd.f32 0.0, %v1753
      %1755 = vmatmul.f32.gmra.mxu0 %v1706
      %v1756 = vpop.f32.mrf.mxu0
      %v1757 = vadd.f32 0.0, %v1756
      %1758 = vmatmul.f32.gmra.mxu0 %v1707
      %v1759 = vpop.f32.mrf.mxu0
      %v1760 = vadd.f32 0.0, %v1759
      %1761 = vmatmul.f32.gmra.mxu0 %v1708
      %v1762 = vpop.f32.mrf.mxu0
      %v1763 = vadd.f32 0.0, %v1762
      %1764 = vmatmul.f32.gmra.mxu0 %v1709
      %v1765 = vpop.f32.mrf.mxu0
      %v1766 = vadd.f32 0.0, %v1765
      %1767 = vmatmul.f32.gmra.mxu0 %v1710
      %v1768 = vpop.f32.mrf.mxu0
      %v1769 = vadd.f32 0.0, %v1768
      %1770 = vmatmul.f32.gmra.mxu0 %v1711
      %v1771 = vpop.f32.mrf.mxu0
      %v1772 = vadd.f32 0.0, %v1771
      %1773 = vmatmul.f32.gmra.mxu0 %v1712
      %v1774 = vpop.f32.mrf.mxu0
      %v1775 = vadd.f32 0.0, %v1774
      %1776 = vmatmul.f32.gmra.mxu0 %v1713
      %v1777 = vpop.f32.mrf.mxu0
      %v1778 = vadd.f32 0.0, %v1777
      %1779 = vmatmul.f32.gmra.mxu0 %v1714
      %v1780 = vpop.f32.mrf.mxu0
      %v1781 = vadd.f32 0.0, %v1780
      %1782 = vmatmul.f32.gmra.mxu0 %v1715
      %v1783 = vpop.f32.mrf.mxu0
      %v1784 = vadd.f32 0.0, %v1783
      %1785 = vdwg.mxu0
      %v1786 = vadd.f32 %v1692, %v1751
      %v1787 = vadd.f32 %v1693, %v1754
      %v1788 = vadd.f32 %v1694, %v1757
      %v1789 = vadd.f32 %v1695, %v1760
      %v1790 = vadd.f32 %v1696, %v1763
      %v1791 = vadd.f32 %v1697, %v1766
      %v1792 = vadd.f32 %v1698, %v1769
      %v1793 = vadd.f32 %v1699, %v1772
      %v1794 = vadd.f32 %v1700, %v1775
      %v1795 = vadd.f32 %v1701, %v1778
      %v1796 = vadd.f32 %v1702, %v1781
      %v1797 = vadd.f32 %v1703, %v1784
      %v1798 = vld [vmem:[%s219 + $0x11] sm:$0xff]
      %v1799 = vld [vmem:[%s219 + $0x19] sm:$0xff]
      %v1800 = vld [vmem:[%s219 + $0x21] sm:$0xff]
      %v1801 = vld [vmem:[%s219 + $0x29] sm:$0xff]
      %v1802 = vld [vmem:[%s219 + $0x31] sm:$0xff]
      %v1803 = vld [vmem:[%s219 + $0x39] sm:$0xff]
      %v1804 = vld [vmem:[%s219 + $0x41] sm:$0xff]
      %v1805 = vld [vmem:[%s219 + $0x49] sm:$0xff]
      %v1806 = vld [vmem:[%s219 + $0x51] sm:$0xff]
      %v1807 = vld [vmem:[%s219 + $0x59] sm:$0xff]
      %v1808 = vld [vmem:[%s219 + $0x61] sm:$0xff]
      %v1809 = vld [vmem:[%s219 + $0x69] sm:$0xff]
      %s1810 = scalar_lea.vmem %s1, 2176
      %v1811 = vld [vmem:[%s1810] sm:$0xff]
      %v1812 = vld [vmem:[%s1810 + $0x8] sm:$0xff]
      %v1813 = vld [vmem:[%s1810 + $0x10] sm:$0xff]
      %v1814 = vld [vmem:[%s1810 + $0x18] sm:$0xff]
      %v1815 = vld [vmem:[%s1810 + $0x20] sm:$0xff]
      %v1816 = vld [vmem:[%s1810 + $0x28] sm:$0xff]
      %v1817 = vld [vmem:[%s1810 + $0x30] sm:$0xff]
      %v1818 = vld [vmem:[%s1810 + $0x38] sm:$0xff]
      %v1819 = vld [vmem:[%s1810 + $0x40] sm:$0xff]
      %v1820 = vld [vmem:[%s1810 + $0x48] sm:$0xff]
      %v1821 = vld [vmem:[%s1810 + $0x50] sm:$0xff]
      %v1822 = vld [vmem:[%s1810 + $0x58] sm:$0xff]
      %v1823 = vld [vmem:[%s1810 + $0x60] sm:$0xff]
      %v1824 = vld [vmem:[%s1810 + $0x68] sm:$0xff]
      %v1825 = vld [vmem:[%s1810 + $0x70] sm:$0xff]
      %v1826 = vld [vmem:[%s1810 + $0x78] sm:$0xff]
      %1827 = vmatpush.msra.mxu0 %v1826
      %1828 = vmatpush.msra.mxu0 %v1825
      %1829 = vmatpush.msra.mxu0 %v1824
      %1830 = vmatpush.msra.mxu0 %v1823
      %1831 = vmatpush.msra.mxu0 %v1822
      %1832 = vmatpush.msra.mxu0 %v1821
      %1833 = vmatpush.msra.mxu0 %v1820
      %1834 = vmatpush.msra.mxu0 %v1819
      %1835 = vmatpush.msra.mxu0 %v1818
      %1836 = vmatpush.msra.mxu0 %v1817
      %1837 = vmatpush.msra.mxu0 %v1816
      %1838 = vmatpush.msra.mxu0 %v1815
      %1839 = vmatpush.msra.mxu0 %v1814
      %1840 = vmatpush.msra.mxu0 %v1813
      %1841 = vmatpush.msra.mxu0 %v1812
      %1842 = vmatpush.msra.mxu0 %v1811
      %1843 = vmatmul.f32.gmra.mxu0 %v1798
      %v1844 = vpop.f32.mrf.mxu0
      %v1845 = vadd.f32 0.0, %v1844
      %1846 = vmatmul.f32.gmra.mxu0 %v1799
      %v1847 = vpop.f32.mrf.mxu0
      %v1848 = vadd.f32 0.0, %v1847
      %1849 = vmatmul.f32.gmra.mxu0 %v1800
      %v1850 = vpop.f32.mrf.mxu0
      %v1851 = vadd.f32 0.0, %v1850
      %1852 = vmatmul.f32.gmra.mxu0 %v1801
      %v1853 = vpop.f32.mrf.mxu0
      %v1854 = vadd.f32 0.0, %v1853
      %1855 = vmatmul.f32.gmra.mxu0 %v1802
      %v1856 = vpop.f32.mrf.mxu0
      %v1857 = vadd.f32 0.0, %v1856
      %1858 = vmatmul.f32.gmra.mxu0 %v1803
      %v1859 = vpop.f32.mrf.mxu0
      %v1860 = vadd.f32 0.0, %v1859
      %1861 = vmatmul.f32.gmra.mxu0 %v1804
      %v1862 = vpop.f32.mrf.mxu0
      %v1863 = vadd.f32 0.0, %v1862
      %1864 = vmatmul.f32.gmra.mxu0 %v1805
      %v1865 = vpop.f32.mrf.mxu0
      %v1866 = vadd.f32 0.0, %v1865
      %1867 = vmatmul.f32.gmra.mxu0 %v1806
      %v1868 = vpop.f32.mrf.mxu0
      %v1869 = vadd.f32 0.0, %v1868
      %1870 = vmatmul.f32.gmra.mxu0 %v1807
      %v1871 = vpop.f32.mrf.mxu0
      %v1872 = vadd.f32 0.0, %v1871
      %1873 = vmatmul.f32.gmra.mxu0 %v1808
      %v1874 = vpop.f32.mrf.mxu0
      %v1875 = vadd.f32 0.0, %v1874
      %1876 = vmatmul.f32.gmra.mxu0 %v1809
      %v1877 = vpop.f32.mrf.mxu0
      %v1878 = vadd.f32 0.0, %v1877
      %1879 = vdwg.mxu0
      %v1880 = vadd.f32 %v1786, %v1845
      %v1881 = vadd.f32 %v1787, %v1848
      %v1882 = vadd.f32 %v1788, %v1851
      %v1883 = vadd.f32 %v1789, %v1854
      %v1884 = vadd.f32 %v1790, %v1857
      %v1885 = vadd.f32 %v1791, %v1860
      %v1886 = vadd.f32 %v1792, %v1863
      %v1887 = vadd.f32 %v1793, %v1866
      %v1888 = vadd.f32 %v1794, %v1869
      %v1889 = vadd.f32 %v1795, %v1872
      %v1890 = vadd.f32 %v1796, %v1875
      %v1891 = vadd.f32 %v1797, %v1878
      %v1892 = vld [vmem:[%s219 + $0x12] sm:$0xff]
      %v1893 = vld [vmem:[%s219 + $0x1a] sm:$0xff]
      %v1894 = vld [vmem:[%s219 + $0x22] sm:$0xff]
      %v1895 = vld [vmem:[%s219 + $0x2a] sm:$0xff]
      %v1896 = vld [vmem:[%s219 + $0x32] sm:$0xff]
      %v1897 = vld [vmem:[%s219 + $0x3a] sm:$0xff]
      %v1898 = vld [vmem:[%s219 + $0x42] sm:$0xff]
      %v1899 = vld [vmem:[%s219 + $0x4a] sm:$0xff]
      %v1900 = vld [vmem:[%s219 + $0x52] sm:$0xff]
      %v1901 = vld [vmem:[%s219 + $0x5a] sm:$0xff]
      %v1902 = vld [vmem:[%s219 + $0x62] sm:$0xff]
      %v1903 = vld [vmem:[%s219 + $0x6a] sm:$0xff]
      %s1904 = scalar_lea.vmem %s1, 2304
      %v1905 = vld [vmem:[%s1904] sm:$0xff]
      %v1906 = vld [vmem:[%s1904 + $0x8] sm:$0xff]
      %v1907 = vld [vmem:[%s1904 + $0x10] sm:$0xff]
      %v1908 = vld [vmem:[%s1904 + $0x18] sm:$0xff]
      %v1909 = vld [vmem:[%s1904 + $0x20] sm:$0xff]
      %v1910 = vld [vmem:[%s1904 + $0x28] sm:$0xff]
      %v1911 = vld [vmem:[%s1904 + $0x30] sm:$0xff]
      %v1912 = vld [vmem:[%s1904 + $0x38] sm:$0xff]
      %v1913 = vld [vmem:[%s1904 + $0x40] sm:$0xff]
      %v1914 = vld [vmem:[%s1904 + $0x48] sm:$0xff]
      %v1915 = vld [vmem:[%s1904 + $0x50] sm:$0xff]
      %v1916 = vld [vmem:[%s1904 + $0x58] sm:$0xff]
      %v1917 = vld [vmem:[%s1904 + $0x60] sm:$0xff]
      %v1918 = vld [vmem:[%s1904 + $0x68] sm:$0xff]
      %v1919 = vld [vmem:[%s1904 + $0x70] sm:$0xff]
      %v1920 = vld [vmem:[%s1904 + $0x78] sm:$0xff]
      %1921 = vmatpush.msra.mxu0 %v1920
      %1922 = vmatpush.msra.mxu0 %v1919
      %1923 = vmatpush.msra.mxu0 %v1918
      %1924 = vmatpush.msra.mxu0 %v1917
      %1925 = vmatpush.msra.mxu0 %v1916
      %1926 = vmatpush.msra.mxu0 %v1915
      %1927 = vmatpush.msra.mxu0 %v1914
      %1928 = vmatpush.msra.mxu0 %v1913
      %1929 = vmatpush.msra.mxu0 %v1912
      %1930 = vmatpush.msra.mxu0 %v1911
      %1931 = vmatpush.msra.mxu0 %v1910
      %1932 = vmatpush.msra.mxu0 %v1909
      %1933 = vmatpush.msra.mxu0 %v1908
      %1934 = vmatpush.msra.mxu0 %v1907
      %1935 = vmatpush.msra.mxu0 %v1906
      %1936 = vmatpush.msra.mxu0 %v1905
      %1937 = vmatmul.f32.gmra.mxu0 %v1892
      %v1938 = vpop.f32.mrf.mxu0
      %v1939 = vadd.f32 0.0, %v1938
      %1940 = vmatmul.f32.gmra.mxu0 %v1893
      %v1941 = vpop.f32.mrf.mxu0
      %v1942 = vadd.f32 0.0, %v1941
      %1943 = vmatmul.f32.gmra.mxu0 %v1894
      %v1944 = vpop.f32.mrf.mxu0
      %v1945 = vadd.f32 0.0, %v1944
      %1946 = vmatmul.f32.gmra.mxu0 %v1895
      %v1947 = vpop.f32.mrf.mxu0
      %v1948 = vadd.f32 0.0, %v1947
      %1949 = vmatmul.f32.gmra.mxu0 %v1896
      %v1950 = vpop.f32.mrf.mxu0
      %v1951 = vadd.f32 0.0, %v1950
      %1952 = vmatmul.f32.gmra.mxu0 %v1897
      %v1953 = vpop.f32.mrf.mxu0
      %v1954 = vadd.f32 0.0, %v1953
      %1955 = vmatmul.f32.gmra.mxu0 %v1898
      %v1956 = vpop.f32.mrf.mxu0
      %v1957 = vadd.f32 0.0, %v1956
      %1958 = vmatmul.f32.gmra.mxu0 %v1899
      %v1959 = vpop.f32.mrf.mxu0
      %v1960 = vadd.f32 0.0, %v1959
      %1961 = vmatmul.f32.gmra.mxu0 %v1900
      %v1962 = vpop.f32.mrf.mxu0
      %v1963 = vadd.f32 0.0, %v1962
      %1964 = vmatmul.f32.gmra.mxu0 %v1901
      %v1965 = vpop.f32.mrf.mxu0
      %v1966 = vadd.f32 0.0, %v1965
      %1967 = vmatmul.f32.gmra.mxu0 %v1902
      %v1968 = vpop.f32.mrf.mxu0
      %v1969 = vadd.f32 0.0, %v1968
      %1970 = vmatmul.f32.gmra.mxu0 %v1903
      %v1971 = vpop.f32.mrf.mxu0
      %v1972 = vadd.f32 0.0, %v1971
      %1973 = vdwg.mxu0
      %v1974 = vadd.f32 %v1880, %v1939
      %v1975 = vadd.f32 %v1881, %v1942
      %v1976 = vadd.f32 %v1882, %v1945
      %v1977 = vadd.f32 %v1883, %v1948
      %v1978 = vadd.f32 %v1884, %v1951
      %v1979 = vadd.f32 %v1885, %v1954
      %v1980 = vadd.f32 %v1886, %v1957
      %v1981 = vadd.f32 %v1887, %v1960
      %v1982 = vadd.f32 %v1888, %v1963
      %v1983 = vadd.f32 %v1889, %v1966
      %v1984 = vadd.f32 %v1890, %v1969
      %v1985 = vadd.f32 %v1891, %v1972
      %v1986 = vld [vmem:[%s219 + $0x13] sm:$0xff]
      %v1987 = vld [vmem:[%s219 + $0x1b] sm:$0xff]
      %v1988 = vld [vmem:[%s219 + $0x23] sm:$0xff]
      %v1989 = vld [vmem:[%s219 + $0x2b] sm:$0xff]
      %v1990 = vld [vmem:[%s219 + $0x33] sm:$0xff]
      %v1991 = vld [vmem:[%s219 + $0x3b] sm:$0xff]
      %v1992 = vld [vmem:[%s219 + $0x43] sm:$0xff]
      %v1993 = vld [vmem:[%s219 + $0x4b] sm:$0xff]
      %v1994 = vld [vmem:[%s219 + $0x53] sm:$0xff]
      %v1995 = vld [vmem:[%s219 + $0x5b] sm:$0xff]
      %v1996 = vld [vmem:[%s219 + $0x63] sm:$0xff]
      %v1997 = vld [vmem:[%s219 + $0x6b] sm:$0xff]
      %s1998 = scalar_lea.vmem %s1, 2432
      %v1999 = vld [vmem:[%s1998] sm:$0xff]
      %v2000 = vld [vmem:[%s1998 + $0x8] sm:$0xff]
      %v2001 = vld [vmem:[%s1998 + $0x10] sm:$0xff]
      %v2002 = vld [vmem:[%s1998 + $0x18] sm:$0xff]
      %v2003 = vld [vmem:[%s1998 + $0x20] sm:$0xff]
      %v2004 = vld [vmem:[%s1998 + $0x28] sm:$0xff]
      %v2005 = vld [vmem:[%s1998 + $0x30] sm:$0xff]
      %v2006 = vld [vmem:[%s1998 + $0x38] sm:$0xff]
      %v2007 = vld [vmem:[%s1998 + $0x40] sm:$0xff]
      %v2008 = vld [vmem:[%s1998 + $0x48] sm:$0xff]
      %v2009 = vld [vmem:[%s1998 + $0x50] sm:$0xff]
      %v2010 = vld [vmem:[%s1998 + $0x58] sm:$0xff]
      %v2011 = vld [vmem:[%s1998 + $0x60] sm:$0xff]
      %v2012 = vld [vmem:[%s1998 + $0x68] sm:$0xff]
      %v2013 = vld [vmem:[%s1998 + $0x70] sm:$0xff]
      %v2014 = vld [vmem:[%s1998 + $0x78] sm:$0xff]
      %2015 = vmatpush.msra.mxu0 %v2014
      %2016 = vmatpush.msra.mxu0 %v2013
      %2017 = vmatpush.msra.mxu0 %v2012
      %2018 = vmatpush.msra.mxu0 %v2011
      %2019 = vmatpush.msra.mxu0 %v2010
      %2020 = vmatpush.msra.mxu0 %v2009
      %2021 = vmatpush.msra.mxu0 %v2008
      %2022 = vmatpush.msra.mxu0 %v2007
      %2023 = vmatpush.msra.mxu0 %v2006
      %2024 = vmatpush.msra.mxu0 %v2005
      %2025 = vmatpush.msra.mxu0 %v2004
      %2026 = vmatpush.msra.mxu0 %v2003
      %2027 = vmatpush.msra.mxu0 %v2002
      %2028 = vmatpush.msra.mxu0 %v2001
      %2029 = vmatpush.msra.mxu0 %v2000
      %2030 = vmatpush.msra.mxu0 %v1999
      %2031 = vmatmul.f32.gmra.mxu0 %v1986
      %v2032 = vpop.f32.mrf.mxu0
      %v2033 = vadd.f32 0.0, %v2032
      %2034 = vmatmul.f32.gmra.mxu0 %v1987
      %v2035 = vpop.f32.mrf.mxu0
      %v2036 = vadd.f32 0.0, %v2035
      %2037 = vmatmul.f32.gmra.mxu0 %v1988
      %v2038 = vpop.f32.mrf.mxu0
      %v2039 = vadd.f32 0.0, %v2038
      %2040 = vmatmul.f32.gmra.mxu0 %v1989
      %v2041 = vpop.f32.mrf.mxu0
      %v2042 = vadd.f32 0.0, %v2041
      %2043 = vmatmul.f32.gmra.mxu0 %v1990
      %v2044 = vpop.f32.mrf.mxu0
      %v2045 = vadd.f32 0.0, %v2044
      %2046 = vmatmul.f32.gmra.mxu0 %v1991
      %v2047 = vpop.f32.mrf.mxu0
      %v2048 = vadd.f32 0.0, %v2047
      %2049 = vmatmul.f32.gmra.mxu0 %v1992
      %v2050 = vpop.f32.mrf.mxu0
      %v2051 = vadd.f32 0.0, %v2050
      %2052 = vmatmul.f32.gmra.mxu0 %v1993
      %v2053 = vpop.f32.mrf.mxu0
      %v2054 = vadd.f32 0.0, %v2053
      %2055 = vmatmul.f32.gmra.mxu0 %v1994
      %v2056 = vpop.f32.mrf.mxu0
      %v2057 = vadd.f32 0.0, %v2056
      %2058 = vmatmul.f32.gmra.mxu0 %v1995
      %v2059 = vpop.f32.mrf.mxu0
      %v2060 = vadd.f32 0.0, %v2059
      %2061 = vmatmul.f32.gmra.mxu0 %v1996
      %v2062 = vpop.f32.mrf.mxu0
      %v2063 = vadd.f32 0.0, %v2062
      %2064 = vmatmul.f32.gmra.mxu0 %v1997
      %v2065 = vpop.f32.mrf.mxu0
      %v2066 = vadd.f32 0.0, %v2065
      %2067 = vdwg.mxu0
      %v2068 = vadd.f32 %v1974, %v2033
      %v2069 = vadd.f32 %v1975, %v2036
      %v2070 = vadd.f32 %v1976, %v2039
      %v2071 = vadd.f32 %v1977, %v2042
      %v2072 = vadd.f32 %v1978, %v2045
      %v2073 = vadd.f32 %v1979, %v2048
      %v2074 = vadd.f32 %v1980, %v2051
      %v2075 = vadd.f32 %v1981, %v2054
      %v2076 = vadd.f32 %v1982, %v2057
      %v2077 = vadd.f32 %v1983, %v2060
      %v2078 = vadd.f32 %v1984, %v2063
      %v2079 = vadd.f32 %v1985, %v2066
      %v2080 = vld [vmem:[%s219 + $0x14] sm:$0xff]
      %v2081 = vld [vmem:[%s219 + $0x1c] sm:$0xff]
      %v2082 = vld [vmem:[%s219 + $0x24] sm:$0xff]
      %v2083 = vld [vmem:[%s219 + $0x2c] sm:$0xff]
      %v2084 = vld [vmem:[%s219 + $0x34] sm:$0xff]
      %v2085 = vld [vmem:[%s219 + $0x3c] sm:$0xff]
      %v2086 = vld [vmem:[%s219 + $0x44] sm:$0xff]
      %v2087 = vld [vmem:[%s219 + $0x4c] sm:$0xff]
      %v2088 = vld [vmem:[%s219 + $0x54] sm:$0xff]
      %v2089 = vld [vmem:[%s219 + $0x5c] sm:$0xff]
      %v2090 = vld [vmem:[%s219 + $0x64] sm:$0xff]
      %v2091 = vld [vmem:[%s219 + $0x6c] sm:$0xff]
      %s2092 = scalar_lea.vmem %s1, 2560
      %v2093 = vld [vmem:[%s2092] sm:$0xff]
      %v2094 = vld [vmem:[%s2092 + $0x8] sm:$0xff]
      %v2095 = vld [vmem:[%s2092 + $0x10] sm:$0xff]
      %v2096 = vld [vmem:[%s2092 + $0x18] sm:$0xff]
      %v2097 = vld [vmem:[%s2092 + $0x20] sm:$0xff]
      %v2098 = vld [vmem:[%s2092 + $0x28] sm:$0xff]
      %v2099 = vld [vmem:[%s2092 + $0x30] sm:$0xff]
      %v2100 = vld [vmem:[%s2092 + $0x38] sm:$0xff]
      %v2101 = vld [vmem:[%s2092 + $0x40] sm:$0xff]
      %v2102 = vld [vmem:[%s2092 + $0x48] sm:$0xff]
      %v2103 = vld [vmem:[%s2092 + $0x50] sm:$0xff]
      %v2104 = vld [vmem:[%s2092 + $0x58] sm:$0xff]
      %v2105 = vld [vmem:[%s2092 + $0x60] sm:$0xff]
      %v2106 = vld [vmem:[%s2092 + $0x68] sm:$0xff]
      %v2107 = vld [vmem:[%s2092 + $0x70] sm:$0xff]
      %v2108 = vld [vmem:[%s2092 + $0x78] sm:$0xff]
      %2109 = vmatpush.msra.mxu0 %v2108
      %2110 = vmatpush.msra.mxu0 %v2107
      %2111 = vmatpush.msra.mxu0 %v2106
      %2112 = vmatpush.msra.mxu0 %v2105
      %2113 = vmatpush.msra.mxu0 %v2104
      %2114 = vmatpush.msra.mxu0 %v2103
      %2115 = vmatpush.msra.mxu0 %v2102
      %2116 = vmatpush.msra.mxu0 %v2101
      %2117 = vmatpush.msra.mxu0 %v2100
      %2118 = vmatpush.msra.mxu0 %v2099
      %2119 = vmatpush.msra.mxu0 %v2098
      %2120 = vmatpush.msra.mxu0 %v2097
      %2121 = vmatpush.msra.mxu0 %v2096
      %2122 = vmatpush.msra.mxu0 %v2095
      %2123 = vmatpush.msra.mxu0 %v2094
      %2124 = vmatpush.msra.mxu0 %v2093
      %2125 = vmatmul.f32.gmra.mxu0 %v2080
      %v2126 = vpop.f32.mrf.mxu0
      %v2127 = vadd.f32 0.0, %v2126
      %2128 = vmatmul.f32.gmra.mxu0 %v2081
      %v2129 = vpop.f32.mrf.mxu0
      %v2130 = vadd.f32 0.0, %v2129
      %2131 = vmatmul.f32.gmra.mxu0 %v2082
      %v2132 = vpop.f32.mrf.mxu0
      %v2133 = vadd.f32 0.0, %v2132
      %2134 = vmatmul.f32.gmra.mxu0 %v2083
      %v2135 = vpop.f32.mrf.mxu0
      %v2136 = vadd.f32 0.0, %v2135
      %2137 = vmatmul.f32.gmra.mxu0 %v2084
      %v2138 = vpop.f32.mrf.mxu0
      %v2139 = vadd.f32 0.0, %v2138
      %2140 = vmatmul.f32.gmra.mxu0 %v2085
      %v2141 = vpop.f32.mrf.mxu0
      %v2142 = vadd.f32 0.0, %v2141
      %2143 = vmatmul.f32.gmra.mxu0 %v2086
      %v2144 = vpop.f32.mrf.mxu0
      %v2145 = vadd.f32 0.0, %v2144
      %2146 = vmatmul.f32.gmra.mxu0 %v2087
      %v2147 = vpop.f32.mrf.mxu0
      %v2148 = vadd.f32 0.0, %v2147
      %2149 = vmatmul.f32.gmra.mxu0 %v2088
      %v2150 = vpop.f32.mrf.mxu0
      %v2151 = vadd.f32 0.0, %v2150
      %2152 = vmatmul.f32.gmra.mxu0 %v2089
      %v2153 = vpop.f32.mrf.mxu0
      %v2154 = vadd.f32 0.0, %v2153
      %2155 = vmatmul.f32.gmra.mxu0 %v2090
      %v2156 = vpop.f32.mrf.mxu0
      %v2157 = vadd.f32 0.0, %v2156
      %2158 = vmatmul.f32.gmra.mxu0 %v2091
      %v2159 = vpop.f32.mrf.mxu0
      %v2160 = vadd.f32 0.0, %v2159
      %2161 = vdwg.mxu0
      %v2162 = vadd.f32 %v2068, %v2127
      %v2163 = vadd.f32 %v2069, %v2130
      %v2164 = vadd.f32 %v2070, %v2133
      %v2165 = vadd.f32 %v2071, %v2136
      %v2166 = vadd.f32 %v2072, %v2139
      %v2167 = vadd.f32 %v2073, %v2142
      %v2168 = vadd.f32 %v2074, %v2145
      %v2169 = vadd.f32 %v2075, %v2148
      %v2170 = vadd.f32 %v2076, %v2151
      %v2171 = vadd.f32 %v2077, %v2154
      %v2172 = vadd.f32 %v2078, %v2157
      %v2173 = vadd.f32 %v2079, %v2160
      %v2174 = vld [vmem:[%s219 + $0x15] sm:$0xff]
      %v2175 = vld [vmem:[%s219 + $0x1d] sm:$0xff]
      %v2176 = vld [vmem:[%s219 + $0x25] sm:$0xff]
      %v2177 = vld [vmem:[%s219 + $0x2d] sm:$0xff]
      %v2178 = vld [vmem:[%s219 + $0x35] sm:$0xff]
      %v2179 = vld [vmem:[%s219 + $0x3d] sm:$0xff]
      %v2180 = vld [vmem:[%s219 + $0x45] sm:$0xff]
      %v2181 = vld [vmem:[%s219 + $0x4d] sm:$0xff]
      %v2182 = vld [vmem:[%s219 + $0x55] sm:$0xff]
      %v2183 = vld [vmem:[%s219 + $0x5d] sm:$0xff]
      %v2184 = vld [vmem:[%s219 + $0x65] sm:$0xff]
      %v2185 = vld [vmem:[%s219 + $0x6d] sm:$0xff]
      %s2186 = scalar_lea.vmem %s1, 2688
      %v2187 = vld [vmem:[%s2186] sm:$0xff]
      %v2188 = vld [vmem:[%s2186 + $0x8] sm:$0xff]
      %v2189 = vld [vmem:[%s2186 + $0x10] sm:$0xff]
      %v2190 = vld [vmem:[%s2186 + $0x18] sm:$0xff]
      %v2191 = vld [vmem:[%s2186 + $0x20] sm:$0xff]
      %v2192 = vld [vmem:[%s2186 + $0x28] sm:$0xff]
      %v2193 = vld [vmem:[%s2186 + $0x30] sm:$0xff]
      %v2194 = vld [vmem:[%s2186 + $0x38] sm:$0xff]
      %v2195 = vld [vmem:[%s2186 + $0x40] sm:$0xff]
      %v2196 = vld [vmem:[%s2186 + $0x48] sm:$0xff]
      %v2197 = vld [vmem:[%s2186 + $0x50] sm:$0xff]
      %v2198 = vld [vmem:[%s2186 + $0x58] sm:$0xff]
      %v2199 = vld [vmem:[%s2186 + $0x60] sm:$0xff]
      %v2200 = vld [vmem:[%s2186 + $0x68] sm:$0xff]
      %v2201 = vld [vmem:[%s2186 + $0x70] sm:$0xff]
      %v2202 = vld [vmem:[%s2186 + $0x78] sm:$0xff]
      %2203 = vmatpush.msra.mxu0 %v2202
      %2204 = vmatpush.msra.mxu0 %v2201
      %2205 = vmatpush.msra.mxu0 %v2200
      %2206 = vmatpush.msra.mxu0 %v2199
      %2207 = vmatpush.msra.mxu0 %v2198
      %2208 = vmatpush.msra.mxu0 %v2197
      %2209 = vmatpush.msra.mxu0 %v2196
      %2210 = vmatpush.msra.mxu0 %v2195
      %2211 = vmatpush.msra.mxu0 %v2194
      %2212 = vmatpush.msra.mxu0 %v2193
      %2213 = vmatpush.msra.mxu0 %v2192
      %2214 = vmatpush.msra.mxu0 %v2191
      %2215 = vmatpush.msra.mxu0 %v2190
      %2216 = vmatpush.msra.mxu0 %v2189
      %2217 = vmatpush.msra.mxu0 %v2188
      %2218 = vmatpush.msra.mxu0 %v2187
      %2219 = vmatmul.f32.gmra.mxu0 %v2174
      %v2220 = vpop.f32.mrf.mxu0
      %v2221 = vadd.f32 0.0, %v2220
      %2222 = vmatmul.f32.gmra.mxu0 %v2175
      %v2223 = vpop.f32.mrf.mxu0
      %v2224 = vadd.f32 0.0, %v2223
      %2225 = vmatmul.f32.gmra.mxu0 %v2176
      %v2226 = vpop.f32.mrf.mxu0
      %v2227 = vadd.f32 0.0, %v2226
      %2228 = vmatmul.f32.gmra.mxu0 %v2177
      %v2229 = vpop.f32.mrf.mxu0
      %v2230 = vadd.f32 0.0, %v2229
      %2231 = vmatmul.f32.gmra.mxu0 %v2178
      %v2232 = vpop.f32.mrf.mxu0
      %v2233 = vadd.f32 0.0, %v2232
      %2234 = vmatmul.f32.gmra.mxu0 %v2179
      %v2235 = vpop.f32.mrf.mxu0
      %v2236 = vadd.f32 0.0, %v2235
      %2237 = vmatmul.f32.gmra.mxu0 %v2180
      %v2238 = vpop.f32.mrf.mxu0
      %v2239 = vadd.f32 0.0, %v2238
      %2240 = vmatmul.f32.gmra.mxu0 %v2181
      %v2241 = vpop.f32.mrf.mxu0
      %v2242 = vadd.f32 0.0, %v2241
      %2243 = vmatmul.f32.gmra.mxu0 %v2182
      %v2244 = vpop.f32.mrf.mxu0
      %v2245 = vadd.f32 0.0, %v2244
      %2246 = vmatmul.f32.gmra.mxu0 %v2183
      %v2247 = vpop.f32.mrf.mxu0
      %v2248 = vadd.f32 0.0, %v2247
      %2249 = vmatmul.f32.gmra.mxu0 %v2184
      %v2250 = vpop.f32.mrf.mxu0
      %v2251 = vadd.f32 0.0, %v2250
      %2252 = vmatmul.f32.gmra.mxu0 %v2185
      %v2253 = vpop.f32.mrf.mxu0
      %v2254 = vadd.f32 0.0, %v2253
      %2255 = vdwg.mxu0
      %v2256 = vadd.f32 %v2162, %v2221
      %v2257 = vadd.f32 %v2163, %v2224
      %v2258 = vadd.f32 %v2164, %v2227
      %v2259 = vadd.f32 %v2165, %v2230
      %v2260 = vadd.f32 %v2166, %v2233
      %v2261 = vadd.f32 %v2167, %v2236
      %v2262 = vadd.f32 %v2168, %v2239
      %v2263 = vadd.f32 %v2169, %v2242
      %v2264 = vadd.f32 %v2170, %v2245
      %v2265 = vadd.f32 %v2171, %v2248
      %v2266 = vadd.f32 %v2172, %v2251
      %v2267 = vadd.f32 %v2173, %v2254
      %v2268 = vld [vmem:[%s219 + $0x16] sm:$0xff]
      %v2269 = vld [vmem:[%s219 + $0x1e] sm:$0xff]
      %v2270 = vld [vmem:[%s219 + $0x26] sm:$0xff]
      %v2271 = vld [vmem:[%s219 + $0x2e] sm:$0xff]
      %v2272 = vld [vmem:[%s219 + $0x36] sm:$0xff]
      %v2273 = vld [vmem:[%s219 + $0x3e] sm:$0xff]
      %v2274 = vld [vmem:[%s219 + $0x46] sm:$0xff]
      %v2275 = vld [vmem:[%s219 + $0x4e] sm:$0xff]
      %v2276 = vld [vmem:[%s219 + $0x56] sm:$0xff]
      %v2277 = vld [vmem:[%s219 + $0x5e] sm:$0xff]
      %v2278 = vld [vmem:[%s219 + $0x66] sm:$0xff]
      %v2279 = vld [vmem:[%s219 + $0x6e] sm:$0xff]
      %s2280 = scalar_lea.vmem %s1, 2816
      %v2281 = vld [vmem:[%s2280] sm:$0xff]
      %v2282 = vld [vmem:[%s2280 + $0x8] sm:$0xff]
      %v2283 = vld [vmem:[%s2280 + $0x10] sm:$0xff]
      %v2284 = vld [vmem:[%s2280 + $0x18] sm:$0xff]
      %v2285 = vld [vmem:[%s2280 + $0x20] sm:$0xff]
      %v2286 = vld [vmem:[%s2280 + $0x28] sm:$0xff]
      %v2287 = vld [vmem:[%s2280 + $0x30] sm:$0xff]
      %v2288 = vld [vmem:[%s2280 + $0x38] sm:$0xff]
      %v2289 = vld [vmem:[%s2280 + $0x40] sm:$0xff]
      %v2290 = vld [vmem:[%s2280 + $0x48] sm:$0xff]
      %v2291 = vld [vmem:[%s2280 + $0x50] sm:$0xff]
      %v2292 = vld [vmem:[%s2280 + $0x58] sm:$0xff]
      %v2293 = vld [vmem:[%s2280 + $0x60] sm:$0xff]
      %v2294 = vld [vmem:[%s2280 + $0x68] sm:$0xff]
      %v2295 = vld [vmem:[%s2280 + $0x70] sm:$0xff]
      %v2296 = vld [vmem:[%s2280 + $0x78] sm:$0xff]
      %2297 = vmatpush.msra.mxu0 %v2296
      %2298 = vmatpush.msra.mxu0 %v2295
      %2299 = vmatpush.msra.mxu0 %v2294
      %2300 = vmatpush.msra.mxu0 %v2293
      %2301 = vmatpush.msra.mxu0 %v2292
      %2302 = vmatpush.msra.mxu0 %v2291
      %2303 = vmatpush.msra.mxu0 %v2290
      %2304 = vmatpush.msra.mxu0 %v2289
      %2305 = vmatpush.msra.mxu0 %v2288
      %2306 = vmatpush.msra.mxu0 %v2287
      %2307 = vmatpush.msra.mxu0 %v2286
      %2308 = vmatpush.msra.mxu0 %v2285
      %2309 = vmatpush.msra.mxu0 %v2284
      %2310 = vmatpush.msra.mxu0 %v2283
      %2311 = vmatpush.msra.mxu0 %v2282
      %2312 = vmatpush.msra.mxu0 %v2281
      %2313 = vmatmul.f32.gmra.mxu0 %v2268
      %v2314 = vpop.f32.mrf.mxu0
      %v2315 = vadd.f32 0.0, %v2314
      %2316 = vmatmul.f32.gmra.mxu0 %v2269
      %v2317 = vpop.f32.mrf.mxu0
      %v2318 = vadd.f32 0.0, %v2317
      %2319 = vmatmul.f32.gmra.mxu0 %v2270
      %v2320 = vpop.f32.mrf.mxu0
      %v2321 = vadd.f32 0.0, %v2320
      %2322 = vmatmul.f32.gmra.mxu0 %v2271
      %v2323 = vpop.f32.mrf.mxu0
      %v2324 = vadd.f32 0.0, %v2323
      %2325 = vmatmul.f32.gmra.mxu0 %v2272
      %v2326 = vpop.f32.mrf.mxu0
      %v2327 = vadd.f32 0.0, %v2326
      %2328 = vmatmul.f32.gmra.mxu0 %v2273
      %v2329 = vpop.f32.mrf.mxu0
      %v2330 = vadd.f32 0.0, %v2329
      %2331 = vmatmul.f32.gmra.mxu0 %v2274
      %v2332 = vpop.f32.mrf.mxu0
      %v2333 = vadd.f32 0.0, %v2332
      %2334 = vmatmul.f32.gmra.mxu0 %v2275
      %v2335 = vpop.f32.mrf.mxu0
      %v2336 = vadd.f32 0.0, %v2335
      %2337 = vmatmul.f32.gmra.mxu0 %v2276
      %v2338 = vpop.f32.mrf.mxu0
      %v2339 = vadd.f32 0.0, %v2338
      %2340 = vmatmul.f32.gmra.mxu0 %v2277
      %v2341 = vpop.f32.mrf.mxu0
      %v2342 = vadd.f32 0.0, %v2341
      %2343 = vmatmul.f32.gmra.mxu0 %v2278
      %v2344 = vpop.f32.mrf.mxu0
      %v2345 = vadd.f32 0.0, %v2344
      %2346 = vmatmul.f32.gmra.mxu0 %v2279
      %v2347 = vpop.f32.mrf.mxu0
      %v2348 = vadd.f32 0.0, %v2347
      %2349 = vdwg.mxu0
      %v2350 = vadd.f32 %v2256, %v2315
      %v2351 = vadd.f32 %v2257, %v2318
      %v2352 = vadd.f32 %v2258, %v2321
      %v2353 = vadd.f32 %v2259, %v2324
      %v2354 = vadd.f32 %v2260, %v2327
      %v2355 = vadd.f32 %v2261, %v2330
      %v2356 = vadd.f32 %v2262, %v2333
      %v2357 = vadd.f32 %v2263, %v2336
      %v2358 = vadd.f32 %v2264, %v2339
      %v2359 = vadd.f32 %v2265, %v2342
      %v2360 = vadd.f32 %v2266, %v2345
      %v2361 = vadd.f32 %v2267, %v2348
      %v2362 = vld [vmem:[%s219 + $0x17] sm:$0xff]
      %v2363 = vld [vmem:[%s219 + $0x1f] sm:$0xff]
      %v2364 = vld [vmem:[%s219 + $0x27] sm:$0xff]
      %v2365 = vld [vmem:[%s219 + $0x2f] sm:$0xff]
      %v2366 = vld [vmem:[%s219 + $0x37] sm:$0xff]
      %v2367 = vld [vmem:[%s219 + $0x3f] sm:$0xff]
      %v2368 = vld [vmem:[%s219 + $0x47] sm:$0xff]
      %v2369 = vld [vmem:[%s219 + $0x4f] sm:$0xff]
      %v2370 = vld [vmem:[%s219 + $0x57] sm:$0xff]
      %v2371 = vld [vmem:[%s219 + $0x5f] sm:$0xff]
      %v2372 = vld [vmem:[%s219 + $0x67] sm:$0xff]
      %v2373 = vld [vmem:[%s219 + $0x6f] sm:$0xff]
      %s2374 = scalar_lea.vmem %s1, 2944
      %v2375 = vld [vmem:[%s2374] sm:$0xff]
      %v2376 = vld [vmem:[%s2374 + $0x8] sm:$0xff]
      %v2377 = vld [vmem:[%s2374 + $0x10] sm:$0xff]
      %v2378 = vld [vmem:[%s2374 + $0x18] sm:$0xff]
      %v2379 = vld [vmem:[%s2374 + $0x20] sm:$0xff]
      %v2380 = vld [vmem:[%s2374 + $0x28] sm:$0xff]
      %v2381 = vld [vmem:[%s2374 + $0x30] sm:$0xff]
      %v2382 = vld [vmem:[%s2374 + $0x38] sm:$0xff]
      %v2383 = vld [vmem:[%s2374 + $0x40] sm:$0xff]
      %v2384 = vld [vmem:[%s2374 + $0x48] sm:$0xff]
      %v2385 = vld [vmem:[%s2374 + $0x50] sm:$0xff]
      %v2386 = vld [vmem:[%s2374 + $0x58] sm:$0xff]
      %v2387 = vld [vmem:[%s2374 + $0x60] sm:$0xff]
      %v2388 = vld [vmem:[%s2374 + $0x68] sm:$0xff]
      %v2389 = vld [vmem:[%s2374 + $0x70] sm:$0xff]
      %v2390 = vld [vmem:[%s2374 + $0x78] sm:$0xff]
      %2391 = vmatpush.msra.mxu0 %v2390
      %2392 = vmatpush.msra.mxu0 %v2389
      %2393 = vmatpush.msra.mxu0 %v2388
      %2394 = vmatpush.msra.mxu0 %v2387
      %2395 = vmatpush.msra.mxu0 %v2386
      %2396 = vmatpush.msra.mxu0 %v2385
      %2397 = vmatpush.msra.mxu0 %v2384
      %2398 = vmatpush.msra.mxu0 %v2383
      %2399 = vmatpush.msra.mxu0 %v2382
      %2400 = vmatpush.msra.mxu0 %v2381
      %2401 = vmatpush.msra.mxu0 %v2380
      %2402 = vmatpush.msra.mxu0 %v2379
      %2403 = vmatpush.msra.mxu0 %v2378
      %2404 = vmatpush.msra.mxu0 %v2377
      %2405 = vmatpush.msra.mxu0 %v2376
      %2406 = vmatpush.msra.mxu0 %v2375
      %2407 = vmatmul.f32.gmra.mxu0 %v2362
      %v2408 = vpop.f32.mrf.mxu0
      %v2409 = vadd.f32 0.0, %v2408
      %2410 = vmatmul.f32.gmra.mxu0 %v2363
      %v2411 = vpop.f32.mrf.mxu0
      %v2412 = vadd.f32 0.0, %v2411
      %2413 = vmatmul.f32.gmra.mxu0 %v2364
      %v2414 = vpop.f32.mrf.mxu0
      %v2415 = vadd.f32 0.0, %v2414
      %2416 = vmatmul.f32.gmra.mxu0 %v2365
      %v2417 = vpop.f32.mrf.mxu0
      %v2418 = vadd.f32 0.0, %v2417
      %2419 = vmatmul.f32.gmra.mxu0 %v2366
      %v2420 = vpop.f32.mrf.mxu0
      %v2421 = vadd.f32 0.0, %v2420
      %2422 = vmatmul.f32.gmra.mxu0 %v2367
      %v2423 = vpop.f32.mrf.mxu0
      %v2424 = vadd.f32 0.0, %v2423
      %2425 = vmatmul.f32.gmra.mxu0 %v2368
      %v2426 = vpop.f32.mrf.mxu0
      %v2427 = vadd.f32 0.0, %v2426
      %2428 = vmatmul.f32.gmra.mxu0 %v2369
      %v2429 = vpop.f32.mrf.mxu0
      %v2430 = vadd.f32 0.0, %v2429
      %2431 = vmatmul.f32.gmra.mxu0 %v2370
      %v2432 = vpop.f32.mrf.mxu0
      %v2433 = vadd.f32 0.0, %v2432
      %2434 = vmatmul.f32.gmra.mxu0 %v2371
      %v2435 = vpop.f32.mrf.mxu0
      %v2436 = vadd.f32 0.0, %v2435
      %2437 = vmatmul.f32.gmra.mxu0 %v2372
      %v2438 = vpop.f32.mrf.mxu0
      %v2439 = vadd.f32 0.0, %v2438
      %2440 = vmatmul.f32.gmra.mxu0 %v2373
      %v2441 = vpop.f32.mrf.mxu0
      %v2442 = vadd.f32 0.0, %v2441
      %2443 = vdwg.mxu0
      %v2444 = vadd.f32 %v2350, %v2409
      %v2445 = vadd.f32 %v2351, %v2412
      %v2446 = vadd.f32 %v2352, %v2415
      %v2447 = vadd.f32 %v2353, %v2418
      %v2448 = vadd.f32 %v2354, %v2421
      %v2449 = vadd.f32 %v2355, %v2424
      %v2450 = vadd.f32 %v2356, %v2427
      %v2451 = vadd.f32 %v2357, %v2430
      %v2452 = vadd.f32 %v2358, %v2433
      %v2453 = vadd.f32 %v2359, %v2436
      %v2454 = vadd.f32 %v2360, %v2439
      %v2455 = vadd.f32 %v2361, %v2442
      %v2456 = vld [vmem:[%s219 + $0x18] sm:$0xff]
      %v2457 = vld [vmem:[%s219 + $0x20] sm:$0xff]
      %v2458 = vld [vmem:[%s219 + $0x28] sm:$0xff]
      %v2459 = vld [vmem:[%s219 + $0x30] sm:$0xff]
      %v2460 = vld [vmem:[%s219 + $0x38] sm:$0xff]
      %v2461 = vld [vmem:[%s219 + $0x40] sm:$0xff]
      %v2462 = vld [vmem:[%s219 + $0x48] sm:$0xff]
      %v2463 = vld [vmem:[%s219 + $0x50] sm:$0xff]
      %v2464 = vld [vmem:[%s219 + $0x58] sm:$0xff]
      %v2465 = vld [vmem:[%s219 + $0x60] sm:$0xff]
      %v2466 = vld [vmem:[%s219 + $0x68] sm:$0xff]
      %v2467 = vld [vmem:[%s219 + $0x70] sm:$0xff]
      %s2468 = scalar_lea.vmem %s1, 3072
      %v2469 = vld [vmem:[%s2468] sm:$0xff]
      %v2470 = vld [vmem:[%s2468 + $0x8] sm:$0xff]
      %v2471 = vld [vmem:[%s2468 + $0x10] sm:$0xff]
      %v2472 = vld [vmem:[%s2468 + $0x18] sm:$0xff]
      %v2473 = vld [vmem:[%s2468 + $0x20] sm:$0xff]
      %v2474 = vld [vmem:[%s2468 + $0x28] sm:$0xff]
      %v2475 = vld [vmem:[%s2468 + $0x30] sm:$0xff]
      %v2476 = vld [vmem:[%s2468 + $0x38] sm:$0xff]
      %v2477 = vld [vmem:[%s2468 + $0x40] sm:$0xff]
      %v2478 = vld [vmem:[%s2468 + $0x48] sm:$0xff]
      %v2479 = vld [vmem:[%s2468 + $0x50] sm:$0xff]
      %v2480 = vld [vmem:[%s2468 + $0x58] sm:$0xff]
      %v2481 = vld [vmem:[%s2468 + $0x60] sm:$0xff]
      %v2482 = vld [vmem:[%s2468 + $0x68] sm:$0xff]
      %v2483 = vld [vmem:[%s2468 + $0x70] sm:$0xff]
      %v2484 = vld [vmem:[%s2468 + $0x78] sm:$0xff]
      %2485 = vmatpush.msra.mxu0 %v2484
      %2486 = vmatpush.msra.mxu0 %v2483
      %2487 = vmatpush.msra.mxu0 %v2482
      %2488 = vmatpush.msra.mxu0 %v2481
      %2489 = vmatpush.msra.mxu0 %v2480
      %2490 = vmatpush.msra.mxu0 %v2479
      %2491 = vmatpush.msra.mxu0 %v2478
      %2492 = vmatpush.msra.mxu0 %v2477
      %2493 = vmatpush.msra.mxu0 %v2476
      %2494 = vmatpush.msra.mxu0 %v2475
      %2495 = vmatpush.msra.mxu0 %v2474
      %2496 = vmatpush.msra.mxu0 %v2473
      %2497 = vmatpush.msra.mxu0 %v2472
      %2498 = vmatpush.msra.mxu0 %v2471
      %2499 = vmatpush.msra.mxu0 %v2470
      %2500 = vmatpush.msra.mxu0 %v2469
      %2501 = vmatmul.f32.gmra.mxu0 %v2456
      %v2502 = vpop.f32.mrf.mxu0
      %v2503 = vadd.f32 0.0, %v2502
      %2504 = vmatmul.f32.gmra.mxu0 %v2457
      %v2505 = vpop.f32.mrf.mxu0
      %v2506 = vadd.f32 0.0, %v2505
      %2507 = vmatmul.f32.gmra.mxu0 %v2458
      %v2508 = vpop.f32.mrf.mxu0
      %v2509 = vadd.f32 0.0, %v2508
      %2510 = vmatmul.f32.gmra.mxu0 %v2459
      %v2511 = vpop.f32.mrf.mxu0
      %v2512 = vadd.f32 0.0, %v2511
      %2513 = vmatmul.f32.gmra.mxu0 %v2460
      %v2514 = vpop.f32.mrf.mxu0
      %v2515 = vadd.f32 0.0, %v2514
      %2516 = vmatmul.f32.gmra.mxu0 %v2461
      %v2517 = vpop.f32.mrf.mxu0
      %v2518 = vadd.f32 0.0, %v2517
      %2519 = vmatmul.f32.gmra.mxu0 %v2462
      %v2520 = vpop.f32.mrf.mxu0
      %v2521 = vadd.f32 0.0, %v2520
      %2522 = vmatmul.f32.gmra.mxu0 %v2463
      %v2523 = vpop.f32.mrf.mxu0
      %v2524 = vadd.f32 0.0, %v2523
      %2525 = vmatmul.f32.gmra.mxu0 %v2464
      %v2526 = vpop.f32.mrf.mxu0
      %v2527 = vadd.f32 0.0, %v2526
      %2528 = vmatmul.f32.gmra.mxu0 %v2465
      %v2529 = vpop.f32.mrf.mxu0
      %v2530 = vadd.f32 0.0, %v2529
      %2531 = vmatmul.f32.gmra.mxu0 %v2466
      %v2532 = vpop.f32.mrf.mxu0
      %v2533 = vadd.f32 0.0, %v2532
      %2534 = vmatmul.f32.gmra.mxu0 %v2467
      %v2535 = vpop.f32.mrf.mxu0
      %v2536 = vadd.f32 0.0, %v2535
      %2537 = vdwg.mxu0
      %v2538 = vadd.f32 %v2444, %v2503
      %v2539 = vadd.f32 %v2445, %v2506
      %v2540 = vadd.f32 %v2446, %v2509
      %v2541 = vadd.f32 %v2447, %v2512
      %v2542 = vadd.f32 %v2448, %v2515
      %v2543 = vadd.f32 %v2449, %v2518
      %v2544 = vadd.f32 %v2450, %v2521
      %v2545 = vadd.f32 %v2451, %v2524
      %v2546 = vadd.f32 %v2452, %v2527
      %v2547 = vadd.f32 %v2453, %v2530
      %v2548 = vadd.f32 %v2454, %v2533
      %v2549 = vadd.f32 %v2455, %v2536
      %v2550 = vld [vmem:[%s2] sm:$0x1]
      %v2552 = vperm.slane %v2550, 0
      %v2554 = vmul.f32 %v2538, %v2552
      %v2555 = vmul.f32 %v2539, %v2552
      %v2556 = vmul.f32 %v2540, %v2552
      %v2557 = vmul.f32 %v2541, %v2552
      %v2558 = vmul.f32 %v2542, %v2552
      %v2559 = vmul.f32 %v2543, %v2552
      %v2560 = vmul.f32 %v2544, %v2552
      %v2561 = vmul.f32 %v2545, %v2552
      %v2562 = vmul.f32 %v2546, %v2552
      %v2563 = vmul.f32 %v2547, %v2552
      %v2564 = vmul.f32 %v2548, %v2552
      %v2565 = vmul.f32 %v2549, %v2552
      %v2566 = vld [vmem:[%s3] sm:$0x1]
      %v2568 = vperm.slane %v2566, 0
      %v2570 = vadd.f32 %v2554, %v2568
      %v2571 = vadd.f32 %v2555, %v2568
      %v2572 = vadd.f32 %v2556, %v2568
      %v2573 = vadd.f32 %v2557, %v2568
      %v2574 = vadd.f32 %v2558, %v2568
      %v2575 = vadd.f32 %v2559, %v2568
      %v2576 = vadd.f32 %v2560, %v2568
      %v2577 = vadd.f32 %v2561, %v2568
      %v2578 = vadd.f32 %v2562, %v2568
      %v2579 = vadd.f32 %v2563, %v2568
      %v2580 = vadd.f32 %v2564, %v2568
      %v2581 = vadd.f32 %v2565, %v2568
      %vm2582 = vcmp.gt.f32.partialorder %v2570, 0.0
      %vm2583 = vcmp.gt.f32.partialorder %v2571, 0.0
      %vm2584 = vcmp.gt.f32.partialorder %v2572, 0.0
      %vm2585 = vcmp.gt.f32.partialorder %v2573, 0.0
      %vm2586 = vcmp.gt.f32.partialorder %v2574, 0.0
      %vm2587 = vcmp.gt.f32.partialorder %v2575, 0.0
      %vm2588 = vcmp.gt.f32.partialorder %v2576, 0.0
      %vm2589 = vcmp.gt.f32.partialorder %v2577, 0.0
      %vm2590 = vcmp.gt.f32.partialorder %v2578, 0.0
      %vm2591 = vcmp.gt.f32.partialorder %v2579, 0.0
      %vm2592 = vcmp.gt.f32.partialorder %v2580, 0.0
      %vm2593 = vcmp.gt.f32.partialorder %v2581, 0.0
      %v2594 = vmul.f32 %v2570, 1.442695
      %v2595 = vpow.pop %v2594
      %v2596 = vmul.f32 %v2571, 1.442695
      %v2597 = vpow.pop %v2596
      %v2598 = vmul.f32 %v2572, 1.442695
      %v2599 = vpow.pop %v2598
      %v2600 = vmul.f32 %v2573, 1.442695
      %v2601 = vpow.pop %v2600
      %v2602 = vmul.f32 %v2574, 1.442695
      %v2603 = vpow.pop %v2602
      %v2604 = vmul.f32 %v2575, 1.442695
      %v2605 = vpow.pop %v2604
      %v2606 = vmul.f32 %v2576, 1.442695
      %v2607 = vpow.pop %v2606
      %v2608 = vmul.f32 %v2577, 1.442695
      %v2609 = vpow.pop %v2608
      %v2610 = vmul.f32 %v2578, 1.442695
      %v2611 = vpow.pop %v2610
      %v2612 = vmul.f32 %v2579, 1.442695
      %v2613 = vpow.pop %v2612
      %v2614 = vmul.f32 %v2580, 1.442695
      %v2615 = vpow.pop %v2614
      %v2616 = vmul.f32 %v2581, 1.442695
      %v2617 = vpow.pop %v2616
      %v2618 = vsub.f32 %v2595, 1.0
      %v2619 = vsub.f32 %v2597, 1.0
      %v2620 = vsub.f32 %v2599, 1.0
      %v2621 = vsub.f32 %v2601, 1.0
      %v2622 = vsub.f32 %v2603, 1.0
      %v2623 = vsub.f32 %v2605, 1.0
      %v2624 = vsub.f32 %v2607, 1.0
      %v2625 = vsub.f32 %v2609, 1.0
      %v2626 = vsub.f32 %v2611, 1.0
      %v2627 = vsub.f32 %v2613, 1.0
      %v2628 = vsub.f32 %v2615, 1.0
      %v2629 = vsub.f32 %v2617, 1.0
      %v2630 = vsel %vm2582, %v2570, %v2618
      %v2631 = vsel %vm2583, %v2571, %v2619
      %v2632 = vsel %vm2584, %v2572, %v2620
      %v2633 = vsel %vm2585, %v2573, %v2621
      %v2634 = vsel %vm2586, %v2574, %v2622
      %v2635 = vsel %vm2587, %v2575, %v2623
      %v2636 = vsel %vm2588, %v2576, %v2624
      %v2637 = vsel %vm2589, %v2577, %v2625
      %v2638 = vsel %vm2590, %v2578, %v2626
      %v2639 = vsel %vm2591, %v2579, %v2627
      %v2640 = vsel %vm2592, %v2580, %v2628
      %v2641 = vsel %vm2593, %v2581, %v2629
      %v2642 = vld [vmem:[%s4] sm:$0xff]
      %v2643 = vld [vmem:[%s4 + $0x8] sm:$0xff]
      %v2644 = vld [vmem:[%s4 + $0x10] sm:$0xff]
      %v2645 = vld [vmem:[%s4 + $0x18] sm:$0xff]
      %v2646 = vld [vmem:[%s4 + $0x20] sm:$0xff]
      %v2647 = vld [vmem:[%s4 + $0x28] sm:$0x7f]
      %vm2648 = vcmask 785408
      %v2650 = vsel %vm2648, %v2642, 0
      %v2653 = vsel %vm2648, %v2643, 0
      %v2656 = vsel %vm2648, %v2644, 0
      %v2659 = vsel %vm2648, %v2645, 0
      %v2662 = vsel %vm2648, %v2646, 0
      %v2665 = vsel %vm2648, %v2647, 0
      %2667 = vmatpush.msra.mxu0 0.0
      %2668 = vmatpush.msra.mxu0 0.0
      %2669 = vmatpush.msra.mxu0 0.0
      %2670 = vmatpush.msra.mxu0 0.0
      %2671 = vmatpush.msra.mxu0 %v2641
      %2672 = vmatpush.msra.mxu0 %v2640
      %2673 = vmatpush.msra.mxu0 %v2639
      %2674 = vmatpush.msra.mxu0 %v2638
      %2675 = vmatpush.msra.mxu0 %v2637
      %2676 = vmatpush.msra.mxu0 %v2636
      %2677 = vmatpush.msra.mxu0 %v2635
      %2678 = vmatpush.msra.mxu0 %v2634
      %2679 = vmatpush.msra.mxu0 %v2633
      %2680 = vmatpush.msra.mxu0 %v2632
      %2681 = vmatpush.msra.mxu0 %v2631
      %2682 = vmatpush.msra.mxu0 %v2630
      %2683 = vmatmul.f32.gmra.mxu0 %v2650
      %v2684 = vpop.f32.mrf.mxu0
      %v2685 = vadd.f32 0.0, %v2684
      %2686 = vmatmul.f32.gmra.mxu0 %v2653
      %v2687 = vpop.f32.mrf.mxu0
      %v2688 = vadd.f32 0.0, %v2687
      %2689 = vmatmul.f32.gmra.mxu0 %v2656
      %v2690 = vpop.f32.mrf.mxu0
      %v2691 = vadd.f32 0.0, %v2690
      %2692 = vmatmul.f32.gmra.mxu0 %v2659
      %v2693 = vpop.f32.mrf.mxu0
      %v2694 = vadd.f32 0.0, %v2693
      %2695 = vmatmul.f32.gmra.mxu0 %v2662
      %v2696 = vpop.f32.mrf.mxu0
      %v2697 = vadd.f32 0.0, %v2696
      %2698 = vmatmul.f32.gmra.mxu0 %v2665
      %v2699 = vpop.f32.mrf.mxu0
      %v2700 = vadd.f32 0.0, %v2699
      %2701 = vdwg.mxu0
      %2702 = vst [vmem:[%s224] sm:$0xff] %v2685
      %2703 = vst [vmem:[%s224 + $0x8] sm:$0xff] %v2688
      %2704 = vst [vmem:[%s224 + $0x10] sm:$0xff] %v2691
      %2705 = vst [vmem:[%s224 + $0x18] sm:$0xff] %v2694
      %2706 = vst [vmem:[%s224 + $0x20] sm:$0xff] %v2697
      %2707 = vst [vmem:[%s224 + $0x28] sm:$0x7f] %v2700
      %p2708 = scmp.lt.s32.totalorder %s16, 1
      %s2709 = scalar_select %p2708, %s16, 1
      %s2710 = smul.addr %s2709, 6
      %s2711 = smul.addr %s2710, 8
      %s2712 = scalar_lea.vmem %s5, %s2711
      // Predicated region
      $region41: #{multibranch_forward_pallas.6} parent=39 // pred_check
        %p2713 = pneg %p144
      $region42: #{multibranch_forward_pallas.6} parent=39 // pred_check_branch
        %2715 = sbr.rel (%p2713) target = $region44
      $region43: #{multibranch_forward_pallas.6} parent=39 // pred_region
        _
      $region44: #{multibranch_forward_pallas.6} parent=39 // pred_fallthru
        _
    $region40: #{multibranch_forward_pallas.6} parent=5 // pred_fallthru
      _
    %p2716 = scmp.le.s32.totalorder 2, %s11
    // Predicated region
    $region45: #{multibranch_forward_pallas.6} parent=5 // pred_check
      %p2717 = pneg %p2716
    $region46: #{multibranch_forward_pallas.6} parent=5 // pred_check_branch
      %2719 = sbr.rel (%p2717) target = $region48
    $region47: #{multibranch_forward_pallas.6} parent=5 // pred_region
      %s2720 = ssub.s32 %s11, 2
      // Predicated region
      $region49: #{multibranch_forward_pallas.6} parent=47 // pred_check
        %p2721 = pneg %p150
      $region50: #{multibranch_forward_pallas.6} parent=47 // pred_check_branch
        %2723 = sbr.rel (%p2721) target = $region52
      $region51: #{multibranch_forward_pallas.6} parent=47 // pred_region
        %p2724 = scmp.lt.s32.totalorder %s17, 1
        %s2725 = scalar_select %p2724, %s17, 1
        %s2726 = smul.addr %s2725, 6
        %s2727 = smul.addr %s2726, 8
        %s2728 = scalar_lea.vmem %s5, %s2727
      $region52: #{multibranch_forward_pallas.6} parent=47 // pred_fallthru
        _
    $region48: #{multibranch_forward_pallas.6} parent=5 // pred_fallthru
      _
  $region6: #{multibranch_forward_pallas.6} parent=0 // loop_footer
    %s15 = sadd.s32 1, %s11
  $region7: #{multibranch_forward_pallas.6} parent=0 // loop_footer_branch
    %10 = sbr.rel target = $region3
  $region8: #{multibranch_forward_pallas.6} parent=0 // loop_exit
    _

</llo_original>
